<compile_context>
chip_gen: v7x
topology: tpu7x:2x2x1
jax: 0.10.0
libtpu: 0.0.40
codegen_flags: <defaults>
</compile_context>

<pallas_src>
import functools
import math

import jax
import jax.numpy as jnp
from jax.experimental import pallas as pl
from jax.experimental.pallas import tpu as pltpu

BN_EPS = 1e-5  # PyTorch BatchNorm2d default eps


def _bn_relu(x):
    """Training-mode BatchNorm (per-channel stats over axis 0, biased variance,
    gamma=1, beta=0) + ReLU.  Two-pass statistics for numerical safety."""
    mean = jnp.mean(x, axis=0, keepdims=True)
    xc = x - mean
    var = jnp.mean(xc * xc, axis=0, keepdims=True)
    return jnp.maximum(xc * jax.lax.rsqrt(var + BN_EPS), 0.0)


# ----------------------------- fused forward kernel ------------------------------
def _spatial_attention_kernel(h_ref, wqkv_ref, wo_ref, o_ref, *, BT, V, K, d):
    D = K * d
    N = BT * V

    xh = h_ref[...]                       # [N, 2D+m]  bf16  (x || ste)
    wqkv = wqkv_ref[...]                  # [2D+m, 3D] bf16  (head-major packing)

    # ---- fused Q/K/V projection: one MXU matmul, f32 accumulation -----------
    z = jnp.dot(xh, wqkv, preferred_element_type=jnp.float32)      # [N, 3D]

    # ---- BatchNorm (training-mode batch stats over all N positions) + ReLU,
    #      computed once over all 3D channels (per-channel == per-column) -----
    z = _bn_relu(z)                                                # [N, 3D] f32

    # ---- head-batched spatial attention --------------------------------------
    # columns are packed per head as [q_h | k_h | v_h]; fold heads into batch
    # (same data movement as torch.cat(torch.split(., d, -1), 0)).
    z3 = z.reshape(BT, V, 3 * D)                                   # free reshape
    zb = jnp.concatenate(
        [z3[:, :, i * 3 * d:(i + 1) * 3 * d] for i in range(K)], axis=0
    )                                                              # [K*BT, V, 3d]
    scale = 1.0 / math.sqrt(d)
    qb = (zb[:, :, 0:d] * scale).astype(jnp.bfloat16)              # [K*BT, V, d]
    kb = zb[:, :, d:2 * d].astype(jnp.bfloat16)
    vb = zb[:, :, 2 * d:3 * d].astype(jnp.bfloat16)

    s = jnp.einsum('bvd,bud->bvu', qb, kb,
                   preferred_element_type=jnp.float32)             # [K*BT, V, V]
    s = s - jnp.max(s, axis=-1, keepdims=True)
    e = jnp.exp(s)
    att = e * pl.reciprocal(jnp.sum(e, axis=-1, keepdims=True), approx=True)
    ctx = jnp.einsum('bvu,bud->bvd', att.astype(jnp.bfloat16), vb,
                     preferred_element_type=jnp.float32)           # [K*BT, V, d]

    # ---- merge heads (single lane concat) + single output projection --------
    ctx3 = jnp.concatenate(
        [ctx[i * BT:(i + 1) * BT] for i in range(K)], axis=-1)     # [BT, V, D]
    y = jnp.dot(ctx3.reshape(N, D).astype(jnp.bfloat16), wo_ref[...],
                preferred_element_type=jnp.float32)                # [N, D]

    # ---- final FC's BatchNorm + ReLU -----------------------------------------
    o_ref[...] = _bn_relu(y)                                       # [N, D]


# ----------------------------------- wrapper --------------------------------------
def spatial_attention(X, STE, params, *, K, d):
    """X: [B, T, V, D+m]; STE: [B, T, V, D]; returns [B, T, V, D]."""
    B, T, V, Cx = X.shape
    D = K * d
    N = B * T * V
    BT = B * T

    # concat X||STE once (cheap lane copy, done in the wrapper) -> one DMA
    h = jnp.concatenate(
        [X.reshape(N, Cx), STE.reshape(N, D)], axis=-1).astype(jnp.bfloat16)

    # pack Wq/Wk/Wv into one fused weight, head-major: per head [q_h | k_h | v_h]
    wq, wk, wv = params["wq"], params["wk"], params["wv"]
    w_qkv = jnp.concatenate(
        [jnp.concatenate([wq[:, i * d:(i + 1) * d],
                          wk[:, i * d:(i + 1) * d],
                          wv[:, i * d:(i + 1) * d]], axis=1)
         for i in range(K)], axis=1).astype(jnp.bfloat16)          # [2D+m, 3D]
    wo = params["wo"].astype(jnp.bfloat16)                         # [D, D]

    kernel = functools.partial(_spatial_attention_kernel, BT=BT, V=V, K=K, d=d)
    vmem = pl.BlockSpec(memory_space=pltpu.MemorySpace.VMEM)

    out = pl.pallas_call(
        kernel,
        out_shape=jax.ShapeDtypeStruct((N, D), jnp.float32),
        in_specs=[vmem, vmem, vmem],
        out_specs=vmem,
    )(h, w_qkv, wo)

    return out.reshape(B, T, V, D)


# ----------------------- parameter init (matches the module) ----------------------
def _xavier_uniform(key, fan_in, fan_out):
    bound = math.sqrt(6.0 / (fan_in + fan_out))
    # conv weight is [out, in, 1, 1]; stored directly as the [in, out] matmul matrix
    return jax.random.uniform(key, (fan_in, fan_out), jnp.float32, -bound, bound)


def init_params(key, K, d, m):
    # Conv biases are omitted: the module zero-initializes them, and with
    # training-mode BN the mean subtraction absorbs any constant channel bias.
    D = K * d
    Cin = 2 * D + m
    kq, kk, kv, ko = jax.random.split(key, 4)
    return {
        "wq": _xavier_uniform(kq, Cin, D),
        "wk": _xavier_uniform(kk, Cin, D),
        "wv": _xavier_uniform(kv, Cin, D),
        "wo": _xavier_uniform(ko, D, D),
    }


if __name__ == "__main__":
    # Small shapes consistent with the module:
    #   K=4 heads, d=8 -> D=32, memory dim m=8 (FC_q input = 2D+m = 72),
    #   batch B=2, num_step T=8, num_vertex V=16.
    K, d, m = 4, 8, 8
    D = K * d
    B, T, V = 2, 8, 16

    key = jax.random.PRNGKey(0)
    kx, ks, kp = jax.random.split(key, 3)
    X = jax.random.normal(kx, (B, T, V, D + m), jnp.float32)
    STE = jax.random.normal(ks, (B, T, V, D), jnp.float32)
    params = init_params(kp, K, d, m)

    fwd = jax.jit(functools.partial(spatial_attention, K=K, d=d))
    out = jax.block_until_ready(fwd(X, STE, params))

    assert out.shape == (B, T, V, D), out.shape
    assert bool(jnp.isfinite(out).all())
    print("KERNEL_OK")
</pallas_src>

<mosaic_0001>
module attributes {stable_mosaic.version = 11 : i64} {
  func.func @_spatial_attention_kernel(%arg0: memref<256x72xbf16, #tpu.memory_space<vmem>>, %arg1: memref<72x96xbf16, #tpu.memory_space<vmem>>, %arg2: memref<32x32xbf16, #tpu.memory_space<vmem>>, %arg3: memref<256x32xf32, #tpu.memory_space<vmem>>) attributes {dimension_semantics = [], scalar_prefetch = 0 : i64, scratch_operands = 0 : i64, tpu.core_type = #tpu.core_type<tc>} {
    %c0 = arith.constant 0 : index
    %c0_0 = arith.constant 0 : index
    %0 = vector.load %arg0[%c0, %c0_0] : memref<256x72xbf16, #tpu.memory_space<vmem>>, vector<256x72xbf16>
    %c0_1 = arith.constant 0 : index
    %c0_2 = arith.constant 0 : index
    %1 = vector.load %arg1[%c0_1, %c0_2] : memref<72x96xbf16, #tpu.memory_space<vmem>>, vector<72x96xbf16>
    %cst = arith.constant dense<0.000000e+00> : vector<256x96xf32>
    %2 = tpu.matmul %0, %1, %cst {dimension_numbers = #tpu.dot_dimension_numbers<[1], [0], [0], [1], [0, 0, 1, 1], [], []>} : vector<256x72xbf16>, vector<72x96xbf16>, vector<256x96xf32> -> vector<256x96xf32>
    %cst_3 = arith.constant dense<0.000000e+00> : vector<96xf32>
    %3 = vector.multi_reduction <add>, %2, %cst_3 [0] : vector<256x96xf32> to vector<96xf32>
    %4 = vector.shape_cast %3 : vector<96xf32> to vector<1x96xf32>
    %cst_4 = arith.constant 2.560000e+02 : f32
    %5 = vector.broadcast %cst_4 : f32 to vector<1x96xf32>
    %6 = arith.divf %4, %5 : vector<1x96xf32>
    %7 = vector.broadcast %6 : vector<1x96xf32> to vector<256x96xf32>
    %8 = arith.subf %2, %7 : vector<256x96xf32>
    %9 = arith.mulf %8, %8 : vector<256x96xf32>
    %cst_5 = arith.constant dense<0.000000e+00> : vector<96xf32>
    %10 = vector.multi_reduction <add>, %9, %cst_5 [0] : vector<256x96xf32> to vector<96xf32>
    %11 = vector.shape_cast %10 : vector<96xf32> to vector<1x96xf32>
    %cst_6 = arith.constant 2.560000e+02 : f32
    %12 = vector.broadcast %cst_6 : f32 to vector<1x96xf32>
    %13 = arith.divf %11, %12 : vector<1x96xf32>
    %cst_7 = arith.constant 9.99999974E-6 : f32
    %14 = vector.broadcast %cst_7 : f32 to vector<1x96xf32>
    %15 = arith.addf %13, %14 : vector<1x96xf32>
    %16 = math.rsqrt %15 : vector<1x96xf32>
    %17 = vector.broadcast %16 : vector<1x96xf32> to vector<256x96xf32>
    %18 = arith.mulf %8, %17 : vector<256x96xf32>
    %cst_8 = arith.constant 0.000000e+00 : f32
    %19 = vector.broadcast %cst_8 : f32 to vector<256x96xf32>
    %20 = arith.maximumf %18, %19 : vector<256x96xf32>
    %21 = vector.shape_cast %20 : vector<256x96xf32> to vector<16x16x96xf32>
    %22 = vector.extract_strided_slice %21 {offsets = [0, 0, 0], sizes = [16, 16, 24], strides = [1, 1, 1]} : vector<16x16x96xf32> to vector<16x16x24xf32>
    %23 = vector.extract_strided_slice %21 {offsets = [0, 0, 24], sizes = [16, 16, 24], strides = [1, 1, 1]} : vector<16x16x96xf32> to vector<16x16x24xf32>
    %24 = vector.extract_strided_slice %21 {offsets = [0, 0, 48], sizes = [16, 16, 24], strides = [1, 1, 1]} : vector<16x16x96xf32> to vector<16x16x24xf32>
    %25 = vector.extract_strided_slice %21 {offsets = [0, 0, 72], sizes = [16, 16, 24], strides = [1, 1, 1]} : vector<16x16x96xf32> to vector<16x16x24xf32>
    %26 = tpu.concatenate %22, %23, %24, %25 in 0 : vector<16x16x24xf32>, vector<16x16x24xf32>, vector<16x16x24xf32>, vector<16x16x24xf32> -> vector<64x16x24xf32>
    %27 = vector.extract_strided_slice %26 {offsets = [0, 0, 0], sizes = [64, 16, 8], strides = [1, 1, 1]} : vector<64x16x24xf32> to vector<64x16x8xf32>
    %cst_9 = arith.constant 0.353553385 : f32
    %28 = vector.broadcast %cst_9 : f32 to vector<64x16x8xf32>
    %29 = arith.mulf %27, %28 : vector<64x16x8xf32>
    %30 = arith.truncf %29 : vector<64x16x8xf32> to vector<64x16x8xbf16>
    %31 = vector.extract_strided_slice %26 {offsets = [0, 0, 8], sizes = [64, 16, 8], strides = [1, 1, 1]} : vector<64x16x24xf32> to vector<64x16x8xf32>
    %32 = arith.truncf %31 : vector<64x16x8xf32> to vector<64x16x8xbf16>
    %33 = vector.extract_strided_slice %26 {offsets = [0, 0, 16], sizes = [64, 16, 8], strides = [1, 1, 1]} : vector<64x16x24xf32> to vector<64x16x8xf32>
    %34 = arith.truncf %33 : vector<64x16x8xf32> to vector<64x16x8xbf16>
    "tpu.trace_start"() <{level = 10 : i32, message = "bvd,bud->bvu"}> : () -> ()
    %cst_10 = arith.constant dense<0.000000e+00> : vector<64x16x16xf32>
    %35 = tpu.matmul %30, %32, %cst_10 {dimension_numbers = #tpu.dot_dimension_numbers<[2], [2], [1], [1], [0, 0, 0, 1, 1, 1], [0], [0]>} : vector<64x16x8xbf16>, vector<64x16x8xbf16>, vector<64x16x16xf32> -> vector<64x16x16xf32>
    "tpu.trace_stop"() : () -> ()
    %cst_11 = arith.constant dense<0xFF800000> : vector<64x16xf32>
    %36 = vector.multi_reduction <maximumf>, %35, %cst_11 [2] : vector<64x16x16xf32> to vector<64x16xf32>
    %37 = vector.shape_cast %36 : vector<64x16xf32> to vector<64x16x1xf32>
    %38 = vector.broadcast %37 : vector<64x16x1xf32> to vector<64x16x16xf32>
    %39 = arith.subf %35, %38 : vector<64x16x16xf32>
    %40 = math.exp %39 : vector<64x16x16xf32>
    %cst_12 = arith.constant dense<0.000000e+00> : vector<64x16xf32>
    %41 = vector.multi_reduction <add>, %40, %cst_12 [2] : vector<64x16x16xf32> to vector<64x16xf32>
    %42 = vector.shape_cast %41 : vector<64x16xf32> to vector<64x16x1xf32>
    %43 = tpu.reciprocal %42 {approx = true} : vector<64x16x1xf32> -> vector<64x16x1xf32>
    %44 = vector.broadcast %43 : vector<64x16x1xf32> to vector<64x16x16xf32>
    %45 = arith.mulf %40, %44 : vector<64x16x16xf32>
    %46 = arith.truncf %45 : vector<64x16x16xf32> to vector<64x16x16xbf16>
    "tpu.trace_start"() <{level = 10 : i32, message = "bvu,bud->bvd"}> : () -> ()
    %cst_13 = arith.constant dense<0.000000e+00> : vector<64x16x8xf32>
    %47 = tpu.matmul %46, %34, %cst_13 {dimension_numbers = #tpu.dot_dimension_numbers<[2], [1], [1], [2], [0, 0, 0, 1, 1, 2], [0], [0]>} : vector<64x16x16xbf16>, vector<64x16x8xbf16>, vector<64x16x8xf32> -> vector<64x16x8xf32>
    "tpu.trace_stop"() : () -> ()
    %48 = vector.extract_strided_slice %47 {offsets = [0, 0, 0], sizes = [16, 16, 8], strides = [1, 1, 1]} : vector<64x16x8xf32> to vector<16x16x8xf32>
    %49 = vector.extract_strided_slice %47 {offsets = [16, 0, 0], sizes = [16, 16, 8], strides = [1, 1, 1]} : vector<64x16x8xf32> to vector<16x16x8xf32>
    %50 = vector.extract_strided_slice %47 {offsets = [32, 0, 0], sizes = [16, 16, 8], strides = [1, 1, 1]} : vector<64x16x8xf32> to vector<16x16x8xf32>
    %51 = vector.extract_strided_slice %47 {offsets = [48, 0, 0], sizes = [16, 16, 8], strides = [1, 1, 1]} : vector<64x16x8xf32> to vector<16x16x8xf32>
    %52 = tpu.concatenate %48, %49, %50, %51 in 2 : vector<16x16x8xf32>, vector<16x16x8xf32>, vector<16x16x8xf32>, vector<16x16x8xf32> -> vector<16x16x32xf32>
    %53 = vector.shape_cast %52 : vector<16x16x32xf32> to vector<256x32xf32>
    %54 = arith.truncf %53 : vector<256x32xf32> to vector<256x32xbf16>
    %c0_14 = arith.constant 0 : index
    %c0_15 = arith.constant 0 : index
    %55 = vector.load %arg2[%c0_14, %c0_15] : memref<32x32xbf16, #tpu.memory_space<vmem>>, vector<32x32xbf16>
    %cst_16 = arith.constant dense<0.000000e+00> : vector<256x32xf32>
    %56 = tpu.matmul %54, %55, %cst_16 {dimension_numbers = #tpu.dot_dimension_numbers<[1], [0], [0], [1], [0, 0, 1, 1], [], []>} : vector<256x32xbf16>, vector<32x32xbf16>, vector<256x32xf32> -> vector<256x32xf32>
    %cst_17 = arith.constant dense<0.000000e+00> : vector<32xf32>
    %57 = vector.multi_reduction <add>, %56, %cst_17 [0] : vector<256x32xf32> to vector<32xf32>
    %58 = vector.shape_cast %57 : vector<32xf32> to vector<1x32xf32>
    %cst_18 = arith.constant 2.560000e+02 : f32
    %59 = vector.broadcast %cst_18 : f32 to vector<1x32xf32>
    %60 = arith.divf %58, %59 : vector<1x32xf32>
    %61 = vector.broadcast %60 : vector<1x32xf32> to vector<256x32xf32>
    %62 = arith.subf %56, %61 : vector<256x32xf32>
    %63 = arith.mulf %62, %62 : vector<256x32xf32>
    %cst_19 = arith.constant dense<0.000000e+00> : vector<32xf32>
    %64 = vector.multi_reduction <add>, %63, %cst_19 [0] : vector<256x32xf32> to vector<32xf32>
    %65 = vector.shape_cast %64 : vector<32xf32> to vector<1x32xf32>
    %cst_20 = arith.constant 2.560000e+02 : f32
    %66 = vector.broadcast %cst_20 : f32 to vector<1x32xf32>
    %67 = arith.divf %65, %66 : vector<1x32xf32>
    %cst_21 = arith.constant 9.99999974E-6 : f32
    %68 = vector.broadcast %cst_21 : f32 to vector<1x32xf32>
    %69 = arith.addf %67, %68 : vector<1x32xf32>
    %70 = math.rsqrt %69 : vector<1x32xf32>
    %71 = vector.broadcast %70 : vector<1x32xf32> to vector<256x32xf32>
    %72 = arith.mulf %62, %71 : vector<256x32xf32>
    %cst_22 = arith.constant 0.000000e+00 : f32
    %73 = vector.broadcast %cst_22 : f32 to vector<256x32xf32>
    %74 = arith.maximumf %72, %73 : vector<256x32xf32>
    %c0_23 = arith.constant 0 : index
    %c0_24 = arith.constant 0 : index
    %75 = vector.load %arg3[%c0_23, %c0_24] : memref<256x32xf32, #tpu.memory_space<vmem>>, vector<256x32xf32>
    tpu.vector_store %arg3[%c0_23, %c0_24], %74 {strides = array<i32>} : memref<256x32xf32, #tpu.memory_space<vmem>>, vector<256x32xf32>,
    return
  }
}

</mosaic_0001>

<llo_original>
// kernel: spatial_attention.1
$region0: #{spatial_attention.1}
  #allocation0 [shape = 'u32[]', space=smem, size = 0x4, offset = 0x4, fixed_abs, tag = 'smem constant byte address 0x4 - core index']
  #allocation1 [shape = 'u32[144,128]{1,0:T(1,128)}', space=vmem, size = 0x12000, scoped, tag = 'internal scratch']
  %s0 = inlined_call_operand.vmem [shape: bf16[256,72], index: 0, kind: input, shape index: {}]
  %s1 = inlined_call_operand.vmem [shape: bf16[72,96], index: 1, kind: input, shape index: {}]
  %s2 = inlined_call_operand.vmem [shape: bf16[32,32], index: 2, kind: input, shape index: {}]
  %s3 = inlined_call_operand.hbm [shape: f32[256,32], index: 3, kind: output, shape index: {}]
  %s4 = sld [smem:[#allocation0]]
  $region22: #{spatial_attention.1} parent=0
    _
  %s6 = ssub.s32 1, %s4
  %s7 = scalar_select 0, %s6, %s4
  $region1: #{spatial_attention.1} parent=0
    #allocation2 [shape = 'u8[131072]{0}', space=vmem, size = 0x20000, scoped, tag = 'output window, operand 0, single buffered']
    #allocation3 [shape = 's32[1]{0}', space=sflag, size = 0x4, scoped, tag = 'scoped memory for spatial_attention.1']
    %8 = vsyncpa [#allocation3], 0
    // Predicated region
    $region2: #{spatial_attention.1} parent=1 // pred_check
      _
    $region3: #{spatial_attention.1} parent=1 // pred_check_branch
      %10 = sbr.rel (0) target = $region5
    $region4: #{spatial_attention.1} parent=1 // pred_region
      _
    $region5: #{spatial_attention.1} parent=1 // pred_fallthru
      _
    // Predicated region
    $region6: #{spatial_attention.1} parent=1 // pred_check
      _
    $region7: #{spatial_attention.1} parent=1 // pred_check_branch
      %12 = sbr.rel (0) target = $region9
    $region8: #{spatial_attention.1} parent=1 // pred_region
      _
    $region9: #{spatial_attention.1} parent=1 // pred_fallthru
      _
    // Predicated region
    $region10: #{spatial_attention.1} parent=1 // pred_check
      _
    $region11: #{spatial_attention.1} parent=1 // pred_check_branch
      %14 = sbr.rel (0) target = $region13
    $region12: #{spatial_attention.1} parent=1 // pred_region
      _
    $region13: #{spatial_attention.1} parent=1 // pred_fallthru
      _
    %v16 = vld [vmem:[%s0] sm:$0xf]
    %v17 = vld [vmem:[%s0 + $0x4] sm:$0xf]
    %v18 = vld [vmem:[%s0 + $0x8] sm:$0xf]
    %v19 = vld [vmem:[%s0 + $0xc] sm:$0xf]
    %v20 = vld [vmem:[%s0 + $0x10] sm:$0xf]
    %v21 = vld [vmem:[%s0 + $0x14] sm:$0xf]
    %v22 = vld [vmem:[%s0 + $0x18] sm:$0xf]
    %v23 = vld [vmem:[%s0 + $0x1c] sm:$0xf]
    %v24 = vld [vmem:[%s0 + $0x20] sm:$0xf]
    %v25 = vld [vmem:[%s0 + $0x24] sm:$0xf]
    %v26 = vld [vmem:[%s0 + $0x28] sm:$0xf]
    %v27 = vld [vmem:[%s0 + $0x2c] sm:$0xf]
    %v28 = vld [vmem:[%s0 + $0x30] sm:$0xf]
    %v29 = vld [vmem:[%s0 + $0x34] sm:$0xf]
    %v30 = vld [vmem:[%s0 + $0x38] sm:$0xf]
    %v31 = vld [vmem:[%s0 + $0x3c] sm:$0xf]
    %v32 = vld [vmem:[%s0 + $0x40] sm:$0xf]
    %v33 = vld [vmem:[%s0 + $0x44] sm:$0xf]
    %v34 = vld [vmem:[%s0 + $0x48] sm:$0xf]
    %v35 = vld [vmem:[%s0 + $0x4c] sm:$0xf]
    %v36 = vld [vmem:[%s0 + $0x50] sm:$0xf]
    %v37 = vld [vmem:[%s0 + $0x54] sm:$0xf]
    %v38 = vld [vmem:[%s0 + $0x58] sm:$0xf]
    %v39 = vld [vmem:[%s0 + $0x5c] sm:$0xf]
    %v40 = vld [vmem:[%s0 + $0x60] sm:$0xf]
    %v41 = vld [vmem:[%s0 + $0x64] sm:$0xf]
    %v42 = vld [vmem:[%s0 + $0x68] sm:$0xf]
    %v43 = vld [vmem:[%s0 + $0x6c] sm:$0xf]
    %v44 = vld [vmem:[%s0 + $0x70] sm:$0xf]
    %v45 = vld [vmem:[%s0 + $0x74] sm:$0xf]
    %v46 = vld [vmem:[%s0 + $0x78] sm:$0xf]
    %v47 = vld [vmem:[%s0 + $0x7c] sm:$0xf]
    %v48 = vld [vmem:[%s1] sm:$0xf]
    %v49 = vld [vmem:[%s1 + $0x4] sm:$0xf]
    %v50 = vld [vmem:[%s1 + $0x8] sm:$0xf]
    %v51 = vld [vmem:[%s1 + $0xc] sm:$0xf]
    %v52 = vld [vmem:[%s1 + $0x10] sm:$0xf]
    %v53 = vld [vmem:[%s1 + $0x14] sm:$0xf]
    %v54 = vld [vmem:[%s1 + $0x18] sm:$0xf]
    %v55 = vld [vmem:[%s1 + $0x1c] sm:$0xf]
    %v56 = vld [vmem:[%s1 + $0x20] sm:$0xf]
    %v89 = vunpack.c.l.b16 %v16
    %v90 = vunpack.c.l.b16 %v17
    %v91 = vunpack.c.l.b16 %v18
    %v92 = vunpack.c.l.b16 %v19
    %v93 = vunpack.c.l.b16 %v20
    %v94 = vunpack.c.l.b16 %v21
    %v95 = vunpack.c.l.b16 %v22
    %v96 = vunpack.c.l.b16 %v23
    %v97 = vunpack.c.l.b16 %v24
    %v98 = vunpack.c.l.b16 %v25
    %v99 = vunpack.c.l.b16 %v26
    %v100 = vunpack.c.l.b16 %v27
    %v101 = vunpack.c.l.b16 %v28
    %v102 = vunpack.c.l.b16 %v29
    %v103 = vunpack.c.l.b16 %v30
    %v104 = vunpack.c.l.b16 %v31
    %v105 = vunpack.c.l.b16 %v32
    %v106 = vunpack.c.l.b16 %v33
    %v107 = vunpack.c.l.b16 %v34
    %v108 = vunpack.c.l.b16 %v35
    %v109 = vunpack.c.l.b16 %v36
    %v110 = vunpack.c.l.b16 %v37
    %v111 = vunpack.c.l.b16 %v38
    %v112 = vunpack.c.l.b16 %v39
    %v113 = vunpack.c.l.b16 %v40
    %v114 = vunpack.c.l.b16 %v41
    %v115 = vunpack.c.l.b16 %v42
    %v116 = vunpack.c.l.b16 %v43
    %v117 = vunpack.c.l.b16 %v44
    %v118 = vunpack.c.l.b16 %v45
    %v119 = vunpack.c.l.b16 %v46
    %v120 = vunpack.c.l.b16 %v47
    %v121 = vpack.c.b16 %v90, %v89
    %v122 = vpack.c.b16 %v92, %v91
    %v123 = vpack.c.b16 %v94, %v93
    %v124 = vpack.c.b16 %v96, %v95
    %v125 = vpack.c.b16 %v98, %v97
    %v126 = vpack.c.b16 %v100, %v99
    %v127 = vpack.c.b16 %v102, %v101
    %v128 = vpack.c.b16 %v104, %v103
    %v129 = vpack.c.b16 %v106, %v105
    %v130 = vpack.c.b16 %v108, %v107
    %v131 = vpack.c.b16 %v110, %v109
    %v132 = vpack.c.b16 %v112, %v111
    %v133 = vpack.c.b16 %v114, %v113
    %v134 = vpack.c.b16 %v116, %v115
    %v135 = vpack.c.b16 %v118, %v117
    %v136 = vpack.c.b16 %v120, %v119
    %v146 = vunpack.c.l.b16 %v48
    %v147 = vunpack.c.l.b16 %v49
    %v148 = vunpack.c.l.b16 %v50
    %v149 = vunpack.c.l.b16 %v51
    %v150 = vunpack.c.l.b16 %v52
    %v151 = vunpack.c.l.b16 %v53
    %v152 = vunpack.c.l.b16 %v54
    %v153 = vunpack.c.l.b16 %v55
    %v154 = vunpack.c.l.b16 %v56
    %v155 = vpack.c.b16 %v147, %v146
    %v156 = vpack.c.b16 %v149, %v148
    %v157 = vpack.c.b16 %v151, %v150
    %v158 = vpack.c.b16 %v153, %v152
    %v159 = vpack.c.b16 %v154, %v154
    %vm164 = vcmask 588800
    %v166 = vsel %vm164, %v121, 0
    %v169 = vsel %vm164, %v122, 0
    %v172 = vsel %vm164, %v123, 0
    %v175 = vsel %vm164, %v124, 0
    %v178 = vsel %vm164, %v125, 0
    %v181 = vsel %vm164, %v126, 0
    %v184 = vsel %vm164, %v127, 0
    %v187 = vsel %vm164, %v128, 0
    %v190 = vsel %vm164, %v129, 0
    %v193 = vsel %vm164, %v130, 0
    %v196 = vsel %vm164, %v131, 0
    %v199 = vsel %vm164, %v132, 0
    %v202 = vsel %vm164, %v133, 0
    %v205 = vsel %vm164, %v134, 0
    %v208 = vsel %vm164, %v135, 0
    %v211 = vsel %vm164, %v136, 0
    %vm213 = vcmask 1043456
    %v215 = vsel %vm213, %v159, 0
    %217 = vmatprep.subr.bf16.mxu0 0
    %218 = vmatpush1.bf16.msra.mxu0 %v155
    %219 = vmatprep.subr.bf16.mxu0 0
    %220 = vmatpush1.bf16.msra.mxu0 %v156
    %221 = vmatprep.subr.bf16.mxu0 0
    %222 = vmatpush1.bf16.msra.mxu0 %v157
    %223 = vmatprep.subr.bf16.mxu0 0
    %224 = vmatpush1.bf16.msra.mxu0 %v158
    %225 = vmatprep.subr.bf16.mxu0 0
    %226 = vmatpush1.bf16.msra.mxu0 %v215
    %227 = vmatprep.subr.bf16.mxu0 0
    %228 = vmatpush1.bf16.msra.mxu0 0
    %229 = vmatprep.subr.bf16.mxu0 0
    %230 = vmatpush1.bf16.msra.mxu0 0
    %231 = vmatprep.subr.bf16.mxu0 0
    %232 = vmatpush1.bf16.msra.mxu0 0
    %233 = vmatprep.subr.bf16.mxu0 0
    %234 = vmatpush1.bf16.msra.mxu0 0
    %235 = vmatprep.subr.bf16.mxu0 0
    %236 = vmatpush1.bf16.msra.mxu0 0
    %237 = vmatprep.subr.bf16.mxu0 0
    %238 = vmatpush1.bf16.msra.mxu0 0
    %239 = vmatprep.subr.bf16.mxu0 0
    %240 = vmatpush1.bf16.msra.mxu0 0
    %241 = vmatprep.subr.bf16.mxu0 0
    %242 = vmatpush1.bf16.msra.mxu0 0
    %243 = vmatprep.subr.bf16.mxu0 0
    %244 = vmatpush1.bf16.msra.mxu0 0
    %245 = vmatprep.subr.bf16.mxu0 0
    %246 = vmatpush1.bf16.msra.mxu0 0
    %247 = vmatprep.subr.bf16.mxu0 0
    %248 = vmatpush1.bf16.msra.mxu0 0
    %249 = vmatprep.mubr.bf16.mxu0 0
    %250 = vmatmul.mubr.bf16.gmra.mrb[0].mxu0 %v166
    %v251 = vpop.f32.mrb[0].mxu0
    %v252 = vadd.f32 0.0, %v251
    %v253 = vpop.f32.mrb[0].mxu0
    %v254 = vpop.f32.mrb[0].mxu0
    %v255 = vadd.f32 0.0, %v254
    %v256 = vpop.f32.mrb[0].mxu0
    %257 = vmatprep.mubr.bf16.mxu0 0
    %258 = vmatmul.mubr.bf16.gmra.mrb[0].mxu0 %v169
    %v259 = vpop.f32.mrb[0].mxu0
    %v260 = vadd.f32 0.0, %v259
    %v261 = vpop.f32.mrb[0].mxu0
    %v262 = vpop.f32.mrb[0].mxu0
    %v263 = vadd.f32 0.0, %v262
    %v264 = vpop.f32.mrb[0].mxu0
    %265 = vmatprep.mubr.bf16.mxu0 0
    %266 = vmatmul.mubr.bf16.gmra.mrb[0].mxu0 %v172
    %v267 = vpop.f32.mrb[0].mxu0
    %v268 = vadd.f32 0.0, %v267
    %v269 = vpop.f32.mrb[0].mxu0
    %v270 = vpop.f32.mrb[0].mxu0
    %v271 = vadd.f32 0.0, %v270
    %v272 = vpop.f32.mrb[0].mxu0
    %273 = vmatprep.mubr.bf16.mxu0 0
    %274 = vmatmul.mubr.bf16.gmra.mrb[0].mxu0 %v175
    %v275 = vpop.f32.mrb[0].mxu0
    %v276 = vadd.f32 0.0, %v275
    %v277 = vpop.f32.mrb[0].mxu0
    %v278 = vpop.f32.mrb[0].mxu0
    %v279 = vadd.f32 0.0, %v278
    %v280 = vpop.f32.mrb[0].mxu0
    %281 = vmatprep.mubr.bf16.mxu0 0
    %282 = vmatmul.mubr.bf16.gmra.mrb[0].mxu0 %v178
    %v283 = vpop.f32.mrb[0].mxu0
    %v284 = vadd.f32 0.0, %v283
    %v285 = vpop.f32.mrb[0].mxu0
    %v286 = vpop.f32.mrb[0].mxu0
    %v287 = vadd.f32 0.0, %v286
    %v288 = vpop.f32.mrb[0].mxu0
    %289 = vmatprep.mubr.bf16.mxu0 0
    %290 = vmatmul.mubr.bf16.gmra.mrb[0].mxu0 %v181
    %v291 = vpop.f32.mrb[0].mxu0
    %v292 = vadd.f32 0.0, %v291
    %v293 = vpop.f32.mrb[0].mxu0
    %v294 = vpop.f32.mrb[0].mxu0
    %v295 = vadd.f32 0.0, %v294
    %v296 = vpop.f32.mrb[0].mxu0
    %297 = vmatprep.mubr.bf16.mxu0 0
    %298 = vmatmul.mubr.bf16.gmra.mrb[0].mxu0 %v184
    %v299 = vpop.f32.mrb[0].mxu0
    %v300 = vadd.f32 0.0, %v299
    %v301 = vpop.f32.mrb[0].mxu0
    %v302 = vpop.f32.mrb[0].mxu0
    %v303 = vadd.f32 0.0, %v302
    %v304 = vpop.f32.mrb[0].mxu0
    %305 = vmatprep.mubr.bf16.mxu0 0
    %306 = vmatmul.mubr.bf16.gmra.mrb[0].mxu0 %v187
    %v307 = vpop.f32.mrb[0].mxu0
    %v308 = vadd.f32 0.0, %v307
    %v309 = vpop.f32.mrb[0].mxu0
    %v310 = vpop.f32.mrb[0].mxu0
    %v311 = vadd.f32 0.0, %v310
    %v312 = vpop.f32.mrb[0].mxu0
    %313 = vmatprep.mubr.bf16.mxu0 0
    %314 = vmatmul.mubr.bf16.gmra.mrb[0].mxu0 %v190
    %v315 = vpop.f32.mrb[0].mxu0
    %v316 = vadd.f32 0.0, %v315
    %v317 = vpop.f32.mrb[0].mxu0
    %v318 = vpop.f32.mrb[0].mxu0
    %v319 = vadd.f32 0.0, %v318
    %v320 = vpop.f32.mrb[0].mxu0
    %321 = vmatprep.mubr.bf16.mxu0 0
    %322 = vmatmul.mubr.bf16.gmra.mrb[0].mxu0 %v193
    %v323 = vpop.f32.mrb[0].mxu0
    %v324 = vadd.f32 0.0, %v323
    %v325 = vpop.f32.mrb[0].mxu0
    %v326 = vpop.f32.mrb[0].mxu0
    %v327 = vadd.f32 0.0, %v326
    %v328 = vpop.f32.mrb[0].mxu0
    %329 = vmatprep.mubr.bf16.mxu0 0
    %330 = vmatmul.mubr.bf16.gmra.mrb[0].mxu0 %v196
    %v331 = vpop.f32.mrb[0].mxu0
    %v332 = vadd.f32 0.0, %v331
    %v333 = vpop.f32.mrb[0].mxu0
    %v334 = vpop.f32.mrb[0].mxu0
    %v335 = vadd.f32 0.0, %v334
    %v336 = vpop.f32.mrb[0].mxu0
    %337 = vmatprep.mubr.bf16.mxu0 0
    %338 = vmatmul.mubr.bf16.gmra.mrb[0].mxu0 %v199
    %v339 = vpop.f32.mrb[0].mxu0
    %v340 = vadd.f32 0.0, %v339
    %v341 = vpop.f32.mrb[0].mxu0
    %v342 = vpop.f32.mrb[0].mxu0
    %v343 = vadd.f32 0.0, %v342
    %v344 = vpop.f32.mrb[0].mxu0
    %345 = vmatprep.mubr.bf16.mxu0 0
    %346 = vmatmul.mubr.bf16.gmra.mrb[0].mxu0 %v202
    %v347 = vpop.f32.mrb[0].mxu0
    %v348 = vadd.f32 0.0, %v347
    %v349 = vpop.f32.mrb[0].mxu0
    %v350 = vpop.f32.mrb[0].mxu0
    %v351 = vadd.f32 0.0, %v350
    %v352 = vpop.f32.mrb[0].mxu0
    %353 = vmatprep.mubr.bf16.mxu0 0
    %354 = vmatmul.mubr.bf16.gmra.mrb[0].mxu0 %v205
    %v355 = vpop.f32.mrb[0].mxu0
    %v356 = vadd.f32 0.0, %v355
    %v357 = vpop.f32.mrb[0].mxu0
    %v358 = vpop.f32.mrb[0].mxu0
    %v359 = vadd.f32 0.0, %v358
    %v360 = vpop.f32.mrb[0].mxu0
    %361 = vmatprep.mubr.bf16.mxu0 0
    %362 = vmatmul.mubr.bf16.gmra.mrb[0].mxu0 %v208
    %v363 = vpop.f32.mrb[0].mxu0
    %v364 = vadd.f32 0.0, %v363
    %v365 = vpop.f32.mrb[0].mxu0
    %v366 = vpop.f32.mrb[0].mxu0
    %v367 = vadd.f32 0.0, %v366
    %v368 = vpop.f32.mrb[0].mxu0
    %369 = vmatprep.mubr.bf16.mxu0 0
    %370 = vmatmul.mubr.bf16.gmra.mrb[0].mxu0 %v211
    %v371 = vpop.f32.mrb[0].mxu0
    %v372 = vadd.f32 0.0, %v371
    %v373 = vpop.f32.mrb[0].mxu0
    %v374 = vpop.f32.mrb[0].mxu0
    %v375 = vadd.f32 0.0, %v374
    %v376 = vpop.f32.mrb[0].mxu0
    %377 = vdwg.mxu0
    %vm378 = vcmask 785408
    %v379 = vsel %vm378, %v252, 0.0
    %v380 = vsel %vm378, %v255, 0.0
    %v381 = vadd.f32 %v379, %v380
    %v382 = vsel %vm378, %v260, 0.0
    %v383 = vadd.f32 %v381, %v382
    %v384 = vsel %vm378, %v263, 0.0
    %v385 = vadd.f32 %v383, %v384
    %v386 = vsel %vm378, %v268, 0.0
    %v387 = vadd.f32 %v385, %v386
    %v388 = vsel %vm378, %v271, 0.0
    %v389 = vadd.f32 %v387, %v388
    %v390 = vsel %vm378, %v276, 0.0
    %v391 = vadd.f32 %v389, %v390
    %v392 = vsel %vm378, %v279, 0.0
    %v393 = vadd.f32 %v391, %v392
    %v394 = vsel %vm378, %v284, 0.0
    %v395 = vadd.f32 %v393, %v394
    %v396 = vsel %vm378, %v287, 0.0
    %v397 = vadd.f32 %v395, %v396
    %v398 = vsel %vm378, %v292, 0.0
    %v399 = vadd.f32 %v397, %v398
    %v400 = vsel %vm378, %v295, 0.0
    %v401 = vadd.f32 %v399, %v400
    %v402 = vsel %vm378, %v300, 0.0
    %v403 = vadd.f32 %v401, %v402
    %v404 = vsel %vm378, %v303, 0.0
    %v405 = vadd.f32 %v403, %v404
    %v406 = vsel %vm378, %v308, 0.0
    %v407 = vadd.f32 %v405, %v406
    %v408 = vsel %vm378, %v311, 0.0
    %v409 = vadd.f32 %v407, %v408
    %v410 = vsel %vm378, %v316, 0.0
    %v411 = vadd.f32 %v409, %v410
    %v412 = vsel %vm378, %v319, 0.0
    %v413 = vadd.f32 %v411, %v412
    %v414 = vsel %vm378, %v324, 0.0
    %v415 = vadd.f32 %v413, %v414
    %v416 = vsel %vm378, %v327, 0.0
    %v417 = vadd.f32 %v415, %v416
    %v418 = vsel %vm378, %v332, 0.0
    %v419 = vadd.f32 %v417, %v418
    %v420 = vsel %vm378, %v335, 0.0
    %v421 = vadd.f32 %v419, %v420
    %v422 = vsel %vm378, %v340, 0.0
    %v423 = vadd.f32 %v421, %v422
    %v424 = vsel %vm378, %v343, 0.0
    %v425 = vadd.f32 %v423, %v424
    %v426 = vsel %vm378, %v348, 0.0
    %v427 = vadd.f32 %v425, %v426
    %v428 = vsel %vm378, %v351, 0.0
    %v429 = vadd.f32 %v427, %v428
    %v430 = vsel %vm378, %v356, 0.0
    %v431 = vadd.f32 %v429, %v430
    %v432 = vsel %vm378, %v359, 0.0
    %v433 = vadd.f32 %v431, %v432
    %v434 = vsel %vm378, %v364, 0.0
    %v435 = vadd.f32 %v433, %v434
    %v436 = vsel %vm378, %v367, 0.0
    %v437 = vadd.f32 %v435, %v436
    %v438 = vsel %vm378, %v372, 0.0
    %v439 = vadd.f32 %v437, %v438
    %v440 = vsel %vm378, %v375, 0.0
    %v441 = vadd.f32 %v439, %v440
    %v442 = vrot.slane %v441, 4
    %v443 = vadd.f32 %v441, %v442
    %v444 = vrot.slane %v443, 2
    %v445 = vadd.f32 %v443, %v444
    %v446 = vrot.slane %v445, 1
    %v447 = vadd.f32 %v445, %v446
    %v448 = vrcp.pop 256.0
    %v449 = vmul.f32 %v447, %v448
    %v450 = vsub.f32 %v252, %v449
    %v451 = vsub.f32 %v255, %v449
    %v452 = vsub.f32 %v260, %v449
    %v453 = vsub.f32 %v263, %v449
    %v454 = vsub.f32 %v268, %v449
    %v455 = vsub.f32 %v271, %v449
    %v456 = vsub.f32 %v276, %v449
    %v457 = vsub.f32 %v279, %v449
    %v458 = vsub.f32 %v284, %v449
    %v459 = vsub.f32 %v287, %v449
    %v460 = vsub.f32 %v292, %v449
    %v461 = vsub.f32 %v295, %v449
    %v462 = vsub.f32 %v300, %v449
    %v463 = vsub.f32 %v303, %v449
    %v464 = vsub.f32 %v308, %v449
    %v465 = vsub.f32 %v311, %v449
    %v466 = vsub.f32 %v316, %v449
    %v467 = vsub.f32 %v319, %v449
    %v468 = vsub.f32 %v324, %v449
    %v469 = vsub.f32 %v327, %v449
    %v470 = vsub.f32 %v332, %v449
    %v471 = vsub.f32 %v335, %v449
    %v472 = vsub.f32 %v340, %v449
    %v473 = vsub.f32 %v343, %v449
    %v474 = vsub.f32 %v348, %v449
    %v475 = vsub.f32 %v351, %v449
    %v476 = vsub.f32 %v356, %v449
    %v477 = vsub.f32 %v359, %v449
    %v478 = vsub.f32 %v364, %v449
    %v479 = vsub.f32 %v367, %v449
    %v480 = vsub.f32 %v372, %v449
    %v481 = vsub.f32 %v375, %v449
    %v482 = vmul.f32 %v450, %v450
    %v483 = vmul.f32 %v451, %v451
    %v484 = vmul.f32 %v452, %v452
    %v485 = vmul.f32 %v453, %v453
    %v486 = vmul.f32 %v454, %v454
    %v487 = vmul.f32 %v455, %v455
    %v488 = vmul.f32 %v456, %v456
    %v489 = vmul.f32 %v457, %v457
    %v490 = vmul.f32 %v458, %v458
    %v491 = vmul.f32 %v459, %v459
    %v492 = vmul.f32 %v460, %v460
    %v493 = vmul.f32 %v461, %v461
    %v494 = vmul.f32 %v462, %v462
    %v495 = vmul.f32 %v463, %v463
    %v496 = vmul.f32 %v464, %v464
    %v497 = vmul.f32 %v465, %v465
    %v498 = vmul.f32 %v466, %v466
    %v499 = vmul.f32 %v467, %v467
    %v500 = vmul.f32 %v468, %v468
    %v501 = vmul.f32 %v469, %v469
    %v502 = vmul.f32 %v470, %v470
    %v503 = vmul.f32 %v471, %v471
    %v504 = vmul.f32 %v472, %v472
    %v505 = vmul.f32 %v473, %v473
    %v506 = vmul.f32 %v474, %v474
    %v507 = vmul.f32 %v475, %v475
    %v508 = vmul.f32 %v476, %v476
    %v509 = vmul.f32 %v477, %v477
    %v510 = vmul.f32 %v478, %v478
    %v511 = vmul.f32 %v479, %v479
    %v512 = vmul.f32 %v480, %v480
    %v513 = vmul.f32 %v481, %v481
    %v514 = vsel %vm378, %v482, 0.0
    %v515 = vsel %vm378, %v483, 0.0
    %v516 = vadd.f32 %v514, %v515
    %v517 = vsel %vm378, %v484, 0.0
    %v518 = vadd.f32 %v516, %v517
    %v519 = vsel %vm378, %v485, 0.0
    %v520 = vadd.f32 %v518, %v519
    %v521 = vsel %vm378, %v486, 0.0
    %v522 = vadd.f32 %v520, %v521
    %v523 = vsel %vm378, %v487, 0.0
    %v524 = vadd.f32 %v522, %v523
    %v525 = vsel %vm378, %v488, 0.0
    %v526 = vadd.f32 %v524, %v525
    %v527 = vsel %vm378, %v489, 0.0
    %v528 = vadd.f32 %v526, %v527
    %v529 = vsel %vm378, %v490, 0.0
    %v530 = vadd.f32 %v528, %v529
    %v531 = vsel %vm378, %v491, 0.0
    %v532 = vadd.f32 %v530, %v531
    %v533 = vsel %vm378, %v492, 0.0
    %v534 = vadd.f32 %v532, %v533
    %v535 = vsel %vm378, %v493, 0.0
    %v536 = vadd.f32 %v534, %v535
    %v537 = vsel %vm378, %v494, 0.0
    %v538 = vadd.f32 %v536, %v537
    %v539 = vsel %vm378, %v495, 0.0
    %v540 = vadd.f32 %v538, %v539
    %v541 = vsel %vm378, %v496, 0.0
    %v542 = vadd.f32 %v540, %v541
    %v543 = vsel %vm378, %v497, 0.0
    %v544 = vadd.f32 %v542, %v543
    %v545 = vsel %vm378, %v498, 0.0
    %v546 = vadd.f32 %v544, %v545
    %v547 = vsel %vm378, %v499, 0.0
    %v548 = vadd.f32 %v546, %v547
    %v549 = vsel %vm378, %v500, 0.0
    %v550 = vadd.f32 %v548, %v549
    %v551 = vsel %vm378, %v501, 0.0
    %v552 = vadd.f32 %v550, %v551
    %v553 = vsel %vm378, %v502, 0.0
    %v554 = vadd.f32 %v552, %v553
    %v555 = vsel %vm378, %v503, 0.0
    %v556 = vadd.f32 %v554, %v555
    %v557 = vsel %vm378, %v504, 0.0
    %v558 = vadd.f32 %v556, %v557
    %v559 = vsel %vm378, %v505, 0.0
    %v560 = vadd.f32 %v558, %v559
    %v561 = vsel %vm378, %v506, 0.0
    %v562 = vadd.f32 %v560, %v561
    %v563 = vsel %vm378, %v507, 0.0
    %v564 = vadd.f32 %v562, %v563
    %v565 = vsel %vm378, %v508, 0.0
    %v566 = vadd.f32 %v564, %v565
    %v567 = vsel %vm378, %v509, 0.0
    %v568 = vadd.f32 %v566, %v567
    %v569 = vsel %vm378, %v510, 0.0
    %v570 = vadd.f32 %v568, %v569
    %v571 = vsel %vm378, %v511, 0.0
    %v572 = vadd.f32 %v570, %v571
    %v573 = vsel %vm378, %v512, 0.0
    %v574 = vadd.f32 %v572, %v573
    %v575 = vsel %vm378, %v513, 0.0
    %v576 = vadd.f32 %v574, %v575
    %v577 = vrot.slane %v576, 4
    %v578 = vadd.f32 %v576, %v577
    %v579 = vrot.slane %v578, 2
    %v580 = vadd.f32 %v578, %v579
    %v581 = vrot.slane %v580, 1
    %v582 = vadd.f32 %v580, %v581
    %v583 = vmul.f32 %v582, %v448
    %v584 = vadd.f32 %v583, 1e-05
    %v585 = vrsqrt.pop %v584
    %v586 = vmul.f32 %v450, %v585
    %v587 = vmul.f32 %v451, %v585
    %v588 = vmul.f32 %v452, %v585
    %v589 = vmul.f32 %v453, %v585
    %v590 = vmul.f32 %v454, %v585
    %v591 = vmul.f32 %v455, %v585
    %v592 = vmul.f32 %v456, %v585
    %v593 = vmul.f32 %v457, %v585
    %v594 = vmul.f32 %v458, %v585
    %v595 = vmul.f32 %v459, %v585
    %v596 = vmul.f32 %v460, %v585
    %v597 = vmul.f32 %v461, %v585
    %v598 = vmul.f32 %v462, %v585
    %v599 = vmul.f32 %v463, %v585
    %v600 = vmul.f32 %v464, %v585
    %v601 = vmul.f32 %v465, %v585
    %v602 = vmul.f32 %v466, %v585
    %v603 = vmul.f32 %v467, %v585
    %v604 = vmul.f32 %v468, %v585
    %v605 = vmul.f32 %v469, %v585
    %v606 = vmul.f32 %v470, %v585
    %v607 = vmul.f32 %v471, %v585
    %v608 = vmul.f32 %v472, %v585
    %v609 = vmul.f32 %v473, %v585
    %v610 = vmul.f32 %v474, %v585
    %v611 = vmul.f32 %v475, %v585
    %v612 = vmul.f32 %v476, %v585
    %v613 = vmul.f32 %v477, %v585
    %v614 = vmul.f32 %v478, %v585
    %v615 = vmul.f32 %v479, %v585
    %v616 = vmul.f32 %v480, %v585
    %v617 = vmul.f32 %v481, %v585
    %v618 = vmax.f32 %v586, 0.0
    %v619 = vmax.f32 %v587, 0.0
    %v620 = vmax.f32 %v588, 0.0
    %v621 = vmax.f32 %v589, 0.0
    %v622 = vmax.f32 %v590, 0.0
    %v623 = vmax.f32 %v591, 0.0
    %v624 = vmax.f32 %v592, 0.0
    %v625 = vmax.f32 %v593, 0.0
    %v626 = vmax.f32 %v594, 0.0
    %v627 = vmax.f32 %v595, 0.0
    %v628 = vmax.f32 %v596, 0.0
    %v629 = vmax.f32 %v597, 0.0
    %v630 = vmax.f32 %v598, 0.0
    %v631 = vmax.f32 %v599, 0.0
    %v632 = vmax.f32 %v600, 0.0
    %v633 = vmax.f32 %v601, 0.0
    %v634 = vmax.f32 %v602, 0.0
    %v635 = vmax.f32 %v603, 0.0
    %v636 = vmax.f32 %v604, 0.0
    %v637 = vmax.f32 %v605, 0.0
    %v638 = vmax.f32 %v606, 0.0
    %v639 = vmax.f32 %v607, 0.0
    %v640 = vmax.f32 %v608, 0.0
    %v641 = vmax.f32 %v609, 0.0
    %v642 = vmax.f32 %v610, 0.0
    %v643 = vmax.f32 %v611, 0.0
    %v644 = vmax.f32 %v612, 0.0
    %v645 = vmax.f32 %v613, 0.0
    %v646 = vmax.f32 %v614, 0.0
    %v647 = vmax.f32 %v615, 0.0
    %v648 = vmax.f32 %v616, 0.0
    %v649 = vmax.f32 %v617, 0.0
    %682 = vrot.lane.b32.xlu0 %v618, 104
    %v683 = vpop.permute.xlu0 %682
    %684 = vrot.lane.b32.xlu0 %v619, 104
    %v685 = vpop.permute.xlu0 %684
    %686 = vrot.lane.b32.xlu0 %v620, 104
    %v687 = vpop.permute.xlu0 %686
    %688 = vrot.lane.b32.xlu0 %v621, 104
    %v689 = vpop.permute.xlu0 %688
    %690 = vrot.lane.b32.xlu0 %v622, 104
    %v691 = vpop.permute.xlu0 %690
    %692 = vrot.lane.b32.xlu0 %v623, 104
    %v693 = vpop.permute.xlu0 %692
    %694 = vrot.lane.b32.xlu0 %v624, 104
    %v695 = vpop.permute.xlu0 %694
    %696 = vrot.lane.b32.xlu0 %v625, 104
    %v697 = vpop.permute.xlu0 %696
    %698 = vrot.lane.b32.xlu0 %v626, 104
    %v699 = vpop.permute.xlu0 %698
    %700 = vrot.lane.b32.xlu0 %v627, 104
    %v701 = vpop.permute.xlu0 %700
    %702 = vrot.lane.b32.xlu0 %v628, 104
    %v703 = vpop.permute.xlu0 %702
    %704 = vrot.lane.b32.xlu0 %v629, 104
    %v705 = vpop.permute.xlu0 %704
    %706 = vrot.lane.b32.xlu0 %v630, 104
    %v707 = vpop.permute.xlu0 %706
    %708 = vrot.lane.b32.xlu0 %v631, 104
    %v709 = vpop.permute.xlu0 %708
    %710 = vrot.lane.b32.xlu0 %v632, 104
    %v711 = vpop.permute.xlu0 %710
    %712 = vrot.lane.b32.xlu0 %v633, 104
    %v713 = vpop.permute.xlu0 %712
    %714 = vrot.lane.b32.xlu0 %v634, 104
    %v715 = vpop.permute.xlu0 %714
    %716 = vrot.lane.b32.xlu0 %v635, 104
    %v717 = vpop.permute.xlu0 %716
    %718 = vrot.lane.b32.xlu0 %v636, 104
    %v719 = vpop.permute.xlu0 %718
    %720 = vrot.lane.b32.xlu0 %v637, 104
    %v721 = vpop.permute.xlu0 %720
    %722 = vrot.lane.b32.xlu0 %v638, 104
    %v723 = vpop.permute.xlu0 %722
    %724 = vrot.lane.b32.xlu0 %v639, 104
    %v725 = vpop.permute.xlu0 %724
    %726 = vrot.lane.b32.xlu0 %v640, 104
    %v727 = vpop.permute.xlu0 %726
    %728 = vrot.lane.b32.xlu0 %v641, 104
    %v729 = vpop.permute.xlu0 %728
    %730 = vrot.lane.b32.xlu0 %v642, 104
    %v731 = vpop.permute.xlu0 %730
    %732 = vrot.lane.b32.xlu0 %v643, 104
    %v733 = vpop.permute.xlu0 %732
    %734 = vrot.lane.b32.xlu0 %v644, 104
    %v735 = vpop.permute.xlu0 %734
    %736 = vrot.lane.b32.xlu0 %v645, 104
    %v737 = vpop.permute.xlu0 %736
    %738 = vrot.lane.b32.xlu0 %v646, 104
    %v739 = vpop.permute.xlu0 %738
    %740 = vrot.lane.b32.xlu0 %v647, 104
    %v741 = vpop.permute.xlu0 %740
    %742 = vrot.lane.b32.xlu0 %v648, 104
    %v743 = vpop.permute.xlu0 %742
    %744 = vrot.lane.b32.xlu0 %v649, 104
    %v745 = vpop.permute.xlu0 %744
    %778 = vrot.lane.b32.xlu0 %v618, 80
    %v779 = vpop.permute.xlu0 %778
    %780 = vrot.lane.b32.xlu0 %v619, 80
    %v781 = vpop.permute.xlu0 %780
    %782 = vrot.lane.b32.xlu0 %v620, 80
    %v783 = vpop.permute.xlu0 %782
    %784 = vrot.lane.b32.xlu0 %v621, 80
    %v785 = vpop.permute.xlu0 %784
    %786 = vrot.lane.b32.xlu0 %v622, 80
    %v787 = vpop.permute.xlu0 %786
    %788 = vrot.lane.b32.xlu0 %v623, 80
    %v789 = vpop.permute.xlu0 %788
    %790 = vrot.lane.b32.xlu0 %v624, 80
    %v791 = vpop.permute.xlu0 %790
    %792 = vrot.lane.b32.xlu0 %v625, 80
    %v793 = vpop.permute.xlu0 %792
    %794 = vrot.lane.b32.xlu0 %v626, 80
    %v795 = vpop.permute.xlu0 %794
    %796 = vrot.lane.b32.xlu0 %v627, 80
    %v797 = vpop.permute.xlu0 %796
    %798 = vrot.lane.b32.xlu0 %v628, 80
    %v799 = vpop.permute.xlu0 %798
    %800 = vrot.lane.b32.xlu0 %v629, 80
    %v801 = vpop.permute.xlu0 %800
    %802 = vrot.lane.b32.xlu0 %v630, 80
    %v803 = vpop.permute.xlu0 %802
    %804 = vrot.lane.b32.xlu0 %v631, 80
    %v805 = vpop.permute.xlu0 %804
    %806 = vrot.lane.b32.xlu0 %v632, 80
    %v807 = vpop.permute.xlu0 %806
    %808 = vrot.lane.b32.xlu0 %v633, 80
    %v809 = vpop.permute.xlu0 %808
    %810 = vrot.lane.b32.xlu0 %v634, 80
    %v811 = vpop.permute.xlu0 %810
    %812 = vrot.lane.b32.xlu0 %v635, 80
    %v813 = vpop.permute.xlu0 %812
    %814 = vrot.lane.b32.xlu0 %v636, 80
    %v815 = vpop.permute.xlu0 %814
    %816 = vrot.lane.b32.xlu0 %v637, 80
    %v817 = vpop.permute.xlu0 %816
    %818 = vrot.lane.b32.xlu0 %v638, 80
    %v819 = vpop.permute.xlu0 %818
    %820 = vrot.lane.b32.xlu0 %v639, 80
    %v821 = vpop.permute.xlu0 %820
    %822 = vrot.lane.b32.xlu0 %v640, 80
    %v823 = vpop.permute.xlu0 %822
    %824 = vrot.lane.b32.xlu0 %v641, 80
    %v825 = vpop.permute.xlu0 %824
    %826 = vrot.lane.b32.xlu0 %v642, 80
    %v827 = vpop.permute.xlu0 %826
    %828 = vrot.lane.b32.xlu0 %v643, 80
    %v829 = vpop.permute.xlu0 %828
    %830 = vrot.lane.b32.xlu0 %v644, 80
    %v831 = vpop.permute.xlu0 %830
    %832 = vrot.lane.b32.xlu0 %v645, 80
    %v833 = vpop.permute.xlu0 %832
    %834 = vrot.lane.b32.xlu0 %v646, 80
    %v835 = vpop.permute.xlu0 %834
    %836 = vrot.lane.b32.xlu0 %v647, 80
    %v837 = vpop.permute.xlu0 %836
    %838 = vrot.lane.b32.xlu0 %v648, 80
    %v839 = vpop.permute.xlu0 %838
    %840 = vrot.lane.b32.xlu0 %v649, 80
    %v841 = vpop.permute.xlu0 %840
    %874 = vrot.lane.b32.xlu0 %v618, 56
    %v875 = vpop.permute.xlu0 %874
    %876 = vrot.lane.b32.xlu0 %v619, 56
    %v877 = vpop.permute.xlu0 %876
    %878 = vrot.lane.b32.xlu0 %v620, 56
    %v879 = vpop.permute.xlu0 %878
    %880 = vrot.lane.b32.xlu0 %v621, 56
    %v881 = vpop.permute.xlu0 %880
    %882 = vrot.lane.b32.xlu0 %v622, 56
    %v883 = vpop.permute.xlu0 %882
    %884 = vrot.lane.b32.xlu0 %v623, 56
    %v885 = vpop.permute.xlu0 %884
    %886 = vrot.lane.b32.xlu0 %v624, 56
    %v887 = vpop.permute.xlu0 %886
    %888 = vrot.lane.b32.xlu0 %v625, 56
    %v889 = vpop.permute.xlu0 %888
    %890 = vrot.lane.b32.xlu0 %v626, 56
    %v891 = vpop.permute.xlu0 %890
    %892 = vrot.lane.b32.xlu0 %v627, 56
    %v893 = vpop.permute.xlu0 %892
    %894 = vrot.lane.b32.xlu0 %v628, 56
    %v895 = vpop.permute.xlu0 %894
    %896 = vrot.lane.b32.xlu0 %v629, 56
    %v897 = vpop.permute.xlu0 %896
    %898 = vrot.lane.b32.xlu0 %v630, 56
    %v899 = vpop.permute.xlu0 %898
    %900 = vrot.lane.b32.xlu0 %v631, 56
    %v901 = vpop.permute.xlu0 %900
    %902 = vrot.lane.b32.xlu0 %v632, 56
    %v903 = vpop.permute.xlu0 %902
    %904 = vrot.lane.b32.xlu0 %v633, 56
    %v905 = vpop.permute.xlu0 %904
    %906 = vrot.lane.b32.xlu0 %v634, 56
    %v907 = vpop.permute.xlu0 %906
    %908 = vrot.lane.b32.xlu0 %v635, 56
    %v909 = vpop.permute.xlu0 %908
    %910 = vrot.lane.b32.xlu0 %v636, 56
    %v911 = vpop.permute.xlu0 %910
    %912 = vrot.lane.b32.xlu0 %v637, 56
    %v913 = vpop.permute.xlu0 %912
    %914 = vrot.lane.b32.xlu0 %v638, 56
    %v915 = vpop.permute.xlu0 %914
    %916 = vrot.lane.b32.xlu0 %v639, 56
    %v917 = vpop.permute.xlu0 %916
    %918 = vrot.lane.b32.xlu0 %v640, 56
    %v919 = vpop.permute.xlu0 %918
    %920 = vrot.lane.b32.xlu0 %v641, 56
    %v921 = vpop.permute.xlu0 %920
    %922 = vrot.lane.b32.xlu0 %v642, 56
    %v923 = vpop.permute.xlu0 %922
    %924 = vrot.lane.b32.xlu0 %v643, 56
    %v925 = vpop.permute.xlu0 %924
    %926 = vrot.lane.b32.xlu0 %v644, 56
    %v927 = vpop.permute.xlu0 %926
    %928 = vrot.lane.b32.xlu0 %v645, 56
    %v929 = vpop.permute.xlu0 %928
    %930 = vrot.lane.b32.xlu0 %v646, 56
    %v931 = vpop.permute.xlu0 %930
    %932 = vrot.lane.b32.xlu0 %v647, 56
    %v933 = vpop.permute.xlu0 %932
    %934 = vrot.lane.b32.xlu0 %v648, 56
    %v935 = vpop.permute.xlu0 %934
    %936 = vrot.lane.b32.xlu0 %v649, 56
    %v937 = vpop.permute.xlu0 %936
    %v970 = vmul.f32 %v618, 0.35355338
    %v971 = vmul.f32 %v619, 0.35355338
    %v972 = vmul.f32 %v620, 0.35355338
    %v973 = vmul.f32 %v621, 0.35355338
    %v974 = vmul.f32 %v622, 0.35355338
    %v975 = vmul.f32 %v623, 0.35355338
    %v976 = vmul.f32 %v624, 0.35355338
    %v977 = vmul.f32 %v625, 0.35355338
    %v978 = vmul.f32 %v626, 0.35355338
    %v979 = vmul.f32 %v627, 0.35355338
    %v980 = vmul.f32 %v628, 0.35355338
    %v981 = vmul.f32 %v629, 0.35355338
    %v982 = vmul.f32 %v630, 0.35355338
    %v983 = vmul.f32 %v631, 0.35355338
    %v984 = vmul.f32 %v632, 0.35355338
    %v985 = vmul.f32 %v633, 0.35355338
    %v986 = vmul.f32 %v634, 0.35355338
    %v987 = vmul.f32 %v635, 0.35355338
    %v988 = vmul.f32 %v636, 0.35355338
    %v989 = vmul.f32 %v637, 0.35355338
    %v990 = vmul.f32 %v638, 0.35355338
    %v991 = vmul.f32 %v639, 0.35355338
    %v992 = vmul.f32 %v640, 0.35355338
    %v993 = vmul.f32 %v641, 0.35355338
    %v994 = vmul.f32 %v642, 0.35355338
    %v995 = vmul.f32 %v643, 0.35355338
    %v996 = vmul.f32 %v644, 0.35355338
    %v997 = vmul.f32 %v645, 0.35355338
    %v998 = vmul.f32 %v646, 0.35355338
    %v999 = vmul.f32 %v647, 0.35355338
    %v1000 = vmul.f32 %v648, 0.35355338
    %v1001 = vmul.f32 %v649, 0.35355338
    %v1002 = vmul.f32 %v683, 0.35355338
    %v1003 = vmul.f32 %v685, 0.35355338
    %v1004 = vmul.f32 %v687, 0.35355338
    %v1005 = vmul.f32 %v689, 0.35355338
    %v1006 = vmul.f32 %v691, 0.35355338
    %v1007 = vmul.f32 %v693, 0.35355338
    %v1008 = vmul.f32 %v695, 0.35355338
    %v1009 = vmul.f32 %v697, 0.35355338
    %v1010 = vmul.f32 %v699, 0.35355338
    %v1011 = vmul.f32 %v701, 0.35355338
    %v1012 = vmul.f32 %v703, 0.35355338
    %v1013 = vmul.f32 %v705, 0.35355338
    %v1014 = vmul.f32 %v707, 0.35355338
    %v1015 = vmul.f32 %v709, 0.35355338
    %v1016 = vmul.f32 %v711, 0.35355338
    %v1017 = vmul.f32 %v713, 0.35355338
    %v1018 = vmul.f32 %v715, 0.35355338
    %v1019 = vmul.f32 %v717, 0.35355338
    %v1020 = vmul.f32 %v719, 0.35355338
    %v1021 = vmul.f32 %v721, 0.35355338
    %v1022 = vmul.f32 %v723, 0.35355338
    %v1023 = vmul.f32 %v725, 0.35355338
    %v1024 = vmul.f32 %v727, 0.35355338
    %v1025 = vmul.f32 %v729, 0.35355338
    %v1026 = vmul.f32 %v731, 0.35355338
    %v1027 = vmul.f32 %v733, 0.35355338
    %v1028 = vmul.f32 %v735, 0.35355338
    %v1029 = vmul.f32 %v737, 0.35355338
    %v1030 = vmul.f32 %v739, 0.35355338
    %v1031 = vmul.f32 %v741, 0.35355338
    %v1032 = vmul.f32 %v743, 0.35355338
    %v1033 = vmul.f32 %v745, 0.35355338
    %v1034 = vmul.f32 %v779, 0.35355338
    %v1035 = vmul.f32 %v781, 0.35355338
    %v1036 = vmul.f32 %v783, 0.35355338
    %v1037 = vmul.f32 %v785, 0.35355338
    %v1038 = vmul.f32 %v787, 0.35355338
    %v1039 = vmul.f32 %v789, 0.35355338
    %v1040 = vmul.f32 %v791, 0.35355338
    %v1041 = vmul.f32 %v793, 0.35355338
    %v1042 = vmul.f32 %v795, 0.35355338
    %v1043 = vmul.f32 %v797, 0.35355338
    %v1044 = vmul.f32 %v799, 0.35355338
    %v1045 = vmul.f32 %v801, 0.35355338
    %v1046 = vmul.f32 %v803, 0.35355338
    %v1047 = vmul.f32 %v805, 0.35355338
    %v1048 = vmul.f32 %v807, 0.35355338
    %v1049 = vmul.f32 %v809, 0.35355338
    %v1050 = vmul.f32 %v811, 0.35355338
    %v1051 = vmul.f32 %v813, 0.35355338
    %v1052 = vmul.f32 %v815, 0.35355338
    %v1053 = vmul.f32 %v817, 0.35355338
    %v1054 = vmul.f32 %v819, 0.35355338
    %v1055 = vmul.f32 %v821, 0.35355338
    %v1056 = vmul.f32 %v823, 0.35355338
    %v1057 = vmul.f32 %v825, 0.35355338
    %v1058 = vmul.f32 %v827, 0.35355338
    %v1059 = vmul.f32 %v829, 0.35355338
    %v1060 = vmul.f32 %v831, 0.35355338
    %v1061 = vmul.f32 %v833, 0.35355338
    %v1062 = vmul.f32 %v835, 0.35355338
    %v1063 = vmul.f32 %v837, 0.35355338
    %v1064 = vmul.f32 %v839, 0.35355338
    %v1065 = vmul.f32 %v841, 0.35355338
    %v1066 = vmul.f32 %v875, 0.35355338
    %v1067 = vmul.f32 %v877, 0.35355338
    %v1068 = vmul.f32 %v879, 0.35355338
    %v1069 = vmul.f32 %v881, 0.35355338
    %v1070 = vmul.f32 %v883, 0.35355338
    %v1071 = vmul.f32 %v885, 0.35355338
    %v1072 = vmul.f32 %v887, 0.35355338
    %v1073 = vmul.f32 %v889, 0.35355338
    %v1074 = vmul.f32 %v891, 0.35355338
    %v1075 = vmul.f32 %v893, 0.35355338
    %v1076 = vmul.f32 %v895, 0.35355338
    %v1077 = vmul.f32 %v897, 0.35355338
    %v1078 = vmul.f32 %v899, 0.35355338
    %v1079 = vmul.f32 %v901, 0.35355338
    %v1080 = vmul.f32 %v903, 0.35355338
    %v1081 = vmul.f32 %v905, 0.35355338
    %v1082 = vmul.f32 %v907, 0.35355338
    %v1083 = vmul.f32 %v909, 0.35355338
    %v1084 = vmul.f32 %v911, 0.35355338
    %v1085 = vmul.f32 %v913, 0.35355338
    %v1086 = vmul.f32 %v915, 0.35355338
    %v1087 = vmul.f32 %v917, 0.35355338
    %v1088 = vmul.f32 %v919, 0.35355338
    %v1089 = vmul.f32 %v921, 0.35355338
    %v1090 = vmul.f32 %v923, 0.35355338
    %v1091 = vmul.f32 %v925, 0.35355338
    %v1092 = vmul.f32 %v927, 0.35355338
    %v1093 = vmul.f32 %v929, 0.35355338
    %v1094 = vmul.f32 %v931, 0.35355338
    %v1095 = vmul.f32 %v933, 0.35355338
    %v1096 = vmul.f32 %v935, 0.35355338
    %v1097 = vmul.f32 %v937, 0.35355338
    %v1098 = vpack.c.bf16 %v971, %v970
    %v1099 = vpack.c.bf16 %v973, %v972
    %v1100 = vpack.c.bf16 %v975, %v974
    %v1101 = vpack.c.bf16 %v977, %v976
    %v1102 = vpack.c.bf16 %v979, %v978
    %v1103 = vpack.c.bf16 %v981, %v980
    %v1104 = vpack.c.bf16 %v983, %v982
    %v1105 = vpack.c.bf16 %v985, %v984
    %v1106 = vpack.c.bf16 %v987, %v986
    %v1107 = vpack.c.bf16 %v989, %v988
    %v1108 = vpack.c.bf16 %v991, %v990
    %v1109 = vpack.c.bf16 %v993, %v992
    %v1110 = vpack.c.bf16 %v995, %v994
    %v1111 = vpack.c.bf16 %v997, %v996
    %v1112 = vpack.c.bf16 %v999, %v998
    %v1113 = vpack.c.bf16 %v1001, %v1000
    %v1114 = vpack.c.bf16 %v1003, %v1002
    %v1115 = vpack.c.bf16 %v1005, %v1004
    %v1116 = vpack.c.bf16 %v1007, %v1006
    %v1117 = vpack.c.bf16 %v1009, %v1008
    %v1118 = vpack.c.bf16 %v1011, %v1010
    %v1119 = vpack.c.bf16 %v1013, %v1012
    %v1120 = vpack.c.bf16 %v1015, %v1014
    %v1121 = vpack.c.bf16 %v1017, %v1016
    %v1122 = vpack.c.bf16 %v1019, %v1018
    %v1123 = vpack.c.bf16 %v1021, %v1020
    %v1124 = vpack.c.bf16 %v1023, %v1022
    %v1125 = vpack.c.bf16 %v1025, %v1024
    %v1126 = vpack.c.bf16 %v1027, %v1026
    %v1127 = vpack.c.bf16 %v1029, %v1028
    %v1128 = vpack.c.bf16 %v1031, %v1030
    %v1129 = vpack.c.bf16 %v1033, %v1032
    %v1130 = vpack.c.bf16 %v1035, %v1034
    %v1131 = vpack.c.bf16 %v1037, %v1036
    %v1132 = vpack.c.bf16 %v1039, %v1038
    %v1133 = vpack.c.bf16 %v1041, %v1040
    %v1134 = vpack.c.bf16 %v1043, %v1042
    %v1135 = vpack.c.bf16 %v1045, %v1044
    %v1136 = vpack.c.bf16 %v1047, %v1046
    %v1137 = vpack.c.bf16 %v1049, %v1048
    %v1138 = vpack.c.bf16 %v1051, %v1050
    %v1139 = vpack.c.bf16 %v1053, %v1052
    %v1140 = vpack.c.bf16 %v1055, %v1054
    %v1141 = vpack.c.bf16 %v1057, %v1056
    %v1142 = vpack.c.bf16 %v1059, %v1058
    %v1143 = vpack.c.bf16 %v1061, %v1060
    %v1144 = vpack.c.bf16 %v1063, %v1062
    %v1145 = vpack.c.bf16 %v1065, %v1064
    %v1146 = vpack.c.bf16 %v1067, %v1066
    %v1147 = vpack.c.bf16 %v1069, %v1068
    %v1148 = vpack.c.bf16 %v1071, %v1070
    %v1149 = vpack.c.bf16 %v1073, %v1072
    %v1150 = vpack.c.bf16 %v1075, %v1074
    %v1151 = vpack.c.bf16 %v1077, %v1076
    %v1152 = vpack.c.bf16 %v1079, %v1078
    %v1153 = vpack.c.bf16 %v1081, %v1080
    %v1154 = vpack.c.bf16 %v1083, %v1082
    %v1155 = vpack.c.bf16 %v1085, %v1084
    %v1156 = vpack.c.bf16 %v1087, %v1086
    %v1157 = vpack.c.bf16 %v1089, %v1088
    %v1158 = vpack.c.bf16 %v1091, %v1090
    %v1159 = vpack.c.bf16 %v1093, %v1092
    %v1160 = vpack.c.bf16 %v1095, %v1094
    %v1161 = vpack.c.bf16 %v1097, %v1096
    %v1162 = vpack.c.bf16 %v619, %v618
    %v1163 = vpack.c.bf16 %v621, %v620
    %v1164 = vpack.c.bf16 %v623, %v622
    %v1165 = vpack.c.bf16 %v625, %v624
    %v1166 = vpack.c.bf16 %v627, %v626
    %v1167 = vpack.c.bf16 %v629, %v628
    %v1168 = vpack.c.bf16 %v631, %v630
    %v1169 = vpack.c.bf16 %v633, %v632
    %v1170 = vpack.c.bf16 %v635, %v634
    %v1171 = vpack.c.bf16 %v637, %v636
    %v1172 = vpack.c.bf16 %v639, %v638
    %v1173 = vpack.c.bf16 %v641, %v640
    %v1174 = vpack.c.bf16 %v643, %v642
    %v1175 = vpack.c.bf16 %v645, %v644
    %v1176 = vpack.c.bf16 %v647, %v646
    %v1177 = vpack.c.bf16 %v649, %v648
    %v1178 = vpack.c.bf16 %v685, %v683
    %v1179 = vpack.c.bf16 %v689, %v687
    %v1180 = vpack.c.bf16 %v693, %v691
    %v1181 = vpack.c.bf16 %v697, %v695
    %v1182 = vpack.c.bf16 %v701, %v699
    %v1183 = vpack.c.bf16 %v705, %v703
    %v1184 = vpack.c.bf16 %v709, %v707
    %v1185 = vpack.c.bf16 %v713, %v711
    %v1186 = vpack.c.bf16 %v717, %v715
    %v1187 = vpack.c.bf16 %v721, %v719
    %v1188 = vpack.c.bf16 %v725, %v723
    %v1189 = vpack.c.bf16 %v729, %v727
    %v1190 = vpack.c.bf16 %v733, %v731
    %v1191 = vpack.c.bf16 %v737, %v735
    %v1192 = vpack.c.bf16 %v741, %v739
    %v1193 = vpack.c.bf16 %v745, %v743
    %v1194 = vpack.c.bf16 %v781, %v779
    %v1195 = vpack.c.bf16 %v785, %v783
    %v1196 = vpack.c.bf16 %v789, %v787
    %v1197 = vpack.c.bf16 %v793, %v791
    %v1198 = vpack.c.bf16 %v797, %v795
    %v1199 = vpack.c.bf16 %v801, %v799
    %v1200 = vpack.c.bf16 %v805, %v803
    %v1201 = vpack.c.bf16 %v809, %v807
    %v1202 = vpack.c.bf16 %v813, %v811
    %v1203 = vpack.c.bf16 %v817, %v815
    %v1204 = vpack.c.bf16 %v821, %v819
    %v1205 = vpack.c.bf16 %v825, %v823
    %v1206 = vpack.c.bf16 %v829, %v827
    %v1207 = vpack.c.bf16 %v833, %v831
    %v1208 = vpack.c.bf16 %v837, %v835
    %v1209 = vpack.c.bf16 %v841, %v839
    %v1210 = vpack.c.bf16 %v877, %v875
    %v1211 = vpack.c.bf16 %v881, %v879
    %v1212 = vpack.c.bf16 %v885, %v883
    %v1213 = vpack.c.bf16 %v889, %v887
    %v1214 = vpack.c.bf16 %v893, %v891
    %v1215 = vpack.c.bf16 %v897, %v895
    %v1216 = vpack.c.bf16 %v901, %v899
    %v1217 = vpack.c.bf16 %v905, %v903
    %v1218 = vpack.c.bf16 %v909, %v907
    %v1219 = vpack.c.bf16 %v913, %v911
    %v1220 = vpack.c.bf16 %v917, %v915
    %v1221 = vpack.c.bf16 %v921, %v919
    %v1222 = vpack.c.bf16 %v925, %v923
    %v1223 = vpack.c.bf16 %v929, %v927
    %v1224 = vpack.c.bf16 %v933, %v931
    %v1225 = vpack.c.bf16 %v937, %v935
    %1227 = vrot.lane.b32.xlu0 %v1162, 120
    %v1228 = vpop.permute.xlu0 %1227
    %vm1229 = vcmask 64512
    %v1231 = vsel %vm1229, %v1098, 0
    %v1234 = vsel %vm1229, %v1228, 0
    %1236 = vmatprep.subr.bf16.mxu0 0
    %1237 = vmatpush1.bf16.xpose.msra.mxu0 %v1234
    %1238 = vmatprep.subr.bf16.mxu0 0
    %1239 = vmatpush1.bf16.xpose.msra.mxu0 0
    %1240 = vmatprep.subr.bf16.mxu0 0
    %1241 = vmatpush1.bf16.xpose.msra.mxu0 0
    %1242 = vmatprep.subr.bf16.mxu0 0
    %1243 = vmatpush1.bf16.xpose.msra.mxu0 0
    %1244 = vmatprep.subr.bf16.mxu0 0
    %1245 = vmatpush1.bf16.xpose.msra.mxu0 0
    %1246 = vmatprep.subr.bf16.mxu0 0
    %1247 = vmatpush1.bf16.xpose.msra.mxu0 0
    %1248 = vmatprep.subr.bf16.mxu0 0
    %1249 = vmatpush1.bf16.xpose.msra.mxu0 0
    %1250 = vmatprep.subr.bf16.mxu0 0
    %1251 = vmatpush1.bf16.xpose.msra.mxu0 0
    %1252 = vmatprep.subr.bf16.mxu0 0
    %1253 = vmatpush1.bf16.xpose.msra.mxu0 0
    %1254 = vmatprep.subr.bf16.mxu0 0
    %1255 = vmatpush1.bf16.xpose.msra.mxu0 0
    %1256 = vmatprep.subr.bf16.mxu0 0
    %1257 = vmatpush1.bf16.xpose.msra.mxu0 0
    %1258 = vmatprep.subr.bf16.mxu0 0
    %1259 = vmatpush1.bf16.xpose.msra.mxu0 0
    %1260 = vmatprep.subr.bf16.mxu0 0
    %1261 = vmatpush1.bf16.xpose.msra.mxu0 0
    %1262 = vmatprep.subr.bf16.mxu0 0
    %1263 = vmatpush1.bf16.xpose.msra.mxu0 0
    %1264 = vmatprep.subr.bf16.mxu0 0
    %1265 = vmatpush1.bf16.xpose.msra.mxu0 0
    %1266 = vmatprep.subr.bf16.mxu0 0
    %1267 = vmatpush1.bf16.xpose.msra.mxu0 0
    %1268 = vmatprep.mubr.bf16.mxu0 0
    %1269 = vmatmul.mubr.bf16.gmra.mrb[0].mxu0 %v1231
    %v1270 = vpop.f32.mrb[0].mxu0
    %v1271 = vadd.f32 0.0, %v1270
    %v1272 = vpop.f32.mrb[0].mxu0
    %v1273 = vpop.f32.mrb[0].mxu0
    %v1274 = vadd.f32 0.0, %v1273
    %v1275 = vpop.f32.mrb[0].mxu0
    %1276 = vdwg.mxu0
    %1278 = vrot.lane.b32.xlu0 %v1163, 120
    %v1279 = vpop.permute.xlu0 %1278
    %v1281 = vsel %vm1229, %v1099, 0
    %v1284 = vsel %vm1229, %v1279, 0
    %1286 = vmatprep.subr.bf16.mxu0 0
    %1287 = vmatpush1.bf16.xpose.msra.mxu0 %v1284
    %1288 = vmatprep.subr.bf16.mxu0 0
    %1289 = vmatpush1.bf16.xpose.msra.mxu0 0
    %1290 = vmatprep.subr.bf16.mxu0 0
    %1291 = vmatpush1.bf16.xpose.msra.mxu0 0
    %1292 = vmatprep.subr.bf16.mxu0 0
    %1293 = vmatpush1.bf16.xpose.msra.mxu0 0
    %1294 = vmatprep.subr.bf16.mxu0 0
    %1295 = vmatpush1.bf16.xpose.msra.mxu0 0
    %1296 = vmatprep.subr.bf16.mxu0 0
    %1297 = vmatpush1.bf16.xpose.msra.mxu0 0
    %1298 = vmatprep.subr.bf16.mxu0 0
    %1299 = vmatpush1.bf16.xpose.msra.mxu0 0
    %1300 = vmatprep.subr.bf16.mxu0 0
    %1301 = vmatpush1.bf16.xpose.msra.mxu0 0
    %1302 = vmatprep.subr.bf16.mxu0 0
    %1303 = vmatpush1.bf16.xpose.msra.mxu0 0
    %1304 = vmatprep.subr.bf16.mxu0 0
    %1305 = vmatpush1.bf16.xpose.msra.mxu0 0
    %1306 = vmatprep.subr.bf16.mxu0 0
    %1307 = vmatpush1.bf16.xpose.msra.mxu0 0
    %1308 = vmatprep.subr.bf16.mxu0 0
    %1309 = vmatpush1.bf16.xpose.msra.mxu0 0
    %1310 = vmatprep.subr.bf16.mxu0 0
    %1311 = vmatpush1.bf16.xpose.msra.mxu0 0
    %1312 = vmatprep.subr.bf16.mxu0 0
    %1313 = vmatpush1.bf16.xpose.msra.mxu0 0
    %1314 = vmatprep.subr.bf16.mxu0 0
    %1315 = vmatpush1.bf16.xpose.msra.mxu0 0
    %1316 = vmatprep.subr.bf16.mxu0 0
    %1317 = vmatpush1.bf16.xpose.msra.mxu0 0
    %1318 = vmatprep.mubr.bf16.mxu0 0
    %1319 = vmatmul.mubr.bf16.gmra.mrb[0].mxu0 %v1281
    %v1320 = vpop.f32.mrb[0].mxu0
    %v1321 = vadd.f32 0.0, %v1320
    %v1322 = vpop.f32.mrb[0].mxu0
    %v1323 = vpop.f32.mrb[0].mxu0
    %v1324 = vadd.f32 0.0, %v1323
    %v1325 = vpop.f32.mrb[0].mxu0
    %1326 = vdwg.mxu0
    %1328 = vrot.lane.b32.xlu0 %v1164, 120
    %v1329 = vpop.permute.xlu0 %1328
    %v1331 = vsel %vm1229, %v1100, 0
    %v1334 = vsel %vm1229, %v1329, 0
    %1336 = vmatprep.subr.bf16.mxu0 0
    %1337 = vmatpush1.bf16.xpose.msra.mxu0 %v1334
    %1338 = vmatprep.subr.bf16.mxu0 0
    %1339 = vmatpush1.bf16.xpose.msra.mxu0 0
    %1340 = vmatprep.subr.bf16.mxu0 0
    %1341 = vmatpush1.bf16.xpose.msra.mxu0 0
    %1342 = vmatprep.subr.bf16.mxu0 0
    %1343 = vmatpush1.bf16.xpose.msra.mxu0 0
    %1344 = vmatprep.subr.bf16.mxu0 0
    %1345 = vmatpush1.bf16.xpose.msra.mxu0 0
    %1346 = vmatprep.subr.bf16.mxu0 0
    %1347 = vmatpush1.bf16.xpose.msra.mxu0 0
    %1348 = vmatprep.subr.bf16.mxu0 0
    %1349 = vmatpush1.bf16.xpose.msra.mxu0 0
    %1350 = vmatprep.subr.bf16.mxu0 0
    %1351 = vmatpush1.bf16.xpose.msra.mxu0 0
    %1352 = vmatprep.subr.bf16.mxu0 0
    %1353 = vmatpush1.bf16.xpose.msra.mxu0 0
    %1354 = vmatprep.subr.bf16.mxu0 0
    %1355 = vmatpush1.bf16.xpose.msra.mxu0 0
    %1356 = vmatprep.subr.bf16.mxu0 0
    %1357 = vmatpush1.bf16.xpose.msra.mxu0 0
    %1358 = vmatprep.subr.bf16.mxu0 0
    %1359 = vmatpush1.bf16.xpose.msra.mxu0 0
    %1360 = vmatprep.subr.bf16.mxu0 0
    %1361 = vmatpush1.bf16.xpose.msra.mxu0 0
    %1362 = vmatprep.subr.bf16.mxu0 0
    %1363 = vmatpush1.bf16.xpose.msra.mxu0 0
    %1364 = vmatprep.subr.bf16.mxu0 0
    %1365 = vmatpush1.bf16.xpose.msra.mxu0 0
    %1366 = vmatprep.subr.bf16.mxu0 0
    %1367 = vmatpush1.bf16.xpose.msra.mxu0 0
    %1368 = vmatprep.mubr.bf16.mxu0 0
    %1369 = vmatmul.mubr.bf16.gmra.mrb[0].mxu0 %v1331
    %v1370 = vpop.f32.mrb[0].mxu0
    %v1371 = vadd.f32 0.0, %v1370
    %v1372 = vpop.f32.mrb[0].mxu0
    %v1373 = vpop.f32.mrb[0].mxu0
    %v1374 = vadd.f32 0.0, %v1373
    %v1375 = vpop.f32.mrb[0].mxu0
    %1376 = vdwg.mxu0
    %1378 = vrot.lane.b32.xlu0 %v1165, 120
    %v1379 = vpop.permute.xlu0 %1378
    %v1381 = vsel %vm1229, %v1101, 0
    %v1384 = vsel %vm1229, %v1379, 0
    %1386 = vmatprep.subr.bf16.mxu0 0
    %1387 = vmatpush1.bf16.xpose.msra.mxu0 %v1384
    %1388 = vmatprep.subr.bf16.mxu0 0
    %1389 = vmatpush1.bf16.xpose.msra.mxu0 0
    %1390 = vmatprep.subr.bf16.mxu0 0
    %1391 = vmatpush1.bf16.xpose.msra.mxu0 0
    %1392 = vmatprep.subr.bf16.mxu0 0
    %1393 = vmatpush1.bf16.xpose.msra.mxu0 0
    %1394 = vmatprep.subr.bf16.mxu0 0
    %1395 = vmatpush1.bf16.xpose.msra.mxu0 0
    %1396 = vmatprep.subr.bf16.mxu0 0
    %1397 = vmatpush1.bf16.xpose.msra.mxu0 0
    %1398 = vmatprep.subr.bf16.mxu0 0
    %1399 = vmatpush1.bf16.xpose.msra.mxu0 0
    %1400 = vmatprep.subr.bf16.mxu0 0
    %1401 = vmatpush1.bf16.xpose.msra.mxu0 0
    %1402 = vmatprep.subr.bf16.mxu0 0
    %1403 = vmatpush1.bf16.xpose.msra.mxu0 0
    %1404 = vmatprep.subr.bf16.mxu0 0
    %1405 = vmatpush1.bf16.xpose.msra.mxu0 0
    %1406 = vmatprep.subr.bf16.mxu0 0
    %1407 = vmatpush1.bf16.xpose.msra.mxu0 0
    %1408 = vmatprep.subr.bf16.mxu0 0
    %1409 = vmatpush1.bf16.xpose.msra.mxu0 0
    %1410 = vmatprep.subr.bf16.mxu0 0
    %1411 = vmatpush1.bf16.xpose.msra.mxu0 0
    %1412 = vmatprep.subr.bf16.mxu0 0
    %1413 = vmatpush1.bf16.xpose.msra.mxu0 0
    %1414 = vmatprep.subr.bf16.mxu0 0
    %1415 = vmatpush1.bf16.xpose.msra.mxu0 0
    %1416 = vmatprep.subr.bf16.mxu0 0
    %1417 = vmatpush1.bf16.xpose.msra.mxu0 0
    %1418 = vmatprep.mubr.bf16.mxu0 0
    %1419 = vmatmul.mubr.bf16.gmra.mrb[0].mxu0 %v1381
    %v1420 = vpop.f32.mrb[0].mxu0
    %v1421 = vadd.f32 0.0, %v1420
    %v1422 = vpop.f32.mrb[0].mxu0
    %v1423 = vpop.f32.mrb[0].mxu0
    %v1424 = vadd.f32 0.0, %v1423
    %v1425 = vpop.f32.mrb[0].mxu0
    %1426 = vdwg.mxu0
    %1428 = vrot.lane.b32.xlu0 %v1166, 120
    %v1429 = vpop.permute.xlu0 %1428
    %v1431 = vsel %vm1229, %v1102, 0
    %v1434 = vsel %vm1229, %v1429, 0
    %1436 = vmatprep.subr.bf16.mxu0 0
    %1437 = vmatpush1.bf16.xpose.msra.mxu0 %v1434
    %1438 = vmatprep.subr.bf16.mxu0 0
    %1439 = vmatpush1.bf16.xpose.msra.mxu0 0
    %1440 = vmatprep.subr.bf16.mxu0 0
    %1441 = vmatpush1.bf16.xpose.msra.mxu0 0
    %1442 = vmatprep.subr.bf16.mxu0 0
    %1443 = vmatpush1.bf16.xpose.msra.mxu0 0
    %1444 = vmatprep.subr.bf16.mxu0 0
    %1445 = vmatpush1.bf16.xpose.msra.mxu0 0
    %1446 = vmatprep.subr.bf16.mxu0 0
    %1447 = vmatpush1.bf16.xpose.msra.mxu0 0
    %1448 = vmatprep.subr.bf16.mxu0 0
    %1449 = vmatpush1.bf16.xpose.msra.mxu0 0
    %1450 = vmatprep.subr.bf16.mxu0 0
    %1451 = vmatpush1.bf16.xpose.msra.mxu0 0
    %1452 = vmatprep.subr.bf16.mxu0 0
    %1453 = vmatpush1.bf16.xpose.msra.mxu0 0
    %1454 = vmatprep.subr.bf16.mxu0 0
    %1455 = vmatpush1.bf16.xpose.msra.mxu0 0
    %1456 = vmatprep.subr.bf16.mxu0 0
    %1457 = vmatpush1.bf16.xpose.msra.mxu0 0
    %1458 = vmatprep.subr.bf16.mxu0 0
    %1459 = vmatpush1.bf16.xpose.msra.mxu0 0
    %1460 = vmatprep.subr.bf16.mxu0 0
    %1461 = vmatpush1.bf16.xpose.msra.mxu0 0
    %1462 = vmatprep.subr.bf16.mxu0 0
    %1463 = vmatpush1.bf16.xpose.msra.mxu0 0
    %1464 = vmatprep.subr.bf16.mxu0 0
    %1465 = vmatpush1.bf16.xpose.msra.mxu0 0
    %1466 = vmatprep.subr.bf16.mxu0 0
    %1467 = vmatpush1.bf16.xpose.msra.mxu0 0
    %1468 = vmatprep.mubr.bf16.mxu0 0
    %1469 = vmatmul.mubr.bf16.gmra.mrb[0].mxu0 %v1431
    %v1470 = vpop.f32.mrb[0].mxu0
    %v1471 = vadd.f32 0.0, %v1470
    %v1472 = vpop.f32.mrb[0].mxu0
    %v1473 = vpop.f32.mrb[0].mxu0
    %v1474 = vadd.f32 0.0, %v1473
    %v1475 = vpop.f32.mrb[0].mxu0
    %1476 = vdwg.mxu0
    %1478 = vrot.lane.b32.xlu0 %v1167, 120
    %v1479 = vpop.permute.xlu0 %1478
    %v1481 = vsel %vm1229, %v1103, 0
    %v1484 = vsel %vm1229, %v1479, 0
    %1486 = vmatprep.subr.bf16.mxu0 0
    %1487 = vmatpush1.bf16.xpose.msra.mxu0 %v1484
    %1488 = vmatprep.subr.bf16.mxu0 0
    %1489 = vmatpush1.bf16.xpose.msra.mxu0 0
    %1490 = vmatprep.subr.bf16.mxu0 0
    %1491 = vmatpush1.bf16.xpose.msra.mxu0 0
    %1492 = vmatprep.subr.bf16.mxu0 0
    %1493 = vmatpush1.bf16.xpose.msra.mxu0 0
    %1494 = vmatprep.subr.bf16.mxu0 0
    %1495 = vmatpush1.bf16.xpose.msra.mxu0 0
    %1496 = vmatprep.subr.bf16.mxu0 0
    %1497 = vmatpush1.bf16.xpose.msra.mxu0 0
    %1498 = vmatprep.subr.bf16.mxu0 0
    %1499 = vmatpush1.bf16.xpose.msra.mxu0 0
    %1500 = vmatprep.subr.bf16.mxu0 0
    %1501 = vmatpush1.bf16.xpose.msra.mxu0 0
    %1502 = vmatprep.subr.bf16.mxu0 0
    %1503 = vmatpush1.bf16.xpose.msra.mxu0 0
    %1504 = vmatprep.subr.bf16.mxu0 0
    %1505 = vmatpush1.bf16.xpose.msra.mxu0 0
    %1506 = vmatprep.subr.bf16.mxu0 0
    %1507 = vmatpush1.bf16.xpose.msra.mxu0 0
    %1508 = vmatprep.subr.bf16.mxu0 0
    %1509 = vmatpush1.bf16.xpose.msra.mxu0 0
    %1510 = vmatprep.subr.bf16.mxu0 0
    %1511 = vmatpush1.bf16.xpose.msra.mxu0 0
    %1512 = vmatprep.subr.bf16.mxu0 0
    %1513 = vmatpush1.bf16.xpose.msra.mxu0 0
    %1514 = vmatprep.subr.bf16.mxu0 0
    %1515 = vmatpush1.bf16.xpose.msra.mxu0 0
    %1516 = vmatprep.subr.bf16.mxu0 0
    %1517 = vmatpush1.bf16.xpose.msra.mxu0 0
    %1518 = vmatprep.mubr.bf16.mxu0 0
    %1519 = vmatmul.mubr.bf16.gmra.mrb[0].mxu0 %v1481
    %v1520 = vpop.f32.mrb[0].mxu0
    %v1521 = vadd.f32 0.0, %v1520
    %v1522 = vpop.f32.mrb[0].mxu0
    %v1523 = vpop.f32.mrb[0].mxu0
    %v1524 = vadd.f32 0.0, %v1523
    %v1525 = vpop.f32.mrb[0].mxu0
    %1526 = vdwg.mxu0
    %1528 = vrot.lane.b32.xlu0 %v1168, 120
    %v1529 = vpop.permute.xlu0 %1528
    %v1531 = vsel %vm1229, %v1104, 0
    %v1534 = vsel %vm1229, %v1529, 0
    %1536 = vmatprep.subr.bf16.mxu0 0
    %1537 = vmatpush1.bf16.xpose.msra.mxu0 %v1534
    %1538 = vmatprep.subr.bf16.mxu0 0
    %1539 = vmatpush1.bf16.xpose.msra.mxu0 0
    %1540 = vmatprep.subr.bf16.mxu0 0
    %1541 = vmatpush1.bf16.xpose.msra.mxu0 0
    %1542 = vmatprep.subr.bf16.mxu0 0
    %1543 = vmatpush1.bf16.xpose.msra.mxu0 0
    %1544 = vmatprep.subr.bf16.mxu0 0
    %1545 = vmatpush1.bf16.xpose.msra.mxu0 0
    %1546 = vmatprep.subr.bf16.mxu0 0
    %1547 = vmatpush1.bf16.xpose.msra.mxu0 0
    %1548 = vmatprep.subr.bf16.mxu0 0
    %1549 = vmatpush1.bf16.xpose.msra.mxu0 0
    %1550 = vmatprep.subr.bf16.mxu0 0
    %1551 = vmatpush1.bf16.xpose.msra.mxu0 0
    %1552 = vmatprep.subr.bf16.mxu0 0
    %1553 = vmatpush1.bf16.xpose.msra.mxu0 0
    %1554 = vmatprep.subr.bf16.mxu0 0
    %1555 = vmatpush1.bf16.xpose.msra.mxu0 0
    %1556 = vmatprep.subr.bf16.mxu0 0
    %1557 = vmatpush1.bf16.xpose.msra.mxu0 0
    %1558 = vmatprep.subr.bf16.mxu0 0
    %1559 = vmatpush1.bf16.xpose.msra.mxu0 0
    %1560 = vmatprep.subr.bf16.mxu0 0
    %1561 = vmatpush1.bf16.xpose.msra.mxu0 0
    %1562 = vmatprep.subr.bf16.mxu0 0
    %1563 = vmatpush1.bf16.xpose.msra.mxu0 0
    %1564 = vmatprep.subr.bf16.mxu0 0
    %1565 = vmatpush1.bf16.xpose.msra.mxu0 0
    %1566 = vmatprep.subr.bf16.mxu0 0
    %1567 = vmatpush1.bf16.xpose.msra.mxu0 0
    %1568 = vmatprep.mubr.bf16.mxu0 0
    %1569 = vmatmul.mubr.bf16.gmra.mrb[0].mxu0 %v1531
    %v1570 = vpop.f32.mrb[0].mxu0
    %v1571 = vadd.f32 0.0, %v1570
    %v1572 = vpop.f32.mrb[0].mxu0
    %v1573 = vpop.f32.mrb[0].mxu0
    %v1574 = vadd.f32 0.0, %v1573
    %v1575 = vpop.f32.mrb[0].mxu0
    %1576 = vdwg.mxu0
    %1578 = vrot.lane.b32.xlu0 %v1169, 120
    %v1579 = vpop.permute.xlu0 %1578
    %v1581 = vsel %vm1229, %v1105, 0
    %v1584 = vsel %vm1229, %v1579, 0
    %1586 = vmatprep.subr.bf16.mxu0 0
    %1587 = vmatpush1.bf16.xpose.msra.mxu0 %v1584
    %1588 = vmatprep.subr.bf16.mxu0 0
    %1589 = vmatpush1.bf16.xpose.msra.mxu0 0
    %1590 = vmatprep.subr.bf16.mxu0 0
    %1591 = vmatpush1.bf16.xpose.msra.mxu0 0
    %1592 = vmatprep.subr.bf16.mxu0 0
    %1593 = vmatpush1.bf16.xpose.msra.mxu0 0
    %1594 = vmatprep.subr.bf16.mxu0 0
    %1595 = vmatpush1.bf16.xpose.msra.mxu0 0
    %1596 = vmatprep.subr.bf16.mxu0 0
    %1597 = vmatpush1.bf16.xpose.msra.mxu0 0
    %1598 = vmatprep.subr.bf16.mxu0 0
    %1599 = vmatpush1.bf16.xpose.msra.mxu0 0
    %1600 = vmatprep.subr.bf16.mxu0 0
    %1601 = vmatpush1.bf16.xpose.msra.mxu0 0
    %1602 = vmatprep.subr.bf16.mxu0 0
    %1603 = vmatpush1.bf16.xpose.msra.mxu0 0
    %1604 = vmatprep.subr.bf16.mxu0 0
    %1605 = vmatpush1.bf16.xpose.msra.mxu0 0
    %1606 = vmatprep.subr.bf16.mxu0 0
    %1607 = vmatpush1.bf16.xpose.msra.mxu0 0
    %1608 = vmatprep.subr.bf16.mxu0 0
    %1609 = vmatpush1.bf16.xpose.msra.mxu0 0
    %1610 = vmatprep.subr.bf16.mxu0 0
    %1611 = vmatpush1.bf16.xpose.msra.mxu0 0
    %1612 = vmatprep.subr.bf16.mxu0 0
    %1613 = vmatpush1.bf16.xpose.msra.mxu0 0
    %1614 = vmatprep.subr.bf16.mxu0 0
    %1615 = vmatpush1.bf16.xpose.msra.mxu0 0
    %1616 = vmatprep.subr.bf16.mxu0 0
    %1617 = vmatpush1.bf16.xpose.msra.mxu0 0
    %1618 = vmatprep.mubr.bf16.mxu0 0
    %1619 = vmatmul.mubr.bf16.gmra.mrb[0].mxu0 %v1581
    %v1620 = vpop.f32.mrb[0].mxu0
    %v1621 = vadd.f32 0.0, %v1620
    %v1622 = vpop.f32.mrb[0].mxu0
    %v1623 = vpop.f32.mrb[0].mxu0
    %v1624 = vadd.f32 0.0, %v1623
    %v1625 = vpop.f32.mrb[0].mxu0
    %1626 = vdwg.mxu0
    %1628 = vrot.lane.b32.xlu0 %v1170, 120
    %v1629 = vpop.permute.xlu0 %1628
    %v1631 = vsel %vm1229, %v1106, 0
    %v1634 = vsel %vm1229, %v1629, 0
    %1636 = vmatprep.subr.bf16.mxu0 0
    %1637 = vmatpush1.bf16.xpose.msra.mxu0 %v1634
    %1638 = vmatprep.subr.bf16.mxu0 0
    %1639 = vmatpush1.bf16.xpose.msra.mxu0 0
    %1640 = vmatprep.subr.bf16.mxu0 0
    %1641 = vmatpush1.bf16.xpose.msra.mxu0 0
    %1642 = vmatprep.subr.bf16.mxu0 0
    %1643 = vmatpush1.bf16.xpose.msra.mxu0 0
    %1644 = vmatprep.subr.bf16.mxu0 0
    %1645 = vmatpush1.bf16.xpose.msra.mxu0 0
    %1646 = vmatprep.subr.bf16.mxu0 0
    %1647 = vmatpush1.bf16.xpose.msra.mxu0 0
    %1648 = vmatprep.subr.bf16.mxu0 0
    %1649 = vmatpush1.bf16.xpose.msra.mxu0 0
    %1650 = vmatprep.subr.bf16.mxu0 0
    %1651 = vmatpush1.bf16.xpose.msra.mxu0 0
    %1652 = vmatprep.subr.bf16.mxu0 0
    %1653 = vmatpush1.bf16.xpose.msra.mxu0 0
    %1654 = vmatprep.subr.bf16.mxu0 0
    %1655 = vmatpush1.bf16.xpose.msra.mxu0 0
    %1656 = vmatprep.subr.bf16.mxu0 0
    %1657 = vmatpush1.bf16.xpose.msra.mxu0 0
    %1658 = vmatprep.subr.bf16.mxu0 0
    %1659 = vmatpush1.bf16.xpose.msra.mxu0 0
    %1660 = vmatprep.subr.bf16.mxu0 0
    %1661 = vmatpush1.bf16.xpose.msra.mxu0 0
    %1662 = vmatprep.subr.bf16.mxu0 0
    %1663 = vmatpush1.bf16.xpose.msra.mxu0 0
    %1664 = vmatprep.subr.bf16.mxu0 0
    %1665 = vmatpush1.bf16.xpose.msra.mxu0 0
    %1666 = vmatprep.subr.bf16.mxu0 0
    %1667 = vmatpush1.bf16.xpose.msra.mxu0 0
    %1668 = vmatprep.mubr.bf16.mxu0 0
    %1669 = vmatmul.mubr.bf16.gmra.mrb[0].mxu0 %v1631
    %v1670 = vpop.f32.mrb[0].mxu0
    %v1671 = vadd.f32 0.0, %v1670
    %v1672 = vpop.f32.mrb[0].mxu0
    %v1673 = vpop.f32.mrb[0].mxu0
    %v1674 = vadd.f32 0.0, %v1673
    %v1675 = vpop.f32.mrb[0].mxu0
    %1676 = vdwg.mxu0
    %1678 = vrot.lane.b32.xlu0 %v1171, 120
    %v1679 = vpop.permute.xlu0 %1678
    %v1681 = vsel %vm1229, %v1107, 0
    %v1684 = vsel %vm1229, %v1679, 0
    %1686 = vmatprep.subr.bf16.mxu0 0
    %1687 = vmatpush1.bf16.xpose.msra.mxu0 %v1684
    %1688 = vmatprep.subr.bf16.mxu0 0
    %1689 = vmatpush1.bf16.xpose.msra.mxu0 0
    %1690 = vmatprep.subr.bf16.mxu0 0
    %1691 = vmatpush1.bf16.xpose.msra.mxu0 0
    %1692 = vmatprep.subr.bf16.mxu0 0
    %1693 = vmatpush1.bf16.xpose.msra.mxu0 0
    %1694 = vmatprep.subr.bf16.mxu0 0
    %1695 = vmatpush1.bf16.xpose.msra.mxu0 0
    %1696 = vmatprep.subr.bf16.mxu0 0
    %1697 = vmatpush1.bf16.xpose.msra.mxu0 0
    %1698 = vmatprep.subr.bf16.mxu0 0
    %1699 = vmatpush1.bf16.xpose.msra.mxu0 0
    %1700 = vmatprep.subr.bf16.mxu0 0
    %1701 = vmatpush1.bf16.xpose.msra.mxu0 0
    %1702 = vmatprep.subr.bf16.mxu0 0
    %1703 = vmatpush1.bf16.xpose.msra.mxu0 0
    %1704 = vmatprep.subr.bf16.mxu0 0
    %1705 = vmatpush1.bf16.xpose.msra.mxu0 0
    %1706 = vmatprep.subr.bf16.mxu0 0
    %1707 = vmatpush1.bf16.xpose.msra.mxu0 0
    %1708 = vmatprep.subr.bf16.mxu0 0
    %1709 = vmatpush1.bf16.xpose.msra.mxu0 0
    %1710 = vmatprep.subr.bf16.mxu0 0
    %1711 = vmatpush1.bf16.xpose.msra.mxu0 0
    %1712 = vmatprep.subr.bf16.mxu0 0
    %1713 = vmatpush1.bf16.xpose.msra.mxu0 0
    %1714 = vmatprep.subr.bf16.mxu0 0
    %1715 = vmatpush1.bf16.xpose.msra.mxu0 0
    %1716 = vmatprep.subr.bf16.mxu0 0
    %1717 = vmatpush1.bf16.xpose.msra.mxu0 0
    %1718 = vmatprep.mubr.bf16.mxu0 0
    %1719 = vmatmul.mubr.bf16.gmra.mrb[0].mxu0 %v1681
    %v1720 = vpop.f32.mrb[0].mxu0
    %v1721 = vadd.f32 0.0, %v1720
    %v1722 = vpop.f32.mrb[0].mxu0
    %v1723 = vpop.f32.mrb[0].mxu0
    %v1724 = vadd.f32 0.0, %v1723
    %v1725 = vpop.f32.mrb[0].mxu0
    %1726 = vdwg.mxu0
    %1728 = vrot.lane.b32.xlu0 %v1172, 120
    %v1729 = vpop.permute.xlu0 %1728
    %v1731 = vsel %vm1229, %v1108, 0
    %v1734 = vsel %vm1229, %v1729, 0
    %1736 = vmatprep.subr.bf16.mxu0 0
    %1737 = vmatpush1.bf16.xpose.msra.mxu0 %v1734
    %1738 = vmatprep.subr.bf16.mxu0 0
    %1739 = vmatpush1.bf16.xpose.msra.mxu0 0
    %1740 = vmatprep.subr.bf16.mxu0 0
    %1741 = vmatpush1.bf16.xpose.msra.mxu0 0
    %1742 = vmatprep.subr.bf16.mxu0 0
    %1743 = vmatpush1.bf16.xpose.msra.mxu0 0
    %1744 = vmatprep.subr.bf16.mxu0 0
    %1745 = vmatpush1.bf16.xpose.msra.mxu0 0
    %1746 = vmatprep.subr.bf16.mxu0 0
    %1747 = vmatpush1.bf16.xpose.msra.mxu0 0
    %1748 = vmatprep.subr.bf16.mxu0 0
    %1749 = vmatpush1.bf16.xpose.msra.mxu0 0
    %1750 = vmatprep.subr.bf16.mxu0 0
    %1751 = vmatpush1.bf16.xpose.msra.mxu0 0
    %1752 = vmatprep.subr.bf16.mxu0 0
    %1753 = vmatpush1.bf16.xpose.msra.mxu0 0
    %1754 = vmatprep.subr.bf16.mxu0 0
    %1755 = vmatpush1.bf16.xpose.msra.mxu0 0
    %1756 = vmatprep.subr.bf16.mxu0 0
    %1757 = vmatpush1.bf16.xpose.msra.mxu0 0
    %1758 = vmatprep.subr.bf16.mxu0 0
    %1759 = vmatpush1.bf16.xpose.msra.mxu0 0
    %1760 = vmatprep.subr.bf16.mxu0 0
    %1761 = vmatpush1.bf16.xpose.msra.mxu0 0
    %1762 = vmatprep.subr.bf16.mxu0 0
    %1763 = vmatpush1.bf16.xpose.msra.mxu0 0
    %1764 = vmatprep.subr.bf16.mxu0 0
    %1765 = vmatpush1.bf16.xpose.msra.mxu0 0
    %1766 = vmatprep.subr.bf16.mxu0 0
    %1767 = vmatpush1.bf16.xpose.msra.mxu0 0
    %1768 = vmatprep.mubr.bf16.mxu0 0
    %1769 = vmatmul.mubr.bf16.gmra.mrb[0].mxu0 %v1731
    %v1770 = vpop.f32.mrb[0].mxu0
    %v1771 = vadd.f32 0.0, %v1770
    %v1772 = vpop.f32.mrb[0].mxu0
    %v1773 = vpop.f32.mrb[0].mxu0
    %v1774 = vadd.f32 0.0, %v1773
    %v1775 = vpop.f32.mrb[0].mxu0
    %1776 = vdwg.mxu0
    %1778 = vrot.lane.b32.xlu0 %v1173, 120
    %v1779 = vpop.permute.xlu0 %1778
    %v1781 = vsel %vm1229, %v1109, 0
    %v1784 = vsel %vm1229, %v1779, 0
    %1786 = vmatprep.subr.bf16.mxu0 0
    %1787 = vmatpush1.bf16.xpose.msra.mxu0 %v1784
    %1788 = vmatprep.subr.bf16.mxu0 0
    %1789 = vmatpush1.bf16.xpose.msra.mxu0 0
    %1790 = vmatprep.subr.bf16.mxu0 0
    %1791 = vmatpush1.bf16.xpose.msra.mxu0 0
    %1792 = vmatprep.subr.bf16.mxu0 0
    %1793 = vmatpush1.bf16.xpose.msra.mxu0 0
    %1794 = vmatprep.subr.bf16.mxu0 0
    %1795 = vmatpush1.bf16.xpose.msra.mxu0 0
    %1796 = vmatprep.subr.bf16.mxu0 0
    %1797 = vmatpush1.bf16.xpose.msra.mxu0 0
    %1798 = vmatprep.subr.bf16.mxu0 0
    %1799 = vmatpush1.bf16.xpose.msra.mxu0 0
    %1800 = vmatprep.subr.bf16.mxu0 0
    %1801 = vmatpush1.bf16.xpose.msra.mxu0 0
    %1802 = vmatprep.subr.bf16.mxu0 0
    %1803 = vmatpush1.bf16.xpose.msra.mxu0 0
    %1804 = vmatprep.subr.bf16.mxu0 0
    %1805 = vmatpush1.bf16.xpose.msra.mxu0 0
    %1806 = vmatprep.subr.bf16.mxu0 0
    %1807 = vmatpush1.bf16.xpose.msra.mxu0 0
    %1808 = vmatprep.subr.bf16.mxu0 0
    %1809 = vmatpush1.bf16.xpose.msra.mxu0 0
    %1810 = vmatprep.subr.bf16.mxu0 0
    %1811 = vmatpush1.bf16.xpose.msra.mxu0 0
    %1812 = vmatprep.subr.bf16.mxu0 0
    %1813 = vmatpush1.bf16.xpose.msra.mxu0 0
    %1814 = vmatprep.subr.bf16.mxu0 0
    %1815 = vmatpush1.bf16.xpose.msra.mxu0 0
    %1816 = vmatprep.subr.bf16.mxu0 0
    %1817 = vmatpush1.bf16.xpose.msra.mxu0 0
    %1818 = vmatprep.mubr.bf16.mxu0 0
    %1819 = vmatmul.mubr.bf16.gmra.mrb[0].mxu0 %v1781
    %v1820 = vpop.f32.mrb[0].mxu0
    %v1821 = vadd.f32 0.0, %v1820
    %v1822 = vpop.f32.mrb[0].mxu0
    %v1823 = vpop.f32.mrb[0].mxu0
    %v1824 = vadd.f32 0.0, %v1823
    %v1825 = vpop.f32.mrb[0].mxu0
    %1826 = vdwg.mxu0
    %1828 = vrot.lane.b32.xlu0 %v1174, 120
    %v1829 = vpop.permute.xlu0 %1828
    %v1831 = vsel %vm1229, %v1110, 0
    %v1834 = vsel %vm1229, %v1829, 0
    %1836 = vmatprep.subr.bf16.mxu0 0
    %1837 = vmatpush1.bf16.xpose.msra.mxu0 %v1834
    %1838 = vmatprep.subr.bf16.mxu0 0
    %1839 = vmatpush1.bf16.xpose.msra.mxu0 0
    %1840 = vmatprep.subr.bf16.mxu0 0
    %1841 = vmatpush1.bf16.xpose.msra.mxu0 0
    %1842 = vmatprep.subr.bf16.mxu0 0
    %1843 = vmatpush1.bf16.xpose.msra.mxu0 0
    %1844 = vmatprep.subr.bf16.mxu0 0
    %1845 = vmatpush1.bf16.xpose.msra.mxu0 0
    %1846 = vmatprep.subr.bf16.mxu0 0
    %1847 = vmatpush1.bf16.xpose.msra.mxu0 0
    %1848 = vmatprep.subr.bf16.mxu0 0
    %1849 = vmatpush1.bf16.xpose.msra.mxu0 0
    %1850 = vmatprep.subr.bf16.mxu0 0
    %1851 = vmatpush1.bf16.xpose.msra.mxu0 0
    %1852 = vmatprep.subr.bf16.mxu0 0
    %1853 = vmatpush1.bf16.xpose.msra.mxu0 0
    %1854 = vmatprep.subr.bf16.mxu0 0
    %1855 = vmatpush1.bf16.xpose.msra.mxu0 0
    %1856 = vmatprep.subr.bf16.mxu0 0
    %1857 = vmatpush1.bf16.xpose.msra.mxu0 0
    %1858 = vmatprep.subr.bf16.mxu0 0
    %1859 = vmatpush1.bf16.xpose.msra.mxu0 0
    %1860 = vmatprep.subr.bf16.mxu0 0
    %1861 = vmatpush1.bf16.xpose.msra.mxu0 0
    %1862 = vmatprep.subr.bf16.mxu0 0
    %1863 = vmatpush1.bf16.xpose.msra.mxu0 0
    %1864 = vmatprep.subr.bf16.mxu0 0
    %1865 = vmatpush1.bf16.xpose.msra.mxu0 0
    %1866 = vmatprep.subr.bf16.mxu0 0
    %1867 = vmatpush1.bf16.xpose.msra.mxu0 0
    %1868 = vmatprep.mubr.bf16.mxu0 0
    %1869 = vmatmul.mubr.bf16.gmra.mrb[0].mxu0 %v1831
    %v1870 = vpop.f32.mrb[0].mxu0
    %v1871 = vadd.f32 0.0, %v1870
    %v1872 = vpop.f32.mrb[0].mxu0
    %v1873 = vpop.f32.mrb[0].mxu0
    %v1874 = vadd.f32 0.0, %v1873
    %v1875 = vpop.f32.mrb[0].mxu0
    %1876 = vdwg.mxu0
    %1878 = vrot.lane.b32.xlu0 %v1175, 120
    %v1879 = vpop.permute.xlu0 %1878
    %v1881 = vsel %vm1229, %v1111, 0
    %v1884 = vsel %vm1229, %v1879, 0
    %1886 = vmatprep.subr.bf16.mxu0 0
    %1887 = vmatpush1.bf16.xpose.msra.mxu0 %v1884
    %1888 = vmatprep.subr.bf16.mxu0 0
    %1889 = vmatpush1.bf16.xpose.msra.mxu0 0
    %1890 = vmatprep.subr.bf16.mxu0 0
    %1891 = vmatpush1.bf16.xpose.msra.mxu0 0
    %1892 = vmatprep.subr.bf16.mxu0 0
    %1893 = vmatpush1.bf16.xpose.msra.mxu0 0
    %1894 = vmatprep.subr.bf16.mxu0 0
    %1895 = vmatpush1.bf16.xpose.msra.mxu0 0
    %1896 = vmatprep.subr.bf16.mxu0 0
    %1897 = vmatpush1.bf16.xpose.msra.mxu0 0
    %1898 = vmatprep.subr.bf16.mxu0 0
    %1899 = vmatpush1.bf16.xpose.msra.mxu0 0
    %1900 = vmatprep.subr.bf16.mxu0 0
    %1901 = vmatpush1.bf16.xpose.msra.mxu0 0
    %1902 = vmatprep.subr.bf16.mxu0 0
    %1903 = vmatpush1.bf16.xpose.msra.mxu0 0
    %1904 = vmatprep.subr.bf16.mxu0 0
    %1905 = vmatpush1.bf16.xpose.msra.mxu0 0
    %1906 = vmatprep.subr.bf16.mxu0 0
    %1907 = vmatpush1.bf16.xpose.msra.mxu0 0
    %1908 = vmatprep.subr.bf16.mxu0 0
    %1909 = vmatpush1.bf16.xpose.msra.mxu0 0
    %1910 = vmatprep.subr.bf16.mxu0 0
    %1911 = vmatpush1.bf16.xpose.msra.mxu0 0
    %1912 = vmatprep.subr.bf16.mxu0 0
    %1913 = vmatpush1.bf16.xpose.msra.mxu0 0
    %1914 = vmatprep.subr.bf16.mxu0 0
    %1915 = vmatpush1.bf16.xpose.msra.mxu0 0
    %1916 = vmatprep.subr.bf16.mxu0 0
    %1917 = vmatpush1.bf16.xpose.msra.mxu0 0
    %1918 = vmatprep.mubr.bf16.mxu0 0
    %1919 = vmatmul.mubr.bf16.gmra.mrb[0].mxu0 %v1881
    %v1920 = vpop.f32.mrb[0].mxu0
    %v1921 = vadd.f32 0.0, %v1920
    %v1922 = vpop.f32.mrb[0].mxu0
    %v1923 = vpop.f32.mrb[0].mxu0
    %v1924 = vadd.f32 0.0, %v1923
    %v1925 = vpop.f32.mrb[0].mxu0
    %1926 = vdwg.mxu0
    %1928 = vrot.lane.b32.xlu0 %v1176, 120
    %v1929 = vpop.permute.xlu0 %1928
    %v1931 = vsel %vm1229, %v1112, 0
    %v1934 = vsel %vm1229, %v1929, 0
    %1936 = vmatprep.subr.bf16.mxu0 0
    %1937 = vmatpush1.bf16.xpose.msra.mxu0 %v1934
    %1938 = vmatprep.subr.bf16.mxu0 0
    %1939 = vmatpush1.bf16.xpose.msra.mxu0 0
    %1940 = vmatprep.subr.bf16.mxu0 0
    %1941 = vmatpush1.bf16.xpose.msra.mxu0 0
    %1942 = vmatprep.subr.bf16.mxu0 0
    %1943 = vmatpush1.bf16.xpose.msra.mxu0 0
    %1944 = vmatprep.subr.bf16.mxu0 0
    %1945 = vmatpush1.bf16.xpose.msra.mxu0 0
    %1946 = vmatprep.subr.bf16.mxu0 0
    %1947 = vmatpush1.bf16.xpose.msra.mxu0 0
    %1948 = vmatprep.subr.bf16.mxu0 0
    %1949 = vmatpush1.bf16.xpose.msra.mxu0 0
    %1950 = vmatprep.subr.bf16.mxu0 0
    %1951 = vmatpush1.bf16.xpose.msra.mxu0 0
    %1952 = vmatprep.subr.bf16.mxu0 0
    %1953 = vmatpush1.bf16.xpose.msra.mxu0 0
    %1954 = vmatprep.subr.bf16.mxu0 0
    %1955 = vmatpush1.bf16.xpose.msra.mxu0 0
    %1956 = vmatprep.subr.bf16.mxu0 0
    %1957 = vmatpush1.bf16.xpose.msra.mxu0 0
    %1958 = vmatprep.subr.bf16.mxu0 0
    %1959 = vmatpush1.bf16.xpose.msra.mxu0 0
    %1960 = vmatprep.subr.bf16.mxu0 0
    %1961 = vmatpush1.bf16.xpose.msra.mxu0 0
    %1962 = vmatprep.subr.bf16.mxu0 0
    %1963 = vmatpush1.bf16.xpose.msra.mxu0 0
    %1964 = vmatprep.subr.bf16.mxu0 0
    %1965 = vmatpush1.bf16.xpose.msra.mxu0 0
    %1966 = vmatprep.subr.bf16.mxu0 0
    %1967 = vmatpush1.bf16.xpose.msra.mxu0 0
    %1968 = vmatprep.mubr.bf16.mxu0 0
    %1969 = vmatmul.mubr.bf16.gmra.mrb[0].mxu0 %v1931
    %v1970 = vpop.f32.mrb[0].mxu0
    %v1971 = vadd.f32 0.0, %v1970
    %v1972 = vpop.f32.mrb[0].mxu0
    %v1973 = vpop.f32.mrb[0].mxu0
    %v1974 = vadd.f32 0.0, %v1973
    %v1975 = vpop.f32.mrb[0].mxu0
    %1976 = vdwg.mxu0
    %1978 = vrot.lane.b32.xlu0 %v1177, 120
    %v1979 = vpop.permute.xlu0 %1978
    %v1981 = vsel %vm1229, %v1113, 0
    %v1984 = vsel %vm1229, %v1979, 0
    %1986 = vmatprep.subr.bf16.mxu0 0
    %1987 = vmatpush1.bf16.xpose.msra.mxu0 %v1984
    %1988 = vmatprep.subr.bf16.mxu0 0
    %1989 = vmatpush1.bf16.xpose.msra.mxu0 0
    %1990 = vmatprep.subr.bf16.mxu0 0
    %1991 = vmatpush1.bf16.xpose.msra.mxu0 0
    %1992 = vmatprep.subr.bf16.mxu0 0
    %1993 = vmatpush1.bf16.xpose.msra.mxu0 0
    %1994 = vmatprep.subr.bf16.mxu0 0
    %1995 = vmatpush1.bf16.xpose.msra.mxu0 0
    %1996 = vmatprep.subr.bf16.mxu0 0
    %1997 = vmatpush1.bf16.xpose.msra.mxu0 0
    %1998 = vmatprep.subr.bf16.mxu0 0
    %1999 = vmatpush1.bf16.xpose.msra.mxu0 0
    %2000 = vmatprep.subr.bf16.mxu0 0
    %2001 = vmatpush1.bf16.xpose.msra.mxu0 0
    %2002 = vmatprep.subr.bf16.mxu0 0
    %2003 = vmatpush1.bf16.xpose.msra.mxu0 0
    %2004 = vmatprep.subr.bf16.mxu0 0
    %2005 = vmatpush1.bf16.xpose.msra.mxu0 0
    %2006 = vmatprep.subr.bf16.mxu0 0
    %2007 = vmatpush1.bf16.xpose.msra.mxu0 0
    %2008 = vmatprep.subr.bf16.mxu0 0
    %2009 = vmatpush1.bf16.xpose.msra.mxu0 0
    %2010 = vmatprep.subr.bf16.mxu0 0
    %2011 = vmatpush1.bf16.xpose.msra.mxu0 0
    %2012 = vmatprep.subr.bf16.mxu0 0
    %2013 = vmatpush1.bf16.xpose.msra.mxu0 0
    %2014 = vmatprep.subr.bf16.mxu0 0
    %2015 = vmatpush1.bf16.xpose.msra.mxu0 0
    %2016 = vmatprep.subr.bf16.mxu0 0
    %2017 = vmatpush1.bf16.xpose.msra.mxu0 0
    %2018 = vmatprep.mubr.bf16.mxu0 0
    %2019 = vmatmul.mubr.bf16.gmra.mrb[0].mxu0 %v1981
    %v2020 = vpop.f32.mrb[0].mxu0
    %v2021 = vadd.f32 0.0, %v2020
    %v2022 = vpop.f32.mrb[0].mxu0
    %v2023 = vpop.f32.mrb[0].mxu0
    %v2024 = vadd.f32 0.0, %v2023
    %v2025 = vpop.f32.mrb[0].mxu0
    %2026 = vdwg.mxu0
    %2028 = vrot.lane.b32.xlu0 %v1178, 120
    %v2029 = vpop.permute.xlu0 %2028
    %v2031 = vsel %vm1229, %v1114, 0
    %v2034 = vsel %vm1229, %v2029, 0
    %2036 = vmatprep.subr.bf16.mxu0 0
    %2037 = vmatpush1.bf16.xpose.msra.mxu0 %v2034
    %2038 = vmatprep.subr.bf16.mxu0 0
    %2039 = vmatpush1.bf16.xpose.msra.mxu0 0
    %2040 = vmatprep.subr.bf16.mxu0 0
    %2041 = vmatpush1.bf16.xpose.msra.mxu0 0
    %2042 = vmatprep.subr.bf16.mxu0 0
    %2043 = vmatpush1.bf16.xpose.msra.mxu0 0
    %2044 = vmatprep.subr.bf16.mxu0 0
    %2045 = vmatpush1.bf16.xpose.msra.mxu0 0
    %2046 = vmatprep.subr.bf16.mxu0 0
    %2047 = vmatpush1.bf16.xpose.msra.mxu0 0
    %2048 = vmatprep.subr.bf16.mxu0 0
    %2049 = vmatpush1.bf16.xpose.msra.mxu0 0
    %2050 = vmatprep.subr.bf16.mxu0 0
    %2051 = vmatpush1.bf16.xpose.msra.mxu0 0
    %2052 = vmatprep.subr.bf16.mxu0 0
    %2053 = vmatpush1.bf16.xpose.msra.mxu0 0
    %2054 = vmatprep.subr.bf16.mxu0 0
    %2055 = vmatpush1.bf16.xpose.msra.mxu0 0
    %2056 = vmatprep.subr.bf16.mxu0 0
    %2057 = vmatpush1.bf16.xpose.msra.mxu0 0
    %2058 = vmatprep.subr.bf16.mxu0 0
    %2059 = vmatpush1.bf16.xpose.msra.mxu0 0
    %2060 = vmatprep.subr.bf16.mxu0 0
    %2061 = vmatpush1.bf16.xpose.msra.mxu0 0
    %2062 = vmatprep.subr.bf16.mxu0 0
    %2063 = vmatpush1.bf16.xpose.msra.mxu0 0
    %2064 = vmatprep.subr.bf16.mxu0 0
    %2065 = vmatpush1.bf16.xpose.msra.mxu0 0
    %2066 = vmatprep.subr.bf16.mxu0 0
    %2067 = vmatpush1.bf16.xpose.msra.mxu0 0
    %2068 = vmatprep.mubr.bf16.mxu0 0
    %2069 = vmatmul.mubr.bf16.gmra.mrb[0].mxu0 %v2031
    %v2070 = vpop.f32.mrb[0].mxu0
    %v2071 = vadd.f32 0.0, %v2070
    %v2072 = vpop.f32.mrb[0].mxu0
    %v2073 = vpop.f32.mrb[0].mxu0
    %v2074 = vadd.f32 0.0, %v2073
    %v2075 = vpop.f32.mrb[0].mxu0
    %2076 = vdwg.mxu0
    %2078 = vrot.lane.b32.xlu0 %v1179, 120
    %v2079 = vpop.permute.xlu0 %2078
    %v2081 = vsel %vm1229, %v1115, 0
    %v2084 = vsel %vm1229, %v2079, 0
    %2086 = vmatprep.subr.bf16.mxu0 0
    %2087 = vmatpush1.bf16.xpose.msra.mxu0 %v2084
    %2088 = vmatprep.subr.bf16.mxu0 0
    %2089 = vmatpush1.bf16.xpose.msra.mxu0 0
    %2090 = vmatprep.subr.bf16.mxu0 0
    %2091 = vmatpush1.bf16.xpose.msra.mxu0 0
    %2092 = vmatprep.subr.bf16.mxu0 0
    %2093 = vmatpush1.bf16.xpose.msra.mxu0 0
    %2094 = vmatprep.subr.bf16.mxu0 0
    %2095 = vmatpush1.bf16.xpose.msra.mxu0 0
    %2096 = vmatprep.subr.bf16.mxu0 0
    %2097 = vmatpush1.bf16.xpose.msra.mxu0 0
    %2098 = vmatprep.subr.bf16.mxu0 0
    %2099 = vmatpush1.bf16.xpose.msra.mxu0 0
    %2100 = vmatprep.subr.bf16.mxu0 0
    %2101 = vmatpush1.bf16.xpose.msra.mxu0 0
    %2102 = vmatprep.subr.bf16.mxu0 0
    %2103 = vmatpush1.bf16.xpose.msra.mxu0 0
    %2104 = vmatprep.subr.bf16.mxu0 0
    %2105 = vmatpush1.bf16.xpose.msra.mxu0 0
    %2106 = vmatprep.subr.bf16.mxu0 0
    %2107 = vmatpush1.bf16.xpose.msra.mxu0 0
    %2108 = vmatprep.subr.bf16.mxu0 0
    %2109 = vmatpush1.bf16.xpose.msra.mxu0 0
    %2110 = vmatprep.subr.bf16.mxu0 0
    %2111 = vmatpush1.bf16.xpose.msra.mxu0 0
    %2112 = vmatprep.subr.bf16.mxu0 0
    %2113 = vmatpush1.bf16.xpose.msra.mxu0 0
    %2114 = vmatprep.subr.bf16.mxu0 0
    %2115 = vmatpush1.bf16.xpose.msra.mxu0 0
    %2116 = vmatprep.subr.bf16.mxu0 0
    %2117 = vmatpush1.bf16.xpose.msra.mxu0 0
    %2118 = vmatprep.mubr.bf16.mxu0 0
    %2119 = vmatmul.mubr.bf16.gmra.mrb[0].mxu0 %v2081
    %v2120 = vpop.f32.mrb[0].mxu0
    %v2121 = vadd.f32 0.0, %v2120
    %v2122 = vpop.f32.mrb[0].mxu0
    %v2123 = vpop.f32.mrb[0].mxu0
    %v2124 = vadd.f32 0.0, %v2123
    %v2125 = vpop.f32.mrb[0].mxu0
    %2126 = vdwg.mxu0
    %2128 = vrot.lane.b32.xlu0 %v1180, 120
    %v2129 = vpop.permute.xlu0 %2128
    %v2131 = vsel %vm1229, %v1116, 0
    %v2134 = vsel %vm1229, %v2129, 0
    %2136 = vmatprep.subr.bf16.mxu0 0
    %2137 = vmatpush1.bf16.xpose.msra.mxu0 %v2134
    %2138 = vmatprep.subr.bf16.mxu0 0
    %2139 = vmatpush1.bf16.xpose.msra.mxu0 0
    %2140 = vmatprep.subr.bf16.mxu0 0
    %2141 = vmatpush1.bf16.xpose.msra.mxu0 0
    %2142 = vmatprep.subr.bf16.mxu0 0
    %2143 = vmatpush1.bf16.xpose.msra.mxu0 0
    %2144 = vmatprep.subr.bf16.mxu0 0
    %2145 = vmatpush1.bf16.xpose.msra.mxu0 0
    %2146 = vmatprep.subr.bf16.mxu0 0
    %2147 = vmatpush1.bf16.xpose.msra.mxu0 0
    %2148 = vmatprep.subr.bf16.mxu0 0
    %2149 = vmatpush1.bf16.xpose.msra.mxu0 0
    %2150 = vmatprep.subr.bf16.mxu0 0
    %2151 = vmatpush1.bf16.xpose.msra.mxu0 0
    %2152 = vmatprep.subr.bf16.mxu0 0
    %2153 = vmatpush1.bf16.xpose.msra.mxu0 0
    %2154 = vmatprep.subr.bf16.mxu0 0
    %2155 = vmatpush1.bf16.xpose.msra.mxu0 0
    %2156 = vmatprep.subr.bf16.mxu0 0
    %2157 = vmatpush1.bf16.xpose.msra.mxu0 0
    %2158 = vmatprep.subr.bf16.mxu0 0
    %2159 = vmatpush1.bf16.xpose.msra.mxu0 0
    %2160 = vmatprep.subr.bf16.mxu0 0
    %2161 = vmatpush1.bf16.xpose.msra.mxu0 0
    %2162 = vmatprep.subr.bf16.mxu0 0
    %2163 = vmatpush1.bf16.xpose.msra.mxu0 0
    %2164 = vmatprep.subr.bf16.mxu0 0
    %2165 = vmatpush1.bf16.xpose.msra.mxu0 0
    %2166 = vmatprep.subr.bf16.mxu0 0
    %2167 = vmatpush1.bf16.xpose.msra.mxu0 0
    %2168 = vmatprep.mubr.bf16.mxu0 0
    %2169 = vmatmul.mubr.bf16.gmra.mrb[0].mxu0 %v2131
    %v2170 = vpop.f32.mrb[0].mxu0
    %v2171 = vadd.f32 0.0, %v2170
    %v2172 = vpop.f32.mrb[0].mxu0
    %v2173 = vpop.f32.mrb[0].mxu0
    %v2174 = vadd.f32 0.0, %v2173
    %v2175 = vpop.f32.mrb[0].mxu0
    %2176 = vdwg.mxu0
    %2178 = vrot.lane.b32.xlu0 %v1181, 120
    %v2179 = vpop.permute.xlu0 %2178
    %v2181 = vsel %vm1229, %v1117, 0
    %v2184 = vsel %vm1229, %v2179, 0
    %2186 = vmatprep.subr.bf16.mxu0 0
    %2187 = vmatpush1.bf16.xpose.msra.mxu0 %v2184
    %2188 = vmatprep.subr.bf16.mxu0 0
    %2189 = vmatpush1.bf16.xpose.msra.mxu0 0
    %2190 = vmatprep.subr.bf16.mxu0 0
    %2191 = vmatpush1.bf16.xpose.msra.mxu0 0
    %2192 = vmatprep.subr.bf16.mxu0 0
    %2193 = vmatpush1.bf16.xpose.msra.mxu0 0
    %2194 = vmatprep.subr.bf16.mxu0 0
    %2195 = vmatpush1.bf16.xpose.msra.mxu0 0
    %2196 = vmatprep.subr.bf16.mxu0 0
    %2197 = vmatpush1.bf16.xpose.msra.mxu0 0
    %2198 = vmatprep.subr.bf16.mxu0 0
    %2199 = vmatpush1.bf16.xpose.msra.mxu0 0
    %2200 = vmatprep.subr.bf16.mxu0 0
    %2201 = vmatpush1.bf16.xpose.msra.mxu0 0
    %2202 = vmatprep.subr.bf16.mxu0 0
    %2203 = vmatpush1.bf16.xpose.msra.mxu0 0
    %2204 = vmatprep.subr.bf16.mxu0 0
    %2205 = vmatpush1.bf16.xpose.msra.mxu0 0
    %2206 = vmatprep.subr.bf16.mxu0 0
    %2207 = vmatpush1.bf16.xpose.msra.mxu0 0
    %2208 = vmatprep.subr.bf16.mxu0 0
    %2209 = vmatpush1.bf16.xpose.msra.mxu0 0
    %2210 = vmatprep.subr.bf16.mxu0 0
    %2211 = vmatpush1.bf16.xpose.msra.mxu0 0
    %2212 = vmatprep.subr.bf16.mxu0 0
    %2213 = vmatpush1.bf16.xpose.msra.mxu0 0
    %2214 = vmatprep.subr.bf16.mxu0 0
    %2215 = vmatpush1.bf16.xpose.msra.mxu0 0
    %2216 = vmatprep.subr.bf16.mxu0 0
    %2217 = vmatpush1.bf16.xpose.msra.mxu0 0
    %2218 = vmatprep.mubr.bf16.mxu0 0
    %2219 = vmatmul.mubr.bf16.gmra.mrb[0].mxu0 %v2181
    %v2220 = vpop.f32.mrb[0].mxu0
    %v2221 = vadd.f32 0.0, %v2220
    %v2222 = vpop.f32.mrb[0].mxu0
    %v2223 = vpop.f32.mrb[0].mxu0
    %v2224 = vadd.f32 0.0, %v2223
    %v2225 = vpop.f32.mrb[0].mxu0
    %2226 = vdwg.mxu0
    %2228 = vrot.lane.b32.xlu0 %v1182, 120
    %v2229 = vpop.permute.xlu0 %2228
    %v2231 = vsel %vm1229, %v1118, 0
    %v2234 = vsel %vm1229, %v2229, 0
    %2236 = vmatprep.subr.bf16.mxu0 0
    %2237 = vmatpush1.bf16.xpose.msra.mxu0 %v2234
    %2238 = vmatprep.subr.bf16.mxu0 0
    %2239 = vmatpush1.bf16.xpose.msra.mxu0 0
    %2240 = vmatprep.subr.bf16.mxu0 0
    %2241 = vmatpush1.bf16.xpose.msra.mxu0 0
    %2242 = vmatprep.subr.bf16.mxu0 0
    %2243 = vmatpush1.bf16.xpose.msra.mxu0 0
    %2244 = vmatprep.subr.bf16.mxu0 0
    %2245 = vmatpush1.bf16.xpose.msra.mxu0 0
    %2246 = vmatprep.subr.bf16.mxu0 0
    %2247 = vmatpush1.bf16.xpose.msra.mxu0 0
    %2248 = vmatprep.subr.bf16.mxu0 0
    %2249 = vmatpush1.bf16.xpose.msra.mxu0 0
    %2250 = vmatprep.subr.bf16.mxu0 0
    %2251 = vmatpush1.bf16.xpose.msra.mxu0 0
    %2252 = vmatprep.subr.bf16.mxu0 0
    %2253 = vmatpush1.bf16.xpose.msra.mxu0 0
    %2254 = vmatprep.subr.bf16.mxu0 0
    %2255 = vmatpush1.bf16.xpose.msra.mxu0 0
    %2256 = vmatprep.subr.bf16.mxu0 0
    %2257 = vmatpush1.bf16.xpose.msra.mxu0 0
    %2258 = vmatprep.subr.bf16.mxu0 0
    %2259 = vmatpush1.bf16.xpose.msra.mxu0 0
    %2260 = vmatprep.subr.bf16.mxu0 0
    %2261 = vmatpush1.bf16.xpose.msra.mxu0 0
    %2262 = vmatprep.subr.bf16.mxu0 0
    %2263 = vmatpush1.bf16.xpose.msra.mxu0 0
    %2264 = vmatprep.subr.bf16.mxu0 0
    %2265 = vmatpush1.bf16.xpose.msra.mxu0 0
    %2266 = vmatprep.subr.bf16.mxu0 0
    %2267 = vmatpush1.bf16.xpose.msra.mxu0 0
    %2268 = vmatprep.mubr.bf16.mxu0 0
    %2269 = vmatmul.mubr.bf16.gmra.mrb[0].mxu0 %v2231
    %v2270 = vpop.f32.mrb[0].mxu0
    %v2271 = vadd.f32 0.0, %v2270
    %v2272 = vpop.f32.mrb[0].mxu0
    %v2273 = vpop.f32.mrb[0].mxu0
    %v2274 = vadd.f32 0.0, %v2273
    %v2275 = vpop.f32.mrb[0].mxu0
    %2276 = vdwg.mxu0
    %2278 = vrot.lane.b32.xlu0 %v1183, 120
    %v2279 = vpop.permute.xlu0 %2278
    %v2281 = vsel %vm1229, %v1119, 0
    %v2284 = vsel %vm1229, %v2279, 0
    %2286 = vmatprep.subr.bf16.mxu0 0
    %2287 = vmatpush1.bf16.xpose.msra.mxu0 %v2284
    %2288 = vmatprep.subr.bf16.mxu0 0
    %2289 = vmatpush1.bf16.xpose.msra.mxu0 0
    %2290 = vmatprep.subr.bf16.mxu0 0
    %2291 = vmatpush1.bf16.xpose.msra.mxu0 0
    %2292 = vmatprep.subr.bf16.mxu0 0
    %2293 = vmatpush1.bf16.xpose.msra.mxu0 0
    %2294 = vmatprep.subr.bf16.mxu0 0
    %2295 = vmatpush1.bf16.xpose.msra.mxu0 0
    %2296 = vmatprep.subr.bf16.mxu0 0
    %2297 = vmatpush1.bf16.xpose.msra.mxu0 0
    %2298 = vmatprep.subr.bf16.mxu0 0
    %2299 = vmatpush1.bf16.xpose.msra.mxu0 0
    %2300 = vmatprep.subr.bf16.mxu0 0
    %2301 = vmatpush1.bf16.xpose.msra.mxu0 0
    %2302 = vmatprep.subr.bf16.mxu0 0
    %2303 = vmatpush1.bf16.xpose.msra.mxu0 0
    %2304 = vmatprep.subr.bf16.mxu0 0
    %2305 = vmatpush1.bf16.xpose.msra.mxu0 0
    %2306 = vmatprep.subr.bf16.mxu0 0
    %2307 = vmatpush1.bf16.xpose.msra.mxu0 0
    %2308 = vmatprep.subr.bf16.mxu0 0
    %2309 = vmatpush1.bf16.xpose.msra.mxu0 0
    %2310 = vmatprep.subr.bf16.mxu0 0
    %2311 = vmatpush1.bf16.xpose.msra.mxu0 0
    %2312 = vmatprep.subr.bf16.mxu0 0
    %2313 = vmatpush1.bf16.xpose.msra.mxu0 0
    %2314 = vmatprep.subr.bf16.mxu0 0
    %2315 = vmatpush1.bf16.xpose.msra.mxu0 0
    %2316 = vmatprep.subr.bf16.mxu0 0
    %2317 = vmatpush1.bf16.xpose.msra.mxu0 0
    %2318 = vmatprep.mubr.bf16.mxu0 0
    %2319 = vmatmul.mubr.bf16.gmra.mrb[0].mxu0 %v2281
    %v2320 = vpop.f32.mrb[0].mxu0
    %v2321 = vadd.f32 0.0, %v2320
    %v2322 = vpop.f32.mrb[0].mxu0
    %v2323 = vpop.f32.mrb[0].mxu0
    %v2324 = vadd.f32 0.0, %v2323
    %v2325 = vpop.f32.mrb[0].mxu0
    %2326 = vdwg.mxu0
    %2328 = vrot.lane.b32.xlu0 %v1184, 120
    %v2329 = vpop.permute.xlu0 %2328
    %v2331 = vsel %vm1229, %v1120, 0
    %v2334 = vsel %vm1229, %v2329, 0
    %2336 = vmatprep.subr.bf16.mxu0 0
    %2337 = vmatpush1.bf16.xpose.msra.mxu0 %v2334
    %2338 = vmatprep.subr.bf16.mxu0 0
    %2339 = vmatpush1.bf16.xpose.msra.mxu0 0
    %2340 = vmatprep.subr.bf16.mxu0 0
    %2341 = vmatpush1.bf16.xpose.msra.mxu0 0
    %2342 = vmatprep.subr.bf16.mxu0 0
    %2343 = vmatpush1.bf16.xpose.msra.mxu0 0
    %2344 = vmatprep.subr.bf16.mxu0 0
    %2345 = vmatpush1.bf16.xpose.msra.mxu0 0
    %2346 = vmatprep.subr.bf16.mxu0 0
    %2347 = vmatpush1.bf16.xpose.msra.mxu0 0
    %2348 = vmatprep.subr.bf16.mxu0 0
    %2349 = vmatpush1.bf16.xpose.msra.mxu0 0
    %2350 = vmatprep.subr.bf16.mxu0 0
    %2351 = vmatpush1.bf16.xpose.msra.mxu0 0
    %2352 = vmatprep.subr.bf16.mxu0 0
    %2353 = vmatpush1.bf16.xpose.msra.mxu0 0
    %2354 = vmatprep.subr.bf16.mxu0 0
    %2355 = vmatpush1.bf16.xpose.msra.mxu0 0
    %2356 = vmatprep.subr.bf16.mxu0 0
    %2357 = vmatpush1.bf16.xpose.msra.mxu0 0
    %2358 = vmatprep.subr.bf16.mxu0 0
    %2359 = vmatpush1.bf16.xpose.msra.mxu0 0
    %2360 = vmatprep.subr.bf16.mxu0 0
    %2361 = vmatpush1.bf16.xpose.msra.mxu0 0
    %2362 = vmatprep.subr.bf16.mxu0 0
    %2363 = vmatpush1.bf16.xpose.msra.mxu0 0
    %2364 = vmatprep.subr.bf16.mxu0 0
    %2365 = vmatpush1.bf16.xpose.msra.mxu0 0
    %2366 = vmatprep.subr.bf16.mxu0 0
    %2367 = vmatpush1.bf16.xpose.msra.mxu0 0
    %2368 = vmatprep.mubr.bf16.mxu0 0
    %2369 = vmatmul.mubr.bf16.gmra.mrb[0].mxu0 %v2331
    %v2370 = vpop.f32.mrb[0].mxu0
    %v2371 = vadd.f32 0.0, %v2370
    %v2372 = vpop.f32.mrb[0].mxu0
    %v2373 = vpop.f32.mrb[0].mxu0
    %v2374 = vadd.f32 0.0, %v2373
    %v2375 = vpop.f32.mrb[0].mxu0
    %2376 = vdwg.mxu0
    %2378 = vrot.lane.b32.xlu0 %v1185, 120
    %v2379 = vpop.permute.xlu0 %2378
    %v2381 = vsel %vm1229, %v1121, 0
    %v2384 = vsel %vm1229, %v2379, 0
    %2386 = vmatprep.subr.bf16.mxu0 0
    %2387 = vmatpush1.bf16.xpose.msra.mxu0 %v2384
    %2388 = vmatprep.subr.bf16.mxu0 0
    %2389 = vmatpush1.bf16.xpose.msra.mxu0 0
    %2390 = vmatprep.subr.bf16.mxu0 0
    %2391 = vmatpush1.bf16.xpose.msra.mxu0 0
    %2392 = vmatprep.subr.bf16.mxu0 0
    %2393 = vmatpush1.bf16.xpose.msra.mxu0 0
    %2394 = vmatprep.subr.bf16.mxu0 0
    %2395 = vmatpush1.bf16.xpose.msra.mxu0 0
    %2396 = vmatprep.subr.bf16.mxu0 0
    %2397 = vmatpush1.bf16.xpose.msra.mxu0 0
    %2398 = vmatprep.subr.bf16.mxu0 0
    %2399 = vmatpush1.bf16.xpose.msra.mxu0 0
    %2400 = vmatprep.subr.bf16.mxu0 0
    %2401 = vmatpush1.bf16.xpose.msra.mxu0 0
    %2402 = vmatprep.subr.bf16.mxu0 0
    %2403 = vmatpush1.bf16.xpose.msra.mxu0 0
    %2404 = vmatprep.subr.bf16.mxu0 0
    %2405 = vmatpush1.bf16.xpose.msra.mxu0 0
    %2406 = vmatprep.subr.bf16.mxu0 0
    %2407 = vmatpush1.bf16.xpose.msra.mxu0 0
    %2408 = vmatprep.subr.bf16.mxu0 0
    %2409 = vmatpush1.bf16.xpose.msra.mxu0 0
    %2410 = vmatprep.subr.bf16.mxu0 0
    %2411 = vmatpush1.bf16.xpose.msra.mxu0 0
    %2412 = vmatprep.subr.bf16.mxu0 0
    %2413 = vmatpush1.bf16.xpose.msra.mxu0 0
    %2414 = vmatprep.subr.bf16.mxu0 0
    %2415 = vmatpush1.bf16.xpose.msra.mxu0 0
    %2416 = vmatprep.subr.bf16.mxu0 0
    %2417 = vmatpush1.bf16.xpose.msra.mxu0 0
    %2418 = vmatprep.mubr.bf16.mxu0 0
    %2419 = vmatmul.mubr.bf16.gmra.mrb[0].mxu0 %v2381
    %v2420 = vpop.f32.mrb[0].mxu0
    %v2421 = vadd.f32 0.0, %v2420
    %v2422 = vpop.f32.mrb[0].mxu0
    %v2423 = vpop.f32.mrb[0].mxu0
    %v2424 = vadd.f32 0.0, %v2423
    %v2425 = vpop.f32.mrb[0].mxu0
    %2426 = vdwg.mxu0
    %2428 = vrot.lane.b32.xlu0 %v1186, 120
    %v2429 = vpop.permute.xlu0 %2428
    %v2431 = vsel %vm1229, %v1122, 0
    %v2434 = vsel %vm1229, %v2429, 0
    %2436 = vmatprep.subr.bf16.mxu0 0
    %2437 = vmatpush1.bf16.xpose.msra.mxu0 %v2434
    %2438 = vmatprep.subr.bf16.mxu0 0
    %2439 = vmatpush1.bf16.xpose.msra.mxu0 0
    %2440 = vmatprep.subr.bf16.mxu0 0
    %2441 = vmatpush1.bf16.xpose.msra.mxu0 0
    %2442 = vmatprep.subr.bf16.mxu0 0
    %2443 = vmatpush1.bf16.xpose.msra.mxu0 0
    %2444 = vmatprep.subr.bf16.mxu0 0
    %2445 = vmatpush1.bf16.xpose.msra.mxu0 0
    %2446 = vmatprep.subr.bf16.mxu0 0
    %2447 = vmatpush1.bf16.xpose.msra.mxu0 0
    %2448 = vmatprep.subr.bf16.mxu0 0
    %2449 = vmatpush1.bf16.xpose.msra.mxu0 0
    %2450 = vmatprep.subr.bf16.mxu0 0
    %2451 = vmatpush1.bf16.xpose.msra.mxu0 0
    %2452 = vmatprep.subr.bf16.mxu0 0
    %2453 = vmatpush1.bf16.xpose.msra.mxu0 0
    %2454 = vmatprep.subr.bf16.mxu0 0
    %2455 = vmatpush1.bf16.xpose.msra.mxu0 0
    %2456 = vmatprep.subr.bf16.mxu0 0
    %2457 = vmatpush1.bf16.xpose.msra.mxu0 0
    %2458 = vmatprep.subr.bf16.mxu0 0
    %2459 = vmatpush1.bf16.xpose.msra.mxu0 0
    %2460 = vmatprep.subr.bf16.mxu0 0
    %2461 = vmatpush1.bf16.xpose.msra.mxu0 0
    %2462 = vmatprep.subr.bf16.mxu0 0
    %2463 = vmatpush1.bf16.xpose.msra.mxu0 0
    %2464 = vmatprep.subr.bf16.mxu0 0
    %2465 = vmatpush1.bf16.xpose.msra.mxu0 0
    %2466 = vmatprep.subr.bf16.mxu0 0
    %2467 = vmatpush1.bf16.xpose.msra.mxu0 0
    %2468 = vmatprep.mubr.bf16.mxu0 0
    %2469 = vmatmul.mubr.bf16.gmra.mrb[0].mxu0 %v2431
    %v2470 = vpop.f32.mrb[0].mxu0
    %v2471 = vadd.f32 0.0, %v2470
    %v2472 = vpop.f32.mrb[0].mxu0
    %v2473 = vpop.f32.mrb[0].mxu0
    %v2474 = vadd.f32 0.0, %v2473
    %v2475 = vpop.f32.mrb[0].mxu0
    %2476 = vdwg.mxu0
    %2478 = vrot.lane.b32.xlu0 %v1187, 120
    %v2479 = vpop.permute.xlu0 %2478
    %v2481 = vsel %vm1229, %v1123, 0
    %v2484 = vsel %vm1229, %v2479, 0
    %2486 = vmatprep.subr.bf16.mxu0 0
    %2487 = vmatpush1.bf16.xpose.msra.mxu0 %v2484
    %2488 = vmatprep.subr.bf16.mxu0 0
    %2489 = vmatpush1.bf16.xpose.msra.mxu0 0
    %2490 = vmatprep.subr.bf16.mxu0 0
    %2491 = vmatpush1.bf16.xpose.msra.mxu0 0
    %2492 = vmatprep.subr.bf16.mxu0 0
    %2493 = vmatpush1.bf16.xpose.msra.mxu0 0
    %2494 = vmatprep.subr.bf16.mxu0 0
    %2495 = vmatpush1.bf16.xpose.msra.mxu0 0
    %2496 = vmatprep.subr.bf16.mxu0 0
    %2497 = vmatpush1.bf16.xpose.msra.mxu0 0
    %2498 = vmatprep.subr.bf16.mxu0 0
    %2499 = vmatpush1.bf16.xpose.msra.mxu0 0
    %2500 = vmatprep.subr.bf16.mxu0 0
    %2501 = vmatpush1.bf16.xpose.msra.mxu0 0
    %2502 = vmatprep.subr.bf16.mxu0 0
    %2503 = vmatpush1.bf16.xpose.msra.mxu0 0
    %2504 = vmatprep.subr.bf16.mxu0 0
    %2505 = vmatpush1.bf16.xpose.msra.mxu0 0
    %2506 = vmatprep.subr.bf16.mxu0 0
    %2507 = vmatpush1.bf16.xpose.msra.mxu0 0
    %2508 = vmatprep.subr.bf16.mxu0 0
    %2509 = vmatpush1.bf16.xpose.msra.mxu0 0
    %2510 = vmatprep.subr.bf16.mxu0 0
    %2511 = vmatpush1.bf16.xpose.msra.mxu0 0
    %2512 = vmatprep.subr.bf16.mxu0 0
    %2513 = vmatpush1.bf16.xpose.msra.mxu0 0
    %2514 = vmatprep.subr.bf16.mxu0 0
    %2515 = vmatpush1.bf16.xpose.msra.mxu0 0
    %2516 = vmatprep.subr.bf16.mxu0 0
    %2517 = vmatpush1.bf16.xpose.msra.mxu0 0
    %2518 = vmatprep.mubr.bf16.mxu0 0
    %2519 = vmatmul.mubr.bf16.gmra.mrb[0].mxu0 %v2481
    %v2520 = vpop.f32.mrb[0].mxu0
    %v2521 = vadd.f32 0.0, %v2520
    %v2522 = vpop.f32.mrb[0].mxu0
    %v2523 = vpop.f32.mrb[0].mxu0
    %v2524 = vadd.f32 0.0, %v2523
    %v2525 = vpop.f32.mrb[0].mxu0
    %2526 = vdwg.mxu0
    %2528 = vrot.lane.b32.xlu0 %v1188, 120
    %v2529 = vpop.permute.xlu0 %2528
    %v2531 = vsel %vm1229, %v1124, 0
    %v2534 = vsel %vm1229, %v2529, 0
    %2536 = vmatprep.subr.bf16.mxu0 0
    %2537 = vmatpush1.bf16.xpose.msra.mxu0 %v2534
    %2538 = vmatprep.subr.bf16.mxu0 0
    %2539 = vmatpush1.bf16.xpose.msra.mxu0 0
    %2540 = vmatprep.subr.bf16.mxu0 0
    %2541 = vmatpush1.bf16.xpose.msra.mxu0 0
    %2542 = vmatprep.subr.bf16.mxu0 0
    %2543 = vmatpush1.bf16.xpose.msra.mxu0 0
    %2544 = vmatprep.subr.bf16.mxu0 0
    %2545 = vmatpush1.bf16.xpose.msra.mxu0 0
    %2546 = vmatprep.subr.bf16.mxu0 0
    %2547 = vmatpush1.bf16.xpose.msra.mxu0 0
    %2548 = vmatprep.subr.bf16.mxu0 0
    %2549 = vmatpush1.bf16.xpose.msra.mxu0 0
    %2550 = vmatprep.subr.bf16.mxu0 0
    %2551 = vmatpush1.bf16.xpose.msra.mxu0 0
    %2552 = vmatprep.subr.bf16.mxu0 0
    %2553 = vmatpush1.bf16.xpose.msra.mxu0 0
    %2554 = vmatprep.subr.bf16.mxu0 0
    %2555 = vmatpush1.bf16.xpose.msra.mxu0 0
    %2556 = vmatprep.subr.bf16.mxu0 0
    %2557 = vmatpush1.bf16.xpose.msra.mxu0 0
    %2558 = vmatprep.subr.bf16.mxu0 0
    %2559 = vmatpush1.bf16.xpose.msra.mxu0 0
    %2560 = vmatprep.subr.bf16.mxu0 0
    %2561 = vmatpush1.bf16.xpose.msra.mxu0 0
    %2562 = vmatprep.subr.bf16.mxu0 0
    %2563 = vmatpush1.bf16.xpose.msra.mxu0 0
    %2564 = vmatprep.subr.bf16.mxu0 0
    %2565 = vmatpush1.bf16.xpose.msra.mxu0 0
    %2566 = vmatprep.subr.bf16.mxu0 0
    %2567 = vmatpush1.bf16.xpose.msra.mxu0 0
    %2568 = vmatprep.mubr.bf16.mxu0 0
    %2569 = vmatmul.mubr.bf16.gmra.mrb[0].mxu0 %v2531
    %v2570 = vpop.f32.mrb[0].mxu0
    %v2571 = vadd.f32 0.0, %v2570
    %v2572 = vpop.f32.mrb[0].mxu0
    %v2573 = vpop.f32.mrb[0].mxu0
    %v2574 = vadd.f32 0.0, %v2573
    %v2575 = vpop.f32.mrb[0].mxu0
    %2576 = vdwg.mxu0
    %2578 = vrot.lane.b32.xlu0 %v1189, 120
    %v2579 = vpop.permute.xlu0 %2578
    %v2581 = vsel %vm1229, %v1125, 0
    %v2584 = vsel %vm1229, %v2579, 0
    %2586 = vmatprep.subr.bf16.mxu0 0
    %2587 = vmatpush1.bf16.xpose.msra.mxu0 %v2584
    %2588 = vmatprep.subr.bf16.mxu0 0
    %2589 = vmatpush1.bf16.xpose.msra.mxu0 0
    %2590 = vmatprep.subr.bf16.mxu0 0
    %2591 = vmatpush1.bf16.xpose.msra.mxu0 0
    %2592 = vmatprep.subr.bf16.mxu0 0
    %2593 = vmatpush1.bf16.xpose.msra.mxu0 0
    %2594 = vmatprep.subr.bf16.mxu0 0
    %2595 = vmatpush1.bf16.xpose.msra.mxu0 0
    %2596 = vmatprep.subr.bf16.mxu0 0
    %2597 = vmatpush1.bf16.xpose.msra.mxu0 0
    %2598 = vmatprep.subr.bf16.mxu0 0
    %2599 = vmatpush1.bf16.xpose.msra.mxu0 0
    %2600 = vmatprep.subr.bf16.mxu0 0
    %2601 = vmatpush1.bf16.xpose.msra.mxu0 0
    %2602 = vmatprep.subr.bf16.mxu0 0
    %2603 = vmatpush1.bf16.xpose.msra.mxu0 0
    %2604 = vmatprep.subr.bf16.mxu0 0
    %2605 = vmatpush1.bf16.xpose.msra.mxu0 0
    %2606 = vmatprep.subr.bf16.mxu0 0
    %2607 = vmatpush1.bf16.xpose.msra.mxu0 0
    %2608 = vmatprep.subr.bf16.mxu0 0
    %2609 = vmatpush1.bf16.xpose.msra.mxu0 0
    %2610 = vmatprep.subr.bf16.mxu0 0
    %2611 = vmatpush1.bf16.xpose.msra.mxu0 0
    %2612 = vmatprep.subr.bf16.mxu0 0
    %2613 = vmatpush1.bf16.xpose.msra.mxu0 0
    %2614 = vmatprep.subr.bf16.mxu0 0
    %2615 = vmatpush1.bf16.xpose.msra.mxu0 0
    %2616 = vmatprep.subr.bf16.mxu0 0
    %2617 = vmatpush1.bf16.xpose.msra.mxu0 0
    %2618 = vmatprep.mubr.bf16.mxu0 0
    %2619 = vmatmul.mubr.bf16.gmra.mrb[0].mxu0 %v2581
    %v2620 = vpop.f32.mrb[0].mxu0
    %v2621 = vadd.f32 0.0, %v2620
    %v2622 = vpop.f32.mrb[0].mxu0
    %v2623 = vpop.f32.mrb[0].mxu0
    %v2624 = vadd.f32 0.0, %v2623
    %v2625 = vpop.f32.mrb[0].mxu0
    %2626 = vdwg.mxu0
    %2628 = vrot.lane.b32.xlu0 %v1190, 120
    %v2629 = vpop.permute.xlu0 %2628
    %v2631 = vsel %vm1229, %v1126, 0
    %v2634 = vsel %vm1229, %v2629, 0
    %2636 = vmatprep.subr.bf16.mxu0 0
    %2637 = vmatpush1.bf16.xpose.msra.mxu0 %v2634
    %2638 = vmatprep.subr.bf16.mxu0 0
    %2639 = vmatpush1.bf16.xpose.msra.mxu0 0
    %2640 = vmatprep.subr.bf16.mxu0 0
    %2641 = vmatpush1.bf16.xpose.msra.mxu0 0
    %2642 = vmatprep.subr.bf16.mxu0 0
    %2643 = vmatpush1.bf16.xpose.msra.mxu0 0
    %2644 = vmatprep.subr.bf16.mxu0 0
    %2645 = vmatpush1.bf16.xpose.msra.mxu0 0
    %2646 = vmatprep.subr.bf16.mxu0 0
    %2647 = vmatpush1.bf16.xpose.msra.mxu0 0
    %2648 = vmatprep.subr.bf16.mxu0 0
    %2649 = vmatpush1.bf16.xpose.msra.mxu0 0
    %2650 = vmatprep.subr.bf16.mxu0 0
    %2651 = vmatpush1.bf16.xpose.msra.mxu0 0
    %2652 = vmatprep.subr.bf16.mxu0 0
    %2653 = vmatpush1.bf16.xpose.msra.mxu0 0
    %2654 = vmatprep.subr.bf16.mxu0 0
    %2655 = vmatpush1.bf16.xpose.msra.mxu0 0
    %2656 = vmatprep.subr.bf16.mxu0 0
    %2657 = vmatpush1.bf16.xpose.msra.mxu0 0
    %2658 = vmatprep.subr.bf16.mxu0 0
    %2659 = vmatpush1.bf16.xpose.msra.mxu0 0
    %2660 = vmatprep.subr.bf16.mxu0 0
    %2661 = vmatpush1.bf16.xpose.msra.mxu0 0
    %2662 = vmatprep.subr.bf16.mxu0 0
    %2663 = vmatpush1.bf16.xpose.msra.mxu0 0
    %2664 = vmatprep.subr.bf16.mxu0 0
    %2665 = vmatpush1.bf16.xpose.msra.mxu0 0
    %2666 = vmatprep.subr.bf16.mxu0 0
    %2667 = vmatpush1.bf16.xpose.msra.mxu0 0
    %2668 = vmatprep.mubr.bf16.mxu0 0
    %2669 = vmatmul.mubr.bf16.gmra.mrb[0].mxu0 %v2631
    %v2670 = vpop.f32.mrb[0].mxu0
    %v2671 = vadd.f32 0.0, %v2670
    %v2672 = vpop.f32.mrb[0].mxu0
    %v2673 = vpop.f32.mrb[0].mxu0
    %v2674 = vadd.f32 0.0, %v2673
    %v2675 = vpop.f32.mrb[0].mxu0
    %2676 = vdwg.mxu0
    %2678 = vrot.lane.b32.xlu0 %v1191, 120
    %v2679 = vpop.permute.xlu0 %2678
    %v2681 = vsel %vm1229, %v1127, 0
    %v2684 = vsel %vm1229, %v2679, 0
    %2686 = vmatprep.subr.bf16.mxu0 0
    %2687 = vmatpush1.bf16.xpose.msra.mxu0 %v2684
    %2688 = vmatprep.subr.bf16.mxu0 0
    %2689 = vmatpush1.bf16.xpose.msra.mxu0 0
    %2690 = vmatprep.subr.bf16.mxu0 0
    %2691 = vmatpush1.bf16.xpose.msra.mxu0 0
    %2692 = vmatprep.subr.bf16.mxu0 0
    %2693 = vmatpush1.bf16.xpose.msra.mxu0 0
    %2694 = vmatprep.subr.bf16.mxu0 0
    %2695 = vmatpush1.bf16.xpose.msra.mxu0 0
    %2696 = vmatprep.subr.bf16.mxu0 0
    %2697 = vmatpush1.bf16.xpose.msra.mxu0 0
    %2698 = vmatprep.subr.bf16.mxu0 0
    %2699 = vmatpush1.bf16.xpose.msra.mxu0 0
    %2700 = vmatprep.subr.bf16.mxu0 0
    %2701 = vmatpush1.bf16.xpose.msra.mxu0 0
    %2702 = vmatprep.subr.bf16.mxu0 0
    %2703 = vmatpush1.bf16.xpose.msra.mxu0 0
    %2704 = vmatprep.subr.bf16.mxu0 0
    %2705 = vmatpush1.bf16.xpose.msra.mxu0 0
    %2706 = vmatprep.subr.bf16.mxu0 0
    %2707 = vmatpush1.bf16.xpose.msra.mxu0 0
    %2708 = vmatprep.subr.bf16.mxu0 0
    %2709 = vmatpush1.bf16.xpose.msra.mxu0 0
    %2710 = vmatprep.subr.bf16.mxu0 0
    %2711 = vmatpush1.bf16.xpose.msra.mxu0 0
    %2712 = vmatprep.subr.bf16.mxu0 0
    %2713 = vmatpush1.bf16.xpose.msra.mxu0 0
    %2714 = vmatprep.subr.bf16.mxu0 0
    %2715 = vmatpush1.bf16.xpose.msra.mxu0 0
    %2716 = vmatprep.subr.bf16.mxu0 0
    %2717 = vmatpush1.bf16.xpose.msra.mxu0 0
    %2718 = vmatprep.mubr.bf16.mxu0 0
    %2719 = vmatmul.mubr.bf16.gmra.mrb[0].mxu0 %v2681
    %v2720 = vpop.f32.mrb[0].mxu0
    %v2721 = vadd.f32 0.0, %v2720
    %v2722 = vpop.f32.mrb[0].mxu0
    %v2723 = vpop.f32.mrb[0].mxu0
    %v2724 = vadd.f32 0.0, %v2723
    %v2725 = vpop.f32.mrb[0].mxu0
    %2726 = vdwg.mxu0
    %2728 = vrot.lane.b32.xlu0 %v1192, 120
    %v2729 = vpop.permute.xlu0 %2728
    %v2731 = vsel %vm1229, %v1128, 0
    %v2734 = vsel %vm1229, %v2729, 0
    %2736 = vmatprep.subr.bf16.mxu0 0
    %2737 = vmatpush1.bf16.xpose.msra.mxu0 %v2734
    %2738 = vmatprep.subr.bf16.mxu0 0
    %2739 = vmatpush1.bf16.xpose.msra.mxu0 0
    %2740 = vmatprep.subr.bf16.mxu0 0
    %2741 = vmatpush1.bf16.xpose.msra.mxu0 0
    %2742 = vmatprep.subr.bf16.mxu0 0
    %2743 = vmatpush1.bf16.xpose.msra.mxu0 0
    %2744 = vmatprep.subr.bf16.mxu0 0
    %2745 = vmatpush1.bf16.xpose.msra.mxu0 0
    %2746 = vmatprep.subr.bf16.mxu0 0
    %2747 = vmatpush1.bf16.xpose.msra.mxu0 0
    %2748 = vmatprep.subr.bf16.mxu0 0
    %2749 = vmatpush1.bf16.xpose.msra.mxu0 0
    %2750 = vmatprep.subr.bf16.mxu0 0
    %2751 = vmatpush1.bf16.xpose.msra.mxu0 0
    %2752 = vmatprep.subr.bf16.mxu0 0
    %2753 = vmatpush1.bf16.xpose.msra.mxu0 0
    %2754 = vmatprep.subr.bf16.mxu0 0
    %2755 = vmatpush1.bf16.xpose.msra.mxu0 0
    %2756 = vmatprep.subr.bf16.mxu0 0
    %2757 = vmatpush1.bf16.xpose.msra.mxu0 0
    %2758 = vmatprep.subr.bf16.mxu0 0
    %2759 = vmatpush1.bf16.xpose.msra.mxu0 0
    %2760 = vmatprep.subr.bf16.mxu0 0
    %2761 = vmatpush1.bf16.xpose.msra.mxu0 0
    %2762 = vmatprep.subr.bf16.mxu0 0
    %2763 = vmatpush1.bf16.xpose.msra.mxu0 0
    %2764 = vmatprep.subr.bf16.mxu0 0
    %2765 = vmatpush1.bf16.xpose.msra.mxu0 0
    %2766 = vmatprep.subr.bf16.mxu0 0
    %2767 = vmatpush1.bf16.xpose.msra.mxu0 0
    %2768 = vmatprep.mubr.bf16.mxu0 0
    %2769 = vmatmul.mubr.bf16.gmra.mrb[0].mxu0 %v2731
    %v2770 = vpop.f32.mrb[0].mxu0
    %v2771 = vadd.f32 0.0, %v2770
    %v2772 = vpop.f32.mrb[0].mxu0
    %v2773 = vpop.f32.mrb[0].mxu0
    %v2774 = vadd.f32 0.0, %v2773
    %v2775 = vpop.f32.mrb[0].mxu0
    %2776 = vdwg.mxu0
    %2778 = vrot.lane.b32.xlu0 %v1193, 120
    %v2779 = vpop.permute.xlu0 %2778
    %v2781 = vsel %vm1229, %v1129, 0
    %v2784 = vsel %vm1229, %v2779, 0
    %2786 = vmatprep.subr.bf16.mxu0 0
    %2787 = vmatpush1.bf16.xpose.msra.mxu0 %v2784
    %2788 = vmatprep.subr.bf16.mxu0 0
    %2789 = vmatpush1.bf16.xpose.msra.mxu0 0
    %2790 = vmatprep.subr.bf16.mxu0 0
    %2791 = vmatpush1.bf16.xpose.msra.mxu0 0
    %2792 = vmatprep.subr.bf16.mxu0 0
    %2793 = vmatpush1.bf16.xpose.msra.mxu0 0
    %2794 = vmatprep.subr.bf16.mxu0 0
    %2795 = vmatpush1.bf16.xpose.msra.mxu0 0
    %2796 = vmatprep.subr.bf16.mxu0 0
    %2797 = vmatpush1.bf16.xpose.msra.mxu0 0
    %2798 = vmatprep.subr.bf16.mxu0 0
    %2799 = vmatpush1.bf16.xpose.msra.mxu0 0
    %2800 = vmatprep.subr.bf16.mxu0 0
    %2801 = vmatpush1.bf16.xpose.msra.mxu0 0
    %2802 = vmatprep.subr.bf16.mxu0 0
    %2803 = vmatpush1.bf16.xpose.msra.mxu0 0
    %2804 = vmatprep.subr.bf16.mxu0 0
    %2805 = vmatpush1.bf16.xpose.msra.mxu0 0
    %2806 = vmatprep.subr.bf16.mxu0 0
    %2807 = vmatpush1.bf16.xpose.msra.mxu0 0
    %2808 = vmatprep.subr.bf16.mxu0 0
    %2809 = vmatpush1.bf16.xpose.msra.mxu0 0
    %2810 = vmatprep.subr.bf16.mxu0 0
    %2811 = vmatpush1.bf16.xpose.msra.mxu0 0
    %2812 = vmatprep.subr.bf16.mxu0 0
    %2813 = vmatpush1.bf16.xpose.msra.mxu0 0
    %2814 = vmatprep.subr.bf16.mxu0 0
    %2815 = vmatpush1.bf16.xpose.msra.mxu0 0
    %2816 = vmatprep.subr.bf16.mxu0 0
    %2817 = vmatpush1.bf16.xpose.msra.mxu0 0
    %2818 = vmatprep.mubr.bf16.mxu0 0
    %2819 = vmatmul.mubr.bf16.gmra.mrb[0].mxu0 %v2781
    %v2820 = vpop.f32.mrb[0].mxu0
    %v2821 = vadd.f32 0.0, %v2820
    %v2822 = vpop.f32.mrb[0].mxu0
    %v2823 = vpop.f32.mrb[0].mxu0
    %v2824 = vadd.f32 0.0, %v2823
    %v2825 = vpop.f32.mrb[0].mxu0
    %2826 = vdwg.mxu0
    %2828 = vrot.lane.b32.xlu0 %v1194, 120
    %v2829 = vpop.permute.xlu0 %2828
    %v2831 = vsel %vm1229, %v1130, 0
    %v2834 = vsel %vm1229, %v2829, 0
    %2836 = vmatprep.subr.bf16.mxu0 0
    %2837 = vmatpush1.bf16.xpose.msra.mxu0 %v2834
    %2838 = vmatprep.subr.bf16.mxu0 0
    %2839 = vmatpush1.bf16.xpose.msra.mxu0 0
    %2840 = vmatprep.subr.bf16.mxu0 0
    %2841 = vmatpush1.bf16.xpose.msra.mxu0 0
    %2842 = vmatprep.subr.bf16.mxu0 0
    %2843 = vmatpush1.bf16.xpose.msra.mxu0 0
    %2844 = vmatprep.subr.bf16.mxu0 0
    %2845 = vmatpush1.bf16.xpose.msra.mxu0 0
    %2846 = vmatprep.subr.bf16.mxu0 0
    %2847 = vmatpush1.bf16.xpose.msra.mxu0 0
    %2848 = vmatprep.subr.bf16.mxu0 0
    %2849 = vmatpush1.bf16.xpose.msra.mxu0 0
    %2850 = vmatprep.subr.bf16.mxu0 0
    %2851 = vmatpush1.bf16.xpose.msra.mxu0 0
    %2852 = vmatprep.subr.bf16.mxu0 0
    %2853 = vmatpush1.bf16.xpose.msra.mxu0 0
    %2854 = vmatprep.subr.bf16.mxu0 0
    %2855 = vmatpush1.bf16.xpose.msra.mxu0 0
    %2856 = vmatprep.subr.bf16.mxu0 0
    %2857 = vmatpush1.bf16.xpose.msra.mxu0 0
    %2858 = vmatprep.subr.bf16.mxu0 0
    %2859 = vmatpush1.bf16.xpose.msra.mxu0 0
    %2860 = vmatprep.subr.bf16.mxu0 0
    %2861 = vmatpush1.bf16.xpose.msra.mxu0 0
    %2862 = vmatprep.subr.bf16.mxu0 0
    %2863 = vmatpush1.bf16.xpose.msra.mxu0 0
    %2864 = vmatprep.subr.bf16.mxu0 0
    %2865 = vmatpush1.bf16.xpose.msra.mxu0 0
    %2866 = vmatprep.subr.bf16.mxu0 0
    %2867 = vmatpush1.bf16.xpose.msra.mxu0 0
    %2868 = vmatprep.mubr.bf16.mxu0 0
    %2869 = vmatmul.mubr.bf16.gmra.mrb[0].mxu0 %v2831
    %v2870 = vpop.f32.mrb[0].mxu0
    %v2871 = vadd.f32 0.0, %v2870
    %v2872 = vpop.f32.mrb[0].mxu0
    %v2873 = vpop.f32.mrb[0].mxu0
    %v2874 = vadd.f32 0.0, %v2873
    %v2875 = vpop.f32.mrb[0].mxu0
    %2876 = vdwg.mxu0
    %2878 = vrot.lane.b32.xlu0 %v1195, 120
    %v2879 = vpop.permute.xlu0 %2878
    %v2881 = vsel %vm1229, %v1131, 0
    %v2884 = vsel %vm1229, %v2879, 0
    %2886 = vmatprep.subr.bf16.mxu0 0
    %2887 = vmatpush1.bf16.xpose.msra.mxu0 %v2884
    %2888 = vmatprep.subr.bf16.mxu0 0
    %2889 = vmatpush1.bf16.xpose.msra.mxu0 0
    %2890 = vmatprep.subr.bf16.mxu0 0
    %2891 = vmatpush1.bf16.xpose.msra.mxu0 0
    %2892 = vmatprep.subr.bf16.mxu0 0
    %2893 = vmatpush1.bf16.xpose.msra.mxu0 0
    %2894 = vmatprep.subr.bf16.mxu0 0
    %2895 = vmatpush1.bf16.xpose.msra.mxu0 0
    %2896 = vmatprep.subr.bf16.mxu0 0
    %2897 = vmatpush1.bf16.xpose.msra.mxu0 0
    %2898 = vmatprep.subr.bf16.mxu0 0
    %2899 = vmatpush1.bf16.xpose.msra.mxu0 0
    %2900 = vmatprep.subr.bf16.mxu0 0
    %2901 = vmatpush1.bf16.xpose.msra.mxu0 0
    %2902 = vmatprep.subr.bf16.mxu0 0
    %2903 = vmatpush1.bf16.xpose.msra.mxu0 0
    %2904 = vmatprep.subr.bf16.mxu0 0
    %2905 = vmatpush1.bf16.xpose.msra.mxu0 0
    %2906 = vmatprep.subr.bf16.mxu0 0
    %2907 = vmatpush1.bf16.xpose.msra.mxu0 0
    %2908 = vmatprep.subr.bf16.mxu0 0
    %2909 = vmatpush1.bf16.xpose.msra.mxu0 0
    %2910 = vmatprep.subr.bf16.mxu0 0
    %2911 = vmatpush1.bf16.xpose.msra.mxu0 0
    %2912 = vmatprep.subr.bf16.mxu0 0
    %2913 = vmatpush1.bf16.xpose.msra.mxu0 0
    %2914 = vmatprep.subr.bf16.mxu0 0
    %2915 = vmatpush1.bf16.xpose.msra.mxu0 0
    %2916 = vmatprep.subr.bf16.mxu0 0
    %2917 = vmatpush1.bf16.xpose.msra.mxu0 0
    %2918 = vmatprep.mubr.bf16.mxu0 0
    %2919 = vmatmul.mubr.bf16.gmra.mrb[0].mxu0 %v2881
    %v2920 = vpop.f32.mrb[0].mxu0
    %v2921 = vadd.f32 0.0, %v2920
    %v2922 = vpop.f32.mrb[0].mxu0
    %v2923 = vpop.f32.mrb[0].mxu0
    %v2924 = vadd.f32 0.0, %v2923
    %v2925 = vpop.f32.mrb[0].mxu0
    %2926 = vdwg.mxu0
    %2928 = vrot.lane.b32.xlu0 %v1196, 120
    %v2929 = vpop.permute.xlu0 %2928
    %v2931 = vsel %vm1229, %v1132, 0
    %v2934 = vsel %vm1229, %v2929, 0
    %2936 = vmatprep.subr.bf16.mxu0 0
    %2937 = vmatpush1.bf16.xpose.msra.mxu0 %v2934
    %2938 = vmatprep.subr.bf16.mxu0 0
    %2939 = vmatpush1.bf16.xpose.msra.mxu0 0
    %2940 = vmatprep.subr.bf16.mxu0 0
    %2941 = vmatpush1.bf16.xpose.msra.mxu0 0
    %2942 = vmatprep.subr.bf16.mxu0 0
    %2943 = vmatpush1.bf16.xpose.msra.mxu0 0
    %2944 = vmatprep.subr.bf16.mxu0 0
    %2945 = vmatpush1.bf16.xpose.msra.mxu0 0
    %2946 = vmatprep.subr.bf16.mxu0 0
    %2947 = vmatpush1.bf16.xpose.msra.mxu0 0
    %2948 = vmatprep.subr.bf16.mxu0 0
    %2949 = vmatpush1.bf16.xpose.msra.mxu0 0
    %2950 = vmatprep.subr.bf16.mxu0 0
    %2951 = vmatpush1.bf16.xpose.msra.mxu0 0
    %2952 = vmatprep.subr.bf16.mxu0 0
    %2953 = vmatpush1.bf16.xpose.msra.mxu0 0
    %2954 = vmatprep.subr.bf16.mxu0 0
    %2955 = vmatpush1.bf16.xpose.msra.mxu0 0
    %2956 = vmatprep.subr.bf16.mxu0 0
    %2957 = vmatpush1.bf16.xpose.msra.mxu0 0
    %2958 = vmatprep.subr.bf16.mxu0 0
    %2959 = vmatpush1.bf16.xpose.msra.mxu0 0
    %2960 = vmatprep.subr.bf16.mxu0 0
    %2961 = vmatpush1.bf16.xpose.msra.mxu0 0
    %2962 = vmatprep.subr.bf16.mxu0 0
    %2963 = vmatpush1.bf16.xpose.msra.mxu0 0
    %2964 = vmatprep.subr.bf16.mxu0 0
    %2965 = vmatpush1.bf16.xpose.msra.mxu0 0
    %2966 = vmatprep.subr.bf16.mxu0 0
    %2967 = vmatpush1.bf16.xpose.msra.mxu0 0
    %2968 = vmatprep.mubr.bf16.mxu0 0
    %2969 = vmatmul.mubr.bf16.gmra.mrb[0].mxu0 %v2931
    %v2970 = vpop.f32.mrb[0].mxu0
    %v2971 = vadd.f32 0.0, %v2970
    %v2972 = vpop.f32.mrb[0].mxu0
    %v2973 = vpop.f32.mrb[0].mxu0
    %v2974 = vadd.f32 0.0, %v2973
    %v2975 = vpop.f32.mrb[0].mxu0
    %2976 = vdwg.mxu0
    %2978 = vrot.lane.b32.xlu0 %v1197, 120
    %v2979 = vpop.permute.xlu0 %2978
    %v2981 = vsel %vm1229, %v1133, 0
    %v2984 = vsel %vm1229, %v2979, 0
    %2986 = vmatprep.subr.bf16.mxu0 0
    %2987 = vmatpush1.bf16.xpose.msra.mxu0 %v2984
    %2988 = vmatprep.subr.bf16.mxu0 0
    %2989 = vmatpush1.bf16.xpose.msra.mxu0 0
    %2990 = vmatprep.subr.bf16.mxu0 0
    %2991 = vmatpush1.bf16.xpose.msra.mxu0 0
    %2992 = vmatprep.subr.bf16.mxu0 0
    %2993 = vmatpush1.bf16.xpose.msra.mxu0 0
    %2994 = vmatprep.subr.bf16.mxu0 0
    %2995 = vmatpush1.bf16.xpose.msra.mxu0 0
    %2996 = vmatprep.subr.bf16.mxu0 0
    %2997 = vmatpush1.bf16.xpose.msra.mxu0 0
    %2998 = vmatprep.subr.bf16.mxu0 0
    %2999 = vmatpush1.bf16.xpose.msra.mxu0 0
    %3000 = vmatprep.subr.bf16.mxu0 0
    %3001 = vmatpush1.bf16.xpose.msra.mxu0 0
    %3002 = vmatprep.subr.bf16.mxu0 0
    %3003 = vmatpush1.bf16.xpose.msra.mxu0 0
    %3004 = vmatprep.subr.bf16.mxu0 0
    %3005 = vmatpush1.bf16.xpose.msra.mxu0 0
    %3006 = vmatprep.subr.bf16.mxu0 0
    %3007 = vmatpush1.bf16.xpose.msra.mxu0 0
    %3008 = vmatprep.subr.bf16.mxu0 0
    %3009 = vmatpush1.bf16.xpose.msra.mxu0 0
    %3010 = vmatprep.subr.bf16.mxu0 0
    %3011 = vmatpush1.bf16.xpose.msra.mxu0 0
    %3012 = vmatprep.subr.bf16.mxu0 0
    %3013 = vmatpush1.bf16.xpose.msra.mxu0 0
    %3014 = vmatprep.subr.bf16.mxu0 0
    %3015 = vmatpush1.bf16.xpose.msra.mxu0 0
    %3016 = vmatprep.subr.bf16.mxu0 0
    %3017 = vmatpush1.bf16.xpose.msra.mxu0 0
    %3018 = vmatprep.mubr.bf16.mxu0 0
    %3019 = vmatmul.mubr.bf16.gmra.mrb[0].mxu0 %v2981
    %v3020 = vpop.f32.mrb[0].mxu0
    %v3021 = vadd.f32 0.0, %v3020
    %v3022 = vpop.f32.mrb[0].mxu0
    %v3023 = vpop.f32.mrb[0].mxu0
    %v3024 = vadd.f32 0.0, %v3023
    %v3025 = vpop.f32.mrb[0].mxu0
    %3026 = vdwg.mxu0
    %3028 = vrot.lane.b32.xlu0 %v1198, 120
    %v3029 = vpop.permute.xlu0 %3028
    %v3031 = vsel %vm1229, %v1134, 0
    %v3034 = vsel %vm1229, %v3029, 0
    %3036 = vmatprep.subr.bf16.mxu0 0
    %3037 = vmatpush1.bf16.xpose.msra.mxu0 %v3034
    %3038 = vmatprep.subr.bf16.mxu0 0
    %3039 = vmatpush1.bf16.xpose.msra.mxu0 0
    %3040 = vmatprep.subr.bf16.mxu0 0
    %3041 = vmatpush1.bf16.xpose.msra.mxu0 0
    %3042 = vmatprep.subr.bf16.mxu0 0
    %3043 = vmatpush1.bf16.xpose.msra.mxu0 0
    %3044 = vmatprep.subr.bf16.mxu0 0
    %3045 = vmatpush1.bf16.xpose.msra.mxu0 0
    %3046 = vmatprep.subr.bf16.mxu0 0
    %3047 = vmatpush1.bf16.xpose.msra.mxu0 0
    %3048 = vmatprep.subr.bf16.mxu0 0
    %3049 = vmatpush1.bf16.xpose.msra.mxu0 0
    %3050 = vmatprep.subr.bf16.mxu0 0
    %3051 = vmatpush1.bf16.xpose.msra.mxu0 0
    %3052 = vmatprep.subr.bf16.mxu0 0
    %3053 = vmatpush1.bf16.xpose.msra.mxu0 0
    %3054 = vmatprep.subr.bf16.mxu0 0
    %3055 = vmatpush1.bf16.xpose.msra.mxu0 0
    %3056 = vmatprep.subr.bf16.mxu0 0
    %3057 = vmatpush1.bf16.xpose.msra.mxu0 0
    %3058 = vmatprep.subr.bf16.mxu0 0
    %3059 = vmatpush1.bf16.xpose.msra.mxu0 0
    %3060 = vmatprep.subr.bf16.mxu0 0
    %3061 = vmatpush1.bf16.xpose.msra.mxu0 0
    %3062 = vmatprep.subr.bf16.mxu0 0
    %3063 = vmatpush1.bf16.xpose.msra.mxu0 0
    %3064 = vmatprep.subr.bf16.mxu0 0
    %3065 = vmatpush1.bf16.xpose.msra.mxu0 0
    %3066 = vmatprep.subr.bf16.mxu0 0
    %3067 = vmatpush1.bf16.xpose.msra.mxu0 0
    %3068 = vmatprep.mubr.bf16.mxu0 0
    %3069 = vmatmul.mubr.bf16.gmra.mrb[0].mxu0 %v3031
    %v3070 = vpop.f32.mrb[0].mxu0
    %v3071 = vadd.f32 0.0, %v3070
    %v3072 = vpop.f32.mrb[0].mxu0
    %v3073 = vpop.f32.mrb[0].mxu0
    %v3074 = vadd.f32 0.0, %v3073
    %v3075 = vpop.f32.mrb[0].mxu0
    %3076 = vdwg.mxu0
    %3078 = vrot.lane.b32.xlu0 %v1199, 120
    %v3079 = vpop.permute.xlu0 %3078
    %v3081 = vsel %vm1229, %v1135, 0
    %v3084 = vsel %vm1229, %v3079, 0
    %3086 = vmatprep.subr.bf16.mxu0 0
    %3087 = vmatpush1.bf16.xpose.msra.mxu0 %v3084
    %3088 = vmatprep.subr.bf16.mxu0 0
    %3089 = vmatpush1.bf16.xpose.msra.mxu0 0
    %3090 = vmatprep.subr.bf16.mxu0 0
    %3091 = vmatpush1.bf16.xpose.msra.mxu0 0
    %3092 = vmatprep.subr.bf16.mxu0 0
    %3093 = vmatpush1.bf16.xpose.msra.mxu0 0
    %3094 = vmatprep.subr.bf16.mxu0 0
    %3095 = vmatpush1.bf16.xpose.msra.mxu0 0
    %3096 = vmatprep.subr.bf16.mxu0 0
    %3097 = vmatpush1.bf16.xpose.msra.mxu0 0
    %3098 = vmatprep.subr.bf16.mxu0 0
    %3099 = vmatpush1.bf16.xpose.msra.mxu0 0
    %3100 = vmatprep.subr.bf16.mxu0 0
    %3101 = vmatpush1.bf16.xpose.msra.mxu0 0
    %3102 = vmatprep.subr.bf16.mxu0 0
    %3103 = vmatpush1.bf16.xpose.msra.mxu0 0
    %3104 = vmatprep.subr.bf16.mxu0 0
    %3105 = vmatpush1.bf16.xpose.msra.mxu0 0
    %3106 = vmatprep.subr.bf16.mxu0 0
    %3107 = vmatpush1.bf16.xpose.msra.mxu0 0
    %3108 = vmatprep.subr.bf16.mxu0 0
    %3109 = vmatpush1.bf16.xpose.msra.mxu0 0
    %3110 = vmatprep.subr.bf16.mxu0 0
    %3111 = vmatpush1.bf16.xpose.msra.mxu0 0
    %3112 = vmatprep.subr.bf16.mxu0 0
    %3113 = vmatpush1.bf16.xpose.msra.mxu0 0
    %3114 = vmatprep.subr.bf16.mxu0 0
    %3115 = vmatpush1.bf16.xpose.msra.mxu0 0
    %3116 = vmatprep.subr.bf16.mxu0 0
    %3117 = vmatpush1.bf16.xpose.msra.mxu0 0
    %3118 = vmatprep.mubr.bf16.mxu0 0
    %3119 = vmatmul.mubr.bf16.gmra.mrb[0].mxu0 %v3081
    %v3120 = vpop.f32.mrb[0].mxu0
    %v3121 = vadd.f32 0.0, %v3120
    %v3122 = vpop.f32.mrb[0].mxu0
    %v3123 = vpop.f32.mrb[0].mxu0
    %v3124 = vadd.f32 0.0, %v3123
    %v3125 = vpop.f32.mrb[0].mxu0
    %3126 = vdwg.mxu0
    %3128 = vrot.lane.b32.xlu0 %v1200, 120
    %v3129 = vpop.permute.xlu0 %3128
    %v3131 = vsel %vm1229, %v1136, 0
    %v3134 = vsel %vm1229, %v3129, 0
    %3136 = vmatprep.subr.bf16.mxu0 0
    %3137 = vmatpush1.bf16.xpose.msra.mxu0 %v3134
    %3138 = vmatprep.subr.bf16.mxu0 0
    %3139 = vmatpush1.bf16.xpose.msra.mxu0 0
    %3140 = vmatprep.subr.bf16.mxu0 0
    %3141 = vmatpush1.bf16.xpose.msra.mxu0 0
    %3142 = vmatprep.subr.bf16.mxu0 0
    %3143 = vmatpush1.bf16.xpose.msra.mxu0 0
    %3144 = vmatprep.subr.bf16.mxu0 0
    %3145 = vmatpush1.bf16.xpose.msra.mxu0 0
    %3146 = vmatprep.subr.bf16.mxu0 0
    %3147 = vmatpush1.bf16.xpose.msra.mxu0 0
    %3148 = vmatprep.subr.bf16.mxu0 0
    %3149 = vmatpush1.bf16.xpose.msra.mxu0 0
    %3150 = vmatprep.subr.bf16.mxu0 0
    %3151 = vmatpush1.bf16.xpose.msra.mxu0 0
    %3152 = vmatprep.subr.bf16.mxu0 0
    %3153 = vmatpush1.bf16.xpose.msra.mxu0 0
    %3154 = vmatprep.subr.bf16.mxu0 0
    %3155 = vmatpush1.bf16.xpose.msra.mxu0 0
    %3156 = vmatprep.subr.bf16.mxu0 0
    %3157 = vmatpush1.bf16.xpose.msra.mxu0 0
    %3158 = vmatprep.subr.bf16.mxu0 0
    %3159 = vmatpush1.bf16.xpose.msra.mxu0 0
    %3160 = vmatprep.subr.bf16.mxu0 0
    %3161 = vmatpush1.bf16.xpose.msra.mxu0 0
    %3162 = vmatprep.subr.bf16.mxu0 0
    %3163 = vmatpush1.bf16.xpose.msra.mxu0 0
    %3164 = vmatprep.subr.bf16.mxu0 0
    %3165 = vmatpush1.bf16.xpose.msra.mxu0 0
    %3166 = vmatprep.subr.bf16.mxu0 0
    %3167 = vmatpush1.bf16.xpose.msra.mxu0 0
    %3168 = vmatprep.mubr.bf16.mxu0 0
    %3169 = vmatmul.mubr.bf16.gmra.mrb[0].mxu0 %v3131
    %v3170 = vpop.f32.mrb[0].mxu0
    %v3171 = vadd.f32 0.0, %v3170
    %v3172 = vpop.f32.mrb[0].mxu0
    %v3173 = vpop.f32.mrb[0].mxu0
    %v3174 = vadd.f32 0.0, %v3173
    %v3175 = vpop.f32.mrb[0].mxu0
    %3176 = vdwg.mxu0
    %3178 = vrot.lane.b32.xlu0 %v1201, 120
    %v3179 = vpop.permute.xlu0 %3178
    %v3181 = vsel %vm1229, %v1137, 0
    %v3184 = vsel %vm1229, %v3179, 0
    %3186 = vmatprep.subr.bf16.mxu0 0
    %3187 = vmatpush1.bf16.xpose.msra.mxu0 %v3184
    %3188 = vmatprep.subr.bf16.mxu0 0
    %3189 = vmatpush1.bf16.xpose.msra.mxu0 0
    %3190 = vmatprep.subr.bf16.mxu0 0
    %3191 = vmatpush1.bf16.xpose.msra.mxu0 0
    %3192 = vmatprep.subr.bf16.mxu0 0
    %3193 = vmatpush1.bf16.xpose.msra.mxu0 0
    %3194 = vmatprep.subr.bf16.mxu0 0
    %3195 = vmatpush1.bf16.xpose.msra.mxu0 0
    %3196 = vmatprep.subr.bf16.mxu0 0
    %3197 = vmatpush1.bf16.xpose.msra.mxu0 0
    %3198 = vmatprep.subr.bf16.mxu0 0
    %3199 = vmatpush1.bf16.xpose.msra.mxu0 0
    %3200 = vmatprep.subr.bf16.mxu0 0
    %3201 = vmatpush1.bf16.xpose.msra.mxu0 0
    %3202 = vmatprep.subr.bf16.mxu0 0
    %3203 = vmatpush1.bf16.xpose.msra.mxu0 0
    %3204 = vmatprep.subr.bf16.mxu0 0
    %3205 = vmatpush1.bf16.xpose.msra.mxu0 0
    %3206 = vmatprep.subr.bf16.mxu0 0
    %3207 = vmatpush1.bf16.xpose.msra.mxu0 0
    %3208 = vmatprep.subr.bf16.mxu0 0
    %3209 = vmatpush1.bf16.xpose.msra.mxu0 0
    %3210 = vmatprep.subr.bf16.mxu0 0
    %3211 = vmatpush1.bf16.xpose.msra.mxu0 0
    %3212 = vmatprep.subr.bf16.mxu0 0
    %3213 = vmatpush1.bf16.xpose.msra.mxu0 0
    %3214 = vmatprep.subr.bf16.mxu0 0
    %3215 = vmatpush1.bf16.xpose.msra.mxu0 0
    %3216 = vmatprep.subr.bf16.mxu0 0
    %3217 = vmatpush1.bf16.xpose.msra.mxu0 0
    %3218 = vmatprep.mubr.bf16.mxu0 0
    %3219 = vmatmul.mubr.bf16.gmra.mrb[0].mxu0 %v3181
    %v3220 = vpop.f32.mrb[0].mxu0
    %v3221 = vadd.f32 0.0, %v3220
    %v3222 = vpop.f32.mrb[0].mxu0
    %v3223 = vpop.f32.mrb[0].mxu0
    %v3224 = vadd.f32 0.0, %v3223
    %v3225 = vpop.f32.mrb[0].mxu0
    %3226 = vdwg.mxu0
    %3228 = vrot.lane.b32.xlu0 %v1202, 120
    %v3229 = vpop.permute.xlu0 %3228
    %v3231 = vsel %vm1229, %v1138, 0
    %v3234 = vsel %vm1229, %v3229, 0
    %3236 = vmatprep.subr.bf16.mxu0 0
    %3237 = vmatpush1.bf16.xpose.msra.mxu0 %v3234
    %3238 = vmatprep.subr.bf16.mxu0 0
    %3239 = vmatpush1.bf16.xpose.msra.mxu0 0
    %3240 = vmatprep.subr.bf16.mxu0 0
    %3241 = vmatpush1.bf16.xpose.msra.mxu0 0
    %3242 = vmatprep.subr.bf16.mxu0 0
    %3243 = vmatpush1.bf16.xpose.msra.mxu0 0
    %3244 = vmatprep.subr.bf16.mxu0 0
    %3245 = vmatpush1.bf16.xpose.msra.mxu0 0
    %3246 = vmatprep.subr.bf16.mxu0 0
    %3247 = vmatpush1.bf16.xpose.msra.mxu0 0
    %3248 = vmatprep.subr.bf16.mxu0 0
    %3249 = vmatpush1.bf16.xpose.msra.mxu0 0
    %3250 = vmatprep.subr.bf16.mxu0 0
    %3251 = vmatpush1.bf16.xpose.msra.mxu0 0
    %3252 = vmatprep.subr.bf16.mxu0 0
    %3253 = vmatpush1.bf16.xpose.msra.mxu0 0
    %3254 = vmatprep.subr.bf16.mxu0 0
    %3255 = vmatpush1.bf16.xpose.msra.mxu0 0
    %3256 = vmatprep.subr.bf16.mxu0 0
    %3257 = vmatpush1.bf16.xpose.msra.mxu0 0
    %3258 = vmatprep.subr.bf16.mxu0 0
    %3259 = vmatpush1.bf16.xpose.msra.mxu0 0
    %3260 = vmatprep.subr.bf16.mxu0 0
    %3261 = vmatpush1.bf16.xpose.msra.mxu0 0
    %3262 = vmatprep.subr.bf16.mxu0 0
    %3263 = vmatpush1.bf16.xpose.msra.mxu0 0
    %3264 = vmatprep.subr.bf16.mxu0 0
    %3265 = vmatpush1.bf16.xpose.msra.mxu0 0
    %3266 = vmatprep.subr.bf16.mxu0 0
    %3267 = vmatpush1.bf16.xpose.msra.mxu0 0
    %3268 = vmatprep.mubr.bf16.mxu0 0
    %3269 = vmatmul.mubr.bf16.gmra.mrb[0].mxu0 %v3231
    %v3270 = vpop.f32.mrb[0].mxu0
    %v3271 = vadd.f32 0.0, %v3270
    %v3272 = vpop.f32.mrb[0].mxu0
    %v3273 = vpop.f32.mrb[0].mxu0
    %v3274 = vadd.f32 0.0, %v3273
    %v3275 = vpop.f32.mrb[0].mxu0
    %3276 = vdwg.mxu0
    %3278 = vrot.lane.b32.xlu0 %v1203, 120
    %v3279 = vpop.permute.xlu0 %3278
    %v3281 = vsel %vm1229, %v1139, 0
    %v3284 = vsel %vm1229, %v3279, 0
    %3286 = vmatprep.subr.bf16.mxu0 0
    %3287 = vmatpush1.bf16.xpose.msra.mxu0 %v3284
    %3288 = vmatprep.subr.bf16.mxu0 0
    %3289 = vmatpush1.bf16.xpose.msra.mxu0 0
    %3290 = vmatprep.subr.bf16.mxu0 0
    %3291 = vmatpush1.bf16.xpose.msra.mxu0 0
    %3292 = vmatprep.subr.bf16.mxu0 0
    %3293 = vmatpush1.bf16.xpose.msra.mxu0 0
    %3294 = vmatprep.subr.bf16.mxu0 0
    %3295 = vmatpush1.bf16.xpose.msra.mxu0 0
    %3296 = vmatprep.subr.bf16.mxu0 0
    %3297 = vmatpush1.bf16.xpose.msra.mxu0 0
    %3298 = vmatprep.subr.bf16.mxu0 0
    %3299 = vmatpush1.bf16.xpose.msra.mxu0 0
    %3300 = vmatprep.subr.bf16.mxu0 0
    %3301 = vmatpush1.bf16.xpose.msra.mxu0 0
    %3302 = vmatprep.subr.bf16.mxu0 0
    %3303 = vmatpush1.bf16.xpose.msra.mxu0 0
    %3304 = vmatprep.subr.bf16.mxu0 0
    %3305 = vmatpush1.bf16.xpose.msra.mxu0 0
    %3306 = vmatprep.subr.bf16.mxu0 0
    %3307 = vmatpush1.bf16.xpose.msra.mxu0 0
    %3308 = vmatprep.subr.bf16.mxu0 0
    %3309 = vmatpush1.bf16.xpose.msra.mxu0 0
    %3310 = vmatprep.subr.bf16.mxu0 0
    %3311 = vmatpush1.bf16.xpose.msra.mxu0 0
    %3312 = vmatprep.subr.bf16.mxu0 0
    %3313 = vmatpush1.bf16.xpose.msra.mxu0 0
    %3314 = vmatprep.subr.bf16.mxu0 0
    %3315 = vmatpush1.bf16.xpose.msra.mxu0 0
    %3316 = vmatprep.subr.bf16.mxu0 0
    %3317 = vmatpush1.bf16.xpose.msra.mxu0 0
    %3318 = vmatprep.mubr.bf16.mxu0 0
    %3319 = vmatmul.mubr.bf16.gmra.mrb[0].mxu0 %v3281
    %v3320 = vpop.f32.mrb[0].mxu0
    %v3321 = vadd.f32 0.0, %v3320
    %v3322 = vpop.f32.mrb[0].mxu0
    %v3323 = vpop.f32.mrb[0].mxu0
    %v3324 = vadd.f32 0.0, %v3323
    %v3325 = vpop.f32.mrb[0].mxu0
    %3326 = vdwg.mxu0
    %3328 = vrot.lane.b32.xlu0 %v1204, 120
    %v3329 = vpop.permute.xlu0 %3328
    %v3331 = vsel %vm1229, %v1140, 0
    %v3334 = vsel %vm1229, %v3329, 0
    %3336 = vmatprep.subr.bf16.mxu0 0
    %3337 = vmatpush1.bf16.xpose.msra.mxu0 %v3334
    %3338 = vmatprep.subr.bf16.mxu0 0
    %3339 = vmatpush1.bf16.xpose.msra.mxu0 0
    %3340 = vmatprep.subr.bf16.mxu0 0
    %3341 = vmatpush1.bf16.xpose.msra.mxu0 0
    %3342 = vmatprep.subr.bf16.mxu0 0
    %3343 = vmatpush1.bf16.xpose.msra.mxu0 0
    %3344 = vmatprep.subr.bf16.mxu0 0
    %3345 = vmatpush1.bf16.xpose.msra.mxu0 0
    %3346 = vmatprep.subr.bf16.mxu0 0
    %3347 = vmatpush1.bf16.xpose.msra.mxu0 0
    %3348 = vmatprep.subr.bf16.mxu0 0
    %3349 = vmatpush1.bf16.xpose.msra.mxu0 0
    %3350 = vmatprep.subr.bf16.mxu0 0
    %3351 = vmatpush1.bf16.xpose.msra.mxu0 0
    %3352 = vmatprep.subr.bf16.mxu0 0
    %3353 = vmatpush1.bf16.xpose.msra.mxu0 0
    %3354 = vmatprep.subr.bf16.mxu0 0
    %3355 = vmatpush1.bf16.xpose.msra.mxu0 0
    %3356 = vmatprep.subr.bf16.mxu0 0
    %3357 = vmatpush1.bf16.xpose.msra.mxu0 0
    %3358 = vmatprep.subr.bf16.mxu0 0
    %3359 = vmatpush1.bf16.xpose.msra.mxu0 0
    %3360 = vmatprep.subr.bf16.mxu0 0
    %3361 = vmatpush1.bf16.xpose.msra.mxu0 0
    %3362 = vmatprep.subr.bf16.mxu0 0
    %3363 = vmatpush1.bf16.xpose.msra.mxu0 0
    %3364 = vmatprep.subr.bf16.mxu0 0
    %3365 = vmatpush1.bf16.xpose.msra.mxu0 0
    %3366 = vmatprep.subr.bf16.mxu0 0
    %3367 = vmatpush1.bf16.xpose.msra.mxu0 0
    %3368 = vmatprep.mubr.bf16.mxu0 0
    %3369 = vmatmul.mubr.bf16.gmra.mrb[0].mxu0 %v3331
    %v3370 = vpop.f32.mrb[0].mxu0
    %v3371 = vadd.f32 0.0, %v3370
    %v3372 = vpop.f32.mrb[0].mxu0
    %v3373 = vpop.f32.mrb[0].mxu0
    %v3374 = vadd.f32 0.0, %v3373
    %v3375 = vpop.f32.mrb[0].mxu0
    %3376 = vdwg.mxu0
    %3378 = vrot.lane.b32.xlu0 %v1205, 120
    %v3379 = vpop.permute.xlu0 %3378
    %v3381 = vsel %vm1229, %v1141, 0
    %v3384 = vsel %vm1229, %v3379, 0
    %3386 = vmatprep.subr.bf16.mxu0 0
    %3387 = vmatpush1.bf16.xpose.msra.mxu0 %v3384
    %3388 = vmatprep.subr.bf16.mxu0 0
    %3389 = vmatpush1.bf16.xpose.msra.mxu0 0
    %3390 = vmatprep.subr.bf16.mxu0 0
    %3391 = vmatpush1.bf16.xpose.msra.mxu0 0
    %3392 = vmatprep.subr.bf16.mxu0 0
    %3393 = vmatpush1.bf16.xpose.msra.mxu0 0
    %3394 = vmatprep.subr.bf16.mxu0 0
    %3395 = vmatpush1.bf16.xpose.msra.mxu0 0
    %3396 = vmatprep.subr.bf16.mxu0 0
    %3397 = vmatpush1.bf16.xpose.msra.mxu0 0
    %3398 = vmatprep.subr.bf16.mxu0 0
    %3399 = vmatpush1.bf16.xpose.msra.mxu0 0
    %3400 = vmatprep.subr.bf16.mxu0 0
    %3401 = vmatpush1.bf16.xpose.msra.mxu0 0
    %3402 = vmatprep.subr.bf16.mxu0 0
    %3403 = vmatpush1.bf16.xpose.msra.mxu0 0
    %3404 = vmatprep.subr.bf16.mxu0 0
    %3405 = vmatpush1.bf16.xpose.msra.mxu0 0
    %3406 = vmatprep.subr.bf16.mxu0 0
    %3407 = vmatpush1.bf16.xpose.msra.mxu0 0
    %3408 = vmatprep.subr.bf16.mxu0 0
    %3409 = vmatpush1.bf16.xpose.msra.mxu0 0
    %3410 = vmatprep.subr.bf16.mxu0 0
    %3411 = vmatpush1.bf16.xpose.msra.mxu0 0
    %3412 = vmatprep.subr.bf16.mxu0 0
    %3413 = vmatpush1.bf16.xpose.msra.mxu0 0
    %3414 = vmatprep.subr.bf16.mxu0 0
    %3415 = vmatpush1.bf16.xpose.msra.mxu0 0
    %3416 = vmatprep.subr.bf16.mxu0 0
    %3417 = vmatpush1.bf16.xpose.msra.mxu0 0
    %3418 = vmatprep.mubr.bf16.mxu0 0
    %3419 = vmatmul.mubr.bf16.gmra.mrb[0].mxu0 %v3381
    %v3420 = vpop.f32.mrb[0].mxu0
    %v3421 = vadd.f32 0.0, %v3420
    %v3422 = vpop.f32.mrb[0].mxu0
    %v3423 = vpop.f32.mrb[0].mxu0
    %v3424 = vadd.f32 0.0, %v3423
    %v3425 = vpop.f32.mrb[0].mxu0
    %3426 = vdwg.mxu0
    %3428 = vrot.lane.b32.xlu0 %v1206, 120
    %v3429 = vpop.permute.xlu0 %3428
    %v3431 = vsel %vm1229, %v1142, 0
    %v3434 = vsel %vm1229, %v3429, 0
    %3436 = vmatprep.subr.bf16.mxu0 0
    %3437 = vmatpush1.bf16.xpose.msra.mxu0 %v3434
    %3438 = vmatprep.subr.bf16.mxu0 0
    %3439 = vmatpush1.bf16.xpose.msra.mxu0 0
    %3440 = vmatprep.subr.bf16.mxu0 0
    %3441 = vmatpush1.bf16.xpose.msra.mxu0 0
    %3442 = vmatprep.subr.bf16.mxu0 0
    %3443 = vmatpush1.bf16.xpose.msra.mxu0 0
    %3444 = vmatprep.subr.bf16.mxu0 0
    %3445 = vmatpush1.bf16.xpose.msra.mxu0 0
    %3446 = vmatprep.subr.bf16.mxu0 0
    %3447 = vmatpush1.bf16.xpose.msra.mxu0 0
    %3448 = vmatprep.subr.bf16.mxu0 0
    %3449 = vmatpush1.bf16.xpose.msra.mxu0 0
    %3450 = vmatprep.subr.bf16.mxu0 0
    %3451 = vmatpush1.bf16.xpose.msra.mxu0 0
    %3452 = vmatprep.subr.bf16.mxu0 0
    %3453 = vmatpush1.bf16.xpose.msra.mxu0 0
    %3454 = vmatprep.subr.bf16.mxu0 0
    %3455 = vmatpush1.bf16.xpose.msra.mxu0 0
    %3456 = vmatprep.subr.bf16.mxu0 0
    %3457 = vmatpush1.bf16.xpose.msra.mxu0 0
    %3458 = vmatprep.subr.bf16.mxu0 0
    %3459 = vmatpush1.bf16.xpose.msra.mxu0 0
    %3460 = vmatprep.subr.bf16.mxu0 0
    %3461 = vmatpush1.bf16.xpose.msra.mxu0 0
    %3462 = vmatprep.subr.bf16.mxu0 0
    %3463 = vmatpush1.bf16.xpose.msra.mxu0 0
    %3464 = vmatprep.subr.bf16.mxu0 0
    %3465 = vmatpush1.bf16.xpose.msra.mxu0 0
    %3466 = vmatprep.subr.bf16.mxu0 0
    %3467 = vmatpush1.bf16.xpose.msra.mxu0 0
    %3468 = vmatprep.mubr.bf16.mxu0 0
    %3469 = vmatmul.mubr.bf16.gmra.mrb[0].mxu0 %v3431
    %v3470 = vpop.f32.mrb[0].mxu0
    %v3471 = vadd.f32 0.0, %v3470
    %v3472 = vpop.f32.mrb[0].mxu0
    %v3473 = vpop.f32.mrb[0].mxu0
    %v3474 = vadd.f32 0.0, %v3473
    %v3475 = vpop.f32.mrb[0].mxu0
    %3476 = vdwg.mxu0
    %3478 = vrot.lane.b32.xlu0 %v1207, 120
    %v3479 = vpop.permute.xlu0 %3478
    %v3481 = vsel %vm1229, %v1143, 0
    %v3484 = vsel %vm1229, %v3479, 0
    %3486 = vmatprep.subr.bf16.mxu0 0
    %3487 = vmatpush1.bf16.xpose.msra.mxu0 %v3484
    %3488 = vmatprep.subr.bf16.mxu0 0
    %3489 = vmatpush1.bf16.xpose.msra.mxu0 0
    %3490 = vmatprep.subr.bf16.mxu0 0
    %3491 = vmatpush1.bf16.xpose.msra.mxu0 0
    %3492 = vmatprep.subr.bf16.mxu0 0
    %3493 = vmatpush1.bf16.xpose.msra.mxu0 0
    %3494 = vmatprep.subr.bf16.mxu0 0
    %3495 = vmatpush1.bf16.xpose.msra.mxu0 0
    %3496 = vmatprep.subr.bf16.mxu0 0
    %3497 = vmatpush1.bf16.xpose.msra.mxu0 0
    %3498 = vmatprep.subr.bf16.mxu0 0
    %3499 = vmatpush1.bf16.xpose.msra.mxu0 0
    %3500 = vmatprep.subr.bf16.mxu0 0
    %3501 = vmatpush1.bf16.xpose.msra.mxu0 0
    %3502 = vmatprep.subr.bf16.mxu0 0
    %3503 = vmatpush1.bf16.xpose.msra.mxu0 0
    %3504 = vmatprep.subr.bf16.mxu0 0
    %3505 = vmatpush1.bf16.xpose.msra.mxu0 0
    %3506 = vmatprep.subr.bf16.mxu0 0
    %3507 = vmatpush1.bf16.xpose.msra.mxu0 0
    %3508 = vmatprep.subr.bf16.mxu0 0
    %3509 = vmatpush1.bf16.xpose.msra.mxu0 0
    %3510 = vmatprep.subr.bf16.mxu0 0
    %3511 = vmatpush1.bf16.xpose.msra.mxu0 0
    %3512 = vmatprep.subr.bf16.mxu0 0
    %3513 = vmatpush1.bf16.xpose.msra.mxu0 0
    %3514 = vmatprep.subr.bf16.mxu0 0
    %3515 = vmatpush1.bf16.xpose.msra.mxu0 0
    %3516 = vmatprep.subr.bf16.mxu0 0
    %3517 = vmatpush1.bf16.xpose.msra.mxu0 0
    %3518 = vmatprep.mubr.bf16.mxu0 0
    %3519 = vmatmul.mubr.bf16.gmra.mrb[0].mxu0 %v3481
    %v3520 = vpop.f32.mrb[0].mxu0
    %v3521 = vadd.f32 0.0, %v3520
    %v3522 = vpop.f32.mrb[0].mxu0
    %v3523 = vpop.f32.mrb[0].mxu0
    %v3524 = vadd.f32 0.0, %v3523
    %v3525 = vpop.f32.mrb[0].mxu0
    %3526 = vdwg.mxu0
    %3528 = vrot.lane.b32.xlu0 %v1208, 120
    %v3529 = vpop.permute.xlu0 %3528
    %v3531 = vsel %vm1229, %v1144, 0
    %v3534 = vsel %vm1229, %v3529, 0
    %3536 = vmatprep.subr.bf16.mxu0 0
    %3537 = vmatpush1.bf16.xpose.msra.mxu0 %v3534
    %3538 = vmatprep.subr.bf16.mxu0 0
    %3539 = vmatpush1.bf16.xpose.msra.mxu0 0
    %3540 = vmatprep.subr.bf16.mxu0 0
    %3541 = vmatpush1.bf16.xpose.msra.mxu0 0
    %3542 = vmatprep.subr.bf16.mxu0 0
    %3543 = vmatpush1.bf16.xpose.msra.mxu0 0
    %3544 = vmatprep.subr.bf16.mxu0 0
    %3545 = vmatpush1.bf16.xpose.msra.mxu0 0
    %3546 = vmatprep.subr.bf16.mxu0 0
    %3547 = vmatpush1.bf16.xpose.msra.mxu0 0
    %3548 = vmatprep.subr.bf16.mxu0 0
    %3549 = vmatpush1.bf16.xpose.msra.mxu0 0
    %3550 = vmatprep.subr.bf16.mxu0 0
    %3551 = vmatpush1.bf16.xpose.msra.mxu0 0
    %3552 = vmatprep.subr.bf16.mxu0 0
    %3553 = vmatpush1.bf16.xpose.msra.mxu0 0
    %3554 = vmatprep.subr.bf16.mxu0 0
    %3555 = vmatpush1.bf16.xpose.msra.mxu0 0
    %3556 = vmatprep.subr.bf16.mxu0 0
    %3557 = vmatpush1.bf16.xpose.msra.mxu0 0
    %3558 = vmatprep.subr.bf16.mxu0 0
    %3559 = vmatpush1.bf16.xpose.msra.mxu0 0
    %3560 = vmatprep.subr.bf16.mxu0 0
    %3561 = vmatpush1.bf16.xpose.msra.mxu0 0
    %3562 = vmatprep.subr.bf16.mxu0 0
    %3563 = vmatpush1.bf16.xpose.msra.mxu0 0
    %3564 = vmatprep.subr.bf16.mxu0 0
    %3565 = vmatpush1.bf16.xpose.msra.mxu0 0
    %3566 = vmatprep.subr.bf16.mxu0 0
    %3567 = vmatpush1.bf16.xpose.msra.mxu0 0
    %3568 = vmatprep.mubr.bf16.mxu0 0
    %3569 = vmatmul.mubr.bf16.gmra.mrb[0].mxu0 %v3531
    %v3570 = vpop.f32.mrb[0].mxu0
    %v3571 = vadd.f32 0.0, %v3570
    %v3572 = vpop.f32.mrb[0].mxu0
    %v3573 = vpop.f32.mrb[0].mxu0
    %v3574 = vadd.f32 0.0, %v3573
    %v3575 = vpop.f32.mrb[0].mxu0
    %3576 = vdwg.mxu0
    %3578 = vrot.lane.b32.xlu0 %v1209, 120
    %v3579 = vpop.permute.xlu0 %3578
    %v3581 = vsel %vm1229, %v1145, 0
    %v3584 = vsel %vm1229, %v3579, 0
    %3586 = vmatprep.subr.bf16.mxu0 0
    %3587 = vmatpush1.bf16.xpose.msra.mxu0 %v3584
    %3588 = vmatprep.subr.bf16.mxu0 0
    %3589 = vmatpush1.bf16.xpose.msra.mxu0 0
    %3590 = vmatprep.subr.bf16.mxu0 0
    %3591 = vmatpush1.bf16.xpose.msra.mxu0 0
    %3592 = vmatprep.subr.bf16.mxu0 0
    %3593 = vmatpush1.bf16.xpose.msra.mxu0 0
    %3594 = vmatprep.subr.bf16.mxu0 0
    %3595 = vmatpush1.bf16.xpose.msra.mxu0 0
    %3596 = vmatprep.subr.bf16.mxu0 0
    %3597 = vmatpush1.bf16.xpose.msra.mxu0 0
    %3598 = vmatprep.subr.bf16.mxu0 0
    %3599 = vmatpush1.bf16.xpose.msra.mxu0 0
    %3600 = vmatprep.subr.bf16.mxu0 0
    %3601 = vmatpush1.bf16.xpose.msra.mxu0 0
    %3602 = vmatprep.subr.bf16.mxu0 0
    %3603 = vmatpush1.bf16.xpose.msra.mxu0 0
    %3604 = vmatprep.subr.bf16.mxu0 0
    %3605 = vmatpush1.bf16.xpose.msra.mxu0 0
    %3606 = vmatprep.subr.bf16.mxu0 0
    %3607 = vmatpush1.bf16.xpose.msra.mxu0 0
    %3608 = vmatprep.subr.bf16.mxu0 0
    %3609 = vmatpush1.bf16.xpose.msra.mxu0 0
    %3610 = vmatprep.subr.bf16.mxu0 0
    %3611 = vmatpush1.bf16.xpose.msra.mxu0 0
    %3612 = vmatprep.subr.bf16.mxu0 0
    %3613 = vmatpush1.bf16.xpose.msra.mxu0 0
    %3614 = vmatprep.subr.bf16.mxu0 0
    %3615 = vmatpush1.bf16.xpose.msra.mxu0 0
    %3616 = vmatprep.subr.bf16.mxu0 0
    %3617 = vmatpush1.bf16.xpose.msra.mxu0 0
    %3618 = vmatprep.mubr.bf16.mxu0 0
    %3619 = vmatmul.mubr.bf16.gmra.mrb[0].mxu0 %v3581
    %v3620 = vpop.f32.mrb[0].mxu0
    %v3621 = vadd.f32 0.0, %v3620
    %v3622 = vpop.f32.mrb[0].mxu0
    %v3623 = vpop.f32.mrb[0].mxu0
    %v3624 = vadd.f32 0.0, %v3623
    %v3625 = vpop.f32.mrb[0].mxu0
    %3626 = vdwg.mxu0
    %3628 = vrot.lane.b32.xlu0 %v1210, 120
    %v3629 = vpop.permute.xlu0 %3628
    %v3631 = vsel %vm1229, %v1146, 0
    %v3634 = vsel %vm1229, %v3629, 0
    %3636 = vmatprep.subr.bf16.mxu0 0
    %3637 = vmatpush1.bf16.xpose.msra.mxu0 %v3634
    %3638 = vmatprep.subr.bf16.mxu0 0
    %3639 = vmatpush1.bf16.xpose.msra.mxu0 0
    %3640 = vmatprep.subr.bf16.mxu0 0
    %3641 = vmatpush1.bf16.xpose.msra.mxu0 0
    %3642 = vmatprep.subr.bf16.mxu0 0
    %3643 = vmatpush1.bf16.xpose.msra.mxu0 0
    %3644 = vmatprep.subr.bf16.mxu0 0
    %3645 = vmatpush1.bf16.xpose.msra.mxu0 0
    %3646 = vmatprep.subr.bf16.mxu0 0
    %3647 = vmatpush1.bf16.xpose.msra.mxu0 0
    %3648 = vmatprep.subr.bf16.mxu0 0
    %3649 = vmatpush1.bf16.xpose.msra.mxu0 0
    %3650 = vmatprep.subr.bf16.mxu0 0
    %3651 = vmatpush1.bf16.xpose.msra.mxu0 0
    %3652 = vmatprep.subr.bf16.mxu0 0
    %3653 = vmatpush1.bf16.xpose.msra.mxu0 0
    %3654 = vmatprep.subr.bf16.mxu0 0
    %3655 = vmatpush1.bf16.xpose.msra.mxu0 0
    %3656 = vmatprep.subr.bf16.mxu0 0
    %3657 = vmatpush1.bf16.xpose.msra.mxu0 0
    %3658 = vmatprep.subr.bf16.mxu0 0
    %3659 = vmatpush1.bf16.xpose.msra.mxu0 0
    %3660 = vmatprep.subr.bf16.mxu0 0
    %3661 = vmatpush1.bf16.xpose.msra.mxu0 0
    %3662 = vmatprep.subr.bf16.mxu0 0
    %3663 = vmatpush1.bf16.xpose.msra.mxu0 0
    %3664 = vmatprep.subr.bf16.mxu0 0
    %3665 = vmatpush1.bf16.xpose.msra.mxu0 0
    %3666 = vmatprep.subr.bf16.mxu0 0
    %3667 = vmatpush1.bf16.xpose.msra.mxu0 0
    %3668 = vmatprep.mubr.bf16.mxu0 0
    %3669 = vmatmul.mubr.bf16.gmra.mrb[0].mxu0 %v3631
    %v3670 = vpop.f32.mrb[0].mxu0
    %v3671 = vadd.f32 0.0, %v3670
    %v3672 = vpop.f32.mrb[0].mxu0
    %v3673 = vpop.f32.mrb[0].mxu0
    %v3674 = vadd.f32 0.0, %v3673
    %v3675 = vpop.f32.mrb[0].mxu0
    %3676 = vdwg.mxu0
    %3678 = vrot.lane.b32.xlu0 %v1211, 120
    %v3679 = vpop.permute.xlu0 %3678
    %v3681 = vsel %vm1229, %v1147, 0
    %v3684 = vsel %vm1229, %v3679, 0
    %3686 = vmatprep.subr.bf16.mxu0 0
    %3687 = vmatpush1.bf16.xpose.msra.mxu0 %v3684
    %3688 = vmatprep.subr.bf16.mxu0 0
    %3689 = vmatpush1.bf16.xpose.msra.mxu0 0
    %3690 = vmatprep.subr.bf16.mxu0 0
    %3691 = vmatpush1.bf16.xpose.msra.mxu0 0
    %3692 = vmatprep.subr.bf16.mxu0 0
    %3693 = vmatpush1.bf16.xpose.msra.mxu0 0
    %3694 = vmatprep.subr.bf16.mxu0 0
    %3695 = vmatpush1.bf16.xpose.msra.mxu0 0
    %3696 = vmatprep.subr.bf16.mxu0 0
    %3697 = vmatpush1.bf16.xpose.msra.mxu0 0
    %3698 = vmatprep.subr.bf16.mxu0 0
    %3699 = vmatpush1.bf16.xpose.msra.mxu0 0
    %3700 = vmatprep.subr.bf16.mxu0 0
    %3701 = vmatpush1.bf16.xpose.msra.mxu0 0
    %3702 = vmatprep.subr.bf16.mxu0 0
    %3703 = vmatpush1.bf16.xpose.msra.mxu0 0
    %3704 = vmatprep.subr.bf16.mxu0 0
    %3705 = vmatpush1.bf16.xpose.msra.mxu0 0
    %3706 = vmatprep.subr.bf16.mxu0 0
    %3707 = vmatpush1.bf16.xpose.msra.mxu0 0
    %3708 = vmatprep.subr.bf16.mxu0 0
    %3709 = vmatpush1.bf16.xpose.msra.mxu0 0
    %3710 = vmatprep.subr.bf16.mxu0 0
    %3711 = vmatpush1.bf16.xpose.msra.mxu0 0
    %3712 = vmatprep.subr.bf16.mxu0 0
    %3713 = vmatpush1.bf16.xpose.msra.mxu0 0
    %3714 = vmatprep.subr.bf16.mxu0 0
    %3715 = vmatpush1.bf16.xpose.msra.mxu0 0
    %3716 = vmatprep.subr.bf16.mxu0 0
    %3717 = vmatpush1.bf16.xpose.msra.mxu0 0
    %3718 = vmatprep.mubr.bf16.mxu0 0
    %3719 = vmatmul.mubr.bf16.gmra.mrb[0].mxu0 %v3681
    %v3720 = vpop.f32.mrb[0].mxu0
    %v3721 = vadd.f32 0.0, %v3720
    %v3722 = vpop.f32.mrb[0].mxu0
    %v3723 = vpop.f32.mrb[0].mxu0
    %v3724 = vadd.f32 0.0, %v3723
    %v3725 = vpop.f32.mrb[0].mxu0
    %3726 = vdwg.mxu0
    %3728 = vrot.lane.b32.xlu0 %v1212, 120
    %v3729 = vpop.permute.xlu0 %3728
    %v3731 = vsel %vm1229, %v1148, 0
    %v3734 = vsel %vm1229, %v3729, 0
    %3736 = vmatprep.subr.bf16.mxu0 0
    %3737 = vmatpush1.bf16.xpose.msra.mxu0 %v3734
    %3738 = vmatprep.subr.bf16.mxu0 0
    %3739 = vmatpush1.bf16.xpose.msra.mxu0 0
    %3740 = vmatprep.subr.bf16.mxu0 0
    %3741 = vmatpush1.bf16.xpose.msra.mxu0 0
    %3742 = vmatprep.subr.bf16.mxu0 0
    %3743 = vmatpush1.bf16.xpose.msra.mxu0 0
    %3744 = vmatprep.subr.bf16.mxu0 0
    %3745 = vmatpush1.bf16.xpose.msra.mxu0 0
    %3746 = vmatprep.subr.bf16.mxu0 0
    %3747 = vmatpush1.bf16.xpose.msra.mxu0 0
    %3748 = vmatprep.subr.bf16.mxu0 0
    %3749 = vmatpush1.bf16.xpose.msra.mxu0 0
    %3750 = vmatprep.subr.bf16.mxu0 0
    %3751 = vmatpush1.bf16.xpose.msra.mxu0 0
    %3752 = vmatprep.subr.bf16.mxu0 0
    %3753 = vmatpush1.bf16.xpose.msra.mxu0 0
    %3754 = vmatprep.subr.bf16.mxu0 0
    %3755 = vmatpush1.bf16.xpose.msra.mxu0 0
    %3756 = vmatprep.subr.bf16.mxu0 0
    %3757 = vmatpush1.bf16.xpose.msra.mxu0 0
    %3758 = vmatprep.subr.bf16.mxu0 0
    %3759 = vmatpush1.bf16.xpose.msra.mxu0 0
    %3760 = vmatprep.subr.bf16.mxu0 0
    %3761 = vmatpush1.bf16.xpose.msra.mxu0 0
    %3762 = vmatprep.subr.bf16.mxu0 0
    %3763 = vmatpush1.bf16.xpose.msra.mxu0 0
    %3764 = vmatprep.subr.bf16.mxu0 0
    %3765 = vmatpush1.bf16.xpose.msra.mxu0 0
    %3766 = vmatprep.subr.bf16.mxu0 0
    %3767 = vmatpush1.bf16.xpose.msra.mxu0 0
    %3768 = vmatprep.mubr.bf16.mxu0 0
    %3769 = vmatmul.mubr.bf16.gmra.mrb[0].mxu0 %v3731
    %v3770 = vpop.f32.mrb[0].mxu0
    %v3771 = vadd.f32 0.0, %v3770
    %v3772 = vpop.f32.mrb[0].mxu0
    %v3773 = vpop.f32.mrb[0].mxu0
    %v3774 = vadd.f32 0.0, %v3773
    %v3775 = vpop.f32.mrb[0].mxu0
    %3776 = vdwg.mxu0
    %3778 = vrot.lane.b32.xlu0 %v1213, 120
    %v3779 = vpop.permute.xlu0 %3778
    %v3781 = vsel %vm1229, %v1149, 0
    %v3784 = vsel %vm1229, %v3779, 0
    %3786 = vmatprep.subr.bf16.mxu0 0
    %3787 = vmatpush1.bf16.xpose.msra.mxu0 %v3784
    %3788 = vmatprep.subr.bf16.mxu0 0
    %3789 = vmatpush1.bf16.xpose.msra.mxu0 0
    %3790 = vmatprep.subr.bf16.mxu0 0
    %3791 = vmatpush1.bf16.xpose.msra.mxu0 0
    %3792 = vmatprep.subr.bf16.mxu0 0
    %3793 = vmatpush1.bf16.xpose.msra.mxu0 0
    %3794 = vmatprep.subr.bf16.mxu0 0
    %3795 = vmatpush1.bf16.xpose.msra.mxu0 0
    %3796 = vmatprep.subr.bf16.mxu0 0
    %3797 = vmatpush1.bf16.xpose.msra.mxu0 0
    %3798 = vmatprep.subr.bf16.mxu0 0
    %3799 = vmatpush1.bf16.xpose.msra.mxu0 0
    %3800 = vmatprep.subr.bf16.mxu0 0
    %3801 = vmatpush1.bf16.xpose.msra.mxu0 0
    %3802 = vmatprep.subr.bf16.mxu0 0
    %3803 = vmatpush1.bf16.xpose.msra.mxu0 0
    %3804 = vmatprep.subr.bf16.mxu0 0
    %3805 = vmatpush1.bf16.xpose.msra.mxu0 0
    %3806 = vmatprep.subr.bf16.mxu0 0
    %3807 = vmatpush1.bf16.xpose.msra.mxu0 0
    %3808 = vmatprep.subr.bf16.mxu0 0
    %3809 = vmatpush1.bf16.xpose.msra.mxu0 0
    %3810 = vmatprep.subr.bf16.mxu0 0
    %3811 = vmatpush1.bf16.xpose.msra.mxu0 0
    %3812 = vmatprep.subr.bf16.mxu0 0
    %3813 = vmatpush1.bf16.xpose.msra.mxu0 0
    %3814 = vmatprep.subr.bf16.mxu0 0
    %3815 = vmatpush1.bf16.xpose.msra.mxu0 0
    %3816 = vmatprep.subr.bf16.mxu0 0
    %3817 = vmatpush1.bf16.xpose.msra.mxu0 0
    %3818 = vmatprep.mubr.bf16.mxu0 0
    %3819 = vmatmul.mubr.bf16.gmra.mrb[0].mxu0 %v3781
    %v3820 = vpop.f32.mrb[0].mxu0
    %v3821 = vadd.f32 0.0, %v3820
    %v3822 = vpop.f32.mrb[0].mxu0
    %v3823 = vpop.f32.mrb[0].mxu0
    %v3824 = vadd.f32 0.0, %v3823
    %v3825 = vpop.f32.mrb[0].mxu0
    %3826 = vdwg.mxu0
    %3828 = vrot.lane.b32.xlu0 %v1214, 120
    %v3829 = vpop.permute.xlu0 %3828
    %v3831 = vsel %vm1229, %v1150, 0
    %v3834 = vsel %vm1229, %v3829, 0
    %3836 = vmatprep.subr.bf16.mxu0 0
    %3837 = vmatpush1.bf16.xpose.msra.mxu0 %v3834
    %3838 = vmatprep.subr.bf16.mxu0 0
    %3839 = vmatpush1.bf16.xpose.msra.mxu0 0
    %3840 = vmatprep.subr.bf16.mxu0 0
    %3841 = vmatpush1.bf16.xpose.msra.mxu0 0
    %3842 = vmatprep.subr.bf16.mxu0 0
    %3843 = vmatpush1.bf16.xpose.msra.mxu0 0
    %3844 = vmatprep.subr.bf16.mxu0 0
    %3845 = vmatpush1.bf16.xpose.msra.mxu0 0
    %3846 = vmatprep.subr.bf16.mxu0 0
    %3847 = vmatpush1.bf16.xpose.msra.mxu0 0
    %3848 = vmatprep.subr.bf16.mxu0 0
    %3849 = vmatpush1.bf16.xpose.msra.mxu0 0
    %3850 = vmatprep.subr.bf16.mxu0 0
    %3851 = vmatpush1.bf16.xpose.msra.mxu0 0
    %3852 = vmatprep.subr.bf16.mxu0 0
    %3853 = vmatpush1.bf16.xpose.msra.mxu0 0
    %3854 = vmatprep.subr.bf16.mxu0 0
    %3855 = vmatpush1.bf16.xpose.msra.mxu0 0
    %3856 = vmatprep.subr.bf16.mxu0 0
    %3857 = vmatpush1.bf16.xpose.msra.mxu0 0
    %3858 = vmatprep.subr.bf16.mxu0 0
    %3859 = vmatpush1.bf16.xpose.msra.mxu0 0
    %3860 = vmatprep.subr.bf16.mxu0 0
    %3861 = vmatpush1.bf16.xpose.msra.mxu0 0
    %3862 = vmatprep.subr.bf16.mxu0 0
    %3863 = vmatpush1.bf16.xpose.msra.mxu0 0
    %3864 = vmatprep.subr.bf16.mxu0 0
    %3865 = vmatpush1.bf16.xpose.msra.mxu0 0
    %3866 = vmatprep.subr.bf16.mxu0 0
    %3867 = vmatpush1.bf16.xpose.msra.mxu0 0
    %3868 = vmatprep.mubr.bf16.mxu0 0
    %3869 = vmatmul.mubr.bf16.gmra.mrb[0].mxu0 %v3831
    %v3870 = vpop.f32.mrb[0].mxu0
    %v3871 = vadd.f32 0.0, %v3870
    %v3872 = vpop.f32.mrb[0].mxu0
    %v3873 = vpop.f32.mrb[0].mxu0
    %v3874 = vadd.f32 0.0, %v3873
    %v3875 = vpop.f32.mrb[0].mxu0
    %3876 = vdwg.mxu0
    %3878 = vrot.lane.b32.xlu0 %v1215, 120
    %v3879 = vpop.permute.xlu0 %3878
    %v3881 = vsel %vm1229, %v1151, 0
    %v3884 = vsel %vm1229, %v3879, 0
    %3886 = vmatprep.subr.bf16.mxu0 0
    %3887 = vmatpush1.bf16.xpose.msra.mxu0 %v3884
    %3888 = vmatprep.subr.bf16.mxu0 0
    %3889 = vmatpush1.bf16.xpose.msra.mxu0 0
    %3890 = vmatprep.subr.bf16.mxu0 0
    %3891 = vmatpush1.bf16.xpose.msra.mxu0 0
    %3892 = vmatprep.subr.bf16.mxu0 0
    %3893 = vmatpush1.bf16.xpose.msra.mxu0 0
    %3894 = vmatprep.subr.bf16.mxu0 0
    %3895 = vmatpush1.bf16.xpose.msra.mxu0 0
    %3896 = vmatprep.subr.bf16.mxu0 0
    %3897 = vmatpush1.bf16.xpose.msra.mxu0 0
    %3898 = vmatprep.subr.bf16.mxu0 0
    %3899 = vmatpush1.bf16.xpose.msra.mxu0 0
    %3900 = vmatprep.subr.bf16.mxu0 0
    %3901 = vmatpush1.bf16.xpose.msra.mxu0 0
    %3902 = vmatprep.subr.bf16.mxu0 0
    %3903 = vmatpush1.bf16.xpose.msra.mxu0 0
    %3904 = vmatprep.subr.bf16.mxu0 0
    %3905 = vmatpush1.bf16.xpose.msra.mxu0 0
    %3906 = vmatprep.subr.bf16.mxu0 0
    %3907 = vmatpush1.bf16.xpose.msra.mxu0 0
    %3908 = vmatprep.subr.bf16.mxu0 0
    %3909 = vmatpush1.bf16.xpose.msra.mxu0 0
    %3910 = vmatprep.subr.bf16.mxu0 0
    %3911 = vmatpush1.bf16.xpose.msra.mxu0 0
    %3912 = vmatprep.subr.bf16.mxu0 0
    %3913 = vmatpush1.bf16.xpose.msra.mxu0 0
    %3914 = vmatprep.subr.bf16.mxu0 0
    %3915 = vmatpush1.bf16.xpose.msra.mxu0 0
    %3916 = vmatprep.subr.bf16.mxu0 0
    %3917 = vmatpush1.bf16.xpose.msra.mxu0 0
    %3918 = vmatprep.mubr.bf16.mxu0 0
    %3919 = vmatmul.mubr.bf16.gmra.mrb[0].mxu0 %v3881
    %v3920 = vpop.f32.mrb[0].mxu0
    %v3921 = vadd.f32 0.0, %v3920
    %v3922 = vpop.f32.mrb[0].mxu0
    %v3923 = vpop.f32.mrb[0].mxu0
    %v3924 = vadd.f32 0.0, %v3923
    %v3925 = vpop.f32.mrb[0].mxu0
    %3926 = vdwg.mxu0
    %3928 = vrot.lane.b32.xlu0 %v1216, 120
    %v3929 = vpop.permute.xlu0 %3928
    %v3931 = vsel %vm1229, %v1152, 0
    %v3934 = vsel %vm1229, %v3929, 0
    %3936 = vmatprep.subr.bf16.mxu0 0
    %3937 = vmatpush1.bf16.xpose.msra.mxu0 %v3934
    %3938 = vmatprep.subr.bf16.mxu0 0
    %3939 = vmatpush1.bf16.xpose.msra.mxu0 0
    %3940 = vmatprep.subr.bf16.mxu0 0
    %3941 = vmatpush1.bf16.xpose.msra.mxu0 0
    %3942 = vmatprep.subr.bf16.mxu0 0
    %3943 = vmatpush1.bf16.xpose.msra.mxu0 0
    %3944 = vmatprep.subr.bf16.mxu0 0
    %3945 = vmatpush1.bf16.xpose.msra.mxu0 0
    %3946 = vmatprep.subr.bf16.mxu0 0
    %3947 = vmatpush1.bf16.xpose.msra.mxu0 0
    %3948 = vmatprep.subr.bf16.mxu0 0
    %3949 = vmatpush1.bf16.xpose.msra.mxu0 0
    %3950 = vmatprep.subr.bf16.mxu0 0
    %3951 = vmatpush1.bf16.xpose.msra.mxu0 0
    %3952 = vmatprep.subr.bf16.mxu0 0
    %3953 = vmatpush1.bf16.xpose.msra.mxu0 0
    %3954 = vmatprep.subr.bf16.mxu0 0
    %3955 = vmatpush1.bf16.xpose.msra.mxu0 0
    %3956 = vmatprep.subr.bf16.mxu0 0
    %3957 = vmatpush1.bf16.xpose.msra.mxu0 0
    %3958 = vmatprep.subr.bf16.mxu0 0
    %3959 = vmatpush1.bf16.xpose.msra.mxu0 0
    %3960 = vmatprep.subr.bf16.mxu0 0
    %3961 = vmatpush1.bf16.xpose.msra.mxu0 0
    %3962 = vmatprep.subr.bf16.mxu0 0
    %3963 = vmatpush1.bf16.xpose.msra.mxu0 0
    %3964 = vmatprep.subr.bf16.mxu0 0
    %3965 = vmatpush1.bf16.xpose.msra.mxu0 0
    %3966 = vmatprep.subr.bf16.mxu0 0
    %3967 = vmatpush1.bf16.xpose.msra.mxu0 0
    %3968 = vmatprep.mubr.bf16.mxu0 0
    %3969 = vmatmul.mubr.bf16.gmra.mrb[0].mxu0 %v3931
    %v3970 = vpop.f32.mrb[0].mxu0
    %v3971 = vadd.f32 0.0, %v3970
    %v3972 = vpop.f32.mrb[0].mxu0
    %v3973 = vpop.f32.mrb[0].mxu0
    %v3974 = vadd.f32 0.0, %v3973
    %v3975 = vpop.f32.mrb[0].mxu0
    %3976 = vdwg.mxu0
    %3978 = vrot.lane.b32.xlu0 %v1217, 120
    %v3979 = vpop.permute.xlu0 %3978
    %v3981 = vsel %vm1229, %v1153, 0
    %v3984 = vsel %vm1229, %v3979, 0
    %3986 = vmatprep.subr.bf16.mxu0 0
    %3987 = vmatpush1.bf16.xpose.msra.mxu0 %v3984
    %3988 = vmatprep.subr.bf16.mxu0 0
    %3989 = vmatpush1.bf16.xpose.msra.mxu0 0
    %3990 = vmatprep.subr.bf16.mxu0 0
    %3991 = vmatpush1.bf16.xpose.msra.mxu0 0
    %3992 = vmatprep.subr.bf16.mxu0 0
    %3993 = vmatpush1.bf16.xpose.msra.mxu0 0
    %3994 = vmatprep.subr.bf16.mxu0 0
    %3995 = vmatpush1.bf16.xpose.msra.mxu0 0
    %3996 = vmatprep.subr.bf16.mxu0 0
    %3997 = vmatpush1.bf16.xpose.msra.mxu0 0
    %3998 = vmatprep.subr.bf16.mxu0 0
    %3999 = vmatpush1.bf16.xpose.msra.mxu0 0
    %4000 = vmatprep.subr.bf16.mxu0 0
    %4001 = vmatpush1.bf16.xpose.msra.mxu0 0
    %4002 = vmatprep.subr.bf16.mxu0 0
    %4003 = vmatpush1.bf16.xpose.msra.mxu0 0
    %4004 = vmatprep.subr.bf16.mxu0 0
    %4005 = vmatpush1.bf16.xpose.msra.mxu0 0
    %4006 = vmatprep.subr.bf16.mxu0 0
    %4007 = vmatpush1.bf16.xpose.msra.mxu0 0
    %4008 = vmatprep.subr.bf16.mxu0 0
    %4009 = vmatpush1.bf16.xpose.msra.mxu0 0
    %4010 = vmatprep.subr.bf16.mxu0 0
    %4011 = vmatpush1.bf16.xpose.msra.mxu0 0
    %4012 = vmatprep.subr.bf16.mxu0 0
    %4013 = vmatpush1.bf16.xpose.msra.mxu0 0
    %4014 = vmatprep.subr.bf16.mxu0 0
    %4015 = vmatpush1.bf16.xpose.msra.mxu0 0
    %4016 = vmatprep.subr.bf16.mxu0 0
    %4017 = vmatpush1.bf16.xpose.msra.mxu0 0
    %4018 = vmatprep.mubr.bf16.mxu0 0
    %4019 = vmatmul.mubr.bf16.gmra.mrb[0].mxu0 %v3981
    %v4020 = vpop.f32.mrb[0].mxu0
    %v4021 = vadd.f32 0.0, %v4020
    %v4022 = vpop.f32.mrb[0].mxu0
    %v4023 = vpop.f32.mrb[0].mxu0
    %v4024 = vadd.f32 0.0, %v4023
    %v4025 = vpop.f32.mrb[0].mxu0
    %4026 = vdwg.mxu0
    %4028 = vrot.lane.b32.xlu0 %v1218, 120
    %v4029 = vpop.permute.xlu0 %4028
    %v4031 = vsel %vm1229, %v1154, 0
    %v4034 = vsel %vm1229, %v4029, 0
    %4036 = vmatprep.subr.bf16.mxu0 0
    %4037 = vmatpush1.bf16.xpose.msra.mxu0 %v4034
    %4038 = vmatprep.subr.bf16.mxu0 0
    %4039 = vmatpush1.bf16.xpose.msra.mxu0 0
    %4040 = vmatprep.subr.bf16.mxu0 0
    %4041 = vmatpush1.bf16.xpose.msra.mxu0 0
    %4042 = vmatprep.subr.bf16.mxu0 0
    %4043 = vmatpush1.bf16.xpose.msra.mxu0 0
    %4044 = vmatprep.subr.bf16.mxu0 0
    %4045 = vmatpush1.bf16.xpose.msra.mxu0 0
    %4046 = vmatprep.subr.bf16.mxu0 0
    %4047 = vmatpush1.bf16.xpose.msra.mxu0 0
    %4048 = vmatprep.subr.bf16.mxu0 0
    %4049 = vmatpush1.bf16.xpose.msra.mxu0 0
    %4050 = vmatprep.subr.bf16.mxu0 0
    %4051 = vmatpush1.bf16.xpose.msra.mxu0 0
    %4052 = vmatprep.subr.bf16.mxu0 0
    %4053 = vmatpush1.bf16.xpose.msra.mxu0 0
    %4054 = vmatprep.subr.bf16.mxu0 0
    %4055 = vmatpush1.bf16.xpose.msra.mxu0 0
    %4056 = vmatprep.subr.bf16.mxu0 0
    %4057 = vmatpush1.bf16.xpose.msra.mxu0 0
    %4058 = vmatprep.subr.bf16.mxu0 0
    %4059 = vmatpush1.bf16.xpose.msra.mxu0 0
    %4060 = vmatprep.subr.bf16.mxu0 0
    %4061 = vmatpush1.bf16.xpose.msra.mxu0 0
    %4062 = vmatprep.subr.bf16.mxu0 0
    %4063 = vmatpush1.bf16.xpose.msra.mxu0 0
    %4064 = vmatprep.subr.bf16.mxu0 0
    %4065 = vmatpush1.bf16.xpose.msra.mxu0 0
    %4066 = vmatprep.subr.bf16.mxu0 0
    %4067 = vmatpush1.bf16.xpose.msra.mxu0 0
    %4068 = vmatprep.mubr.bf16.mxu0 0
    %4069 = vmatmul.mubr.bf16.gmra.mrb[0].mxu0 %v4031
    %v4070 = vpop.f32.mrb[0].mxu0
    %v4071 = vadd.f32 0.0, %v4070
    %v4072 = vpop.f32.mrb[0].mxu0
    %v4073 = vpop.f32.mrb[0].mxu0
    %v4074 = vadd.f32 0.0, %v4073
    %v4075 = vpop.f32.mrb[0].mxu0
    %4076 = vdwg.mxu0
    %4078 = vrot.lane.b32.xlu0 %v1219, 120
    %v4079 = vpop.permute.xlu0 %4078
    %v4081 = vsel %vm1229, %v1155, 0
    %v4084 = vsel %vm1229, %v4079, 0
    %4086 = vmatprep.subr.bf16.mxu0 0
    %4087 = vmatpush1.bf16.xpose.msra.mxu0 %v4084
    %4088 = vmatprep.subr.bf16.mxu0 0
    %4089 = vmatpush1.bf16.xpose.msra.mxu0 0
    %4090 = vmatprep.subr.bf16.mxu0 0
    %4091 = vmatpush1.bf16.xpose.msra.mxu0 0
    %4092 = vmatprep.subr.bf16.mxu0 0
    %4093 = vmatpush1.bf16.xpose.msra.mxu0 0
    %4094 = vmatprep.subr.bf16.mxu0 0
    %4095 = vmatpush1.bf16.xpose.msra.mxu0 0
    %4096 = vmatprep.subr.bf16.mxu0 0
    %4097 = vmatpush1.bf16.xpose.msra.mxu0 0
    %4098 = vmatprep.subr.bf16.mxu0 0
    %4099 = vmatpush1.bf16.xpose.msra.mxu0 0
    %4100 = vmatprep.subr.bf16.mxu0 0
    %4101 = vmatpush1.bf16.xpose.msra.mxu0 0
    %4102 = vmatprep.subr.bf16.mxu0 0
    %4103 = vmatpush1.bf16.xpose.msra.mxu0 0
    %4104 = vmatprep.subr.bf16.mxu0 0
    %4105 = vmatpush1.bf16.xpose.msra.mxu0 0
    %4106 = vmatprep.subr.bf16.mxu0 0
    %4107 = vmatpush1.bf16.xpose.msra.mxu0 0
    %4108 = vmatprep.subr.bf16.mxu0 0
    %4109 = vmatpush1.bf16.xpose.msra.mxu0 0
    %4110 = vmatprep.subr.bf16.mxu0 0
    %4111 = vmatpush1.bf16.xpose.msra.mxu0 0
    %4112 = vmatprep.subr.bf16.mxu0 0
    %4113 = vmatpush1.bf16.xpose.msra.mxu0 0
    %4114 = vmatprep.subr.bf16.mxu0 0
    %4115 = vmatpush1.bf16.xpose.msra.mxu0 0
    %4116 = vmatprep.subr.bf16.mxu0 0
    %4117 = vmatpush1.bf16.xpose.msra.mxu0 0
    %4118 = vmatprep.mubr.bf16.mxu0 0
    %4119 = vmatmul.mubr.bf16.gmra.mrb[0].mxu0 %v4081
    %v4120 = vpop.f32.mrb[0].mxu0
    %v4121 = vadd.f32 0.0, %v4120
    %v4122 = vpop.f32.mrb[0].mxu0
    %v4123 = vpop.f32.mrb[0].mxu0
    %v4124 = vadd.f32 0.0, %v4123
    %v4125 = vpop.f32.mrb[0].mxu0
    %4126 = vdwg.mxu0
    %4128 = vrot.lane.b32.xlu0 %v1220, 120
    %v4129 = vpop.permute.xlu0 %4128
    %v4131 = vsel %vm1229, %v1156, 0
    %v4134 = vsel %vm1229, %v4129, 0
    %4136 = vmatprep.subr.bf16.mxu0 0
    %4137 = vmatpush1.bf16.xpose.msra.mxu0 %v4134
    %4138 = vmatprep.subr.bf16.mxu0 0
    %4139 = vmatpush1.bf16.xpose.msra.mxu0 0
    %4140 = vmatprep.subr.bf16.mxu0 0
    %4141 = vmatpush1.bf16.xpose.msra.mxu0 0
    %4142 = vmatprep.subr.bf16.mxu0 0
    %4143 = vmatpush1.bf16.xpose.msra.mxu0 0
    %4144 = vmatprep.subr.bf16.mxu0 0
    %4145 = vmatpush1.bf16.xpose.msra.mxu0 0
    %4146 = vmatprep.subr.bf16.mxu0 0
    %4147 = vmatpush1.bf16.xpose.msra.mxu0 0
    %4148 = vmatprep.subr.bf16.mxu0 0
    %4149 = vmatpush1.bf16.xpose.msra.mxu0 0
    %4150 = vmatprep.subr.bf16.mxu0 0
    %4151 = vmatpush1.bf16.xpose.msra.mxu0 0
    %4152 = vmatprep.subr.bf16.mxu0 0
    %4153 = vmatpush1.bf16.xpose.msra.mxu0 0
    %4154 = vmatprep.subr.bf16.mxu0 0
    %4155 = vmatpush1.bf16.xpose.msra.mxu0 0
    %4156 = vmatprep.subr.bf16.mxu0 0
    %4157 = vmatpush1.bf16.xpose.msra.mxu0 0
    %4158 = vmatprep.subr.bf16.mxu0 0
    %4159 = vmatpush1.bf16.xpose.msra.mxu0 0
    %4160 = vmatprep.subr.bf16.mxu0 0
    %4161 = vmatpush1.bf16.xpose.msra.mxu0 0
    %4162 = vmatprep.subr.bf16.mxu0 0
    %4163 = vmatpush1.bf16.xpose.msra.mxu0 0
    %4164 = vmatprep.subr.bf16.mxu0 0
    %4165 = vmatpush1.bf16.xpose.msra.mxu0 0
    %4166 = vmatprep.subr.bf16.mxu0 0
    %4167 = vmatpush1.bf16.xpose.msra.mxu0 0
    %4168 = vmatprep.mubr.bf16.mxu0 0
    %4169 = vmatmul.mubr.bf16.gmra.mrb[0].mxu0 %v4131
    %v4170 = vpop.f32.mrb[0].mxu0
    %v4171 = vadd.f32 0.0, %v4170
    %v4172 = vpop.f32.mrb[0].mxu0
    %v4173 = vpop.f32.mrb[0].mxu0
    %v4174 = vadd.f32 0.0, %v4173
    %v4175 = vpop.f32.mrb[0].mxu0
    %4176 = vdwg.mxu0
    %4178 = vrot.lane.b32.xlu0 %v1221, 120
    %v4179 = vpop.permute.xlu0 %4178
    %v4181 = vsel %vm1229, %v1157, 0
    %v4184 = vsel %vm1229, %v4179, 0
    %4186 = vmatprep.subr.bf16.mxu0 0
    %4187 = vmatpush1.bf16.xpose.msra.mxu0 %v4184
    %4188 = vmatprep.subr.bf16.mxu0 0
    %4189 = vmatpush1.bf16.xpose.msra.mxu0 0
    %4190 = vmatprep.subr.bf16.mxu0 0
    %4191 = vmatpush1.bf16.xpose.msra.mxu0 0
    %4192 = vmatprep.subr.bf16.mxu0 0
    %4193 = vmatpush1.bf16.xpose.msra.mxu0 0
    %4194 = vmatprep.subr.bf16.mxu0 0
    %4195 = vmatpush1.bf16.xpose.msra.mxu0 0
    %4196 = vmatprep.subr.bf16.mxu0 0
    %4197 = vmatpush1.bf16.xpose.msra.mxu0 0
    %4198 = vmatprep.subr.bf16.mxu0 0
    %4199 = vmatpush1.bf16.xpose.msra.mxu0 0
    %4200 = vmatprep.subr.bf16.mxu0 0
    %4201 = vmatpush1.bf16.xpose.msra.mxu0 0
    %4202 = vmatprep.subr.bf16.mxu0 0
    %4203 = vmatpush1.bf16.xpose.msra.mxu0 0
    %4204 = vmatprep.subr.bf16.mxu0 0
    %4205 = vmatpush1.bf16.xpose.msra.mxu0 0
    %4206 = vmatprep.subr.bf16.mxu0 0
    %4207 = vmatpush1.bf16.xpose.msra.mxu0 0
    %4208 = vmatprep.subr.bf16.mxu0 0
    %4209 = vmatpush1.bf16.xpose.msra.mxu0 0
    %4210 = vmatprep.subr.bf16.mxu0 0
    %4211 = vmatpush1.bf16.xpose.msra.mxu0 0
    %4212 = vmatprep.subr.bf16.mxu0 0
    %4213 = vmatpush1.bf16.xpose.msra.mxu0 0
    %4214 = vmatprep.subr.bf16.mxu0 0
    %4215 = vmatpush1.bf16.xpose.msra.mxu0 0
    %4216 = vmatprep.subr.bf16.mxu0 0
    %4217 = vmatpush1.bf16.xpose.msra.mxu0 0
    %4218 = vmatprep.mubr.bf16.mxu0 0
    %4219 = vmatmul.mubr.bf16.gmra.mrb[0].mxu0 %v4181
    %v4220 = vpop.f32.mrb[0].mxu0
    %v4221 = vadd.f32 0.0, %v4220
    %v4222 = vpop.f32.mrb[0].mxu0
    %v4223 = vpop.f32.mrb[0].mxu0
    %v4224 = vadd.f32 0.0, %v4223
    %v4225 = vpop.f32.mrb[0].mxu0
    %4226 = vdwg.mxu0
    %4228 = vrot.lane.b32.xlu0 %v1222, 120
    %v4229 = vpop.permute.xlu0 %4228
    %v4231 = vsel %vm1229, %v1158, 0
    %v4234 = vsel %vm1229, %v4229, 0
    %4236 = vmatprep.subr.bf16.mxu0 0
    %4237 = vmatpush1.bf16.xpose.msra.mxu0 %v4234
    %4238 = vmatprep.subr.bf16.mxu0 0
    %4239 = vmatpush1.bf16.xpose.msra.mxu0 0
    %4240 = vmatprep.subr.bf16.mxu0 0
    %4241 = vmatpush1.bf16.xpose.msra.mxu0 0
    %4242 = vmatprep.subr.bf16.mxu0 0
    %4243 = vmatpush1.bf16.xpose.msra.mxu0 0
    %4244 = vmatprep.subr.bf16.mxu0 0
    %4245 = vmatpush1.bf16.xpose.msra.mxu0 0
    %4246 = vmatprep.subr.bf16.mxu0 0
    %4247 = vmatpush1.bf16.xpose.msra.mxu0 0
    %4248 = vmatprep.subr.bf16.mxu0 0
    %4249 = vmatpush1.bf16.xpose.msra.mxu0 0
    %4250 = vmatprep.subr.bf16.mxu0 0
    %4251 = vmatpush1.bf16.xpose.msra.mxu0 0
    %4252 = vmatprep.subr.bf16.mxu0 0
    %4253 = vmatpush1.bf16.xpose.msra.mxu0 0
    %4254 = vmatprep.subr.bf16.mxu0 0
    %4255 = vmatpush1.bf16.xpose.msra.mxu0 0
    %4256 = vmatprep.subr.bf16.mxu0 0
    %4257 = vmatpush1.bf16.xpose.msra.mxu0 0
    %4258 = vmatprep.subr.bf16.mxu0 0
    %4259 = vmatpush1.bf16.xpose.msra.mxu0 0
    %4260 = vmatprep.subr.bf16.mxu0 0
    %4261 = vmatpush1.bf16.xpose.msra.mxu0 0
    %4262 = vmatprep.subr.bf16.mxu0 0
    %4263 = vmatpush1.bf16.xpose.msra.mxu0 0
    %4264 = vmatprep.subr.bf16.mxu0 0
    %4265 = vmatpush1.bf16.xpose.msra.mxu0 0
    %4266 = vmatprep.subr.bf16.mxu0 0
    %4267 = vmatpush1.bf16.xpose.msra.mxu0 0
    %4268 = vmatprep.mubr.bf16.mxu0 0
    %4269 = vmatmul.mubr.bf16.gmra.mrb[0].mxu0 %v4231
    %v4270 = vpop.f32.mrb[0].mxu0
    %v4271 = vadd.f32 0.0, %v4270
    %v4272 = vpop.f32.mrb[0].mxu0
    %v4273 = vpop.f32.mrb[0].mxu0
    %v4274 = vadd.f32 0.0, %v4273
    %v4275 = vpop.f32.mrb[0].mxu0
    %4276 = vdwg.mxu0
    %4278 = vrot.lane.b32.xlu0 %v1223, 120
    %v4279 = vpop.permute.xlu0 %4278
    %v4281 = vsel %vm1229, %v1159, 0
    %v4284 = vsel %vm1229, %v4279, 0
    %4286 = vmatprep.subr.bf16.mxu0 0
    %4287 = vmatpush1.bf16.xpose.msra.mxu0 %v4284
    %4288 = vmatprep.subr.bf16.mxu0 0
    %4289 = vmatpush1.bf16.xpose.msra.mxu0 0
    %4290 = vmatprep.subr.bf16.mxu0 0
    %4291 = vmatpush1.bf16.xpose.msra.mxu0 0
    %4292 = vmatprep.subr.bf16.mxu0 0
    %4293 = vmatpush1.bf16.xpose.msra.mxu0 0
    %4294 = vmatprep.subr.bf16.mxu0 0
    %4295 = vmatpush1.bf16.xpose.msra.mxu0 0
    %4296 = vmatprep.subr.bf16.mxu0 0
    %4297 = vmatpush1.bf16.xpose.msra.mxu0 0
    %4298 = vmatprep.subr.bf16.mxu0 0
    %4299 = vmatpush1.bf16.xpose.msra.mxu0 0
    %4300 = vmatprep.subr.bf16.mxu0 0
    %4301 = vmatpush1.bf16.xpose.msra.mxu0 0
    %4302 = vmatprep.subr.bf16.mxu0 0
    %4303 = vmatpush1.bf16.xpose.msra.mxu0 0
    %4304 = vmatprep.subr.bf16.mxu0 0
    %4305 = vmatpush1.bf16.xpose.msra.mxu0 0
    %4306 = vmatprep.subr.bf16.mxu0 0
    %4307 = vmatpush1.bf16.xpose.msra.mxu0 0
    %4308 = vmatprep.subr.bf16.mxu0 0
    %4309 = vmatpush1.bf16.xpose.msra.mxu0 0
    %4310 = vmatprep.subr.bf16.mxu0 0
    %4311 = vmatpush1.bf16.xpose.msra.mxu0 0
    %4312 = vmatprep.subr.bf16.mxu0 0
    %4313 = vmatpush1.bf16.xpose.msra.mxu0 0
    %4314 = vmatprep.subr.bf16.mxu0 0
    %4315 = vmatpush1.bf16.xpose.msra.mxu0 0
    %4316 = vmatprep.subr.bf16.mxu0 0
    %4317 = vmatpush1.bf16.xpose.msra.mxu0 0
    %4318 = vmatprep.mubr.bf16.mxu0 0
    %4319 = vmatmul.mubr.bf16.gmra.mrb[0].mxu0 %v4281
    %v4320 = vpop.f32.mrb[0].mxu0
    %v4321 = vadd.f32 0.0, %v4320
    %v4322 = vpop.f32.mrb[0].mxu0
    %v4323 = vpop.f32.mrb[0].mxu0
    %v4324 = vadd.f32 0.0, %v4323
    %v4325 = vpop.f32.mrb[0].mxu0
    %4326 = vdwg.mxu0
    %4328 = vrot.lane.b32.xlu0 %v1224, 120
    %v4329 = vpop.permute.xlu0 %4328
    %v4331 = vsel %vm1229, %v1160, 0
    %v4334 = vsel %vm1229, %v4329, 0
    %4336 = vmatprep.subr.bf16.mxu0 0
    %4337 = vmatpush1.bf16.xpose.msra.mxu0 %v4334
    %4338 = vmatprep.subr.bf16.mxu0 0
    %4339 = vmatpush1.bf16.xpose.msra.mxu0 0
    %4340 = vmatprep.subr.bf16.mxu0 0
    %4341 = vmatpush1.bf16.xpose.msra.mxu0 0
    %4342 = vmatprep.subr.bf16.mxu0 0
    %4343 = vmatpush1.bf16.xpose.msra.mxu0 0
    %4344 = vmatprep.subr.bf16.mxu0 0
    %4345 = vmatpush1.bf16.xpose.msra.mxu0 0
    %4346 = vmatprep.subr.bf16.mxu0 0
    %4347 = vmatpush1.bf16.xpose.msra.mxu0 0
    %4348 = vmatprep.subr.bf16.mxu0 0
    %4349 = vmatpush1.bf16.xpose.msra.mxu0 0
    %4350 = vmatprep.subr.bf16.mxu0 0
    %4351 = vmatpush1.bf16.xpose.msra.mxu0 0
    %4352 = vmatprep.subr.bf16.mxu0 0
    %4353 = vmatpush1.bf16.xpose.msra.mxu0 0
    %4354 = vmatprep.subr.bf16.mxu0 0
    %4355 = vmatpush1.bf16.xpose.msra.mxu0 0
    %4356 = vmatprep.subr.bf16.mxu0 0
    %4357 = vmatpush1.bf16.xpose.msra.mxu0 0
    %4358 = vmatprep.subr.bf16.mxu0 0
    %4359 = vmatpush1.bf16.xpose.msra.mxu0 0
    %4360 = vmatprep.subr.bf16.mxu0 0
    %4361 = vmatpush1.bf16.xpose.msra.mxu0 0
    %4362 = vmatprep.subr.bf16.mxu0 0
    %4363 = vmatpush1.bf16.xpose.msra.mxu0 0
    %4364 = vmatprep.subr.bf16.mxu0 0
    %4365 = vmatpush1.bf16.xpose.msra.mxu0 0
    %4366 = vmatprep.subr.bf16.mxu0 0
    %4367 = vmatpush1.bf16.xpose.msra.mxu0 0
    %4368 = vmatprep.mubr.bf16.mxu0 0
    %4369 = vmatmul.mubr.bf16.gmra.mrb[0].mxu0 %v4331
    %v4370 = vpop.f32.mrb[0].mxu0
    %v4371 = vadd.f32 0.0, %v4370
    %v4372 = vpop.f32.mrb[0].mxu0
    %v4373 = vpop.f32.mrb[0].mxu0
    %v4374 = vadd.f32 0.0, %v4373
    %v4375 = vpop.f32.mrb[0].mxu0
    %4376 = vdwg.mxu0
    %4378 = vrot.lane.b32.xlu0 %v1225, 120
    %v4379 = vpop.permute.xlu0 %4378
    %v4381 = vsel %vm1229, %v1161, 0
    %v4384 = vsel %vm1229, %v4379, 0
    %4386 = vmatprep.subr.bf16.mxu0 0
    %4387 = vmatpush1.bf16.xpose.msra.mxu0 %v4384
    %4388 = vmatprep.subr.bf16.mxu0 0
    %4389 = vmatpush1.bf16.xpose.msra.mxu0 0
    %4390 = vmatprep.subr.bf16.mxu0 0
    %4391 = vmatpush1.bf16.xpose.msra.mxu0 0
    %4392 = vmatprep.subr.bf16.mxu0 0
    %4393 = vmatpush1.bf16.xpose.msra.mxu0 0
    %4394 = vmatprep.subr.bf16.mxu0 0
    %4395 = vmatpush1.bf16.xpose.msra.mxu0 0
    %4396 = vmatprep.subr.bf16.mxu0 0
    %4397 = vmatpush1.bf16.xpose.msra.mxu0 0
    %4398 = vmatprep.subr.bf16.mxu0 0
    %4399 = vmatpush1.bf16.xpose.msra.mxu0 0
    %4400 = vmatprep.subr.bf16.mxu0 0
    %4401 = vmatpush1.bf16.xpose.msra.mxu0 0
    %4402 = vmatprep.subr.bf16.mxu0 0
    %4403 = vmatpush1.bf16.xpose.msra.mxu0 0
    %4404 = vmatprep.subr.bf16.mxu0 0
    %4405 = vmatpush1.bf16.xpose.msra.mxu0 0
    %4406 = vmatprep.subr.bf16.mxu0 0
    %4407 = vmatpush1.bf16.xpose.msra.mxu0 0
    %4408 = vmatprep.subr.bf16.mxu0 0
    %4409 = vmatpush1.bf16.xpose.msra.mxu0 0
    %4410 = vmatprep.subr.bf16.mxu0 0
    %4411 = vmatpush1.bf16.xpose.msra.mxu0 0
    %4412 = vmatprep.subr.bf16.mxu0 0
    %4413 = vmatpush1.bf16.xpose.msra.mxu0 0
    %4414 = vmatprep.subr.bf16.mxu0 0
    %4415 = vmatpush1.bf16.xpose.msra.mxu0 0
    %4416 = vmatprep.subr.bf16.mxu0 0
    %4417 = vmatpush1.bf16.xpose.msra.mxu0 0
    %4418 = vmatprep.mubr.bf16.mxu0 0
    %4419 = vmatmul.mubr.bf16.gmra.mrb[0].mxu0 %v4381
    %v4420 = vpop.f32.mrb[0].mxu0
    %v4421 = vadd.f32 0.0, %v4420
    %v4422 = vpop.f32.mrb[0].mxu0
    %v4423 = vpop.f32.mrb[0].mxu0
    %v4424 = vadd.f32 0.0, %v4423
    %v4425 = vpop.f32.mrb[0].mxu0
    %4426 = vdwg.mxu0
    %vm4427 = vcmask 130048
    %v4428 = vsel %vm4427, %v1271, -inf
    %4429 = vmax.xlane.f32.xlu0 %v4428
    %v4430 = vpop.xlane.xlu0 %4429
    %v4431 = vsel %vm4427, %v1274, -inf
    %4432 = vmax.xlane.f32.xlu0 %v4431
    %v4433 = vpop.xlane.xlu0 %4432
    %v4434 = vsel %vm4427, %v1321, -inf
    %4435 = vmax.xlane.f32.xlu0 %v4434
    %v4436 = vpop.xlane.xlu0 %4435
    %v4437 = vsel %vm4427, %v1324, -inf
    %4438 = vmax.xlane.f32.xlu0 %v4437
    %v4439 = vpop.xlane.xlu0 %4438
    %v4440 = vsel %vm4427, %v1371, -inf
    %4441 = vmax.xlane.f32.xlu0 %v4440
    %v4442 = vpop.xlane.xlu0 %4441
    %v4443 = vsel %vm4427, %v1374, -inf
    %4444 = vmax.xlane.f32.xlu0 %v4443
    %v4445 = vpop.xlane.xlu0 %4444
    %v4446 = vsel %vm4427, %v1421, -inf
    %4447 = vmax.xlane.f32.xlu0 %v4446
    %v4448 = vpop.xlane.xlu0 %4447
    %v4449 = vsel %vm4427, %v1424, -inf
    %4450 = vmax.xlane.f32.xlu0 %v4449
    %v4451 = vpop.xlane.xlu0 %4450
    %v4452 = vsel %vm4427, %v1471, -inf
    %4453 = vmax.xlane.f32.xlu0 %v4452
    %v4454 = vpop.xlane.xlu0 %4453
    %v4455 = vsel %vm4427, %v1474, -inf
    %4456 = vmax.xlane.f32.xlu0 %v4455
    %v4457 = vpop.xlane.xlu0 %4456
    %v4458 = vsel %vm4427, %v1521, -inf
    %4459 = vmax.xlane.f32.xlu0 %v4458
    %v4460 = vpop.xlane.xlu0 %4459
    %v4461 = vsel %vm4427, %v1524, -inf
    %4462 = vmax.xlane.f32.xlu0 %v4461
    %v4463 = vpop.xlane.xlu0 %4462
    %v4464 = vsel %vm4427, %v1571, -inf
    %4465 = vmax.xlane.f32.xlu0 %v4464
    %v4466 = vpop.xlane.xlu0 %4465
    %v4467 = vsel %vm4427, %v1574, -inf
    %4468 = vmax.xlane.f32.xlu0 %v4467
    %v4469 = vpop.xlane.xlu0 %4468
    %v4470 = vsel %vm4427, %v1621, -inf
    %4471 = vmax.xlane.f32.xlu0 %v4470
    %v4472 = vpop.xlane.xlu0 %4471
    %v4473 = vsel %vm4427, %v1624, -inf
    %4474 = vmax.xlane.f32.xlu0 %v4473
    %v4475 = vpop.xlane.xlu0 %4474
    %v4476 = vsel %vm4427, %v1671, -inf
    %4477 = vmax.xlane.f32.xlu0 %v4476
    %v4478 = vpop.xlane.xlu0 %4477
    %v4479 = vsel %vm4427, %v1674, -inf
    %4480 = vmax.xlane.f32.xlu0 %v4479
    %v4481 = vpop.xlane.xlu0 %4480
    %v4482 = vsel %vm4427, %v1721, -inf
    %4483 = vmax.xlane.f32.xlu0 %v4482
    %v4484 = vpop.xlane.xlu0 %4483
    %v4485 = vsel %vm4427, %v1724, -inf
    %4486 = vmax.xlane.f32.xlu0 %v4485
    %v4487 = vpop.xlane.xlu0 %4486
    %v4488 = vsel %vm4427, %v1771, -inf
    %4489 = vmax.xlane.f32.xlu0 %v4488
    %v4490 = vpop.xlane.xlu0 %4489
    %v4491 = vsel %vm4427, %v1774, -inf
    %4492 = vmax.xlane.f32.xlu0 %v4491
    %v4493 = vpop.xlane.xlu0 %4492
    %v4494 = vsel %vm4427, %v1821, -inf
    %4495 = vmax.xlane.f32.xlu0 %v4494
    %v4496 = vpop.xlane.xlu0 %4495
    %v4497 = vsel %vm4427, %v1824, -inf
    %4498 = vmax.xlane.f32.xlu0 %v4497
    %v4499 = vpop.xlane.xlu0 %4498
    %v4500 = vsel %vm4427, %v1871, -inf
    %4501 = vmax.xlane.f32.xlu0 %v4500
    %v4502 = vpop.xlane.xlu0 %4501
    %v4503 = vsel %vm4427, %v1874, -inf
    %4504 = vmax.xlane.f32.xlu0 %v4503
    %v4505 = vpop.xlane.xlu0 %4504
    %v4506 = vsel %vm4427, %v1921, -inf
    %4507 = vmax.xlane.f32.xlu0 %v4506
    %v4508 = vpop.xlane.xlu0 %4507
    %v4509 = vsel %vm4427, %v1924, -inf
    %4510 = vmax.xlane.f32.xlu0 %v4509
    %v4511 = vpop.xlane.xlu0 %4510
    %v4512 = vsel %vm4427, %v1971, -inf
    %4513 = vmax.xlane.f32.xlu0 %v4512
    %v4514 = vpop.xlane.xlu0 %4513
    %v4515 = vsel %vm4427, %v1974, -inf
    %4516 = vmax.xlane.f32.xlu0 %v4515
    %v4517 = vpop.xlane.xlu0 %4516
    %v4518 = vsel %vm4427, %v2021, -inf
    %4519 = vmax.xlane.f32.xlu0 %v4518
    %v4520 = vpop.xlane.xlu0 %4519
    %v4521 = vsel %vm4427, %v2024, -inf
    %4522 = vmax.xlane.f32.xlu0 %v4521
    %v4523 = vpop.xlane.xlu0 %4522
    %v4524 = vsel %vm4427, %v2071, -inf
    %4525 = vmax.xlane.f32.xlu0 %v4524
    %v4526 = vpop.xlane.xlu0 %4525
    %v4527 = vsel %vm4427, %v2074, -inf
    %4528 = vmax.xlane.f32.xlu0 %v4527
    %v4529 = vpop.xlane.xlu0 %4528
    %v4530 = vsel %vm4427, %v2121, -inf
    %4531 = vmax.xlane.f32.xlu0 %v4530
    %v4532 = vpop.xlane.xlu0 %4531
    %v4533 = vsel %vm4427, %v2124, -inf
    %4534 = vmax.xlane.f32.xlu0 %v4533
    %v4535 = vpop.xlane.xlu0 %4534
    %v4536 = vsel %vm4427, %v2171, -inf
    %4537 = vmax.xlane.f32.xlu0 %v4536
    %v4538 = vpop.xlane.xlu0 %4537
    %v4539 = vsel %vm4427, %v2174, -inf
    %4540 = vmax.xlane.f32.xlu0 %v4539
    %v4541 = vpop.xlane.xlu0 %4540
    %v4542 = vsel %vm4427, %v2221, -inf
    %4543 = vmax.xlane.f32.xlu0 %v4542
    %v4544 = vpop.xlane.xlu0 %4543
    %v4545 = vsel %vm4427, %v2224, -inf
    %4546 = vmax.xlane.f32.xlu0 %v4545
    %v4547 = vpop.xlane.xlu0 %4546
    %v4548 = vsel %vm4427, %v2271, -inf
    %4549 = vmax.xlane.f32.xlu0 %v4548
    %v4550 = vpop.xlane.xlu0 %4549
    %v4551 = vsel %vm4427, %v2274, -inf
    %4552 = vmax.xlane.f32.xlu0 %v4551
    %v4553 = vpop.xlane.xlu0 %4552
    %v4554 = vsel %vm4427, %v2321, -inf
    %4555 = vmax.xlane.f32.xlu0 %v4554
    %v4556 = vpop.xlane.xlu0 %4555
    %v4557 = vsel %vm4427, %v2324, -inf
    %4558 = vmax.xlane.f32.xlu0 %v4557
    %v4559 = vpop.xlane.xlu0 %4558
    %v4560 = vsel %vm4427, %v2371, -inf
    %4561 = vmax.xlane.f32.xlu0 %v4560
    %v4562 = vpop.xlane.xlu0 %4561
    %v4563 = vsel %vm4427, %v2374, -inf
    %4564 = vmax.xlane.f32.xlu0 %v4563
    %v4565 = vpop.xlane.xlu0 %4564
    %v4566 = vsel %vm4427, %v2421, -inf
    %4567 = vmax.xlane.f32.xlu0 %v4566
    %v4568 = vpop.xlane.xlu0 %4567
    %v4569 = vsel %vm4427, %v2424, -inf
    %4570 = vmax.xlane.f32.xlu0 %v4569
    %v4571 = vpop.xlane.xlu0 %4570
    %v4572 = vsel %vm4427, %v2471, -inf
    %4573 = vmax.xlane.f32.xlu0 %v4572
    %v4574 = vpop.xlane.xlu0 %4573
    %v4575 = vsel %vm4427, %v2474, -inf
    %4576 = vmax.xlane.f32.xlu0 %v4575
    %v4577 = vpop.xlane.xlu0 %4576
    %v4578 = vsel %vm4427, %v2521, -inf
    %4579 = vmax.xlane.f32.xlu0 %v4578
    %v4580 = vpop.xlane.xlu0 %4579
    %v4581 = vsel %vm4427, %v2524, -inf
    %4582 = vmax.xlane.f32.xlu0 %v4581
    %v4583 = vpop.xlane.xlu0 %4582
    %v4584 = vsel %vm4427, %v2571, -inf
    %4585 = vmax.xlane.f32.xlu0 %v4584
    %v4586 = vpop.xlane.xlu0 %4585
    %v4587 = vsel %vm4427, %v2574, -inf
    %4588 = vmax.xlane.f32.xlu0 %v4587
    %v4589 = vpop.xlane.xlu0 %4588
    %v4590 = vsel %vm4427, %v2621, -inf
    %4591 = vmax.xlane.f32.xlu0 %v4590
    %v4592 = vpop.xlane.xlu0 %4591
    %v4593 = vsel %vm4427, %v2624, -inf
    %4594 = vmax.xlane.f32.xlu0 %v4593
    %v4595 = vpop.xlane.xlu0 %4594
    %v4596 = vsel %vm4427, %v2671, -inf
    %4597 = vmax.xlane.f32.xlu0 %v4596
    %v4598 = vpop.xlane.xlu0 %4597
    %v4599 = vsel %vm4427, %v2674, -inf
    %4600 = vmax.xlane.f32.xlu0 %v4599
    %v4601 = vpop.xlane.xlu0 %4600
    %v4602 = vsel %vm4427, %v2721, -inf
    %4603 = vmax.xlane.f32.xlu0 %v4602
    %v4604 = vpop.xlane.xlu0 %4603
    %v4605 = vsel %vm4427, %v2724, -inf
    %4606 = vmax.xlane.f32.xlu0 %v4605
    %v4607 = vpop.xlane.xlu0 %4606
    %v4608 = vsel %vm4427, %v2771, -inf
    %4609 = vmax.xlane.f32.xlu0 %v4608
    %v4610 = vpop.xlane.xlu0 %4609
    %v4611 = vsel %vm4427, %v2774, -inf
    %4612 = vmax.xlane.f32.xlu0 %v4611
    %v4613 = vpop.xlane.xlu0 %4612
    %v4614 = vsel %vm4427, %v2821, -inf
    %4615 = vmax.xlane.f32.xlu0 %v4614
    %v4616 = vpop.xlane.xlu0 %4615
    %v4617 = vsel %vm4427, %v2824, -inf
    %4618 = vmax.xlane.f32.xlu0 %v4617
    %v4619 = vpop.xlane.xlu0 %4618
    %v4620 = vsel %vm4427, %v2871, -inf
    %4621 = vmax.xlane.f32.xlu0 %v4620
    %v4622 = vpop.xlane.xlu0 %4621
    %v4623 = vsel %vm4427, %v2874, -inf
    %4624 = vmax.xlane.f32.xlu0 %v4623
    %v4625 = vpop.xlane.xlu0 %4624
    %v4626 = vsel %vm4427, %v2921, -inf
    %4627 = vmax.xlane.f32.xlu0 %v4626
    %v4628 = vpop.xlane.xlu0 %4627
    %v4629 = vsel %vm4427, %v2924, -inf
    %4630 = vmax.xlane.f32.xlu0 %v4629
    %v4631 = vpop.xlane.xlu0 %4630
    %v4632 = vsel %vm4427, %v2971, -inf
    %4633 = vmax.xlane.f32.xlu0 %v4632
    %v4634 = vpop.xlane.xlu0 %4633
    %v4635 = vsel %vm4427, %v2974, -inf
    %4636 = vmax.xlane.f32.xlu0 %v4635
    %v4637 = vpop.xlane.xlu0 %4636
    %v4638 = vsel %vm4427, %v3021, -inf
    %4639 = vmax.xlane.f32.xlu0 %v4638
    %v4640 = vpop.xlane.xlu0 %4639
    %v4641 = vsel %vm4427, %v3024, -inf
    %4642 = vmax.xlane.f32.xlu0 %v4641
    %v4643 = vpop.xlane.xlu0 %4642
    %v4644 = vsel %vm4427, %v3071, -inf
    %4645 = vmax.xlane.f32.xlu0 %v4644
    %v4646 = vpop.xlane.xlu0 %4645
    %v4647 = vsel %vm4427, %v3074, -inf
    %4648 = vmax.xlane.f32.xlu0 %v4647
    %v4649 = vpop.xlane.xlu0 %4648
    %v4650 = vsel %vm4427, %v3121, -inf
    %4651 = vmax.xlane.f32.xlu0 %v4650
    %v4652 = vpop.xlane.xlu0 %4651
    %v4653 = vsel %vm4427, %v3124, -inf
    %4654 = vmax.xlane.f32.xlu0 %v4653
    %v4655 = vpop.xlane.xlu0 %4654
    %v4656 = vsel %vm4427, %v3171, -inf
    %4657 = vmax.xlane.f32.xlu0 %v4656
    %v4658 = vpop.xlane.xlu0 %4657
    %v4659 = vsel %vm4427, %v3174, -inf
    %4660 = vmax.xlane.f32.xlu0 %v4659
    %v4661 = vpop.xlane.xlu0 %4660
    %v4662 = vsel %vm4427, %v3221, -inf
    %4663 = vmax.xlane.f32.xlu0 %v4662
    %v4664 = vpop.xlane.xlu0 %4663
    %v4665 = vsel %vm4427, %v3224, -inf
    %4666 = vmax.xlane.f32.xlu0 %v4665
    %v4667 = vpop.xlane.xlu0 %4666
    %v4668 = vsel %vm4427, %v3271, -inf
    %4669 = vmax.xlane.f32.xlu0 %v4668
    %v4670 = vpop.xlane.xlu0 %4669
    %v4671 = vsel %vm4427, %v3274, -inf
    %4672 = vmax.xlane.f32.xlu0 %v4671
    %v4673 = vpop.xlane.xlu0 %4672
    %v4674 = vsel %vm4427, %v3321, -inf
    %4675 = vmax.xlane.f32.xlu0 %v4674
    %v4676 = vpop.xlane.xlu0 %4675
    %v4677 = vsel %vm4427, %v3324, -inf
    %4678 = vmax.xlane.f32.xlu0 %v4677
    %v4679 = vpop.xlane.xlu0 %4678
    %v4680 = vsel %vm4427, %v3371, -inf
    %4681 = vmax.xlane.f32.xlu0 %v4680
    %v4682 = vpop.xlane.xlu0 %4681
    %v4683 = vsel %vm4427, %v3374, -inf
    %4684 = vmax.xlane.f32.xlu0 %v4683
    %v4685 = vpop.xlane.xlu0 %4684
    %v4686 = vsel %vm4427, %v3421, -inf
    %4687 = vmax.xlane.f32.xlu0 %v4686
    %v4688 = vpop.xlane.xlu0 %4687
    %v4689 = vsel %vm4427, %v3424, -inf
    %4690 = vmax.xlane.f32.xlu0 %v4689
    %v4691 = vpop.xlane.xlu0 %4690
    %v4692 = vsel %vm4427, %v3471, -inf
    %4693 = vmax.xlane.f32.xlu0 %v4692
    %v4694 = vpop.xlane.xlu0 %4693
    %v4695 = vsel %vm4427, %v3474, -inf
    %4696 = vmax.xlane.f32.xlu0 %v4695
    %v4697 = vpop.xlane.xlu0 %4696
    %v4698 = vsel %vm4427, %v3521, -inf
    %4699 = vmax.xlane.f32.xlu0 %v4698
    %v4700 = vpop.xlane.xlu0 %4699
    %v4701 = vsel %vm4427, %v3524, -inf
    %4702 = vmax.xlane.f32.xlu0 %v4701
    %v4703 = vpop.xlane.xlu0 %4702
    %v4704 = vsel %vm4427, %v3571, -inf
    %4705 = vmax.xlane.f32.xlu0 %v4704
    %v4706 = vpop.xlane.xlu0 %4705
    %v4707 = vsel %vm4427, %v3574, -inf
    %4708 = vmax.xlane.f32.xlu0 %v4707
    %v4709 = vpop.xlane.xlu0 %4708
    %v4710 = vsel %vm4427, %v3621, -inf
    %4711 = vmax.xlane.f32.xlu0 %v4710
    %v4712 = vpop.xlane.xlu0 %4711
    %v4713 = vsel %vm4427, %v3624, -inf
    %4714 = vmax.xlane.f32.xlu0 %v4713
    %v4715 = vpop.xlane.xlu0 %4714
    %v4716 = vsel %vm4427, %v3671, -inf
    %4717 = vmax.xlane.f32.xlu0 %v4716
    %v4718 = vpop.xlane.xlu0 %4717
    %v4719 = vsel %vm4427, %v3674, -inf
    %4720 = vmax.xlane.f32.xlu0 %v4719
    %v4721 = vpop.xlane.xlu0 %4720
    %v4722 = vsel %vm4427, %v3721, -inf
    %4723 = vmax.xlane.f32.xlu0 %v4722
    %v4724 = vpop.xlane.xlu0 %4723
    %v4725 = vsel %vm4427, %v3724, -inf
    %4726 = vmax.xlane.f32.xlu0 %v4725
    %v4727 = vpop.xlane.xlu0 %4726
    %v4728 = vsel %vm4427, %v3771, -inf
    %4729 = vmax.xlane.f32.xlu0 %v4728
    %v4730 = vpop.xlane.xlu0 %4729
    %v4731 = vsel %vm4427, %v3774, -inf
    %4732 = vmax.xlane.f32.xlu0 %v4731
    %v4733 = vpop.xlane.xlu0 %4732
    %v4734 = vsel %vm4427, %v3821, -inf
    %4735 = vmax.xlane.f32.xlu0 %v4734
    %v4736 = vpop.xlane.xlu0 %4735
    %v4737 = vsel %vm4427, %v3824, -inf
    %4738 = vmax.xlane.f32.xlu0 %v4737
    %v4739 = vpop.xlane.xlu0 %4738
    %v4740 = vsel %vm4427, %v3871, -inf
    %4741 = vmax.xlane.f32.xlu0 %v4740
    %v4742 = vpop.xlane.xlu0 %4741
    %v4743 = vsel %vm4427, %v3874, -inf
    %4744 = vmax.xlane.f32.xlu0 %v4743
    %v4745 = vpop.xlane.xlu0 %4744
    %v4746 = vsel %vm4427, %v3921, -inf
    %4747 = vmax.xlane.f32.xlu0 %v4746
    %v4748 = vpop.xlane.xlu0 %4747
    %v4749 = vsel %vm4427, %v3924, -inf
    %4750 = vmax.xlane.f32.xlu0 %v4749
    %v4751 = vpop.xlane.xlu0 %4750
    %v4752 = vsel %vm4427, %v3971, -inf
    %4753 = vmax.xlane.f32.xlu0 %v4752
    %v4754 = vpop.xlane.xlu0 %4753
    %v4755 = vsel %vm4427, %v3974, -inf
    %4756 = vmax.xlane.f32.xlu0 %v4755
    %v4757 = vpop.xlane.xlu0 %4756
    %v4758 = vsel %vm4427, %v4021, -inf
    %4759 = vmax.xlane.f32.xlu0 %v4758
    %v4760 = vpop.xlane.xlu0 %4759
    %v4761 = vsel %vm4427, %v4024, -inf
    %4762 = vmax.xlane.f32.xlu0 %v4761
    %v4763 = vpop.xlane.xlu0 %4762
    %v4764 = vsel %vm4427, %v4071, -inf
    %4765 = vmax.xlane.f32.xlu0 %v4764
    %v4766 = vpop.xlane.xlu0 %4765
    %v4767 = vsel %vm4427, %v4074, -inf
    %4768 = vmax.xlane.f32.xlu0 %v4767
    %v4769 = vpop.xlane.xlu0 %4768
    %v4770 = vsel %vm4427, %v4121, -inf
    %4771 = vmax.xlane.f32.xlu0 %v4770
    %v4772 = vpop.xlane.xlu0 %4771
    %v4773 = vsel %vm4427, %v4124, -inf
    %4774 = vmax.xlane.f32.xlu0 %v4773
    %v4775 = vpop.xlane.xlu0 %4774
    %v4776 = vsel %vm4427, %v4171, -inf
    %4777 = vmax.xlane.f32.xlu0 %v4776
    %v4778 = vpop.xlane.xlu0 %4777
    %v4779 = vsel %vm4427, %v4174, -inf
    %4780 = vmax.xlane.f32.xlu0 %v4779
    %v4781 = vpop.xlane.xlu0 %4780
    %v4782 = vsel %vm4427, %v4221, -inf
    %4783 = vmax.xlane.f32.xlu0 %v4782
    %v4784 = vpop.xlane.xlu0 %4783
    %v4785 = vsel %vm4427, %v4224, -inf
    %4786 = vmax.xlane.f32.xlu0 %v4785
    %v4787 = vpop.xlane.xlu0 %4786
    %v4788 = vsel %vm4427, %v4271, -inf
    %4789 = vmax.xlane.f32.xlu0 %v4788
    %v4790 = vpop.xlane.xlu0 %4789
    %v4791 = vsel %vm4427, %v4274, -inf
    %4792 = vmax.xlane.f32.xlu0 %v4791
    %v4793 = vpop.xlane.xlu0 %4792
    %v4794 = vsel %vm4427, %v4321, -inf
    %4795 = vmax.xlane.f32.xlu0 %v4794
    %v4796 = vpop.xlane.xlu0 %4795
    %v4797 = vsel %vm4427, %v4324, -inf
    %4798 = vmax.xlane.f32.xlu0 %v4797
    %v4799 = vpop.xlane.xlu0 %4798
    %v4800 = vsel %vm4427, %v4371, -inf
    %4801 = vmax.xlane.f32.xlu0 %v4800
    %v4802 = vpop.xlane.xlu0 %4801
    %v4803 = vsel %vm4427, %v4374, -inf
    %4804 = vmax.xlane.f32.xlu0 %v4803
    %v4805 = vpop.xlane.xlu0 %4804
    %v4806 = vsel %vm4427, %v4421, -inf
    %4807 = vmax.xlane.f32.xlu0 %v4806
    %v4808 = vpop.xlane.xlu0 %4807
    %v4809 = vsel %vm4427, %v4424, -inf
    %4810 = vmax.xlane.f32.xlu0 %v4809
    %v4811 = vpop.xlane.xlu0 %4810
    %v4812 = vsub.f32 %v1271, %v4430
    %v4813 = vsub.f32 %v1274, %v4433
    %v4814 = vsub.f32 %v1321, %v4436
    %v4815 = vsub.f32 %v1324, %v4439
    %v4816 = vsub.f32 %v1371, %v4442
    %v4817 = vsub.f32 %v1374, %v4445
    %v4818 = vsub.f32 %v1421, %v4448
    %v4819 = vsub.f32 %v1424, %v4451
    %v4820 = vsub.f32 %v1471, %v4454
    %v4821 = vsub.f32 %v1474, %v4457
    %v4822 = vsub.f32 %v1521, %v4460
    %v4823 = vsub.f32 %v1524, %v4463
    %v4824 = vsub.f32 %v1571, %v4466
    %v4825 = vsub.f32 %v1574, %v4469
    %v4826 = vsub.f32 %v1621, %v4472
    %v4827 = vsub.f32 %v1624, %v4475
    %v4828 = vsub.f32 %v1671, %v4478
    %v4829 = vsub.f32 %v1674, %v4481
    %v4830 = vsub.f32 %v1721, %v4484
    %v4831 = vsub.f32 %v1724, %v4487
    %v4832 = vsub.f32 %v1771, %v4490
    %v4833 = vsub.f32 %v1774, %v4493
    %v4834 = vsub.f32 %v1821, %v4496
    %v4835 = vsub.f32 %v1824, %v4499
    %v4836 = vsub.f32 %v1871, %v4502
    %v4837 = vsub.f32 %v1874, %v4505
    %v4838 = vsub.f32 %v1921, %v4508
    %v4839 = vsub.f32 %v1924, %v4511
    %v4840 = vsub.f32 %v1971, %v4514
    %v4841 = vsub.f32 %v1974, %v4517
    %v4842 = vsub.f32 %v2021, %v4520
    %v4843 = vsub.f32 %v2024, %v4523
    %v4844 = vsub.f32 %v2071, %v4526
    %v4845 = vsub.f32 %v2074, %v4529
    %v4846 = vsub.f32 %v2121, %v4532
    %v4847 = vsub.f32 %v2124, %v4535
    %v4848 = vsub.f32 %v2171, %v4538
    %v4849 = vsub.f32 %v2174, %v4541
    %v4850 = vsub.f32 %v2221, %v4544
    %v4851 = vsub.f32 %v2224, %v4547
    %v4852 = vsub.f32 %v2271, %v4550
    %v4853 = vsub.f32 %v2274, %v4553
    %v4854 = vsub.f32 %v2321, %v4556
    %v4855 = vsub.f32 %v2324, %v4559
    %v4856 = vsub.f32 %v2371, %v4562
    %v4857 = vsub.f32 %v2374, %v4565
    %v4858 = vsub.f32 %v2421, %v4568
    %v4859 = vsub.f32 %v2424, %v4571
    %v4860 = vsub.f32 %v2471, %v4574
    %v4861 = vsub.f32 %v2474, %v4577
    %v4862 = vsub.f32 %v2521, %v4580
    %v4863 = vsub.f32 %v2524, %v4583
    %v4864 = vsub.f32 %v2571, %v4586
    %v4865 = vsub.f32 %v2574, %v4589
    %v4866 = vsub.f32 %v2621, %v4592
    %v4867 = vsub.f32 %v2624, %v4595
    %v4868 = vsub.f32 %v2671, %v4598
    %v4869 = vsub.f32 %v2674, %v4601
    %v4870 = vsub.f32 %v2721, %v4604
    %v4871 = vsub.f32 %v2724, %v4607
    %v4872 = vsub.f32 %v2771, %v4610
    %v4873 = vsub.f32 %v2774, %v4613
    %v4874 = vsub.f32 %v2821, %v4616
    %v4875 = vsub.f32 %v2824, %v4619
    %v4876 = vsub.f32 %v2871, %v4622
    %v4877 = vsub.f32 %v2874, %v4625
    %v4878 = vsub.f32 %v2921, %v4628
    %v4879 = vsub.f32 %v2924, %v4631
    %v4880 = vsub.f32 %v2971, %v4634
    %v4881 = vsub.f32 %v2974, %v4637
    %v4882 = vsub.f32 %v3021, %v4640
    %v4883 = vsub.f32 %v3024, %v4643
    %v4884 = vsub.f32 %v3071, %v4646
    %v4885 = vsub.f32 %v3074, %v4649
    %v4886 = vsub.f32 %v3121, %v4652
    %v4887 = vsub.f32 %v3124, %v4655
    %v4888 = vsub.f32 %v3171, %v4658
    %v4889 = vsub.f32 %v3174, %v4661
    %v4890 = vsub.f32 %v3221, %v4664
    %v4891 = vsub.f32 %v3224, %v4667
    %v4892 = vsub.f32 %v3271, %v4670
    %v4893 = vsub.f32 %v3274, %v4673
    %v4894 = vsub.f32 %v3321, %v4676
    %v4895 = vsub.f32 %v3324, %v4679
    %v4896 = vsub.f32 %v3371, %v4682
    %v4897 = vsub.f32 %v3374, %v4685
    %v4898 = vsub.f32 %v3421, %v4688
    %v4899 = vsub.f32 %v3424, %v4691
    %v4900 = vsub.f32 %v3471, %v4694
    %v4901 = vsub.f32 %v3474, %v4697
    %v4902 = vsub.f32 %v3521, %v4700
    %v4903 = vsub.f32 %v3524, %v4703
    %v4904 = vsub.f32 %v3571, %v4706
    %v4905 = vsub.f32 %v3574, %v4709
    %v4906 = vsub.f32 %v3621, %v4712
    %v4907 = vsub.f32 %v3624, %v4715
    %v4908 = vsub.f32 %v3671, %v4718
    %v4909 = vsub.f32 %v3674, %v4721
    %v4910 = vsub.f32 %v3721, %v4724
    %v4911 = vsub.f32 %v3724, %v4727
    %v4912 = vsub.f32 %v3771, %v4730
    %v4913 = vsub.f32 %v3774, %v4733
    %v4914 = vsub.f32 %v3821, %v4736
    %v4915 = vsub.f32 %v3824, %v4739
    %v4916 = vsub.f32 %v3871, %v4742
    %v4917 = vsub.f32 %v3874, %v4745
    %v4918 = vsub.f32 %v3921, %v4748
    %v4919 = vsub.f32 %v3924, %v4751
    %v4920 = vsub.f32 %v3971, %v4754
    %v4921 = vsub.f32 %v3974, %v4757
    %v4922 = vsub.f32 %v4021, %v4760
    %v4923 = vsub.f32 %v4024, %v4763
    %v4924 = vsub.f32 %v4071, %v4766
    %v4925 = vsub.f32 %v4074, %v4769
    %v4926 = vsub.f32 %v4121, %v4772
    %v4927 = vsub.f32 %v4124, %v4775
    %v4928 = vsub.f32 %v4171, %v4778
    %v4929 = vsub.f32 %v4174, %v4781
    %v4930 = vsub.f32 %v4221, %v4784
    %v4931 = vsub.f32 %v4224, %v4787
    %v4932 = vsub.f32 %v4271, %v4790
    %v4933 = vsub.f32 %v4274, %v4793
    %v4934 = vsub.f32 %v4321, %v4796
    %v4935 = vsub.f32 %v4324, %v4799
    %v4936 = vsub.f32 %v4371, %v4802
    %v4937 = vsub.f32 %v4374, %v4805
    %v4938 = vsub.f32 %v4421, %v4808
    %v4939 = vsub.f32 %v4424, %v4811
    %v4940 = vmul.f32 %v4812, 1.442695
    %v4941 = vpow.pop %v4940
    %v4942 = vmul.f32 %v4813, 1.442695
    %v4943 = vpow.pop %v4942
    %v4944 = vmul.f32 %v4814, 1.442695
    %v4945 = vpow.pop %v4944
    %v4946 = vmul.f32 %v4815, 1.442695
    %v4947 = vpow.pop %v4946
    %v4948 = vmul.f32 %v4816, 1.442695
    %v4949 = vpow.pop %v4948
    %v4950 = vmul.f32 %v4817, 1.442695
    %v4951 = vpow.pop %v4950
    %v4952 = vmul.f32 %v4818, 1.442695
    %v4953 = vpow.pop %v4952
    %v4954 = vmul.f32 %v4819, 1.442695
    %v4955 = vpow.pop %v4954
    %v4956 = vmul.f32 %v4820, 1.442695
    %v4957 = vpow.pop %v4956
    %v4958 = vmul.f32 %v4821, 1.442695
    %v4959 = vpow.pop %v4958
    %v4960 = vmul.f32 %v4822, 1.442695
    %v4961 = vpow.pop %v4960
    %v4962 = vmul.f32 %v4823, 1.442695
    %v4963 = vpow.pop %v4962
    %v4964 = vmul.f32 %v4824, 1.442695
    %v4965 = vpow.pop %v4964
    %v4966 = vmul.f32 %v4825, 1.442695
    %v4967 = vpow.pop %v4966
    %v4968 = vmul.f32 %v4826, 1.442695
    %v4969 = vpow.pop %v4968
    %v4970 = vmul.f32 %v4827, 1.442695
    %v4971 = vpow.pop %v4970
    %v4972 = vmul.f32 %v4828, 1.442695
    %v4973 = vpow.pop %v4972
    %v4974 = vmul.f32 %v4829, 1.442695
    %v4975 = vpow.pop %v4974
    %v4976 = vmul.f32 %v4830, 1.442695
    %v4977 = vpow.pop %v4976
    %v4978 = vmul.f32 %v4831, 1.442695
    %v4979 = vpow.pop %v4978
    %v4980 = vmul.f32 %v4832, 1.442695
    %v4981 = vpow.pop %v4980
    %v4982 = vmul.f32 %v4833, 1.442695
    %v4983 = vpow.pop %v4982
    %v4984 = vmul.f32 %v4834, 1.442695
    %v4985 = vpow.pop %v4984
    %v4986 = vmul.f32 %v4835, 1.442695
    %v4987 = vpow.pop %v4986
    %v4988 = vmul.f32 %v4836, 1.442695
    %v4989 = vpow.pop %v4988
    %v4990 = vmul.f32 %v4837, 1.442695
    %v4991 = vpow.pop %v4990
    %v4992 = vmul.f32 %v4838, 1.442695
    %v4993 = vpow.pop %v4992
    %v4994 = vmul.f32 %v4839, 1.442695
    %v4995 = vpow.pop %v4994
    %v4996 = vmul.f32 %v4840, 1.442695
    %v4997 = vpow.pop %v4996
    %v4998 = vmul.f32 %v4841, 1.442695
    %v4999 = vpow.pop %v4998
    %v5000 = vmul.f32 %v4842, 1.442695
    %v5001 = vpow.pop %v5000
    %v5002 = vmul.f32 %v4843, 1.442695
    %v5003 = vpow.pop %v5002
    %v5004 = vmul.f32 %v4844, 1.442695
    %v5005 = vpow.pop %v5004
    %v5006 = vmul.f32 %v4845, 1.442695
    %v5007 = vpow.pop %v5006
    %v5008 = vmul.f32 %v4846, 1.442695
    %v5009 = vpow.pop %v5008
    %v5010 = vmul.f32 %v4847, 1.442695
    %v5011 = vpow.pop %v5010
    %v5012 = vmul.f32 %v4848, 1.442695
    %v5013 = vpow.pop %v5012
    %v5014 = vmul.f32 %v4849, 1.442695
    %v5015 = vpow.pop %v5014
    %v5016 = vmul.f32 %v4850, 1.442695
    %v5017 = vpow.pop %v5016
    %v5018 = vmul.f32 %v4851, 1.442695
    %v5019 = vpow.pop %v5018
    %v5020 = vmul.f32 %v4852, 1.442695
    %v5021 = vpow.pop %v5020
    %v5022 = vmul.f32 %v4853, 1.442695
    %v5023 = vpow.pop %v5022
    %v5024 = vmul.f32 %v4854, 1.442695
    %v5025 = vpow.pop %v5024
    %v5026 = vmul.f32 %v4855, 1.442695
    %v5027 = vpow.pop %v5026
    %v5028 = vmul.f32 %v4856, 1.442695
    %v5029 = vpow.pop %v5028
    %v5030 = vmul.f32 %v4857, 1.442695
    %v5031 = vpow.pop %v5030
    %v5032 = vmul.f32 %v4858, 1.442695
    %v5033 = vpow.pop %v5032
    %v5034 = vmul.f32 %v4859, 1.442695
    %v5035 = vpow.pop %v5034
    %v5036 = vmul.f32 %v4860, 1.442695
    %v5037 = vpow.pop %v5036
    %v5038 = vmul.f32 %v4861, 1.442695
    %v5039 = vpow.pop %v5038
    %v5040 = vmul.f32 %v4862, 1.442695
    %v5041 = vpow.pop %v5040
    %v5042 = vmul.f32 %v4863, 1.442695
    %v5043 = vpow.pop %v5042
    %v5044 = vmul.f32 %v4864, 1.442695
    %v5045 = vpow.pop %v5044
    %v5046 = vmul.f32 %v4865, 1.442695
    %v5047 = vpow.pop %v5046
    %v5048 = vmul.f32 %v4866, 1.442695
    %v5049 = vpow.pop %v5048
    %v5050 = vmul.f32 %v4867, 1.442695
    %v5051 = vpow.pop %v5050
    %v5052 = vmul.f32 %v4868, 1.442695
    %v5053 = vpow.pop %v5052
    %v5054 = vmul.f32 %v4869, 1.442695
    %v5055 = vpow.pop %v5054
    %v5056 = vmul.f32 %v4870, 1.442695
    %v5057 = vpow.pop %v5056
    %v5058 = vmul.f32 %v4871, 1.442695
    %v5059 = vpow.pop %v5058
    %v5060 = vmul.f32 %v4872, 1.442695
    %v5061 = vpow.pop %v5060
    %v5062 = vmul.f32 %v4873, 1.442695
    %v5063 = vpow.pop %v5062
    %v5064 = vmul.f32 %v4874, 1.442695
    %v5065 = vpow.pop %v5064
    %v5066 = vmul.f32 %v4875, 1.442695
    %v5067 = vpow.pop %v5066
    %v5068 = vmul.f32 %v4876, 1.442695
    %v5069 = vpow.pop %v5068
    %v5070 = vmul.f32 %v4877, 1.442695
    %v5071 = vpow.pop %v5070
    %v5072 = vmul.f32 %v4878, 1.442695
    %v5073 = vpow.pop %v5072
    %v5074 = vmul.f32 %v4879, 1.442695
    %v5075 = vpow.pop %v5074
    %v5076 = vmul.f32 %v4880, 1.442695
    %v5077 = vpow.pop %v5076
    %v5078 = vmul.f32 %v4881, 1.442695
    %v5079 = vpow.pop %v5078
    %v5080 = vmul.f32 %v4882, 1.442695
    %v5081 = vpow.pop %v5080
    %v5082 = vmul.f32 %v4883, 1.442695
    %v5083 = vpow.pop %v5082
    %v5084 = vmul.f32 %v4884, 1.442695
    %v5085 = vpow.pop %v5084
    %v5086 = vmul.f32 %v4885, 1.442695
    %v5087 = vpow.pop %v5086
    %v5088 = vmul.f32 %v4886, 1.442695
    %v5089 = vpow.pop %v5088
    %v5090 = vmul.f32 %v4887, 1.442695
    %v5091 = vpow.pop %v5090
    %v5092 = vmul.f32 %v4888, 1.442695
    %v5093 = vpow.pop %v5092
    %v5094 = vmul.f32 %v4889, 1.442695
    %v5095 = vpow.pop %v5094
    %v5096 = vmul.f32 %v4890, 1.442695
    %v5097 = vpow.pop %v5096
    %v5098 = vmul.f32 %v4891, 1.442695
    %v5099 = vpow.pop %v5098
    %v5100 = vmul.f32 %v4892, 1.442695
    %v5101 = vpow.pop %v5100
    %v5102 = vmul.f32 %v4893, 1.442695
    %v5103 = vpow.pop %v5102
    %v5104 = vmul.f32 %v4894, 1.442695
    %v5105 = vpow.pop %v5104
    %v5106 = vmul.f32 %v4895, 1.442695
    %v5107 = vpow.pop %v5106
    %v5108 = vmul.f32 %v4896, 1.442695
    %v5109 = vpow.pop %v5108
    %v5110 = vmul.f32 %v4897, 1.442695
    %v5111 = vpow.pop %v5110
    %v5112 = vmul.f32 %v4898, 1.442695
    %v5113 = vpow.pop %v5112
    %v5114 = vmul.f32 %v4899, 1.442695
    %v5115 = vpow.pop %v5114
    %v5116 = vmul.f32 %v4900, 1.442695
    %v5117 = vpow.pop %v5116
    %v5118 = vmul.f32 %v4901, 1.442695
    %v5119 = vpow.pop %v5118
    %v5120 = vmul.f32 %v4902, 1.442695
    %v5121 = vpow.pop %v5120
    %v5122 = vmul.f32 %v4903, 1.442695
    %v5123 = vpow.pop %v5122
    %v5124 = vmul.f32 %v4904, 1.442695
    %v5125 = vpow.pop %v5124
    %v5126 = vmul.f32 %v4905, 1.442695
    %v5127 = vpow.pop %v5126
    %v5128 = vmul.f32 %v4906, 1.442695
    %v5129 = vpow.pop %v5128
    %v5130 = vmul.f32 %v4907, 1.442695
    %v5131 = vpow.pop %v5130
    %v5132 = vmul.f32 %v4908, 1.442695
    %v5133 = vpow.pop %v5132
    %v5134 = vmul.f32 %v4909, 1.442695
    %v5135 = vpow.pop %v5134
    %v5136 = vmul.f32 %v4910, 1.442695
    %v5137 = vpow.pop %v5136
    %v5138 = vmul.f32 %v4911, 1.442695
    %v5139 = vpow.pop %v5138
    %v5140 = vmul.f32 %v4912, 1.442695
    %v5141 = vpow.pop %v5140
    %v5142 = vmul.f32 %v4913, 1.442695
    %v5143 = vpow.pop %v5142
    %v5144 = vmul.f32 %v4914, 1.442695
    %v5145 = vpow.pop %v5144
    %v5146 = vmul.f32 %v4915, 1.442695
    %v5147 = vpow.pop %v5146
    %v5148 = vmul.f32 %v4916, 1.442695
    %v5149 = vpow.pop %v5148
    %v5150 = vmul.f32 %v4917, 1.442695
    %v5151 = vpow.pop %v5150
    %v5152 = vmul.f32 %v4918, 1.442695
    %v5153 = vpow.pop %v5152
    %v5154 = vmul.f32 %v4919, 1.442695
    %v5155 = vpow.pop %v5154
    %v5156 = vmul.f32 %v4920, 1.442695
    %v5157 = vpow.pop %v5156
    %v5158 = vmul.f32 %v4921, 1.442695
    %v5159 = vpow.pop %v5158
    %v5160 = vmul.f32 %v4922, 1.442695
    %v5161 = vpow.pop %v5160
    %v5162 = vmul.f32 %v4923, 1.442695
    %v5163 = vpow.pop %v5162
    %v5164 = vmul.f32 %v4924, 1.442695
    %v5165 = vpow.pop %v5164
    %v5166 = vmul.f32 %v4925, 1.442695
    %v5167 = vpow.pop %v5166
    %v5168 = vmul.f32 %v4926, 1.442695
    %v5169 = vpow.pop %v5168
    %v5170 = vmul.f32 %v4927, 1.442695
    %v5171 = vpow.pop %v5170
    %v5172 = vmul.f32 %v4928, 1.442695
    %v5173 = vpow.pop %v5172
    %v5174 = vmul.f32 %v4929, 1.442695
    %v5175 = vpow.pop %v5174
    %v5176 = vmul.f32 %v4930, 1.442695
    %v5177 = vpow.pop %v5176
    %v5178 = vmul.f32 %v4931, 1.442695
    %v5179 = vpow.pop %v5178
    %v5180 = vmul.f32 %v4932, 1.442695
    %v5181 = vpow.pop %v5180
    %v5182 = vmul.f32 %v4933, 1.442695
    %v5183 = vpow.pop %v5182
    %v5184 = vmul.f32 %v4934, 1.442695
    %v5185 = vpow.pop %v5184
    %v5186 = vmul.f32 %v4935, 1.442695
    %v5187 = vpow.pop %v5186
    %v5188 = vmul.f32 %v4936, 1.442695
    %v5189 = vpow.pop %v5188
    %v5190 = vmul.f32 %v4937, 1.442695
    %v5191 = vpow.pop %v5190
    %v5192 = vmul.f32 %v4938, 1.442695
    %v5193 = vpow.pop %v5192
    %v5194 = vmul.f32 %v4939, 1.442695
    %v5195 = vpow.pop %v5194
    %v5196 = vsel %vm4427, %v4941, 0.0
    %5197 = vadd.xlane.f32.xlu0 %v5196
    %v5198 = vpop.xlane.xlu0 %5197
    %v5199 = vsel %vm4427, %v4943, 0.0
    %5200 = vadd.xlane.f32.xlu0 %v5199
    %v5201 = vpop.xlane.xlu0 %5200
    %v5202 = vsel %vm4427, %v4945, 0.0
    %5203 = vadd.xlane.f32.xlu0 %v5202
    %v5204 = vpop.xlane.xlu0 %5203
    %v5205 = vsel %vm4427, %v4947, 0.0
    %5206 = vadd.xlane.f32.xlu0 %v5205
    %v5207 = vpop.xlane.xlu0 %5206
    %v5208 = vsel %vm4427, %v4949, 0.0
    %5209 = vadd.xlane.f32.xlu0 %v5208
    %v5210 = vpop.xlane.xlu0 %5209
    %v5211 = vsel %vm4427, %v4951, 0.0
    %5212 = vadd.xlane.f32.xlu0 %v5211
    %v5213 = vpop.xlane.xlu0 %5212
    %v5214 = vsel %vm4427, %v4953, 0.0
    %5215 = vadd.xlane.f32.xlu0 %v5214
    %v5216 = vpop.xlane.xlu0 %5215
    %v5217 = vsel %vm4427, %v4955, 0.0
    %5218 = vadd.xlane.f32.xlu0 %v5217
    %v5219 = vpop.xlane.xlu0 %5218
    %v5220 = vsel %vm4427, %v4957, 0.0
    %5221 = vadd.xlane.f32.xlu0 %v5220
    %v5222 = vpop.xlane.xlu0 %5221
    %v5223 = vsel %vm4427, %v4959, 0.0
    %5224 = vadd.xlane.f32.xlu0 %v5223
    %v5225 = vpop.xlane.xlu0 %5224
    %v5226 = vsel %vm4427, %v4961, 0.0
    %5227 = vadd.xlane.f32.xlu0 %v5226
    %v5228 = vpop.xlane.xlu0 %5227
    %v5229 = vsel %vm4427, %v4963, 0.0
    %5230 = vadd.xlane.f32.xlu0 %v5229
    %v5231 = vpop.xlane.xlu0 %5230
    %v5232 = vsel %vm4427, %v4965, 0.0
    %5233 = vadd.xlane.f32.xlu0 %v5232
    %v5234 = vpop.xlane.xlu0 %5233
    %v5235 = vsel %vm4427, %v4967, 0.0
    %5236 = vadd.xlane.f32.xlu0 %v5235
    %v5237 = vpop.xlane.xlu0 %5236
    %v5238 = vsel %vm4427, %v4969, 0.0
    %5239 = vadd.xlane.f32.xlu0 %v5238
    %v5240 = vpop.xlane.xlu0 %5239
    %v5241 = vsel %vm4427, %v4971, 0.0
    %5242 = vadd.xlane.f32.xlu0 %v5241
    %v5243 = vpop.xlane.xlu0 %5242
    %v5244 = vsel %vm4427, %v4973, 0.0
    %5245 = vadd.xlane.f32.xlu0 %v5244
    %v5246 = vpop.xlane.xlu0 %5245
    %v5247 = vsel %vm4427, %v4975, 0.0
    %5248 = vadd.xlane.f32.xlu0 %v5247
    %v5249 = vpop.xlane.xlu0 %5248
    %v5250 = vsel %vm4427, %v4977, 0.0
    %5251 = vadd.xlane.f32.xlu0 %v5250
    %v5252 = vpop.xlane.xlu0 %5251
    %v5253 = vsel %vm4427, %v4979, 0.0
    %5254 = vadd.xlane.f32.xlu0 %v5253
    %v5255 = vpop.xlane.xlu0 %5254
    %v5256 = vsel %vm4427, %v4981, 0.0
    %5257 = vadd.xlane.f32.xlu0 %v5256
    %v5258 = vpop.xlane.xlu0 %5257
    %v5259 = vsel %vm4427, %v4983, 0.0
    %5260 = vadd.xlane.f32.xlu0 %v5259
    %v5261 = vpop.xlane.xlu0 %5260
    %v5262 = vsel %vm4427, %v4985, 0.0
    %5263 = vadd.xlane.f32.xlu0 %v5262
    %v5264 = vpop.xlane.xlu0 %5263
    %v5265 = vsel %vm4427, %v4987, 0.0
    %5266 = vadd.xlane.f32.xlu0 %v5265
    %v5267 = vpop.xlane.xlu0 %5266
    %v5268 = vsel %vm4427, %v4989, 0.0
    %5269 = vadd.xlane.f32.xlu0 %v5268
    %v5270 = vpop.xlane.xlu0 %5269
    %v5271 = vsel %vm4427, %v4991, 0.0
    %5272 = vadd.xlane.f32.xlu0 %v5271
    %v5273 = vpop.xlane.xlu0 %5272
    %v5274 = vsel %vm4427, %v4993, 0.0
    %5275 = vadd.xlane.f32.xlu0 %v5274
    %v5276 = vpop.xlane.xlu0 %5275
    %v5277 = vsel %vm4427, %v4995, 0.0
    %5278 = vadd.xlane.f32.xlu0 %v5277
    %v5279 = vpop.xlane.xlu0 %5278
    %v5280 = vsel %vm4427, %v4997, 0.0
    %5281 = vadd.xlane.f32.xlu0 %v5280
    %v5282 = vpop.xlane.xlu0 %5281
    %v5283 = vsel %vm4427, %v4999, 0.0
    %5284 = vadd.xlane.f32.xlu0 %v5283
    %v5285 = vpop.xlane.xlu0 %5284
    %v5286 = vsel %vm4427, %v5001, 0.0
    %5287 = vadd.xlane.f32.xlu0 %v5286
    %v5288 = vpop.xlane.xlu0 %5287
    %v5289 = vsel %vm4427, %v5003, 0.0
    %5290 = vadd.xlane.f32.xlu0 %v5289
    %v5291 = vpop.xlane.xlu0 %5290
    %v5292 = vsel %vm4427, %v5005, 0.0
    %5293 = vadd.xlane.f32.xlu0 %v5292
    %v5294 = vpop.xlane.xlu0 %5293
    %v5295 = vsel %vm4427, %v5007, 0.0
    %5296 = vadd.xlane.f32.xlu0 %v5295
    %v5297 = vpop.xlane.xlu0 %5296
    %v5298 = vsel %vm4427, %v5009, 0.0
    %5299 = vadd.xlane.f32.xlu0 %v5298
    %v5300 = vpop.xlane.xlu0 %5299
    %v5301 = vsel %vm4427, %v5011, 0.0
    %5302 = vadd.xlane.f32.xlu0 %v5301
    %v5303 = vpop.xlane.xlu0 %5302
    %v5304 = vsel %vm4427, %v5013, 0.0
    %5305 = vadd.xlane.f32.xlu0 %v5304
    %v5306 = vpop.xlane.xlu0 %5305
    %v5307 = vsel %vm4427, %v5015, 0.0
    %5308 = vadd.xlane.f32.xlu0 %v5307
    %v5309 = vpop.xlane.xlu0 %5308
    %v5310 = vsel %vm4427, %v5017, 0.0
    %5311 = vadd.xlane.f32.xlu0 %v5310
    %v5312 = vpop.xlane.xlu0 %5311
    %v5313 = vsel %vm4427, %v5019, 0.0
    %5314 = vadd.xlane.f32.xlu0 %v5313
    %v5315 = vpop.xlane.xlu0 %5314
    %v5316 = vsel %vm4427, %v5021, 0.0
    %5317 = vadd.xlane.f32.xlu0 %v5316
    %v5318 = vpop.xlane.xlu0 %5317
    %v5319 = vsel %vm4427, %v5023, 0.0
    %5320 = vadd.xlane.f32.xlu0 %v5319
    %v5321 = vpop.xlane.xlu0 %5320
    %v5322 = vsel %vm4427, %v5025, 0.0
    %5323 = vadd.xlane.f32.xlu0 %v5322
    %v5324 = vpop.xlane.xlu0 %5323
    %v5325 = vsel %vm4427, %v5027, 0.0
    %5326 = vadd.xlane.f32.xlu0 %v5325
    %v5327 = vpop.xlane.xlu0 %5326
    %v5328 = vsel %vm4427, %v5029, 0.0
    %5329 = vadd.xlane.f32.xlu0 %v5328
    %v5330 = vpop.xlane.xlu0 %5329
    %v5331 = vsel %vm4427, %v5031, 0.0
    %5332 = vadd.xlane.f32.xlu0 %v5331
    %v5333 = vpop.xlane.xlu0 %5332
    %v5334 = vsel %vm4427, %v5033, 0.0
    %5335 = vadd.xlane.f32.xlu0 %v5334
    %v5336 = vpop.xlane.xlu0 %5335
    %v5337 = vsel %vm4427, %v5035, 0.0
    %5338 = vadd.xlane.f32.xlu0 %v5337
    %v5339 = vpop.xlane.xlu0 %5338
    %v5340 = vsel %vm4427, %v5037, 0.0
    %5341 = vadd.xlane.f32.xlu0 %v5340
    %v5342 = vpop.xlane.xlu0 %5341
    %v5343 = vsel %vm4427, %v5039, 0.0
    %5344 = vadd.xlane.f32.xlu0 %v5343
    %v5345 = vpop.xlane.xlu0 %5344
    %v5346 = vsel %vm4427, %v5041, 0.0
    %5347 = vadd.xlane.f32.xlu0 %v5346
    %v5348 = vpop.xlane.xlu0 %5347
    %v5349 = vsel %vm4427, %v5043, 0.0
    %5350 = vadd.xlane.f32.xlu0 %v5349
    %v5351 = vpop.xlane.xlu0 %5350
    %v5352 = vsel %vm4427, %v5045, 0.0
    %5353 = vadd.xlane.f32.xlu0 %v5352
    %v5354 = vpop.xlane.xlu0 %5353
    %v5355 = vsel %vm4427, %v5047, 0.0
    %5356 = vadd.xlane.f32.xlu0 %v5355
    %v5357 = vpop.xlane.xlu0 %5356
    %v5358 = vsel %vm4427, %v5049, 0.0
    %5359 = vadd.xlane.f32.xlu0 %v5358
    %v5360 = vpop.xlane.xlu0 %5359
    %v5361 = vsel %vm4427, %v5051, 0.0
    %5362 = vadd.xlane.f32.xlu0 %v5361
    %v5363 = vpop.xlane.xlu0 %5362
    %v5364 = vsel %vm4427, %v5053, 0.0
    %5365 = vadd.xlane.f32.xlu0 %v5364
    %v5366 = vpop.xlane.xlu0 %5365
    %v5367 = vsel %vm4427, %v5055, 0.0
    %5368 = vadd.xlane.f32.xlu0 %v5367
    %v5369 = vpop.xlane.xlu0 %5368
    %v5370 = vsel %vm4427, %v5057, 0.0
    %5371 = vadd.xlane.f32.xlu0 %v5370
    %v5372 = vpop.xlane.xlu0 %5371
    %v5373 = vsel %vm4427, %v5059, 0.0
    %5374 = vadd.xlane.f32.xlu0 %v5373
    %v5375 = vpop.xlane.xlu0 %5374
    %v5376 = vsel %vm4427, %v5061, 0.0
    %5377 = vadd.xlane.f32.xlu0 %v5376
    %v5378 = vpop.xlane.xlu0 %5377
    %v5379 = vsel %vm4427, %v5063, 0.0
    %5380 = vadd.xlane.f32.xlu0 %v5379
    %v5381 = vpop.xlane.xlu0 %5380
    %v5382 = vsel %vm4427, %v5065, 0.0
    %5383 = vadd.xlane.f32.xlu0 %v5382
    %v5384 = vpop.xlane.xlu0 %5383
    %v5385 = vsel %vm4427, %v5067, 0.0
    %5386 = vadd.xlane.f32.xlu0 %v5385
    %v5387 = vpop.xlane.xlu0 %5386
    %v5388 = vsel %vm4427, %v5069, 0.0
    %5389 = vadd.xlane.f32.xlu0 %v5388
    %v5390 = vpop.xlane.xlu0 %5389
    %v5391 = vsel %vm4427, %v5071, 0.0
    %5392 = vadd.xlane.f32.xlu0 %v5391
    %v5393 = vpop.xlane.xlu0 %5392
    %v5394 = vsel %vm4427, %v5073, 0.0
    %5395 = vadd.xlane.f32.xlu0 %v5394
    %v5396 = vpop.xlane.xlu0 %5395
    %v5397 = vsel %vm4427, %v5075, 0.0
    %5398 = vadd.xlane.f32.xlu0 %v5397
    %v5399 = vpop.xlane.xlu0 %5398
    %v5400 = vsel %vm4427, %v5077, 0.0
    %5401 = vadd.xlane.f32.xlu0 %v5400
    %v5402 = vpop.xlane.xlu0 %5401
    %v5403 = vsel %vm4427, %v5079, 0.0
    %5404 = vadd.xlane.f32.xlu0 %v5403
    %v5405 = vpop.xlane.xlu0 %5404
    %v5406 = vsel %vm4427, %v5081, 0.0
    %5407 = vadd.xlane.f32.xlu0 %v5406
    %v5408 = vpop.xlane.xlu0 %5407
    %v5409 = vsel %vm4427, %v5083, 0.0
    %5410 = vadd.xlane.f32.xlu0 %v5409
    %v5411 = vpop.xlane.xlu0 %5410
    %v5412 = vsel %vm4427, %v5085, 0.0
    %5413 = vadd.xlane.f32.xlu0 %v5412
    %v5414 = vpop.xlane.xlu0 %5413
    %v5415 = vsel %vm4427, %v5087, 0.0
    %5416 = vadd.xlane.f32.xlu0 %v5415
    %v5417 = vpop.xlane.xlu0 %5416
    %v5418 = vsel %vm4427, %v5089, 0.0
    %5419 = vadd.xlane.f32.xlu0 %v5418
    %v5420 = vpop.xlane.xlu0 %5419
    %v5421 = vsel %vm4427, %v5091, 0.0
    %5422 = vadd.xlane.f32.xlu0 %v5421
    %v5423 = vpop.xlane.xlu0 %5422
    %v5424 = vsel %vm4427, %v5093, 0.0
    %5425 = vadd.xlane.f32.xlu0 %v5424
    %v5426 = vpop.xlane.xlu0 %5425
    %v5427 = vsel %vm4427, %v5095, 0.0
    %5428 = vadd.xlane.f32.xlu0 %v5427
    %v5429 = vpop.xlane.xlu0 %5428
    %v5430 = vsel %vm4427, %v5097, 0.0
    %5431 = vadd.xlane.f32.xlu0 %v5430
    %v5432 = vpop.xlane.xlu0 %5431
    %v5433 = vsel %vm4427, %v5099, 0.0
    %5434 = vadd.xlane.f32.xlu0 %v5433
    %v5435 = vpop.xlane.xlu0 %5434
    %v5436 = vsel %vm4427, %v5101, 0.0
    %5437 = vadd.xlane.f32.xlu0 %v5436
    %v5438 = vpop.xlane.xlu0 %5437
    %v5439 = vsel %vm4427, %v5103, 0.0
    %5440 = vadd.xlane.f32.xlu0 %v5439
    %v5441 = vpop.xlane.xlu0 %5440
    %v5442 = vsel %vm4427, %v5105, 0.0
    %5443 = vadd.xlane.f32.xlu0 %v5442
    %v5444 = vpop.xlane.xlu0 %5443
    %v5445 = vsel %vm4427, %v5107, 0.0
    %5446 = vadd.xlane.f32.xlu0 %v5445
    %v5447 = vpop.xlane.xlu0 %5446
    %v5448 = vsel %vm4427, %v5109, 0.0
    %5449 = vadd.xlane.f32.xlu0 %v5448
    %v5450 = vpop.xlane.xlu0 %5449
    %v5451 = vsel %vm4427, %v5111, 0.0
    %5452 = vadd.xlane.f32.xlu0 %v5451
    %v5453 = vpop.xlane.xlu0 %5452
    %v5454 = vsel %vm4427, %v5113, 0.0
    %5455 = vadd.xlane.f32.xlu0 %v5454
    %v5456 = vpop.xlane.xlu0 %5455
    %v5457 = vsel %vm4427, %v5115, 0.0
    %5458 = vadd.xlane.f32.xlu0 %v5457
    %v5459 = vpop.xlane.xlu0 %5458
    %v5460 = vsel %vm4427, %v5117, 0.0
    %5461 = vadd.xlane.f32.xlu0 %v5460
    %v5462 = vpop.xlane.xlu0 %5461
    %v5463 = vsel %vm4427, %v5119, 0.0
    %5464 = vadd.xlane.f32.xlu0 %v5463
    %v5465 = vpop.xlane.xlu0 %5464
    %v5466 = vsel %vm4427, %v5121, 0.0
    %5467 = vadd.xlane.f32.xlu0 %v5466
    %v5468 = vpop.xlane.xlu0 %5467
    %v5469 = vsel %vm4427, %v5123, 0.0
    %5470 = vadd.xlane.f32.xlu0 %v5469
    %v5471 = vpop.xlane.xlu0 %5470
    %v5472 = vsel %vm4427, %v5125, 0.0
    %5473 = vadd.xlane.f32.xlu0 %v5472
    %v5474 = vpop.xlane.xlu0 %5473
    %v5475 = vsel %vm4427, %v5127, 0.0
    %5476 = vadd.xlane.f32.xlu0 %v5475
    %v5477 = vpop.xlane.xlu0 %5476
    %v5478 = vsel %vm4427, %v5129, 0.0
    %5479 = vadd.xlane.f32.xlu0 %v5478
    %v5480 = vpop.xlane.xlu0 %5479
    %v5481 = vsel %vm4427, %v5131, 0.0
    %5482 = vadd.xlane.f32.xlu0 %v5481
    %v5483 = vpop.xlane.xlu0 %5482
    %v5484 = vsel %vm4427, %v5133, 0.0
    %5485 = vadd.xlane.f32.xlu0 %v5484
    %v5486 = vpop.xlane.xlu0 %5485
    %v5487 = vsel %vm4427, %v5135, 0.0
    %5488 = vadd.xlane.f32.xlu0 %v5487
    %v5489 = vpop.xlane.xlu0 %5488
    %v5490 = vsel %vm4427, %v5137, 0.0
    %5491 = vadd.xlane.f32.xlu0 %v5490
    %v5492 = vpop.xlane.xlu0 %5491
    %v5493 = vsel %vm4427, %v5139, 0.0
    %5494 = vadd.xlane.f32.xlu0 %v5493
    %v5495 = vpop.xlane.xlu0 %5494
    %v5496 = vsel %vm4427, %v5141, 0.0
    %5497 = vadd.xlane.f32.xlu0 %v5496
    %v5498 = vpop.xlane.xlu0 %5497
    %v5499 = vsel %vm4427, %v5143, 0.0
    %5500 = vadd.xlane.f32.xlu0 %v5499
    %v5501 = vpop.xlane.xlu0 %5500
    %v5502 = vsel %vm4427, %v5145, 0.0
    %5503 = vadd.xlane.f32.xlu0 %v5502
    %v5504 = vpop.xlane.xlu0 %5503
    %v5505 = vsel %vm4427, %v5147, 0.0
    %5506 = vadd.xlane.f32.xlu0 %v5505
    %v5507 = vpop.xlane.xlu0 %5506
    %v5508 = vsel %vm4427, %v5149, 0.0
    %5509 = vadd.xlane.f32.xlu0 %v5508
    %v5510 = vpop.xlane.xlu0 %5509
    %v5511 = vsel %vm4427, %v5151, 0.0
    %5512 = vadd.xlane.f32.xlu0 %v5511
    %v5513 = vpop.xlane.xlu0 %5512
    %v5514 = vsel %vm4427, %v5153, 0.0
    %5515 = vadd.xlane.f32.xlu0 %v5514
    %v5516 = vpop.xlane.xlu0 %5515
    %v5517 = vsel %vm4427, %v5155, 0.0
    %5518 = vadd.xlane.f32.xlu0 %v5517
    %v5519 = vpop.xlane.xlu0 %5518
    %v5520 = vsel %vm4427, %v5157, 0.0
    %5521 = vadd.xlane.f32.xlu0 %v5520
    %v5522 = vpop.xlane.xlu0 %5521
    %v5523 = vsel %vm4427, %v5159, 0.0
    %5524 = vadd.xlane.f32.xlu0 %v5523
    %v5525 = vpop.xlane.xlu0 %5524
    %v5526 = vsel %vm4427, %v5161, 0.0
    %5527 = vadd.xlane.f32.xlu0 %v5526
    %v5528 = vpop.xlane.xlu0 %5527
    %v5529 = vsel %vm4427, %v5163, 0.0
    %5530 = vadd.xlane.f32.xlu0 %v5529
    %v5531 = vpop.xlane.xlu0 %5530
    %v5532 = vsel %vm4427, %v5165, 0.0
    %5533 = vadd.xlane.f32.xlu0 %v5532
    %v5534 = vpop.xlane.xlu0 %5533
    %v5535 = vsel %vm4427, %v5167, 0.0
    %5536 = vadd.xlane.f32.xlu0 %v5535
    %v5537 = vpop.xlane.xlu0 %5536
    %v5538 = vsel %vm4427, %v5169, 0.0
    %5539 = vadd.xlane.f32.xlu0 %v5538
    %v5540 = vpop.xlane.xlu0 %5539
    %v5541 = vsel %vm4427, %v5171, 0.0
    %5542 = vadd.xlane.f32.xlu0 %v5541
    %v5543 = vpop.xlane.xlu0 %5542
    %v5544 = vsel %vm4427, %v5173, 0.0
    %5545 = vadd.xlane.f32.xlu0 %v5544
    %v5546 = vpop.xlane.xlu0 %5545
    %v5547 = vsel %vm4427, %v5175, 0.0
    %5548 = vadd.xlane.f32.xlu0 %v5547
    %v5549 = vpop.xlane.xlu0 %5548
    %v5550 = vsel %vm4427, %v5177, 0.0
    %5551 = vadd.xlane.f32.xlu0 %v5550
    %v5552 = vpop.xlane.xlu0 %5551
    %v5553 = vsel %vm4427, %v5179, 0.0
    %5554 = vadd.xlane.f32.xlu0 %v5553
    %v5555 = vpop.xlane.xlu0 %5554
    %v5556 = vsel %vm4427, %v5181, 0.0
    %5557 = vadd.xlane.f32.xlu0 %v5556
    %v5558 = vpop.xlane.xlu0 %5557
    %v5559 = vsel %vm4427, %v5183, 0.0
    %5560 = vadd.xlane.f32.xlu0 %v5559
    %v5561 = vpop.xlane.xlu0 %5560
    %v5562 = vsel %vm4427, %v5185, 0.0
    %5563 = vadd.xlane.f32.xlu0 %v5562
    %v5564 = vpop.xlane.xlu0 %5563
    %v5565 = vsel %vm4427, %v5187, 0.0
    %5566 = vadd.xlane.f32.xlu0 %v5565
    %v5567 = vpop.xlane.xlu0 %5566
    %v5568 = vsel %vm4427, %v5189, 0.0
    %5569 = vadd.xlane.f32.xlu0 %v5568
    %v5570 = vpop.xlane.xlu0 %5569
    %v5571 = vsel %vm4427, %v5191, 0.0
    %5572 = vadd.xlane.f32.xlu0 %v5571
    %v5573 = vpop.xlane.xlu0 %5572
    %v5574 = vsel %vm4427, %v5193, 0.0
    %5575 = vadd.xlane.f32.xlu0 %v5574
    %v5576 = vpop.xlane.xlu0 %5575
    %v5577 = vsel %vm4427, %v5195, 0.0
    %5578 = vadd.xlane.f32.xlu0 %v5577
    %v5579 = vpop.xlane.xlu0 %5578
    %v5580 = vrcp.pop %v5198
    %v5581 = vrcp.pop %v5201
    %v5582 = vrcp.pop %v5204
    %v5583 = vrcp.pop %v5207
    %v5584 = vrcp.pop %v5210
    %v5585 = vrcp.pop %v5213
    %v5586 = vrcp.pop %v5216
    %v5587 = vrcp.pop %v5219
    %v5588 = vrcp.pop %v5222
    %v5589 = vrcp.pop %v5225
    %v5590 = vrcp.pop %v5228
    %v5591 = vrcp.pop %v5231
    %v5592 = vrcp.pop %v5234
    %v5593 = vrcp.pop %v5237
    %v5594 = vrcp.pop %v5240
    %v5595 = vrcp.pop %v5243
    %v5596 = vrcp.pop %v5246
    %v5597 = vrcp.pop %v5249
    %v5598 = vrcp.pop %v5252
    %v5599 = vrcp.pop %v5255
    %v5600 = vrcp.pop %v5258
    %v5601 = vrcp.pop %v5261
    %v5602 = vrcp.pop %v5264
    %v5603 = vrcp.pop %v5267
    %v5604 = vrcp.pop %v5270
    %v5605 = vrcp.pop %v5273
    %v5606 = vrcp.pop %v5276
    %v5607 = vrcp.pop %v5279
    %v5608 = vrcp.pop %v5282
    %v5609 = vrcp.pop %v5285
    %v5610 = vrcp.pop %v5288
    %v5611 = vrcp.pop %v5291
    %v5612 = vrcp.pop %v5294
    %v5613 = vrcp.pop %v5297
    %v5614 = vrcp.pop %v5300
    %v5615 = vrcp.pop %v5303
    %v5616 = vrcp.pop %v5306
    %v5617 = vrcp.pop %v5309
    %v5618 = vrcp.pop %v5312
    %v5619 = vrcp.pop %v5315
    %v5620 = vrcp.pop %v5318
    %v5621 = vrcp.pop %v5321
    %v5622 = vrcp.pop %v5324
    %v5623 = vrcp.pop %v5327
    %v5624 = vrcp.pop %v5330
    %v5625 = vrcp.pop %v5333
    %v5626 = vrcp.pop %v5336
    %v5627 = vrcp.pop %v5339
    %v5628 = vrcp.pop %v5342
    %v5629 = vrcp.pop %v5345
    %v5630 = vrcp.pop %v5348
    %v5631 = vrcp.pop %v5351
    %v5632 = vrcp.pop %v5354
    %v5633 = vrcp.pop %v5357
    %v5634 = vrcp.pop %v5360
    %v5635 = vrcp.pop %v5363
    %v5636 = vrcp.pop %v5366
    %v5637 = vrcp.pop %v5369
    %v5638 = vrcp.pop %v5372
    %v5639 = vrcp.pop %v5375
    %v5640 = vrcp.pop %v5378
    %v5641 = vrcp.pop %v5381
    %v5642 = vrcp.pop %v5384
    %v5643 = vrcp.pop %v5387
    %v5644 = vrcp.pop %v5390
    %v5645 = vrcp.pop %v5393
    %v5646 = vrcp.pop %v5396
    %v5647 = vrcp.pop %v5399
    %v5648 = vrcp.pop %v5402
    %v5649 = vrcp.pop %v5405
    %v5650 = vrcp.pop %v5408
    %v5651 = vrcp.pop %v5411
    %v5652 = vrcp.pop %v5414
    %v5653 = vrcp.pop %v5417
    %v5654 = vrcp.pop %v5420
    %v5655 = vrcp.pop %v5423
    %v5656 = vrcp.pop %v5426
    %v5657 = vrcp.pop %v5429
    %v5658 = vrcp.pop %v5432
    %v5659 = vrcp.pop %v5435
    %v5660 = vrcp.pop %v5438
    %v5661 = vrcp.pop %v5441
    %v5662 = vrcp.pop %v5444
    %v5663 = vrcp.pop %v5447
    %v5664 = vrcp.pop %v5450
    %v5665 = vrcp.pop %v5453
    %v5666 = vrcp.pop %v5456
    %v5667 = vrcp.pop %v5459
    %v5668 = vrcp.pop %v5462
    %v5669 = vrcp.pop %v5465
    %v5670 = vrcp.pop %v5468
    %v5671 = vrcp.pop %v5471
    %v5672 = vrcp.pop %v5474
    %v5673 = vrcp.pop %v5477
    %v5674 = vrcp.pop %v5480
    %v5675 = vrcp.pop %v5483
    %v5676 = vrcp.pop %v5486
    %v5677 = vrcp.pop %v5489
    %v5678 = vrcp.pop %v5492
    %v5679 = vrcp.pop %v5495
    %v5680 = vrcp.pop %v5498
    %v5681 = vrcp.pop %v5501
    %v5682 = vrcp.pop %v5504
    %v5683 = vrcp.pop %v5507
    %v5684 = vrcp.pop %v5510
    %v5685 = vrcp.pop %v5513
    %v5686 = vrcp.pop %v5516
    %v5687 = vrcp.pop %v5519
    %v5688 = vrcp.pop %v5522
    %v5689 = vrcp.pop %v5525
    %v5690 = vrcp.pop %v5528
    %v5691 = vrcp.pop %v5531
    %v5692 = vrcp.pop %v5534
    %v5693 = vrcp.pop %v5537
    %v5694 = vrcp.pop %v5540
    %v5695 = vrcp.pop %v5543
    %v5696 = vrcp.pop %v5546
    %v5697 = vrcp.pop %v5549
    %v5698 = vrcp.pop %v5552
    %v5699 = vrcp.pop %v5555
    %v5700 = vrcp.pop %v5558
    %v5701 = vrcp.pop %v5561
    %v5702 = vrcp.pop %v5564
    %v5703 = vrcp.pop %v5567
    %v5704 = vrcp.pop %v5570
    %v5705 = vrcp.pop %v5573
    %v5706 = vrcp.pop %v5576
    %v5707 = vrcp.pop %v5579
    %v5708 = vmul.f32 %v4941, %v5580
    %v5709 = vmul.f32 %v4943, %v5581
    %v5710 = vmul.f32 %v4945, %v5582
    %v5711 = vmul.f32 %v4947, %v5583
    %v5712 = vmul.f32 %v4949, %v5584
    %v5713 = vmul.f32 %v4951, %v5585
    %v5714 = vmul.f32 %v4953, %v5586
    %v5715 = vmul.f32 %v4955, %v5587
    %v5716 = vmul.f32 %v4957, %v5588
    %v5717 = vmul.f32 %v4959, %v5589
    %v5718 = vmul.f32 %v4961, %v5590
    %v5719 = vmul.f32 %v4963, %v5591
    %v5720 = vmul.f32 %v4965, %v5592
    %v5721 = vmul.f32 %v4967, %v5593
    %v5722 = vmul.f32 %v4969, %v5594
    %v5723 = vmul.f32 %v4971, %v5595
    %v5724 = vmul.f32 %v4973, %v5596
    %v5725 = vmul.f32 %v4975, %v5597
    %v5726 = vmul.f32 %v4977, %v5598
    %v5727 = vmul.f32 %v4979, %v5599
    %v5728 = vmul.f32 %v4981, %v5600
    %v5729 = vmul.f32 %v4983, %v5601
    %v5730 = vmul.f32 %v4985, %v5602
    %v5731 = vmul.f32 %v4987, %v5603
    %v5732 = vmul.f32 %v4989, %v5604
    %v5733 = vmul.f32 %v4991, %v5605
    %v5734 = vmul.f32 %v4993, %v5606
    %v5735 = vmul.f32 %v4995, %v5607
    %v5736 = vmul.f32 %v4997, %v5608
    %v5737 = vmul.f32 %v4999, %v5609
    %v5738 = vmul.f32 %v5001, %v5610
    %v5739 = vmul.f32 %v5003, %v5611
    %v5740 = vmul.f32 %v5005, %v5612
    %v5741 = vmul.f32 %v5007, %v5613
    %v5742 = vmul.f32 %v5009, %v5614
    %v5743 = vmul.f32 %v5011, %v5615
    %v5744 = vmul.f32 %v5013, %v5616
    %v5745 = vmul.f32 %v5015, %v5617
    %v5746 = vmul.f32 %v5017, %v5618
    %v5747 = vmul.f32 %v5019, %v5619
    %v5748 = vmul.f32 %v5021, %v5620
    %v5749 = vmul.f32 %v5023, %v5621
    %v5750 = vmul.f32 %v5025, %v5622
    %v5751 = vmul.f32 %v5027, %v5623
    %v5752 = vmul.f32 %v5029, %v5624
    %v5753 = vmul.f32 %v5031, %v5625
    %v5754 = vmul.f32 %v5033, %v5626
    %v5755 = vmul.f32 %v5035, %v5627
    %v5756 = vmul.f32 %v5037, %v5628
    %v5757 = vmul.f32 %v5039, %v5629
    %v5758 = vmul.f32 %v5041, %v5630
    %v5759 = vmul.f32 %v5043, %v5631
    %v5760 = vmul.f32 %v5045, %v5632
    %v5761 = vmul.f32 %v5047, %v5633
    %v5762 = vmul.f32 %v5049, %v5634
    %v5763 = vmul.f32 %v5051, %v5635
    %v5764 = vmul.f32 %v5053, %v5636
    %v5765 = vmul.f32 %v5055, %v5637
    %v5766 = vmul.f32 %v5057, %v5638
    %v5767 = vmul.f32 %v5059, %v5639
    %v5768 = vmul.f32 %v5061, %v5640
    %v5769 = vmul.f32 %v5063, %v5641
    %v5770 = vmul.f32 %v5065, %v5642
    %v5771 = vmul.f32 %v5067, %v5643
    %v5772 = vmul.f32 %v5069, %v5644
    %v5773 = vmul.f32 %v5071, %v5645
    %v5774 = vmul.f32 %v5073, %v5646
    %v5775 = vmul.f32 %v5075, %v5647
    %v5776 = vmul.f32 %v5077, %v5648
    %v5777 = vmul.f32 %v5079, %v5649
    %v5778 = vmul.f32 %v5081, %v5650
    %v5779 = vmul.f32 %v5083, %v5651
    %v5780 = vmul.f32 %v5085, %v5652
    %v5781 = vmul.f32 %v5087, %v5653
    %v5782 = vmul.f32 %v5089, %v5654
    %v5783 = vmul.f32 %v5091, %v5655
    %v5784 = vmul.f32 %v5093, %v5656
    %v5785 = vmul.f32 %v5095, %v5657
    %v5786 = vmul.f32 %v5097, %v5658
    %v5787 = vmul.f32 %v5099, %v5659
    %v5788 = vmul.f32 %v5101, %v5660
    %v5789 = vmul.f32 %v5103, %v5661
    %v5790 = vmul.f32 %v5105, %v5662
    %v5791 = vmul.f32 %v5107, %v5663
    %v5792 = vmul.f32 %v5109, %v5664
    %v5793 = vmul.f32 %v5111, %v5665
    %v5794 = vmul.f32 %v5113, %v5666
    %v5795 = vmul.f32 %v5115, %v5667
    %v5796 = vmul.f32 %v5117, %v5668
    %v5797 = vmul.f32 %v5119, %v5669
    %v5798 = vmul.f32 %v5121, %v5670
    %v5799 = vmul.f32 %v5123, %v5671
    %v5800 = vmul.f32 %v5125, %v5672
    %v5801 = vmul.f32 %v5127, %v5673
    %v5802 = vmul.f32 %v5129, %v5674
    %v5803 = vmul.f32 %v5131, %v5675
    %v5804 = vmul.f32 %v5133, %v5676
    %v5805 = vmul.f32 %v5135, %v5677
    %v5806 = vmul.f32 %v5137, %v5678
    %v5807 = vmul.f32 %v5139, %v5679
    %v5808 = vmul.f32 %v5141, %v5680
    %v5809 = vmul.f32 %v5143, %v5681
    %v5810 = vmul.f32 %v5145, %v5682
    %v5811 = vmul.f32 %v5147, %v5683
    %v5812 = vmul.f32 %v5149, %v5684
    %v5813 = vmul.f32 %v5151, %v5685
    %v5814 = vmul.f32 %v5153, %v5686
    %v5815 = vmul.f32 %v5155, %v5687
    %v5816 = vmul.f32 %v5157, %v5688
    %v5817 = vmul.f32 %v5159, %v5689
    %v5818 = vmul.f32 %v5161, %v5690
    %v5819 = vmul.f32 %v5163, %v5691
    %v5820 = vmul.f32 %v5165, %v5692
    %v5821 = vmul.f32 %v5167, %v5693
    %v5822 = vmul.f32 %v5169, %v5694
    %v5823 = vmul.f32 %v5171, %v5695
    %v5824 = vmul.f32 %v5173, %v5696
    %v5825 = vmul.f32 %v5175, %v5697
    %v5826 = vmul.f32 %v5177, %v5698
    %v5827 = vmul.f32 %v5179, %v5699
    %v5828 = vmul.f32 %v5181, %v5700
    %v5829 = vmul.f32 %v5183, %v5701
    %v5830 = vmul.f32 %v5185, %v5702
    %v5831 = vmul.f32 %v5187, %v5703
    %v5832 = vmul.f32 %v5189, %v5704
    %v5833 = vmul.f32 %v5191, %v5705
    %v5834 = vmul.f32 %v5193, %v5706
    %v5835 = vmul.f32 %v5195, %v5707
    %v5836 = vpack.c.bf16 %v5709, %v5708
    %v5837 = vpack.c.bf16 %v5711, %v5710
    %v5838 = vpack.c.bf16 %v5713, %v5712
    %v5839 = vpack.c.bf16 %v5715, %v5714
    %v5840 = vpack.c.bf16 %v5717, %v5716
    %v5841 = vpack.c.bf16 %v5719, %v5718
    %v5842 = vpack.c.bf16 %v5721, %v5720
    %v5843 = vpack.c.bf16 %v5723, %v5722
    %v5844 = vpack.c.bf16 %v5725, %v5724
    %v5845 = vpack.c.bf16 %v5727, %v5726
    %v5846 = vpack.c.bf16 %v5729, %v5728
    %v5847 = vpack.c.bf16 %v5731, %v5730
    %v5848 = vpack.c.bf16 %v5733, %v5732
    %v5849 = vpack.c.bf16 %v5735, %v5734
    %v5850 = vpack.c.bf16 %v5737, %v5736
    %v5851 = vpack.c.bf16 %v5739, %v5738
    %v5852 = vpack.c.bf16 %v5741, %v5740
    %v5853 = vpack.c.bf16 %v5743, %v5742
    %v5854 = vpack.c.bf16 %v5745, %v5744
    %v5855 = vpack.c.bf16 %v5747, %v5746
    %v5856 = vpack.c.bf16 %v5749, %v5748
    %v5857 = vpack.c.bf16 %v5751, %v5750
    %v5858 = vpack.c.bf16 %v5753, %v5752
    %v5859 = vpack.c.bf16 %v5755, %v5754
    %v5860 = vpack.c.bf16 %v5757, %v5756
    %v5861 = vpack.c.bf16 %v5759, %v5758
    %v5862 = vpack.c.bf16 %v5761, %v5760
    %v5863 = vpack.c.bf16 %v5763, %v5762
    %v5864 = vpack.c.bf16 %v5765, %v5764
    %v5865 = vpack.c.bf16 %v5767, %v5766
    %v5866 = vpack.c.bf16 %v5769, %v5768
    %v5867 = vpack.c.bf16 %v5771, %v5770
    %v5868 = vpack.c.bf16 %v5773, %v5772
    %v5869 = vpack.c.bf16 %v5775, %v5774
    %v5870 = vpack.c.bf16 %v5777, %v5776
    %v5871 = vpack.c.bf16 %v5779, %v5778
    %v5872 = vpack.c.bf16 %v5781, %v5780
    %v5873 = vpack.c.bf16 %v5783, %v5782
    %v5874 = vpack.c.bf16 %v5785, %v5784
    %v5875 = vpack.c.bf16 %v5787, %v5786
    %v5876 = vpack.c.bf16 %v5789, %v5788
    %v5877 = vpack.c.bf16 %v5791, %v5790
    %v5878 = vpack.c.bf16 %v5793, %v5792
    %v5879 = vpack.c.bf16 %v5795, %v5794
    %v5880 = vpack.c.bf16 %v5797, %v5796
    %v5881 = vpack.c.bf16 %v5799, %v5798
    %v5882 = vpack.c.bf16 %v5801, %v5800
    %v5883 = vpack.c.bf16 %v5803, %v5802
    %v5884 = vpack.c.bf16 %v5805, %v5804
    %v5885 = vpack.c.bf16 %v5807, %v5806
    %v5886 = vpack.c.bf16 %v5809, %v5808
    %v5887 = vpack.c.bf16 %v5811, %v5810
    %v5888 = vpack.c.bf16 %v5813, %v5812
    %v5889 = vpack.c.bf16 %v5815, %v5814
    %v5890 = vpack.c.bf16 %v5817, %v5816
    %v5891 = vpack.c.bf16 %v5819, %v5818
    %v5892 = vpack.c.bf16 %v5821, %v5820
    %v5893 = vpack.c.bf16 %v5823, %v5822
    %v5894 = vpack.c.bf16 %v5825, %v5824
    %v5895 = vpack.c.bf16 %v5827, %v5826
    %v5896 = vpack.c.bf16 %v5829, %v5828
    %v5897 = vpack.c.bf16 %v5831, %v5830
    %v5898 = vpack.c.bf16 %v5833, %v5832
    %v5899 = vpack.c.bf16 %v5835, %v5834
    %5900 = vrot.lane.b32.xlu0 %v1162, 112
    %v5901 = vpop.permute.xlu0 %5900
    %v5904 = vsel %vm4427, %v5836, 0
    %5906 = vmatprep.subr.bf16.mxu0 0
    %5907 = vmatpush1.bf16.msra.mxu0 %v5901
    %5908 = vmatprep.subr.bf16.mxu0 0
    %5909 = vmatpush1.bf16.msra.mxu0 0
    %5910 = vmatprep.subr.bf16.mxu0 0
    %5911 = vmatpush1.bf16.msra.mxu0 0
    %5912 = vmatprep.subr.bf16.mxu0 0
    %5913 = vmatpush1.bf16.msra.mxu0 0
    %5914 = vmatprep.subr.bf16.mxu0 0
    %5915 = vmatpush1.bf16.msra.mxu0 0
    %5916 = vmatprep.subr.bf16.mxu0 0
    %5917 = vmatpush1.bf16.msra.mxu0 0
    %5918 = vmatprep.subr.bf16.mxu0 0
    %5919 = vmatpush1.bf16.msra.mxu0 0
    %5920 = vmatprep.subr.bf16.mxu0 0
    %5921 = vmatpush1.bf16.msra.mxu0 0
    %5922 = vmatprep.subr.bf16.mxu0 0
    %5923 = vmatpush1.bf16.msra.mxu0 0
    %5924 = vmatprep.subr.bf16.mxu0 0
    %5925 = vmatpush1.bf16.msra.mxu0 0
    %5926 = vmatprep.subr.bf16.mxu0 0
    %5927 = vmatpush1.bf16.msra.mxu0 0
    %5928 = vmatprep.subr.bf16.mxu0 0
    %5929 = vmatpush1.bf16.msra.mxu0 0
    %5930 = vmatprep.subr.bf16.mxu0 0
    %5931 = vmatpush1.bf16.msra.mxu0 0
    %5932 = vmatprep.subr.bf16.mxu0 0
    %5933 = vmatpush1.bf16.msra.mxu0 0
    %5934 = vmatprep.subr.bf16.mxu0 0
    %5935 = vmatpush1.bf16.msra.mxu0 0
    %5936 = vmatprep.subr.bf16.mxu0 0
    %5937 = vmatpush1.bf16.msra.mxu0 0
    %5938 = vmatprep.mubr.bf16.mxu0 0
    %5939 = vmatmul.mubr.bf16.gmra.mrb[0].mxu0 %v5904
    %v5940 = vpop.f32.mrb[0].mxu0
    %v5941 = vadd.f32 0.0, %v5940
    %v5942 = vpop.f32.mrb[0].mxu0
    %v5943 = vpop.f32.mrb[0].mxu0
    %v5944 = vadd.f32 0.0, %v5943
    %v5945 = vpop.f32.mrb[0].mxu0
    %5946 = vdwg.mxu0
    %5947 = vrot.lane.b32.xlu0 %v1163, 112
    %v5948 = vpop.permute.xlu0 %5947
    %v5951 = vsel %vm4427, %v5837, 0
    %5953 = vmatprep.subr.bf16.mxu0 0
    %5954 = vmatpush1.bf16.msra.mxu0 %v5948
    %5955 = vmatprep.subr.bf16.mxu0 0
    %5956 = vmatpush1.bf16.msra.mxu0 0
    %5957 = vmatprep.subr.bf16.mxu0 0
    %5958 = vmatpush1.bf16.msra.mxu0 0
    %5959 = vmatprep.subr.bf16.mxu0 0
    %5960 = vmatpush1.bf16.msra.mxu0 0
    %5961 = vmatprep.subr.bf16.mxu0 0
    %5962 = vmatpush1.bf16.msra.mxu0 0
    %5963 = vmatprep.subr.bf16.mxu0 0
    %5964 = vmatpush1.bf16.msra.mxu0 0
    %5965 = vmatprep.subr.bf16.mxu0 0
    %5966 = vmatpush1.bf16.msra.mxu0 0
    %5967 = vmatprep.subr.bf16.mxu0 0
    %5968 = vmatpush1.bf16.msra.mxu0 0
    %5969 = vmatprep.subr.bf16.mxu0 0
    %5970 = vmatpush1.bf16.msra.mxu0 0
    %5971 = vmatprep.subr.bf16.mxu0 0
    %5972 = vmatpush1.bf16.msra.mxu0 0
    %5973 = vmatprep.subr.bf16.mxu0 0
    %5974 = vmatpush1.bf16.msra.mxu0 0
    %5975 = vmatprep.subr.bf16.mxu0 0
    %5976 = vmatpush1.bf16.msra.mxu0 0
    %5977 = vmatprep.subr.bf16.mxu0 0
    %5978 = vmatpush1.bf16.msra.mxu0 0
    %5979 = vmatprep.subr.bf16.mxu0 0
    %5980 = vmatpush1.bf16.msra.mxu0 0
    %5981 = vmatprep.subr.bf16.mxu0 0
    %5982 = vmatpush1.bf16.msra.mxu0 0
    %5983 = vmatprep.subr.bf16.mxu0 0
    %5984 = vmatpush1.bf16.msra.mxu0 0
    %5985 = vmatprep.mubr.bf16.mxu0 0
    %5986 = vmatmul.mubr.bf16.gmra.mrb[0].mxu0 %v5951
    %v5987 = vpop.f32.mrb[0].mxu0
    %v5988 = vadd.f32 0.0, %v5987
    %v5989 = vpop.f32.mrb[0].mxu0
    %v5990 = vpop.f32.mrb[0].mxu0
    %v5991 = vadd.f32 0.0, %v5990
    %v5992 = vpop.f32.mrb[0].mxu0
    %5993 = vdwg.mxu0
    %5994 = vrot.lane.b32.xlu0 %v1164, 112
    %v5995 = vpop.permute.xlu0 %5994
    %v5998 = vsel %vm4427, %v5838, 0
    %6000 = vmatprep.subr.bf16.mxu0 0
    %6001 = vmatpush1.bf16.msra.mxu0 %v5995
    %6002 = vmatprep.subr.bf16.mxu0 0
    %6003 = vmatpush1.bf16.msra.mxu0 0
    %6004 = vmatprep.subr.bf16.mxu0 0
    %6005 = vmatpush1.bf16.msra.mxu0 0
    %6006 = vmatprep.subr.bf16.mxu0 0
    %6007 = vmatpush1.bf16.msra.mxu0 0
    %6008 = vmatprep.subr.bf16.mxu0 0
    %6009 = vmatpush1.bf16.msra.mxu0 0
    %6010 = vmatprep.subr.bf16.mxu0 0
    %6011 = vmatpush1.bf16.msra.mxu0 0
    %6012 = vmatprep.subr.bf16.mxu0 0
    %6013 = vmatpush1.bf16.msra.mxu0 0
    %6014 = vmatprep.subr.bf16.mxu0 0
    %6015 = vmatpush1.bf16.msra.mxu0 0
    %6016 = vmatprep.subr.bf16.mxu0 0
    %6017 = vmatpush1.bf16.msra.mxu0 0
    %6018 = vmatprep.subr.bf16.mxu0 0
    %6019 = vmatpush1.bf16.msra.mxu0 0
    %6020 = vmatprep.subr.bf16.mxu0 0
    %6021 = vmatpush1.bf16.msra.mxu0 0
    %6022 = vmatprep.subr.bf16.mxu0 0
    %6023 = vmatpush1.bf16.msra.mxu0 0
    %6024 = vmatprep.subr.bf16.mxu0 0
    %6025 = vmatpush1.bf16.msra.mxu0 0
    %6026 = vmatprep.subr.bf16.mxu0 0
    %6027 = vmatpush1.bf16.msra.mxu0 0
    %6028 = vmatprep.subr.bf16.mxu0 0
    %6029 = vmatpush1.bf16.msra.mxu0 0
    %6030 = vmatprep.subr.bf16.mxu0 0
    %6031 = vmatpush1.bf16.msra.mxu0 0
    %6032 = vmatprep.mubr.bf16.mxu0 0
    %6033 = vmatmul.mubr.bf16.gmra.mrb[0].mxu0 %v5998
    %v6034 = vpop.f32.mrb[0].mxu0
    %v6035 = vadd.f32 0.0, %v6034
    %v6036 = vpop.f32.mrb[0].mxu0
    %v6037 = vpop.f32.mrb[0].mxu0
    %v6038 = vadd.f32 0.0, %v6037
    %v6039 = vpop.f32.mrb[0].mxu0
    %6040 = vdwg.mxu0
    %6041 = vrot.lane.b32.xlu0 %v1165, 112
    %v6042 = vpop.permute.xlu0 %6041
    %v6045 = vsel %vm4427, %v5839, 0
    %6047 = vmatprep.subr.bf16.mxu0 0
    %6048 = vmatpush1.bf16.msra.mxu0 %v6042
    %6049 = vmatprep.subr.bf16.mxu0 0
    %6050 = vmatpush1.bf16.msra.mxu0 0
    %6051 = vmatprep.subr.bf16.mxu0 0
    %6052 = vmatpush1.bf16.msra.mxu0 0
    %6053 = vmatprep.subr.bf16.mxu0 0
    %6054 = vmatpush1.bf16.msra.mxu0 0
    %6055 = vmatprep.subr.bf16.mxu0 0
    %6056 = vmatpush1.bf16.msra.mxu0 0
    %6057 = vmatprep.subr.bf16.mxu0 0
    %6058 = vmatpush1.bf16.msra.mxu0 0
    %6059 = vmatprep.subr.bf16.mxu0 0
    %6060 = vmatpush1.bf16.msra.mxu0 0
    %6061 = vmatprep.subr.bf16.mxu0 0
    %6062 = vmatpush1.bf16.msra.mxu0 0
    %6063 = vmatprep.subr.bf16.mxu0 0
    %6064 = vmatpush1.bf16.msra.mxu0 0
    %6065 = vmatprep.subr.bf16.mxu0 0
    %6066 = vmatpush1.bf16.msra.mxu0 0
    %6067 = vmatprep.subr.bf16.mxu0 0
    %6068 = vmatpush1.bf16.msra.mxu0 0
    %6069 = vmatprep.subr.bf16.mxu0 0
    %6070 = vmatpush1.bf16.msra.mxu0 0
    %6071 = vmatprep.subr.bf16.mxu0 0
    %6072 = vmatpush1.bf16.msra.mxu0 0
    %6073 = vmatprep.subr.bf16.mxu0 0
    %6074 = vmatpush1.bf16.msra.mxu0 0
    %6075 = vmatprep.subr.bf16.mxu0 0
    %6076 = vmatpush1.bf16.msra.mxu0 0
    %6077 = vmatprep.subr.bf16.mxu0 0
    %6078 = vmatpush1.bf16.msra.mxu0 0
    %6079 = vmatprep.mubr.bf16.mxu0 0
    %6080 = vmatmul.mubr.bf16.gmra.mrb[0].mxu0 %v6045
    %v6081 = vpop.f32.mrb[0].mxu0
    %v6082 = vadd.f32 0.0, %v6081
    %v6083 = vpop.f32.mrb[0].mxu0
    %v6084 = vpop.f32.mrb[0].mxu0
    %v6085 = vadd.f32 0.0, %v6084
    %v6086 = vpop.f32.mrb[0].mxu0
    %6087 = vdwg.mxu0
    %6088 = vrot.lane.b32.xlu0 %v1166, 112
    %v6089 = vpop.permute.xlu0 %6088
    %v6092 = vsel %vm4427, %v5840, 0
    %6094 = vmatprep.subr.bf16.mxu0 0
    %6095 = vmatpush1.bf16.msra.mxu0 %v6089
    %6096 = vmatprep.subr.bf16.mxu0 0
    %6097 = vmatpush1.bf16.msra.mxu0 0
    %6098 = vmatprep.subr.bf16.mxu0 0
    %6099 = vmatpush1.bf16.msra.mxu0 0
    %6100 = vmatprep.subr.bf16.mxu0 0
    %6101 = vmatpush1.bf16.msra.mxu0 0
    %6102 = vmatprep.subr.bf16.mxu0 0
    %6103 = vmatpush1.bf16.msra.mxu0 0
    %6104 = vmatprep.subr.bf16.mxu0 0
    %6105 = vmatpush1.bf16.msra.mxu0 0
    %6106 = vmatprep.subr.bf16.mxu0 0
    %6107 = vmatpush1.bf16.msra.mxu0 0
    %6108 = vmatprep.subr.bf16.mxu0 0
    %6109 = vmatpush1.bf16.msra.mxu0 0
    %6110 = vmatprep.subr.bf16.mxu0 0
    %6111 = vmatpush1.bf16.msra.mxu0 0
    %6112 = vmatprep.subr.bf16.mxu0 0
    %6113 = vmatpush1.bf16.msra.mxu0 0
    %6114 = vmatprep.subr.bf16.mxu0 0
    %6115 = vmatpush1.bf16.msra.mxu0 0
    %6116 = vmatprep.subr.bf16.mxu0 0
    %6117 = vmatpush1.bf16.msra.mxu0 0
    %6118 = vmatprep.subr.bf16.mxu0 0
    %6119 = vmatpush1.bf16.msra.mxu0 0
    %6120 = vmatprep.subr.bf16.mxu0 0
    %6121 = vmatpush1.bf16.msra.mxu0 0
    %6122 = vmatprep.subr.bf16.mxu0 0
    %6123 = vmatpush1.bf16.msra.mxu0 0
    %6124 = vmatprep.subr.bf16.mxu0 0
    %6125 = vmatpush1.bf16.msra.mxu0 0
    %6126 = vmatprep.mubr.bf16.mxu0 0
    %6127 = vmatmul.mubr.bf16.gmra.mrb[0].mxu0 %v6092
    %v6128 = vpop.f32.mrb[0].mxu0
    %v6129 = vadd.f32 0.0, %v6128
    %v6130 = vpop.f32.mrb[0].mxu0
    %v6131 = vpop.f32.mrb[0].mxu0
    %v6132 = vadd.f32 0.0, %v6131
    %v6133 = vpop.f32.mrb[0].mxu0
    %6134 = vdwg.mxu0
    %6135 = vrot.lane.b32.xlu0 %v1167, 112
    %v6136 = vpop.permute.xlu0 %6135
    %v6139 = vsel %vm4427, %v5841, 0
    %6141 = vmatprep.subr.bf16.mxu0 0
    %6142 = vmatpush1.bf16.msra.mxu0 %v6136
    %6143 = vmatprep.subr.bf16.mxu0 0
    %6144 = vmatpush1.bf16.msra.mxu0 0
    %6145 = vmatprep.subr.bf16.mxu0 0
    %6146 = vmatpush1.bf16.msra.mxu0 0
    %6147 = vmatprep.subr.bf16.mxu0 0
    %6148 = vmatpush1.bf16.msra.mxu0 0
    %6149 = vmatprep.subr.bf16.mxu0 0
    %6150 = vmatpush1.bf16.msra.mxu0 0
    %6151 = vmatprep.subr.bf16.mxu0 0
    %6152 = vmatpush1.bf16.msra.mxu0 0
    %6153 = vmatprep.subr.bf16.mxu0 0
    %6154 = vmatpush1.bf16.msra.mxu0 0
    %6155 = vmatprep.subr.bf16.mxu0 0
    %6156 = vmatpush1.bf16.msra.mxu0 0
    %6157 = vmatprep.subr.bf16.mxu0 0
    %6158 = vmatpush1.bf16.msra.mxu0 0
    %6159 = vmatprep.subr.bf16.mxu0 0
    %6160 = vmatpush1.bf16.msra.mxu0 0
    %6161 = vmatprep.subr.bf16.mxu0 0
    %6162 = vmatpush1.bf16.msra.mxu0 0
    %6163 = vmatprep.subr.bf16.mxu0 0
    %6164 = vmatpush1.bf16.msra.mxu0 0
    %6165 = vmatprep.subr.bf16.mxu0 0
    %6166 = vmatpush1.bf16.msra.mxu0 0
    %6167 = vmatprep.subr.bf16.mxu0 0
    %6168 = vmatpush1.bf16.msra.mxu0 0
    %6169 = vmatprep.subr.bf16.mxu0 0
    %6170 = vmatpush1.bf16.msra.mxu0 0
    %6171 = vmatprep.subr.bf16.mxu0 0
    %6172 = vmatpush1.bf16.msra.mxu0 0
    %6173 = vmatprep.mubr.bf16.mxu0 0
    %6174 = vmatmul.mubr.bf16.gmra.mrb[0].mxu0 %v6139
    %v6175 = vpop.f32.mrb[0].mxu0
    %v6176 = vadd.f32 0.0, %v6175
    %v6177 = vpop.f32.mrb[0].mxu0
    %v6178 = vpop.f32.mrb[0].mxu0
    %v6179 = vadd.f32 0.0, %v6178
    %v6180 = vpop.f32.mrb[0].mxu0
    %6181 = vdwg.mxu0
    %6182 = vrot.lane.b32.xlu0 %v1168, 112
    %v6183 = vpop.permute.xlu0 %6182
    %v6186 = vsel %vm4427, %v5842, 0
    %6188 = vmatprep.subr.bf16.mxu0 0
    %6189 = vmatpush1.bf16.msra.mxu0 %v6183
    %6190 = vmatprep.subr.bf16.mxu0 0
    %6191 = vmatpush1.bf16.msra.mxu0 0
    %6192 = vmatprep.subr.bf16.mxu0 0
    %6193 = vmatpush1.bf16.msra.mxu0 0
    %6194 = vmatprep.subr.bf16.mxu0 0
    %6195 = vmatpush1.bf16.msra.mxu0 0
    %6196 = vmatprep.subr.bf16.mxu0 0
    %6197 = vmatpush1.bf16.msra.mxu0 0
    %6198 = vmatprep.subr.bf16.mxu0 0
    %6199 = vmatpush1.bf16.msra.mxu0 0
    %6200 = vmatprep.subr.bf16.mxu0 0
    %6201 = vmatpush1.bf16.msra.mxu0 0
    %6202 = vmatprep.subr.bf16.mxu0 0
    %6203 = vmatpush1.bf16.msra.mxu0 0
    %6204 = vmatprep.subr.bf16.mxu0 0
    %6205 = vmatpush1.bf16.msra.mxu0 0
    %6206 = vmatprep.subr.bf16.mxu0 0
    %6207 = vmatpush1.bf16.msra.mxu0 0
    %6208 = vmatprep.subr.bf16.mxu0 0
    %6209 = vmatpush1.bf16.msra.mxu0 0
    %6210 = vmatprep.subr.bf16.mxu0 0
    %6211 = vmatpush1.bf16.msra.mxu0 0
    %6212 = vmatprep.subr.bf16.mxu0 0
    %6213 = vmatpush1.bf16.msra.mxu0 0
    %6214 = vmatprep.subr.bf16.mxu0 0
    %6215 = vmatpush1.bf16.msra.mxu0 0
    %6216 = vmatprep.subr.bf16.mxu0 0
    %6217 = vmatpush1.bf16.msra.mxu0 0
    %6218 = vmatprep.subr.bf16.mxu0 0
    %6219 = vmatpush1.bf16.msra.mxu0 0
    %6220 = vmatprep.mubr.bf16.mxu0 0
    %6221 = vmatmul.mubr.bf16.gmra.mrb[0].mxu0 %v6186
    %v6222 = vpop.f32.mrb[0].mxu0
    %v6223 = vadd.f32 0.0, %v6222
    %v6224 = vpop.f32.mrb[0].mxu0
    %v6225 = vpop.f32.mrb[0].mxu0
    %v6226 = vadd.f32 0.0, %v6225
    %v6227 = vpop.f32.mrb[0].mxu0
    %6228 = vdwg.mxu0
    %6229 = vrot.lane.b32.xlu0 %v1169, 112
    %v6230 = vpop.permute.xlu0 %6229
    %v6233 = vsel %vm4427, %v5843, 0
    %6235 = vmatprep.subr.bf16.mxu0 0
    %6236 = vmatpush1.bf16.msra.mxu0 %v6230
    %6237 = vmatprep.subr.bf16.mxu0 0
    %6238 = vmatpush1.bf16.msra.mxu0 0
    %6239 = vmatprep.subr.bf16.mxu0 0
    %6240 = vmatpush1.bf16.msra.mxu0 0
    %6241 = vmatprep.subr.bf16.mxu0 0
    %6242 = vmatpush1.bf16.msra.mxu0 0
    %6243 = vmatprep.subr.bf16.mxu0 0
    %6244 = vmatpush1.bf16.msra.mxu0 0
    %6245 = vmatprep.subr.bf16.mxu0 0
    %6246 = vmatpush1.bf16.msra.mxu0 0
    %6247 = vmatprep.subr.bf16.mxu0 0
    %6248 = vmatpush1.bf16.msra.mxu0 0
    %6249 = vmatprep.subr.bf16.mxu0 0
    %6250 = vmatpush1.bf16.msra.mxu0 0
    %6251 = vmatprep.subr.bf16.mxu0 0
    %6252 = vmatpush1.bf16.msra.mxu0 0
    %6253 = vmatprep.subr.bf16.mxu0 0
    %6254 = vmatpush1.bf16.msra.mxu0 0
    %6255 = vmatprep.subr.bf16.mxu0 0
    %6256 = vmatpush1.bf16.msra.mxu0 0
    %6257 = vmatprep.subr.bf16.mxu0 0
    %6258 = vmatpush1.bf16.msra.mxu0 0
    %6259 = vmatprep.subr.bf16.mxu0 0
    %6260 = vmatpush1.bf16.msra.mxu0 0
    %6261 = vmatprep.subr.bf16.mxu0 0
    %6262 = vmatpush1.bf16.msra.mxu0 0
    %6263 = vmatprep.subr.bf16.mxu0 0
    %6264 = vmatpush1.bf16.msra.mxu0 0
    %6265 = vmatprep.subr.bf16.mxu0 0
    %6266 = vmatpush1.bf16.msra.mxu0 0
    %6267 = vmatprep.mubr.bf16.mxu0 0
    %6268 = vmatmul.mubr.bf16.gmra.mrb[0].mxu0 %v6233
    %v6269 = vpop.f32.mrb[0].mxu0
    %v6270 = vadd.f32 0.0, %v6269
    %v6271 = vpop.f32.mrb[0].mxu0
    %v6272 = vpop.f32.mrb[0].mxu0
    %v6273 = vadd.f32 0.0, %v6272
    %v6274 = vpop.f32.mrb[0].mxu0
    %6275 = vdwg.mxu0
    %6276 = vrot.lane.b32.xlu0 %v1170, 112
    %v6277 = vpop.permute.xlu0 %6276
    %v6280 = vsel %vm4427, %v5844, 0
    %6282 = vmatprep.subr.bf16.mxu0 0
    %6283 = vmatpush1.bf16.msra.mxu0 %v6277
    %6284 = vmatprep.subr.bf16.mxu0 0
    %6285 = vmatpush1.bf16.msra.mxu0 0
    %6286 = vmatprep.subr.bf16.mxu0 0
    %6287 = vmatpush1.bf16.msra.mxu0 0
    %6288 = vmatprep.subr.bf16.mxu0 0
    %6289 = vmatpush1.bf16.msra.mxu0 0
    %6290 = vmatprep.subr.bf16.mxu0 0
    %6291 = vmatpush1.bf16.msra.mxu0 0
    %6292 = vmatprep.subr.bf16.mxu0 0
    %6293 = vmatpush1.bf16.msra.mxu0 0
    %6294 = vmatprep.subr.bf16.mxu0 0
    %6295 = vmatpush1.bf16.msra.mxu0 0
    %6296 = vmatprep.subr.bf16.mxu0 0
    %6297 = vmatpush1.bf16.msra.mxu0 0
    %6298 = vmatprep.subr.bf16.mxu0 0
    %6299 = vmatpush1.bf16.msra.mxu0 0
    %6300 = vmatprep.subr.bf16.mxu0 0
    %6301 = vmatpush1.bf16.msra.mxu0 0
    %6302 = vmatprep.subr.bf16.mxu0 0
    %6303 = vmatpush1.bf16.msra.mxu0 0
    %6304 = vmatprep.subr.bf16.mxu0 0
    %6305 = vmatpush1.bf16.msra.mxu0 0
    %6306 = vmatprep.subr.bf16.mxu0 0
    %6307 = vmatpush1.bf16.msra.mxu0 0
    %6308 = vmatprep.subr.bf16.mxu0 0
    %6309 = vmatpush1.bf16.msra.mxu0 0
    %6310 = vmatprep.subr.bf16.mxu0 0
    %6311 = vmatpush1.bf16.msra.mxu0 0
    %6312 = vmatprep.subr.bf16.mxu0 0
    %6313 = vmatpush1.bf16.msra.mxu0 0
    %6314 = vmatprep.mubr.bf16.mxu0 0
    %6315 = vmatmul.mubr.bf16.gmra.mrb[0].mxu0 %v6280
    %v6316 = vpop.f32.mrb[0].mxu0
    %v6317 = vadd.f32 0.0, %v6316
    %v6318 = vpop.f32.mrb[0].mxu0
    %v6319 = vpop.f32.mrb[0].mxu0
    %v6320 = vadd.f32 0.0, %v6319
    %v6321 = vpop.f32.mrb[0].mxu0
    %6322 = vdwg.mxu0
    %6323 = vrot.lane.b32.xlu0 %v1171, 112
    %v6324 = vpop.permute.xlu0 %6323
    %v6327 = vsel %vm4427, %v5845, 0
    %6329 = vmatprep.subr.bf16.mxu0 0
    %6330 = vmatpush1.bf16.msra.mxu0 %v6324
    %6331 = vmatprep.subr.bf16.mxu0 0
    %6332 = vmatpush1.bf16.msra.mxu0 0
    %6333 = vmatprep.subr.bf16.mxu0 0
    %6334 = vmatpush1.bf16.msra.mxu0 0
    %6335 = vmatprep.subr.bf16.mxu0 0
    %6336 = vmatpush1.bf16.msra.mxu0 0
    %6337 = vmatprep.subr.bf16.mxu0 0
    %6338 = vmatpush1.bf16.msra.mxu0 0
    %6339 = vmatprep.subr.bf16.mxu0 0
    %6340 = vmatpush1.bf16.msra.mxu0 0
    %6341 = vmatprep.subr.bf16.mxu0 0
    %6342 = vmatpush1.bf16.msra.mxu0 0
    %6343 = vmatprep.subr.bf16.mxu0 0
    %6344 = vmatpush1.bf16.msra.mxu0 0
    %6345 = vmatprep.subr.bf16.mxu0 0
    %6346 = vmatpush1.bf16.msra.mxu0 0
    %6347 = vmatprep.subr.bf16.mxu0 0
    %6348 = vmatpush1.bf16.msra.mxu0 0
    %6349 = vmatprep.subr.bf16.mxu0 0
    %6350 = vmatpush1.bf16.msra.mxu0 0
    %6351 = vmatprep.subr.bf16.mxu0 0
    %6352 = vmatpush1.bf16.msra.mxu0 0
    %6353 = vmatprep.subr.bf16.mxu0 0
    %6354 = vmatpush1.bf16.msra.mxu0 0
    %6355 = vmatprep.subr.bf16.mxu0 0
    %6356 = vmatpush1.bf16.msra.mxu0 0
    %6357 = vmatprep.subr.bf16.mxu0 0
    %6358 = vmatpush1.bf16.msra.mxu0 0
    %6359 = vmatprep.subr.bf16.mxu0 0
    %6360 = vmatpush1.bf16.msra.mxu0 0
    %6361 = vmatprep.mubr.bf16.mxu0 0
    %6362 = vmatmul.mubr.bf16.gmra.mrb[0].mxu0 %v6327
    %v6363 = vpop.f32.mrb[0].mxu0
    %v6364 = vadd.f32 0.0, %v6363
    %v6365 = vpop.f32.mrb[0].mxu0
    %v6366 = vpop.f32.mrb[0].mxu0
    %v6367 = vadd.f32 0.0, %v6366
    %v6368 = vpop.f32.mrb[0].mxu0
    %6369 = vdwg.mxu0
    %6370 = vrot.lane.b32.xlu0 %v1172, 112
    %v6371 = vpop.permute.xlu0 %6370
    %v6374 = vsel %vm4427, %v5846, 0
    %6376 = vmatprep.subr.bf16.mxu0 0
    %6377 = vmatpush1.bf16.msra.mxu0 %v6371
    %6378 = vmatprep.subr.bf16.mxu0 0
    %6379 = vmatpush1.bf16.msra.mxu0 0
    %6380 = vmatprep.subr.bf16.mxu0 0
    %6381 = vmatpush1.bf16.msra.mxu0 0
    %6382 = vmatprep.subr.bf16.mxu0 0
    %6383 = vmatpush1.bf16.msra.mxu0 0
    %6384 = vmatprep.subr.bf16.mxu0 0
    %6385 = vmatpush1.bf16.msra.mxu0 0
    %6386 = vmatprep.subr.bf16.mxu0 0
    %6387 = vmatpush1.bf16.msra.mxu0 0
    %6388 = vmatprep.subr.bf16.mxu0 0
    %6389 = vmatpush1.bf16.msra.mxu0 0
    %6390 = vmatprep.subr.bf16.mxu0 0
    %6391 = vmatpush1.bf16.msra.mxu0 0
    %6392 = vmatprep.subr.bf16.mxu0 0
    %6393 = vmatpush1.bf16.msra.mxu0 0
    %6394 = vmatprep.subr.bf16.mxu0 0
    %6395 = vmatpush1.bf16.msra.mxu0 0
    %6396 = vmatprep.subr.bf16.mxu0 0
    %6397 = vmatpush1.bf16.msra.mxu0 0
    %6398 = vmatprep.subr.bf16.mxu0 0
    %6399 = vmatpush1.bf16.msra.mxu0 0
    %6400 = vmatprep.subr.bf16.mxu0 0
    %6401 = vmatpush1.bf16.msra.mxu0 0
    %6402 = vmatprep.subr.bf16.mxu0 0
    %6403 = vmatpush1.bf16.msra.mxu0 0
    %6404 = vmatprep.subr.bf16.mxu0 0
    %6405 = vmatpush1.bf16.msra.mxu0 0
    %6406 = vmatprep.subr.bf16.mxu0 0
    %6407 = vmatpush1.bf16.msra.mxu0 0
    %6408 = vmatprep.mubr.bf16.mxu0 0
    %6409 = vmatmul.mubr.bf16.gmra.mrb[0].mxu0 %v6374
    %v6410 = vpop.f32.mrb[0].mxu0
    %v6411 = vadd.f32 0.0, %v6410
    %v6412 = vpop.f32.mrb[0].mxu0
    %v6413 = vpop.f32.mrb[0].mxu0
    %v6414 = vadd.f32 0.0, %v6413
    %v6415 = vpop.f32.mrb[0].mxu0
    %6416 = vdwg.mxu0
    %6417 = vrot.lane.b32.xlu0 %v1173, 112
    %v6418 = vpop.permute.xlu0 %6417
    %v6421 = vsel %vm4427, %v5847, 0
    %6423 = vmatprep.subr.bf16.mxu0 0
    %6424 = vmatpush1.bf16.msra.mxu0 %v6418
    %6425 = vmatprep.subr.bf16.mxu0 0
    %6426 = vmatpush1.bf16.msra.mxu0 0
    %6427 = vmatprep.subr.bf16.mxu0 0
    %6428 = vmatpush1.bf16.msra.mxu0 0
    %6429 = vmatprep.subr.bf16.mxu0 0
    %6430 = vmatpush1.bf16.msra.mxu0 0
    %6431 = vmatprep.subr.bf16.mxu0 0
    %6432 = vmatpush1.bf16.msra.mxu0 0
    %6433 = vmatprep.subr.bf16.mxu0 0
    %6434 = vmatpush1.bf16.msra.mxu0 0
    %6435 = vmatprep.subr.bf16.mxu0 0
    %6436 = vmatpush1.bf16.msra.mxu0 0
    %6437 = vmatprep.subr.bf16.mxu0 0
    %6438 = vmatpush1.bf16.msra.mxu0 0
    %6439 = vmatprep.subr.bf16.mxu0 0
    %6440 = vmatpush1.bf16.msra.mxu0 0
    %6441 = vmatprep.subr.bf16.mxu0 0
    %6442 = vmatpush1.bf16.msra.mxu0 0
    %6443 = vmatprep.subr.bf16.mxu0 0
    %6444 = vmatpush1.bf16.msra.mxu0 0
    %6445 = vmatprep.subr.bf16.mxu0 0
    %6446 = vmatpush1.bf16.msra.mxu0 0
    %6447 = vmatprep.subr.bf16.mxu0 0
    %6448 = vmatpush1.bf16.msra.mxu0 0
    %6449 = vmatprep.subr.bf16.mxu0 0
    %6450 = vmatpush1.bf16.msra.mxu0 0
    %6451 = vmatprep.subr.bf16.mxu0 0
    %6452 = vmatpush1.bf16.msra.mxu0 0
    %6453 = vmatprep.subr.bf16.mxu0 0
    %6454 = vmatpush1.bf16.msra.mxu0 0
    %6455 = vmatprep.mubr.bf16.mxu0 0
    %6456 = vmatmul.mubr.bf16.gmra.mrb[0].mxu0 %v6421
    %v6457 = vpop.f32.mrb[0].mxu0
    %v6458 = vadd.f32 0.0, %v6457
    %v6459 = vpop.f32.mrb[0].mxu0
    %v6460 = vpop.f32.mrb[0].mxu0
    %v6461 = vadd.f32 0.0, %v6460
    %v6462 = vpop.f32.mrb[0].mxu0
    %6463 = vdwg.mxu0
    %6464 = vrot.lane.b32.xlu0 %v1174, 112
    %v6465 = vpop.permute.xlu0 %6464
    %v6468 = vsel %vm4427, %v5848, 0
    %6470 = vmatprep.subr.bf16.mxu0 0
    %6471 = vmatpush1.bf16.msra.mxu0 %v6465
    %6472 = vmatprep.subr.bf16.mxu0 0
    %6473 = vmatpush1.bf16.msra.mxu0 0
    %6474 = vmatprep.subr.bf16.mxu0 0
    %6475 = vmatpush1.bf16.msra.mxu0 0
    %6476 = vmatprep.subr.bf16.mxu0 0
    %6477 = vmatpush1.bf16.msra.mxu0 0
    %6478 = vmatprep.subr.bf16.mxu0 0
    %6479 = vmatpush1.bf16.msra.mxu0 0
    %6480 = vmatprep.subr.bf16.mxu0 0
    %6481 = vmatpush1.bf16.msra.mxu0 0
    %6482 = vmatprep.subr.bf16.mxu0 0
    %6483 = vmatpush1.bf16.msra.mxu0 0
    %6484 = vmatprep.subr.bf16.mxu0 0
    %6485 = vmatpush1.bf16.msra.mxu0 0
    %6486 = vmatprep.subr.bf16.mxu0 0
    %6487 = vmatpush1.bf16.msra.mxu0 0
    %6488 = vmatprep.subr.bf16.mxu0 0
    %6489 = vmatpush1.bf16.msra.mxu0 0
    %6490 = vmatprep.subr.bf16.mxu0 0
    %6491 = vmatpush1.bf16.msra.mxu0 0
    %6492 = vmatprep.subr.bf16.mxu0 0
    %6493 = vmatpush1.bf16.msra.mxu0 0
    %6494 = vmatprep.subr.bf16.mxu0 0
    %6495 = vmatpush1.bf16.msra.mxu0 0
    %6496 = vmatprep.subr.bf16.mxu0 0
    %6497 = vmatpush1.bf16.msra.mxu0 0
    %6498 = vmatprep.subr.bf16.mxu0 0
    %6499 = vmatpush1.bf16.msra.mxu0 0
    %6500 = vmatprep.subr.bf16.mxu0 0
    %6501 = vmatpush1.bf16.msra.mxu0 0
    %6502 = vmatprep.mubr.bf16.mxu0 0
    %6503 = vmatmul.mubr.bf16.gmra.mrb[0].mxu0 %v6468
    %v6504 = vpop.f32.mrb[0].mxu0
    %v6505 = vadd.f32 0.0, %v6504
    %v6506 = vpop.f32.mrb[0].mxu0
    %v6507 = vpop.f32.mrb[0].mxu0
    %v6508 = vadd.f32 0.0, %v6507
    %v6509 = vpop.f32.mrb[0].mxu0
    %6510 = vdwg.mxu0
    %6511 = vrot.lane.b32.xlu0 %v1175, 112
    %v6512 = vpop.permute.xlu0 %6511
    %v6515 = vsel %vm4427, %v5849, 0
    %6517 = vmatprep.subr.bf16.mxu0 0
    %6518 = vmatpush1.bf16.msra.mxu0 %v6512
    %6519 = vmatprep.subr.bf16.mxu0 0
    %6520 = vmatpush1.bf16.msra.mxu0 0
    %6521 = vmatprep.subr.bf16.mxu0 0
    %6522 = vmatpush1.bf16.msra.mxu0 0
    %6523 = vmatprep.subr.bf16.mxu0 0
    %6524 = vmatpush1.bf16.msra.mxu0 0
    %6525 = vmatprep.subr.bf16.mxu0 0
    %6526 = vmatpush1.bf16.msra.mxu0 0
    %6527 = vmatprep.subr.bf16.mxu0 0
    %6528 = vmatpush1.bf16.msra.mxu0 0
    %6529 = vmatprep.subr.bf16.mxu0 0
    %6530 = vmatpush1.bf16.msra.mxu0 0
    %6531 = vmatprep.subr.bf16.mxu0 0
    %6532 = vmatpush1.bf16.msra.mxu0 0
    %6533 = vmatprep.subr.bf16.mxu0 0
    %6534 = vmatpush1.bf16.msra.mxu0 0
    %6535 = vmatprep.subr.bf16.mxu0 0
    %6536 = vmatpush1.bf16.msra.mxu0 0
    %6537 = vmatprep.subr.bf16.mxu0 0
    %6538 = vmatpush1.bf16.msra.mxu0 0
    %6539 = vmatprep.subr.bf16.mxu0 0
    %6540 = vmatpush1.bf16.msra.mxu0 0
    %6541 = vmatprep.subr.bf16.mxu0 0
    %6542 = vmatpush1.bf16.msra.mxu0 0
    %6543 = vmatprep.subr.bf16.mxu0 0
    %6544 = vmatpush1.bf16.msra.mxu0 0
    %6545 = vmatprep.subr.bf16.mxu0 0
    %6546 = vmatpush1.bf16.msra.mxu0 0
    %6547 = vmatprep.subr.bf16.mxu0 0
    %6548 = vmatpush1.bf16.msra.mxu0 0
    %6549 = vmatprep.mubr.bf16.mxu0 0
    %6550 = vmatmul.mubr.bf16.gmra.mrb[0].mxu0 %v6515
    %v6551 = vpop.f32.mrb[0].mxu0
    %v6552 = vadd.f32 0.0, %v6551
    %v6553 = vpop.f32.mrb[0].mxu0
    %v6554 = vpop.f32.mrb[0].mxu0
    %v6555 = vadd.f32 0.0, %v6554
    %v6556 = vpop.f32.mrb[0].mxu0
    %6557 = vdwg.mxu0
    %6558 = vrot.lane.b32.xlu0 %v1176, 112
    %v6559 = vpop.permute.xlu0 %6558
    %v6562 = vsel %vm4427, %v5850, 0
    %6564 = vmatprep.subr.bf16.mxu0 0
    %6565 = vmatpush1.bf16.msra.mxu0 %v6559
    %6566 = vmatprep.subr.bf16.mxu0 0
    %6567 = vmatpush1.bf16.msra.mxu0 0
    %6568 = vmatprep.subr.bf16.mxu0 0
    %6569 = vmatpush1.bf16.msra.mxu0 0
    %6570 = vmatprep.subr.bf16.mxu0 0
    %6571 = vmatpush1.bf16.msra.mxu0 0
    %6572 = vmatprep.subr.bf16.mxu0 0
    %6573 = vmatpush1.bf16.msra.mxu0 0
    %6574 = vmatprep.subr.bf16.mxu0 0
    %6575 = vmatpush1.bf16.msra.mxu0 0
    %6576 = vmatprep.subr.bf16.mxu0 0
    %6577 = vmatpush1.bf16.msra.mxu0 0
    %6578 = vmatprep.subr.bf16.mxu0 0
    %6579 = vmatpush1.bf16.msra.mxu0 0
    %6580 = vmatprep.subr.bf16.mxu0 0
    %6581 = vmatpush1.bf16.msra.mxu0 0
    %6582 = vmatprep.subr.bf16.mxu0 0
    %6583 = vmatpush1.bf16.msra.mxu0 0
    %6584 = vmatprep.subr.bf16.mxu0 0
    %6585 = vmatpush1.bf16.msra.mxu0 0
    %6586 = vmatprep.subr.bf16.mxu0 0
    %6587 = vmatpush1.bf16.msra.mxu0 0
    %6588 = vmatprep.subr.bf16.mxu0 0
    %6589 = vmatpush1.bf16.msra.mxu0 0
    %6590 = vmatprep.subr.bf16.mxu0 0
    %6591 = vmatpush1.bf16.msra.mxu0 0
    %6592 = vmatprep.subr.bf16.mxu0 0
    %6593 = vmatpush1.bf16.msra.mxu0 0
    %6594 = vmatprep.subr.bf16.mxu0 0
    %6595 = vmatpush1.bf16.msra.mxu0 0
    %6596 = vmatprep.mubr.bf16.mxu0 0
    %6597 = vmatmul.mubr.bf16.gmra.mrb[0].mxu0 %v6562
    %v6598 = vpop.f32.mrb[0].mxu0
    %v6599 = vadd.f32 0.0, %v6598
    %v6600 = vpop.f32.mrb[0].mxu0
    %v6601 = vpop.f32.mrb[0].mxu0
    %v6602 = vadd.f32 0.0, %v6601
    %v6603 = vpop.f32.mrb[0].mxu0
    %6604 = vdwg.mxu0
    %6605 = vrot.lane.b32.xlu0 %v1177, 112
    %v6606 = vpop.permute.xlu0 %6605
    %v6609 = vsel %vm4427, %v5851, 0
    %6611 = vmatprep.subr.bf16.mxu0 0
    %6612 = vmatpush1.bf16.msra.mxu0 %v6606
    %6613 = vmatprep.subr.bf16.mxu0 0
    %6614 = vmatpush1.bf16.msra.mxu0 0
    %6615 = vmatprep.subr.bf16.mxu0 0
    %6616 = vmatpush1.bf16.msra.mxu0 0
    %6617 = vmatprep.subr.bf16.mxu0 0
    %6618 = vmatpush1.bf16.msra.mxu0 0
    %6619 = vmatprep.subr.bf16.mxu0 0
    %6620 = vmatpush1.bf16.msra.mxu0 0
    %6621 = vmatprep.subr.bf16.mxu0 0
    %6622 = vmatpush1.bf16.msra.mxu0 0
    %6623 = vmatprep.subr.bf16.mxu0 0
    %6624 = vmatpush1.bf16.msra.mxu0 0
    %6625 = vmatprep.subr.bf16.mxu0 0
    %6626 = vmatpush1.bf16.msra.mxu0 0
    %6627 = vmatprep.subr.bf16.mxu0 0
    %6628 = vmatpush1.bf16.msra.mxu0 0
    %6629 = vmatprep.subr.bf16.mxu0 0
    %6630 = vmatpush1.bf16.msra.mxu0 0
    %6631 = vmatprep.subr.bf16.mxu0 0
    %6632 = vmatpush1.bf16.msra.mxu0 0
    %6633 = vmatprep.subr.bf16.mxu0 0
    %6634 = vmatpush1.bf16.msra.mxu0 0
    %6635 = vmatprep.subr.bf16.mxu0 0
    %6636 = vmatpush1.bf16.msra.mxu0 0
    %6637 = vmatprep.subr.bf16.mxu0 0
    %6638 = vmatpush1.bf16.msra.mxu0 0
    %6639 = vmatprep.subr.bf16.mxu0 0
    %6640 = vmatpush1.bf16.msra.mxu0 0
    %6641 = vmatprep.subr.bf16.mxu0 0
    %6642 = vmatpush1.bf16.msra.mxu0 0
    %6643 = vmatprep.mubr.bf16.mxu0 0
    %6644 = vmatmul.mubr.bf16.gmra.mrb[0].mxu0 %v6609
    %v6645 = vpop.f32.mrb[0].mxu0
    %v6646 = vadd.f32 0.0, %v6645
    %v6647 = vpop.f32.mrb[0].mxu0
    %v6648 = vpop.f32.mrb[0].mxu0
    %v6649 = vadd.f32 0.0, %v6648
    %v6650 = vpop.f32.mrb[0].mxu0
    %6651 = vdwg.mxu0
    %6652 = vrot.lane.b32.xlu0 %v1178, 112
    %v6653 = vpop.permute.xlu0 %6652
    %v6656 = vsel %vm4427, %v5852, 0
    %6658 = vmatprep.subr.bf16.mxu0 0
    %6659 = vmatpush1.bf16.msra.mxu0 %v6653
    %6660 = vmatprep.subr.bf16.mxu0 0
    %6661 = vmatpush1.bf16.msra.mxu0 0
    %6662 = vmatprep.subr.bf16.mxu0 0
    %6663 = vmatpush1.bf16.msra.mxu0 0
    %6664 = vmatprep.subr.bf16.mxu0 0
    %6665 = vmatpush1.bf16.msra.mxu0 0
    %6666 = vmatprep.subr.bf16.mxu0 0
    %6667 = vmatpush1.bf16.msra.mxu0 0
    %6668 = vmatprep.subr.bf16.mxu0 0
    %6669 = vmatpush1.bf16.msra.mxu0 0
    %6670 = vmatprep.subr.bf16.mxu0 0
    %6671 = vmatpush1.bf16.msra.mxu0 0
    %6672 = vmatprep.subr.bf16.mxu0 0
    %6673 = vmatpush1.bf16.msra.mxu0 0
    %6674 = vmatprep.subr.bf16.mxu0 0
    %6675 = vmatpush1.bf16.msra.mxu0 0
    %6676 = vmatprep.subr.bf16.mxu0 0
    %6677 = vmatpush1.bf16.msra.mxu0 0
    %6678 = vmatprep.subr.bf16.mxu0 0
    %6679 = vmatpush1.bf16.msra.mxu0 0
    %6680 = vmatprep.subr.bf16.mxu0 0
    %6681 = vmatpush1.bf16.msra.mxu0 0
    %6682 = vmatprep.subr.bf16.mxu0 0
    %6683 = vmatpush1.bf16.msra.mxu0 0
    %6684 = vmatprep.subr.bf16.mxu0 0
    %6685 = vmatpush1.bf16.msra.mxu0 0
    %6686 = vmatprep.subr.bf16.mxu0 0
    %6687 = vmatpush1.bf16.msra.mxu0 0
    %6688 = vmatprep.subr.bf16.mxu0 0
    %6689 = vmatpush1.bf16.msra.mxu0 0
    %6690 = vmatprep.mubr.bf16.mxu0 0
    %6691 = vmatmul.mubr.bf16.gmra.mrb[0].mxu0 %v6656
    %v6692 = vpop.f32.mrb[0].mxu0
    %v6693 = vadd.f32 0.0, %v6692
    %v6694 = vpop.f32.mrb[0].mxu0
    %v6695 = vpop.f32.mrb[0].mxu0
    %v6696 = vadd.f32 0.0, %v6695
    %v6697 = vpop.f32.mrb[0].mxu0
    %6698 = vdwg.mxu0
    %6699 = vrot.lane.b32.xlu0 %v1179, 112
    %v6700 = vpop.permute.xlu0 %6699
    %v6703 = vsel %vm4427, %v5853, 0
    %6705 = vmatprep.subr.bf16.mxu0 0
    %6706 = vmatpush1.bf16.msra.mxu0 %v6700
    %6707 = vmatprep.subr.bf16.mxu0 0
    %6708 = vmatpush1.bf16.msra.mxu0 0
    %6709 = vmatprep.subr.bf16.mxu0 0
    %6710 = vmatpush1.bf16.msra.mxu0 0
    %6711 = vmatprep.subr.bf16.mxu0 0
    %6712 = vmatpush1.bf16.msra.mxu0 0
    %6713 = vmatprep.subr.bf16.mxu0 0
    %6714 = vmatpush1.bf16.msra.mxu0 0
    %6715 = vmatprep.subr.bf16.mxu0 0
    %6716 = vmatpush1.bf16.msra.mxu0 0
    %6717 = vmatprep.subr.bf16.mxu0 0
    %6718 = vmatpush1.bf16.msra.mxu0 0
    %6719 = vmatprep.subr.bf16.mxu0 0
    %6720 = vmatpush1.bf16.msra.mxu0 0
    %6721 = vmatprep.subr.bf16.mxu0 0
    %6722 = vmatpush1.bf16.msra.mxu0 0
    %6723 = vmatprep.subr.bf16.mxu0 0
    %6724 = vmatpush1.bf16.msra.mxu0 0
    %6725 = vmatprep.subr.bf16.mxu0 0
    %6726 = vmatpush1.bf16.msra.mxu0 0
    %6727 = vmatprep.subr.bf16.mxu0 0
    %6728 = vmatpush1.bf16.msra.mxu0 0
    %6729 = vmatprep.subr.bf16.mxu0 0
    %6730 = vmatpush1.bf16.msra.mxu0 0
    %6731 = vmatprep.subr.bf16.mxu0 0
    %6732 = vmatpush1.bf16.msra.mxu0 0
    %6733 = vmatprep.subr.bf16.mxu0 0
    %6734 = vmatpush1.bf16.msra.mxu0 0
    %6735 = vmatprep.subr.bf16.mxu0 0
    %6736 = vmatpush1.bf16.msra.mxu0 0
    %6737 = vmatprep.mubr.bf16.mxu0 0
    %6738 = vmatmul.mubr.bf16.gmra.mrb[0].mxu0 %v6703
    %v6739 = vpop.f32.mrb[0].mxu0
    %v6740 = vadd.f32 0.0, %v6739
    %v6741 = vpop.f32.mrb[0].mxu0
    %v6742 = vpop.f32.mrb[0].mxu0
    %v6743 = vadd.f32 0.0, %v6742
    %v6744 = vpop.f32.mrb[0].mxu0
    %6745 = vdwg.mxu0
    %6746 = vrot.lane.b32.xlu0 %v1180, 112
    %v6747 = vpop.permute.xlu0 %6746
    %v6750 = vsel %vm4427, %v5854, 0
    %6752 = vmatprep.subr.bf16.mxu0 0
    %6753 = vmatpush1.bf16.msra.mxu0 %v6747
    %6754 = vmatprep.subr.bf16.mxu0 0
    %6755 = vmatpush1.bf16.msra.mxu0 0
    %6756 = vmatprep.subr.bf16.mxu0 0
    %6757 = vmatpush1.bf16.msra.mxu0 0
    %6758 = vmatprep.subr.bf16.mxu0 0
    %6759 = vmatpush1.bf16.msra.mxu0 0
    %6760 = vmatprep.subr.bf16.mxu0 0
    %6761 = vmatpush1.bf16.msra.mxu0 0
    %6762 = vmatprep.subr.bf16.mxu0 0
    %6763 = vmatpush1.bf16.msra.mxu0 0
    %6764 = vmatprep.subr.bf16.mxu0 0
    %6765 = vmatpush1.bf16.msra.mxu0 0
    %6766 = vmatprep.subr.bf16.mxu0 0
    %6767 = vmatpush1.bf16.msra.mxu0 0
    %6768 = vmatprep.subr.bf16.mxu0 0
    %6769 = vmatpush1.bf16.msra.mxu0 0
    %6770 = vmatprep.subr.bf16.mxu0 0
    %6771 = vmatpush1.bf16.msra.mxu0 0
    %6772 = vmatprep.subr.bf16.mxu0 0
    %6773 = vmatpush1.bf16.msra.mxu0 0
    %6774 = vmatprep.subr.bf16.mxu0 0
    %6775 = vmatpush1.bf16.msra.mxu0 0
    %6776 = vmatprep.subr.bf16.mxu0 0
    %6777 = vmatpush1.bf16.msra.mxu0 0
    %6778 = vmatprep.subr.bf16.mxu0 0
    %6779 = vmatpush1.bf16.msra.mxu0 0
    %6780 = vmatprep.subr.bf16.mxu0 0
    %6781 = vmatpush1.bf16.msra.mxu0 0
    %6782 = vmatprep.subr.bf16.mxu0 0
    %6783 = vmatpush1.bf16.msra.mxu0 0
    %6784 = vmatprep.mubr.bf16.mxu0 0
    %6785 = vmatmul.mubr.bf16.gmra.mrb[0].mxu0 %v6750
    %v6786 = vpop.f32.mrb[0].mxu0
    %v6787 = vadd.f32 0.0, %v6786
    %v6788 = vpop.f32.mrb[0].mxu0
    %v6789 = vpop.f32.mrb[0].mxu0
    %v6790 = vadd.f32 0.0, %v6789
    %v6791 = vpop.f32.mrb[0].mxu0
    %6792 = vdwg.mxu0
    %6793 = vrot.lane.b32.xlu0 %v1181, 112
    %v6794 = vpop.permute.xlu0 %6793
    %v6797 = vsel %vm4427, %v5855, 0
    %6799 = vmatprep.subr.bf16.mxu0 0
    %6800 = vmatpush1.bf16.msra.mxu0 %v6794
    %6801 = vmatprep.subr.bf16.mxu0 0
    %6802 = vmatpush1.bf16.msra.mxu0 0
    %6803 = vmatprep.subr.bf16.mxu0 0
    %6804 = vmatpush1.bf16.msra.mxu0 0
    %6805 = vmatprep.subr.bf16.mxu0 0
    %6806 = vmatpush1.bf16.msra.mxu0 0
    %6807 = vmatprep.subr.bf16.mxu0 0
    %6808 = vmatpush1.bf16.msra.mxu0 0
    %6809 = vmatprep.subr.bf16.mxu0 0
    %6810 = vmatpush1.bf16.msra.mxu0 0
    %6811 = vmatprep.subr.bf16.mxu0 0
    %6812 = vmatpush1.bf16.msra.mxu0 0
    %6813 = vmatprep.subr.bf16.mxu0 0
    %6814 = vmatpush1.bf16.msra.mxu0 0
    %6815 = vmatprep.subr.bf16.mxu0 0
    %6816 = vmatpush1.bf16.msra.mxu0 0
    %6817 = vmatprep.subr.bf16.mxu0 0
    %6818 = vmatpush1.bf16.msra.mxu0 0
    %6819 = vmatprep.subr.bf16.mxu0 0
    %6820 = vmatpush1.bf16.msra.mxu0 0
    %6821 = vmatprep.subr.bf16.mxu0 0
    %6822 = vmatpush1.bf16.msra.mxu0 0
    %6823 = vmatprep.subr.bf16.mxu0 0
    %6824 = vmatpush1.bf16.msra.mxu0 0
    %6825 = vmatprep.subr.bf16.mxu0 0
    %6826 = vmatpush1.bf16.msra.mxu0 0
    %6827 = vmatprep.subr.bf16.mxu0 0
    %6828 = vmatpush1.bf16.msra.mxu0 0
    %6829 = vmatprep.subr.bf16.mxu0 0
    %6830 = vmatpush1.bf16.msra.mxu0 0
    %6831 = vmatprep.mubr.bf16.mxu0 0
    %6832 = vmatmul.mubr.bf16.gmra.mrb[0].mxu0 %v6797
    %v6833 = vpop.f32.mrb[0].mxu0
    %v6834 = vadd.f32 0.0, %v6833
    %v6835 = vpop.f32.mrb[0].mxu0
    %v6836 = vpop.f32.mrb[0].mxu0
    %v6837 = vadd.f32 0.0, %v6836
    %v6838 = vpop.f32.mrb[0].mxu0
    %6839 = vdwg.mxu0
    %6840 = vrot.lane.b32.xlu0 %v1182, 112
    %v6841 = vpop.permute.xlu0 %6840
    %v6844 = vsel %vm4427, %v5856, 0
    %6846 = vmatprep.subr.bf16.mxu0 0
    %6847 = vmatpush1.bf16.msra.mxu0 %v6841
    %6848 = vmatprep.subr.bf16.mxu0 0
    %6849 = vmatpush1.bf16.msra.mxu0 0
    %6850 = vmatprep.subr.bf16.mxu0 0
    %6851 = vmatpush1.bf16.msra.mxu0 0
    %6852 = vmatprep.subr.bf16.mxu0 0
    %6853 = vmatpush1.bf16.msra.mxu0 0
    %6854 = vmatprep.subr.bf16.mxu0 0
    %6855 = vmatpush1.bf16.msra.mxu0 0
    %6856 = vmatprep.subr.bf16.mxu0 0
    %6857 = vmatpush1.bf16.msra.mxu0 0
    %6858 = vmatprep.subr.bf16.mxu0 0
    %6859 = vmatpush1.bf16.msra.mxu0 0
    %6860 = vmatprep.subr.bf16.mxu0 0
    %6861 = vmatpush1.bf16.msra.mxu0 0
    %6862 = vmatprep.subr.bf16.mxu0 0
    %6863 = vmatpush1.bf16.msra.mxu0 0
    %6864 = vmatprep.subr.bf16.mxu0 0
    %6865 = vmatpush1.bf16.msra.mxu0 0
    %6866 = vmatprep.subr.bf16.mxu0 0
    %6867 = vmatpush1.bf16.msra.mxu0 0
    %6868 = vmatprep.subr.bf16.mxu0 0
    %6869 = vmatpush1.bf16.msra.mxu0 0
    %6870 = vmatprep.subr.bf16.mxu0 0
    %6871 = vmatpush1.bf16.msra.mxu0 0
    %6872 = vmatprep.subr.bf16.mxu0 0
    %6873 = vmatpush1.bf16.msra.mxu0 0
    %6874 = vmatprep.subr.bf16.mxu0 0
    %6875 = vmatpush1.bf16.msra.mxu0 0
    %6876 = vmatprep.subr.bf16.mxu0 0
    %6877 = vmatpush1.bf16.msra.mxu0 0
    %6878 = vmatprep.mubr.bf16.mxu0 0
    %6879 = vmatmul.mubr.bf16.gmra.mrb[0].mxu0 %v6844
    %v6880 = vpop.f32.mrb[0].mxu0
    %v6881 = vadd.f32 0.0, %v6880
    %v6882 = vpop.f32.mrb[0].mxu0
    %v6883 = vpop.f32.mrb[0].mxu0
    %v6884 = vadd.f32 0.0, %v6883
    %v6885 = vpop.f32.mrb[0].mxu0
    %6886 = vdwg.mxu0
    %6887 = vrot.lane.b32.xlu0 %v1183, 112
    %v6888 = vpop.permute.xlu0 %6887
    %v6891 = vsel %vm4427, %v5857, 0
    %6893 = vmatprep.subr.bf16.mxu0 0
    %6894 = vmatpush1.bf16.msra.mxu0 %v6888
    %6895 = vmatprep.subr.bf16.mxu0 0
    %6896 = vmatpush1.bf16.msra.mxu0 0
    %6897 = vmatprep.subr.bf16.mxu0 0
    %6898 = vmatpush1.bf16.msra.mxu0 0
    %6899 = vmatprep.subr.bf16.mxu0 0
    %6900 = vmatpush1.bf16.msra.mxu0 0
    %6901 = vmatprep.subr.bf16.mxu0 0
    %6902 = vmatpush1.bf16.msra.mxu0 0
    %6903 = vmatprep.subr.bf16.mxu0 0
    %6904 = vmatpush1.bf16.msra.mxu0 0
    %6905 = vmatprep.subr.bf16.mxu0 0
    %6906 = vmatpush1.bf16.msra.mxu0 0
    %6907 = vmatprep.subr.bf16.mxu0 0
    %6908 = vmatpush1.bf16.msra.mxu0 0
    %6909 = vmatprep.subr.bf16.mxu0 0
    %6910 = vmatpush1.bf16.msra.mxu0 0
    %6911 = vmatprep.subr.bf16.mxu0 0
    %6912 = vmatpush1.bf16.msra.mxu0 0
    %6913 = vmatprep.subr.bf16.mxu0 0
    %6914 = vmatpush1.bf16.msra.mxu0 0
    %6915 = vmatprep.subr.bf16.mxu0 0
    %6916 = vmatpush1.bf16.msra.mxu0 0
    %6917 = vmatprep.subr.bf16.mxu0 0
    %6918 = vmatpush1.bf16.msra.mxu0 0
    %6919 = vmatprep.subr.bf16.mxu0 0
    %6920 = vmatpush1.bf16.msra.mxu0 0
    %6921 = vmatprep.subr.bf16.mxu0 0
    %6922 = vmatpush1.bf16.msra.mxu0 0
    %6923 = vmatprep.subr.bf16.mxu0 0
    %6924 = vmatpush1.bf16.msra.mxu0 0
    %6925 = vmatprep.mubr.bf16.mxu0 0
    %6926 = vmatmul.mubr.bf16.gmra.mrb[0].mxu0 %v6891
    %v6927 = vpop.f32.mrb[0].mxu0
    %v6928 = vadd.f32 0.0, %v6927
    %v6929 = vpop.f32.mrb[0].mxu0
    %v6930 = vpop.f32.mrb[0].mxu0
    %v6931 = vadd.f32 0.0, %v6930
    %v6932 = vpop.f32.mrb[0].mxu0
    %6933 = vdwg.mxu0
    %6934 = vrot.lane.b32.xlu0 %v1184, 112
    %v6935 = vpop.permute.xlu0 %6934
    %v6938 = vsel %vm4427, %v5858, 0
    %6940 = vmatprep.subr.bf16.mxu0 0
    %6941 = vmatpush1.bf16.msra.mxu0 %v6935
    %6942 = vmatprep.subr.bf16.mxu0 0
    %6943 = vmatpush1.bf16.msra.mxu0 0
    %6944 = vmatprep.subr.bf16.mxu0 0
    %6945 = vmatpush1.bf16.msra.mxu0 0
    %6946 = vmatprep.subr.bf16.mxu0 0
    %6947 = vmatpush1.bf16.msra.mxu0 0
    %6948 = vmatprep.subr.bf16.mxu0 0
    %6949 = vmatpush1.bf16.msra.mxu0 0
    %6950 = vmatprep.subr.bf16.mxu0 0
    %6951 = vmatpush1.bf16.msra.mxu0 0
    %6952 = vmatprep.subr.bf16.mxu0 0
    %6953 = vmatpush1.bf16.msra.mxu0 0
    %6954 = vmatprep.subr.bf16.mxu0 0
    %6955 = vmatpush1.bf16.msra.mxu0 0
    %6956 = vmatprep.subr.bf16.mxu0 0
    %6957 = vmatpush1.bf16.msra.mxu0 0
    %6958 = vmatprep.subr.bf16.mxu0 0
    %6959 = vmatpush1.bf16.msra.mxu0 0
    %6960 = vmatprep.subr.bf16.mxu0 0
    %6961 = vmatpush1.bf16.msra.mxu0 0
    %6962 = vmatprep.subr.bf16.mxu0 0
    %6963 = vmatpush1.bf16.msra.mxu0 0
    %6964 = vmatprep.subr.bf16.mxu0 0
    %6965 = vmatpush1.bf16.msra.mxu0 0
    %6966 = vmatprep.subr.bf16.mxu0 0
    %6967 = vmatpush1.bf16.msra.mxu0 0
    %6968 = vmatprep.subr.bf16.mxu0 0
    %6969 = vmatpush1.bf16.msra.mxu0 0
    %6970 = vmatprep.subr.bf16.mxu0 0
    %6971 = vmatpush1.bf16.msra.mxu0 0
    %6972 = vmatprep.mubr.bf16.mxu0 0
    %6973 = vmatmul.mubr.bf16.gmra.mrb[0].mxu0 %v6938
    %v6974 = vpop.f32.mrb[0].mxu0
    %v6975 = vadd.f32 0.0, %v6974
    %v6976 = vpop.f32.mrb[0].mxu0
    %v6977 = vpop.f32.mrb[0].mxu0
    %v6978 = vadd.f32 0.0, %v6977
    %v6979 = vpop.f32.mrb[0].mxu0
    %6980 = vdwg.mxu0
    %6981 = vrot.lane.b32.xlu0 %v1185, 112
    %v6982 = vpop.permute.xlu0 %6981
    %v6985 = vsel %vm4427, %v5859, 0
    %6987 = vmatprep.subr.bf16.mxu0 0
    %6988 = vmatpush1.bf16.msra.mxu0 %v6982
    %6989 = vmatprep.subr.bf16.mxu0 0
    %6990 = vmatpush1.bf16.msra.mxu0 0
    %6991 = vmatprep.subr.bf16.mxu0 0
    %6992 = vmatpush1.bf16.msra.mxu0 0
    %6993 = vmatprep.subr.bf16.mxu0 0
    %6994 = vmatpush1.bf16.msra.mxu0 0
    %6995 = vmatprep.subr.bf16.mxu0 0
    %6996 = vmatpush1.bf16.msra.mxu0 0
    %6997 = vmatprep.subr.bf16.mxu0 0
    %6998 = vmatpush1.bf16.msra.mxu0 0
    %6999 = vmatprep.subr.bf16.mxu0 0
    %7000 = vmatpush1.bf16.msra.mxu0 0
    %7001 = vmatprep.subr.bf16.mxu0 0
    %7002 = vmatpush1.bf16.msra.mxu0 0
    %7003 = vmatprep.subr.bf16.mxu0 0
    %7004 = vmatpush1.bf16.msra.mxu0 0
    %7005 = vmatprep.subr.bf16.mxu0 0
    %7006 = vmatpush1.bf16.msra.mxu0 0
    %7007 = vmatprep.subr.bf16.mxu0 0
    %7008 = vmatpush1.bf16.msra.mxu0 0
    %7009 = vmatprep.subr.bf16.mxu0 0
    %7010 = vmatpush1.bf16.msra.mxu0 0
    %7011 = vmatprep.subr.bf16.mxu0 0
    %7012 = vmatpush1.bf16.msra.mxu0 0
    %7013 = vmatprep.subr.bf16.mxu0 0
    %7014 = vmatpush1.bf16.msra.mxu0 0
    %7015 = vmatprep.subr.bf16.mxu0 0
    %7016 = vmatpush1.bf16.msra.mxu0 0
    %7017 = vmatprep.subr.bf16.mxu0 0
    %7018 = vmatpush1.bf16.msra.mxu0 0
    %7019 = vmatprep.mubr.bf16.mxu0 0
    %7020 = vmatmul.mubr.bf16.gmra.mrb[0].mxu0 %v6985
    %v7021 = vpop.f32.mrb[0].mxu0
    %v7022 = vadd.f32 0.0, %v7021
    %v7023 = vpop.f32.mrb[0].mxu0
    %v7024 = vpop.f32.mrb[0].mxu0
    %v7025 = vadd.f32 0.0, %v7024
    %v7026 = vpop.f32.mrb[0].mxu0
    %7027 = vdwg.mxu0
    %7028 = vrot.lane.b32.xlu0 %v1186, 112
    %v7029 = vpop.permute.xlu0 %7028
    %v7032 = vsel %vm4427, %v5860, 0
    %7034 = vmatprep.subr.bf16.mxu0 0
    %7035 = vmatpush1.bf16.msra.mxu0 %v7029
    %7036 = vmatprep.subr.bf16.mxu0 0
    %7037 = vmatpush1.bf16.msra.mxu0 0
    %7038 = vmatprep.subr.bf16.mxu0 0
    %7039 = vmatpush1.bf16.msra.mxu0 0
    %7040 = vmatprep.subr.bf16.mxu0 0
    %7041 = vmatpush1.bf16.msra.mxu0 0
    %7042 = vmatprep.subr.bf16.mxu0 0
    %7043 = vmatpush1.bf16.msra.mxu0 0
    %7044 = vmatprep.subr.bf16.mxu0 0
    %7045 = vmatpush1.bf16.msra.mxu0 0
    %7046 = vmatprep.subr.bf16.mxu0 0
    %7047 = vmatpush1.bf16.msra.mxu0 0
    %7048 = vmatprep.subr.bf16.mxu0 0
    %7049 = vmatpush1.bf16.msra.mxu0 0
    %7050 = vmatprep.subr.bf16.mxu0 0
    %7051 = vmatpush1.bf16.msra.mxu0 0
    %7052 = vmatprep.subr.bf16.mxu0 0
    %7053 = vmatpush1.bf16.msra.mxu0 0
    %7054 = vmatprep.subr.bf16.mxu0 0
    %7055 = vmatpush1.bf16.msra.mxu0 0
    %7056 = vmatprep.subr.bf16.mxu0 0
    %7057 = vmatpush1.bf16.msra.mxu0 0
    %7058 = vmatprep.subr.bf16.mxu0 0
    %7059 = vmatpush1.bf16.msra.mxu0 0
    %7060 = vmatprep.subr.bf16.mxu0 0
    %7061 = vmatpush1.bf16.msra.mxu0 0
    %7062 = vmatprep.subr.bf16.mxu0 0
    %7063 = vmatpush1.bf16.msra.mxu0 0
    %7064 = vmatprep.subr.bf16.mxu0 0
    %7065 = vmatpush1.bf16.msra.mxu0 0
    %7066 = vmatprep.mubr.bf16.mxu0 0
    %7067 = vmatmul.mubr.bf16.gmra.mrb[0].mxu0 %v7032
    %v7068 = vpop.f32.mrb[0].mxu0
    %v7069 = vadd.f32 0.0, %v7068
    %v7070 = vpop.f32.mrb[0].mxu0
    %v7071 = vpop.f32.mrb[0].mxu0
    %v7072 = vadd.f32 0.0, %v7071
    %v7073 = vpop.f32.mrb[0].mxu0
    %7074 = vdwg.mxu0
    %7075 = vrot.lane.b32.xlu0 %v1187, 112
    %v7076 = vpop.permute.xlu0 %7075
    %v7079 = vsel %vm4427, %v5861, 0
    %7081 = vmatprep.subr.bf16.mxu0 0
    %7082 = vmatpush1.bf16.msra.mxu0 %v7076
    %7083 = vmatprep.subr.bf16.mxu0 0
    %7084 = vmatpush1.bf16.msra.mxu0 0
    %7085 = vmatprep.subr.bf16.mxu0 0
    %7086 = vmatpush1.bf16.msra.mxu0 0
    %7087 = vmatprep.subr.bf16.mxu0 0
    %7088 = vmatpush1.bf16.msra.mxu0 0
    %7089 = vmatprep.subr.bf16.mxu0 0
    %7090 = vmatpush1.bf16.msra.mxu0 0
    %7091 = vmatprep.subr.bf16.mxu0 0
    %7092 = vmatpush1.bf16.msra.mxu0 0
    %7093 = vmatprep.subr.bf16.mxu0 0
    %7094 = vmatpush1.bf16.msra.mxu0 0
    %7095 = vmatprep.subr.bf16.mxu0 0
    %7096 = vmatpush1.bf16.msra.mxu0 0
    %7097 = vmatprep.subr.bf16.mxu0 0
    %7098 = vmatpush1.bf16.msra.mxu0 0
    %7099 = vmatprep.subr.bf16.mxu0 0
    %7100 = vmatpush1.bf16.msra.mxu0 0
    %7101 = vmatprep.subr.bf16.mxu0 0
    %7102 = vmatpush1.bf16.msra.mxu0 0
    %7103 = vmatprep.subr.bf16.mxu0 0
    %7104 = vmatpush1.bf16.msra.mxu0 0
    %7105 = vmatprep.subr.bf16.mxu0 0
    %7106 = vmatpush1.bf16.msra.mxu0 0
    %7107 = vmatprep.subr.bf16.mxu0 0
    %7108 = vmatpush1.bf16.msra.mxu0 0
    %7109 = vmatprep.subr.bf16.mxu0 0
    %7110 = vmatpush1.bf16.msra.mxu0 0
    %7111 = vmatprep.subr.bf16.mxu0 0
    %7112 = vmatpush1.bf16.msra.mxu0 0
    %7113 = vmatprep.mubr.bf16.mxu0 0
    %7114 = vmatmul.mubr.bf16.gmra.mrb[0].mxu0 %v7079
    %v7115 = vpop.f32.mrb[0].mxu0
    %v7116 = vadd.f32 0.0, %v7115
    %v7117 = vpop.f32.mrb[0].mxu0
    %v7118 = vpop.f32.mrb[0].mxu0
    %v7119 = vadd.f32 0.0, %v7118
    %v7120 = vpop.f32.mrb[0].mxu0
    %7121 = vdwg.mxu0
    %7122 = vrot.lane.b32.xlu0 %v1188, 112
    %v7123 = vpop.permute.xlu0 %7122
    %v7126 = vsel %vm4427, %v5862, 0
    %7128 = vmatprep.subr.bf16.mxu0 0
    %7129 = vmatpush1.bf16.msra.mxu0 %v7123
    %7130 = vmatprep.subr.bf16.mxu0 0
    %7131 = vmatpush1.bf16.msra.mxu0 0
    %7132 = vmatprep.subr.bf16.mxu0 0
    %7133 = vmatpush1.bf16.msra.mxu0 0
    %7134 = vmatprep.subr.bf16.mxu0 0
    %7135 = vmatpush1.bf16.msra.mxu0 0
    %7136 = vmatprep.subr.bf16.mxu0 0
    %7137 = vmatpush1.bf16.msra.mxu0 0
    %7138 = vmatprep.subr.bf16.mxu0 0
    %7139 = vmatpush1.bf16.msra.mxu0 0
    %7140 = vmatprep.subr.bf16.mxu0 0
    %7141 = vmatpush1.bf16.msra.mxu0 0
    %7142 = vmatprep.subr.bf16.mxu0 0
    %7143 = vmatpush1.bf16.msra.mxu0 0
    %7144 = vmatprep.subr.bf16.mxu0 0
    %7145 = vmatpush1.bf16.msra.mxu0 0
    %7146 = vmatprep.subr.bf16.mxu0 0
    %7147 = vmatpush1.bf16.msra.mxu0 0
    %7148 = vmatprep.subr.bf16.mxu0 0
    %7149 = vmatpush1.bf16.msra.mxu0 0
    %7150 = vmatprep.subr.bf16.mxu0 0
    %7151 = vmatpush1.bf16.msra.mxu0 0
    %7152 = vmatprep.subr.bf16.mxu0 0
    %7153 = vmatpush1.bf16.msra.mxu0 0
    %7154 = vmatprep.subr.bf16.mxu0 0
    %7155 = vmatpush1.bf16.msra.mxu0 0
    %7156 = vmatprep.subr.bf16.mxu0 0
    %7157 = vmatpush1.bf16.msra.mxu0 0
    %7158 = vmatprep.subr.bf16.mxu0 0
    %7159 = vmatpush1.bf16.msra.mxu0 0
    %7160 = vmatprep.mubr.bf16.mxu0 0
    %7161 = vmatmul.mubr.bf16.gmra.mrb[0].mxu0 %v7126
    %v7162 = vpop.f32.mrb[0].mxu0
    %v7163 = vadd.f32 0.0, %v7162
    %v7164 = vpop.f32.mrb[0].mxu0
    %v7165 = vpop.f32.mrb[0].mxu0
    %v7166 = vadd.f32 0.0, %v7165
    %v7167 = vpop.f32.mrb[0].mxu0
    %7168 = vdwg.mxu0
    %7169 = vrot.lane.b32.xlu0 %v1189, 112
    %v7170 = vpop.permute.xlu0 %7169
    %v7173 = vsel %vm4427, %v5863, 0
    %7175 = vmatprep.subr.bf16.mxu0 0
    %7176 = vmatpush1.bf16.msra.mxu0 %v7170
    %7177 = vmatprep.subr.bf16.mxu0 0
    %7178 = vmatpush1.bf16.msra.mxu0 0
    %7179 = vmatprep.subr.bf16.mxu0 0
    %7180 = vmatpush1.bf16.msra.mxu0 0
    %7181 = vmatprep.subr.bf16.mxu0 0
    %7182 = vmatpush1.bf16.msra.mxu0 0
    %7183 = vmatprep.subr.bf16.mxu0 0
    %7184 = vmatpush1.bf16.msra.mxu0 0
    %7185 = vmatprep.subr.bf16.mxu0 0
    %7186 = vmatpush1.bf16.msra.mxu0 0
    %7187 = vmatprep.subr.bf16.mxu0 0
    %7188 = vmatpush1.bf16.msra.mxu0 0
    %7189 = vmatprep.subr.bf16.mxu0 0
    %7190 = vmatpush1.bf16.msra.mxu0 0
    %7191 = vmatprep.subr.bf16.mxu0 0
    %7192 = vmatpush1.bf16.msra.mxu0 0
    %7193 = vmatprep.subr.bf16.mxu0 0
    %7194 = vmatpush1.bf16.msra.mxu0 0
    %7195 = vmatprep.subr.bf16.mxu0 0
    %7196 = vmatpush1.bf16.msra.mxu0 0
    %7197 = vmatprep.subr.bf16.mxu0 0
    %7198 = vmatpush1.bf16.msra.mxu0 0
    %7199 = vmatprep.subr.bf16.mxu0 0
    %7200 = vmatpush1.bf16.msra.mxu0 0
    %7201 = vmatprep.subr.bf16.mxu0 0
    %7202 = vmatpush1.bf16.msra.mxu0 0
    %7203 = vmatprep.subr.bf16.mxu0 0
    %7204 = vmatpush1.bf16.msra.mxu0 0
    %7205 = vmatprep.subr.bf16.mxu0 0
    %7206 = vmatpush1.bf16.msra.mxu0 0
    %7207 = vmatprep.mubr.bf16.mxu0 0
    %7208 = vmatmul.mubr.bf16.gmra.mrb[0].mxu0 %v7173
    %v7209 = vpop.f32.mrb[0].mxu0
    %v7210 = vadd.f32 0.0, %v7209
    %v7211 = vpop.f32.mrb[0].mxu0
    %v7212 = vpop.f32.mrb[0].mxu0
    %v7213 = vadd.f32 0.0, %v7212
    %v7214 = vpop.f32.mrb[0].mxu0
    %7215 = vdwg.mxu0
    %7216 = vrot.lane.b32.xlu0 %v1190, 112
    %v7217 = vpop.permute.xlu0 %7216
    %v7220 = vsel %vm4427, %v5864, 0
    %7222 = vmatprep.subr.bf16.mxu0 0
    %7223 = vmatpush1.bf16.msra.mxu0 %v7217
    %7224 = vmatprep.subr.bf16.mxu0 0
    %7225 = vmatpush1.bf16.msra.mxu0 0
    %7226 = vmatprep.subr.bf16.mxu0 0
    %7227 = vmatpush1.bf16.msra.mxu0 0
    %7228 = vmatprep.subr.bf16.mxu0 0
    %7229 = vmatpush1.bf16.msra.mxu0 0
    %7230 = vmatprep.subr.bf16.mxu0 0
    %7231 = vmatpush1.bf16.msra.mxu0 0
    %7232 = vmatprep.subr.bf16.mxu0 0
    %7233 = vmatpush1.bf16.msra.mxu0 0
    %7234 = vmatprep.subr.bf16.mxu0 0
    %7235 = vmatpush1.bf16.msra.mxu0 0
    %7236 = vmatprep.subr.bf16.mxu0 0
    %7237 = vmatpush1.bf16.msra.mxu0 0
    %7238 = vmatprep.subr.bf16.mxu0 0
    %7239 = vmatpush1.bf16.msra.mxu0 0
    %7240 = vmatprep.subr.bf16.mxu0 0
    %7241 = vmatpush1.bf16.msra.mxu0 0
    %7242 = vmatprep.subr.bf16.mxu0 0
    %7243 = vmatpush1.bf16.msra.mxu0 0
    %7244 = vmatprep.subr.bf16.mxu0 0
    %7245 = vmatpush1.bf16.msra.mxu0 0
    %7246 = vmatprep.subr.bf16.mxu0 0
    %7247 = vmatpush1.bf16.msra.mxu0 0
    %7248 = vmatprep.subr.bf16.mxu0 0
    %7249 = vmatpush1.bf16.msra.mxu0 0
    %7250 = vmatprep.subr.bf16.mxu0 0
    %7251 = vmatpush1.bf16.msra.mxu0 0
    %7252 = vmatprep.subr.bf16.mxu0 0
    %7253 = vmatpush1.bf16.msra.mxu0 0
    %7254 = vmatprep.mubr.bf16.mxu0 0
    %7255 = vmatmul.mubr.bf16.gmra.mrb[0].mxu0 %v7220
    %v7256 = vpop.f32.mrb[0].mxu0
    %v7257 = vadd.f32 0.0, %v7256
    %v7258 = vpop.f32.mrb[0].mxu0
    %v7259 = vpop.f32.mrb[0].mxu0
    %v7260 = vadd.f32 0.0, %v7259
    %v7261 = vpop.f32.mrb[0].mxu0
    %7262 = vdwg.mxu0
    %7263 = vrot.lane.b32.xlu0 %v1191, 112
    %v7264 = vpop.permute.xlu0 %7263
    %v7267 = vsel %vm4427, %v5865, 0
    %7269 = vmatprep.subr.bf16.mxu0 0
    %7270 = vmatpush1.bf16.msra.mxu0 %v7264
    %7271 = vmatprep.subr.bf16.mxu0 0
    %7272 = vmatpush1.bf16.msra.mxu0 0
    %7273 = vmatprep.subr.bf16.mxu0 0
    %7274 = vmatpush1.bf16.msra.mxu0 0
    %7275 = vmatprep.subr.bf16.mxu0 0
    %7276 = vmatpush1.bf16.msra.mxu0 0
    %7277 = vmatprep.subr.bf16.mxu0 0
    %7278 = vmatpush1.bf16.msra.mxu0 0
    %7279 = vmatprep.subr.bf16.mxu0 0
    %7280 = vmatpush1.bf16.msra.mxu0 0
    %7281 = vmatprep.subr.bf16.mxu0 0
    %7282 = vmatpush1.bf16.msra.mxu0 0
    %7283 = vmatprep.subr.bf16.mxu0 0
    %7284 = vmatpush1.bf16.msra.mxu0 0
    %7285 = vmatprep.subr.bf16.mxu0 0
    %7286 = vmatpush1.bf16.msra.mxu0 0
    %7287 = vmatprep.subr.bf16.mxu0 0
    %7288 = vmatpush1.bf16.msra.mxu0 0
    %7289 = vmatprep.subr.bf16.mxu0 0
    %7290 = vmatpush1.bf16.msra.mxu0 0
    %7291 = vmatprep.subr.bf16.mxu0 0
    %7292 = vmatpush1.bf16.msra.mxu0 0
    %7293 = vmatprep.subr.bf16.mxu0 0
    %7294 = vmatpush1.bf16.msra.mxu0 0
    %7295 = vmatprep.subr.bf16.mxu0 0
    %7296 = vmatpush1.bf16.msra.mxu0 0
    %7297 = vmatprep.subr.bf16.mxu0 0
    %7298 = vmatpush1.bf16.msra.mxu0 0
    %7299 = vmatprep.subr.bf16.mxu0 0
    %7300 = vmatpush1.bf16.msra.mxu0 0
    %7301 = vmatprep.mubr.bf16.mxu0 0
    %7302 = vmatmul.mubr.bf16.gmra.mrb[0].mxu0 %v7267
    %v7303 = vpop.f32.mrb[0].mxu0
    %v7304 = vadd.f32 0.0, %v7303
    %v7305 = vpop.f32.mrb[0].mxu0
    %v7306 = vpop.f32.mrb[0].mxu0
    %v7307 = vadd.f32 0.0, %v7306
    %v7308 = vpop.f32.mrb[0].mxu0
    %7309 = vdwg.mxu0
    %7310 = vrot.lane.b32.xlu0 %v1192, 112
    %v7311 = vpop.permute.xlu0 %7310
    %v7314 = vsel %vm4427, %v5866, 0
    %7316 = vmatprep.subr.bf16.mxu0 0
    %7317 = vmatpush1.bf16.msra.mxu0 %v7311
    %7318 = vmatprep.subr.bf16.mxu0 0
    %7319 = vmatpush1.bf16.msra.mxu0 0
    %7320 = vmatprep.subr.bf16.mxu0 0
    %7321 = vmatpush1.bf16.msra.mxu0 0
    %7322 = vmatprep.subr.bf16.mxu0 0
    %7323 = vmatpush1.bf16.msra.mxu0 0
    %7324 = vmatprep.subr.bf16.mxu0 0
    %7325 = vmatpush1.bf16.msra.mxu0 0
    %7326 = vmatprep.subr.bf16.mxu0 0
    %7327 = vmatpush1.bf16.msra.mxu0 0
    %7328 = vmatprep.subr.bf16.mxu0 0
    %7329 = vmatpush1.bf16.msra.mxu0 0
    %7330 = vmatprep.subr.bf16.mxu0 0
    %7331 = vmatpush1.bf16.msra.mxu0 0
    %7332 = vmatprep.subr.bf16.mxu0 0
    %7333 = vmatpush1.bf16.msra.mxu0 0
    %7334 = vmatprep.subr.bf16.mxu0 0
    %7335 = vmatpush1.bf16.msra.mxu0 0
    %7336 = vmatprep.subr.bf16.mxu0 0
    %7337 = vmatpush1.bf16.msra.mxu0 0
    %7338 = vmatprep.subr.bf16.mxu0 0
    %7339 = vmatpush1.bf16.msra.mxu0 0
    %7340 = vmatprep.subr.bf16.mxu0 0
    %7341 = vmatpush1.bf16.msra.mxu0 0
    %7342 = vmatprep.subr.bf16.mxu0 0
    %7343 = vmatpush1.bf16.msra.mxu0 0
    %7344 = vmatprep.subr.bf16.mxu0 0
    %7345 = vmatpush1.bf16.msra.mxu0 0
    %7346 = vmatprep.subr.bf16.mxu0 0
    %7347 = vmatpush1.bf16.msra.mxu0 0
    %7348 = vmatprep.mubr.bf16.mxu0 0
    %7349 = vmatmul.mubr.bf16.gmra.mrb[0].mxu0 %v7314
    %v7350 = vpop.f32.mrb[0].mxu0
    %v7351 = vadd.f32 0.0, %v7350
    %v7352 = vpop.f32.mrb[0].mxu0
    %v7353 = vpop.f32.mrb[0].mxu0
    %v7354 = vadd.f32 0.0, %v7353
    %v7355 = vpop.f32.mrb[0].mxu0
    %7356 = vdwg.mxu0
    %7357 = vrot.lane.b32.xlu0 %v1193, 112
    %v7358 = vpop.permute.xlu0 %7357
    %v7361 = vsel %vm4427, %v5867, 0
    %7363 = vmatprep.subr.bf16.mxu0 0
    %7364 = vmatpush1.bf16.msra.mxu0 %v7358
    %7365 = vmatprep.subr.bf16.mxu0 0
    %7366 = vmatpush1.bf16.msra.mxu0 0
    %7367 = vmatprep.subr.bf16.mxu0 0
    %7368 = vmatpush1.bf16.msra.mxu0 0
    %7369 = vmatprep.subr.bf16.mxu0 0
    %7370 = vmatpush1.bf16.msra.mxu0 0
    %7371 = vmatprep.subr.bf16.mxu0 0
    %7372 = vmatpush1.bf16.msra.mxu0 0
    %7373 = vmatprep.subr.bf16.mxu0 0
    %7374 = vmatpush1.bf16.msra.mxu0 0
    %7375 = vmatprep.subr.bf16.mxu0 0
    %7376 = vmatpush1.bf16.msra.mxu0 0
    %7377 = vmatprep.subr.bf16.mxu0 0
    %7378 = vmatpush1.bf16.msra.mxu0 0
    %7379 = vmatprep.subr.bf16.mxu0 0
    %7380 = vmatpush1.bf16.msra.mxu0 0
    %7381 = vmatprep.subr.bf16.mxu0 0
    %7382 = vmatpush1.bf16.msra.mxu0 0
    %7383 = vmatprep.subr.bf16.mxu0 0
    %7384 = vmatpush1.bf16.msra.mxu0 0
    %7385 = vmatprep.subr.bf16.mxu0 0
    %7386 = vmatpush1.bf16.msra.mxu0 0
    %7387 = vmatprep.subr.bf16.mxu0 0
    %7388 = vmatpush1.bf16.msra.mxu0 0
    %7389 = vmatprep.subr.bf16.mxu0 0
    %7390 = vmatpush1.bf16.msra.mxu0 0
    %7391 = vmatprep.subr.bf16.mxu0 0
    %7392 = vmatpush1.bf16.msra.mxu0 0
    %7393 = vmatprep.subr.bf16.mxu0 0
    %7394 = vmatpush1.bf16.msra.mxu0 0
    %7395 = vmatprep.mubr.bf16.mxu0 0
    %7396 = vmatmul.mubr.bf16.gmra.mrb[0].mxu0 %v7361
    %v7397 = vpop.f32.mrb[0].mxu0
    %v7398 = vadd.f32 0.0, %v7397
    %v7399 = vpop.f32.mrb[0].mxu0
    %v7400 = vpop.f32.mrb[0].mxu0
    %v7401 = vadd.f32 0.0, %v7400
    %v7402 = vpop.f32.mrb[0].mxu0
    %7403 = vdwg.mxu0
    %7404 = vrot.lane.b32.xlu0 %v1194, 112
    %v7405 = vpop.permute.xlu0 %7404
    %v7408 = vsel %vm4427, %v5868, 0
    %7410 = vmatprep.subr.bf16.mxu0 0
    %7411 = vmatpush1.bf16.msra.mxu0 %v7405
    %7412 = vmatprep.subr.bf16.mxu0 0
    %7413 = vmatpush1.bf16.msra.mxu0 0
    %7414 = vmatprep.subr.bf16.mxu0 0
    %7415 = vmatpush1.bf16.msra.mxu0 0
    %7416 = vmatprep.subr.bf16.mxu0 0
    %7417 = vmatpush1.bf16.msra.mxu0 0
    %7418 = vmatprep.subr.bf16.mxu0 0
    %7419 = vmatpush1.bf16.msra.mxu0 0
    %7420 = vmatprep.subr.bf16.mxu0 0
    %7421 = vmatpush1.bf16.msra.mxu0 0
    %7422 = vmatprep.subr.bf16.mxu0 0
    %7423 = vmatpush1.bf16.msra.mxu0 0
    %7424 = vmatprep.subr.bf16.mxu0 0
    %7425 = vmatpush1.bf16.msra.mxu0 0
    %7426 = vmatprep.subr.bf16.mxu0 0
    %7427 = vmatpush1.bf16.msra.mxu0 0
    %7428 = vmatprep.subr.bf16.mxu0 0
    %7429 = vmatpush1.bf16.msra.mxu0 0
    %7430 = vmatprep.subr.bf16.mxu0 0
    %7431 = vmatpush1.bf16.msra.mxu0 0
    %7432 = vmatprep.subr.bf16.mxu0 0
    %7433 = vmatpush1.bf16.msra.mxu0 0
    %7434 = vmatprep.subr.bf16.mxu0 0
    %7435 = vmatpush1.bf16.msra.mxu0 0
    %7436 = vmatprep.subr.bf16.mxu0 0
    %7437 = vmatpush1.bf16.msra.mxu0 0
    %7438 = vmatprep.subr.bf16.mxu0 0
    %7439 = vmatpush1.bf16.msra.mxu0 0
    %7440 = vmatprep.subr.bf16.mxu0 0
    %7441 = vmatpush1.bf16.msra.mxu0 0
    %7442 = vmatprep.mubr.bf16.mxu0 0
    %7443 = vmatmul.mubr.bf16.gmra.mrb[0].mxu0 %v7408
    %v7444 = vpop.f32.mrb[0].mxu0
    %v7445 = vadd.f32 0.0, %v7444
    %v7446 = vpop.f32.mrb[0].mxu0
    %v7447 = vpop.f32.mrb[0].mxu0
    %v7448 = vadd.f32 0.0, %v7447
    %v7449 = vpop.f32.mrb[0].mxu0
    %7450 = vdwg.mxu0
    %7451 = vrot.lane.b32.xlu0 %v1195, 112
    %v7452 = vpop.permute.xlu0 %7451
    %v7455 = vsel %vm4427, %v5869, 0
    %7457 = vmatprep.subr.bf16.mxu0 0
    %7458 = vmatpush1.bf16.msra.mxu0 %v7452
    %7459 = vmatprep.subr.bf16.mxu0 0
    %7460 = vmatpush1.bf16.msra.mxu0 0
    %7461 = vmatprep.subr.bf16.mxu0 0
    %7462 = vmatpush1.bf16.msra.mxu0 0
    %7463 = vmatprep.subr.bf16.mxu0 0
    %7464 = vmatpush1.bf16.msra.mxu0 0
    %7465 = vmatprep.subr.bf16.mxu0 0
    %7466 = vmatpush1.bf16.msra.mxu0 0
    %7467 = vmatprep.subr.bf16.mxu0 0
    %7468 = vmatpush1.bf16.msra.mxu0 0
    %7469 = vmatprep.subr.bf16.mxu0 0
    %7470 = vmatpush1.bf16.msra.mxu0 0
    %7471 = vmatprep.subr.bf16.mxu0 0
    %7472 = vmatpush1.bf16.msra.mxu0 0
    %7473 = vmatprep.subr.bf16.mxu0 0
    %7474 = vmatpush1.bf16.msra.mxu0 0
    %7475 = vmatprep.subr.bf16.mxu0 0
    %7476 = vmatpush1.bf16.msra.mxu0 0
    %7477 = vmatprep.subr.bf16.mxu0 0
    %7478 = vmatpush1.bf16.msra.mxu0 0
    %7479 = vmatprep.subr.bf16.mxu0 0
    %7480 = vmatpush1.bf16.msra.mxu0 0
    %7481 = vmatprep.subr.bf16.mxu0 0
    %7482 = vmatpush1.bf16.msra.mxu0 0
    %7483 = vmatprep.subr.bf16.mxu0 0
    %7484 = vmatpush1.bf16.msra.mxu0 0
    %7485 = vmatprep.subr.bf16.mxu0 0
    %7486 = vmatpush1.bf16.msra.mxu0 0
    %7487 = vmatprep.subr.bf16.mxu0 0
    %7488 = vmatpush1.bf16.msra.mxu0 0
    %7489 = vmatprep.mubr.bf16.mxu0 0
    %7490 = vmatmul.mubr.bf16.gmra.mrb[0].mxu0 %v7455
    %v7491 = vpop.f32.mrb[0].mxu0
    %v7492 = vadd.f32 0.0, %v7491
    %v7493 = vpop.f32.mrb[0].mxu0
    %v7494 = vpop.f32.mrb[0].mxu0
    %v7495 = vadd.f32 0.0, %v7494
    %v7496 = vpop.f32.mrb[0].mxu0
    %7497 = vdwg.mxu0
    %7498 = vrot.lane.b32.xlu0 %v1196, 112
    %v7499 = vpop.permute.xlu0 %7498
    %v7502 = vsel %vm4427, %v5870, 0
    %7504 = vmatprep.subr.bf16.mxu0 0
    %7505 = vmatpush1.bf16.msra.mxu0 %v7499
    %7506 = vmatprep.subr.bf16.mxu0 0
    %7507 = vmatpush1.bf16.msra.mxu0 0
    %7508 = vmatprep.subr.bf16.mxu0 0
    %7509 = vmatpush1.bf16.msra.mxu0 0
    %7510 = vmatprep.subr.bf16.mxu0 0
    %7511 = vmatpush1.bf16.msra.mxu0 0
    %7512 = vmatprep.subr.bf16.mxu0 0
    %7513 = vmatpush1.bf16.msra.mxu0 0
    %7514 = vmatprep.subr.bf16.mxu0 0
    %7515 = vmatpush1.bf16.msra.mxu0 0
    %7516 = vmatprep.subr.bf16.mxu0 0
    %7517 = vmatpush1.bf16.msra.mxu0 0
    %7518 = vmatprep.subr.bf16.mxu0 0
    %7519 = vmatpush1.bf16.msra.mxu0 0
    %7520 = vmatprep.subr.bf16.mxu0 0
    %7521 = vmatpush1.bf16.msra.mxu0 0
    %7522 = vmatprep.subr.bf16.mxu0 0
    %7523 = vmatpush1.bf16.msra.mxu0 0
    %7524 = vmatprep.subr.bf16.mxu0 0
    %7525 = vmatpush1.bf16.msra.mxu0 0
    %7526 = vmatprep.subr.bf16.mxu0 0
    %7527 = vmatpush1.bf16.msra.mxu0 0
    %7528 = vmatprep.subr.bf16.mxu0 0
    %7529 = vmatpush1.bf16.msra.mxu0 0
    %7530 = vmatprep.subr.bf16.mxu0 0
    %7531 = vmatpush1.bf16.msra.mxu0 0
    %7532 = vmatprep.subr.bf16.mxu0 0
    %7533 = vmatpush1.bf16.msra.mxu0 0
    %7534 = vmatprep.subr.bf16.mxu0 0
    %7535 = vmatpush1.bf16.msra.mxu0 0
    %7536 = vmatprep.mubr.bf16.mxu0 0
    %7537 = vmatmul.mubr.bf16.gmra.mrb[0].mxu0 %v7502
    %v7538 = vpop.f32.mrb[0].mxu0
    %v7539 = vadd.f32 0.0, %v7538
    %v7540 = vpop.f32.mrb[0].mxu0
    %v7541 = vpop.f32.mrb[0].mxu0
    %v7542 = vadd.f32 0.0, %v7541
    %v7543 = vpop.f32.mrb[0].mxu0
    %7544 = vdwg.mxu0
    %7545 = vrot.lane.b32.xlu0 %v1197, 112
    %v7546 = vpop.permute.xlu0 %7545
    %v7549 = vsel %vm4427, %v5871, 0
    %7551 = vmatprep.subr.bf16.mxu0 0
    %7552 = vmatpush1.bf16.msra.mxu0 %v7546
    %7553 = vmatprep.subr.bf16.mxu0 0
    %7554 = vmatpush1.bf16.msra.mxu0 0
    %7555 = vmatprep.subr.bf16.mxu0 0
    %7556 = vmatpush1.bf16.msra.mxu0 0
    %7557 = vmatprep.subr.bf16.mxu0 0
    %7558 = vmatpush1.bf16.msra.mxu0 0
    %7559 = vmatprep.subr.bf16.mxu0 0
    %7560 = vmatpush1.bf16.msra.mxu0 0
    %7561 = vmatprep.subr.bf16.mxu0 0
    %7562 = vmatpush1.bf16.msra.mxu0 0
    %7563 = vmatprep.subr.bf16.mxu0 0
    %7564 = vmatpush1.bf16.msra.mxu0 0
    %7565 = vmatprep.subr.bf16.mxu0 0
    %7566 = vmatpush1.bf16.msra.mxu0 0
    %7567 = vmatprep.subr.bf16.mxu0 0
    %7568 = vmatpush1.bf16.msra.mxu0 0
    %7569 = vmatprep.subr.bf16.mxu0 0
    %7570 = vmatpush1.bf16.msra.mxu0 0
    %7571 = vmatprep.subr.bf16.mxu0 0
    %7572 = vmatpush1.bf16.msra.mxu0 0
    %7573 = vmatprep.subr.bf16.mxu0 0
    %7574 = vmatpush1.bf16.msra.mxu0 0
    %7575 = vmatprep.subr.bf16.mxu0 0
    %7576 = vmatpush1.bf16.msra.mxu0 0
    %7577 = vmatprep.subr.bf16.mxu0 0
    %7578 = vmatpush1.bf16.msra.mxu0 0
    %7579 = vmatprep.subr.bf16.mxu0 0
    %7580 = vmatpush1.bf16.msra.mxu0 0
    %7581 = vmatprep.subr.bf16.mxu0 0
    %7582 = vmatpush1.bf16.msra.mxu0 0
    %7583 = vmatprep.mubr.bf16.mxu0 0
    %7584 = vmatmul.mubr.bf16.gmra.mrb[0].mxu0 %v7549
    %v7585 = vpop.f32.mrb[0].mxu0
    %v7586 = vadd.f32 0.0, %v7585
    %v7587 = vpop.f32.mrb[0].mxu0
    %v7588 = vpop.f32.mrb[0].mxu0
    %v7589 = vadd.f32 0.0, %v7588
    %v7590 = vpop.f32.mrb[0].mxu0
    %7591 = vdwg.mxu0
    %7592 = vrot.lane.b32.xlu0 %v1198, 112
    %v7593 = vpop.permute.xlu0 %7592
    %v7596 = vsel %vm4427, %v5872, 0
    %7598 = vmatprep.subr.bf16.mxu0 0
    %7599 = vmatpush1.bf16.msra.mxu0 %v7593
    %7600 = vmatprep.subr.bf16.mxu0 0
    %7601 = vmatpush1.bf16.msra.mxu0 0
    %7602 = vmatprep.subr.bf16.mxu0 0
    %7603 = vmatpush1.bf16.msra.mxu0 0
    %7604 = vmatprep.subr.bf16.mxu0 0
    %7605 = vmatpush1.bf16.msra.mxu0 0
    %7606 = vmatprep.subr.bf16.mxu0 0
    %7607 = vmatpush1.bf16.msra.mxu0 0
    %7608 = vmatprep.subr.bf16.mxu0 0
    %7609 = vmatpush1.bf16.msra.mxu0 0
    %7610 = vmatprep.subr.bf16.mxu0 0
    %7611 = vmatpush1.bf16.msra.mxu0 0
    %7612 = vmatprep.subr.bf16.mxu0 0
    %7613 = vmatpush1.bf16.msra.mxu0 0
    %7614 = vmatprep.subr.bf16.mxu0 0
    %7615 = vmatpush1.bf16.msra.mxu0 0
    %7616 = vmatprep.subr.bf16.mxu0 0
    %7617 = vmatpush1.bf16.msra.mxu0 0
    %7618 = vmatprep.subr.bf16.mxu0 0
    %7619 = vmatpush1.bf16.msra.mxu0 0
    %7620 = vmatprep.subr.bf16.mxu0 0
    %7621 = vmatpush1.bf16.msra.mxu0 0
    %7622 = vmatprep.subr.bf16.mxu0 0
    %7623 = vmatpush1.bf16.msra.mxu0 0
    %7624 = vmatprep.subr.bf16.mxu0 0
    %7625 = vmatpush1.bf16.msra.mxu0 0
    %7626 = vmatprep.subr.bf16.mxu0 0
    %7627 = vmatpush1.bf16.msra.mxu0 0
    %7628 = vmatprep.subr.bf16.mxu0 0
    %7629 = vmatpush1.bf16.msra.mxu0 0
    %7630 = vmatprep.mubr.bf16.mxu0 0
    %7631 = vmatmul.mubr.bf16.gmra.mrb[0].mxu0 %v7596
    %v7632 = vpop.f32.mrb[0].mxu0
    %v7633 = vadd.f32 0.0, %v7632
    %v7634 = vpop.f32.mrb[0].mxu0
    %v7635 = vpop.f32.mrb[0].mxu0
    %v7636 = vadd.f32 0.0, %v7635
    %v7637 = vpop.f32.mrb[0].mxu0
    %7638 = vdwg.mxu0
    %7639 = vrot.lane.b32.xlu0 %v1199, 112
    %v7640 = vpop.permute.xlu0 %7639
    %v7643 = vsel %vm4427, %v5873, 0
    %7645 = vmatprep.subr.bf16.mxu0 0
    %7646 = vmatpush1.bf16.msra.mxu0 %v7640
    %7647 = vmatprep.subr.bf16.mxu0 0
    %7648 = vmatpush1.bf16.msra.mxu0 0
    %7649 = vmatprep.subr.bf16.mxu0 0
    %7650 = vmatpush1.bf16.msra.mxu0 0
    %7651 = vmatprep.subr.bf16.mxu0 0
    %7652 = vmatpush1.bf16.msra.mxu0 0
    %7653 = vmatprep.subr.bf16.mxu0 0
    %7654 = vmatpush1.bf16.msra.mxu0 0
    %7655 = vmatprep.subr.bf16.mxu0 0
    %7656 = vmatpush1.bf16.msra.mxu0 0
    %7657 = vmatprep.subr.bf16.mxu0 0
    %7658 = vmatpush1.bf16.msra.mxu0 0
    %7659 = vmatprep.subr.bf16.mxu0 0
    %7660 = vmatpush1.bf16.msra.mxu0 0
    %7661 = vmatprep.subr.bf16.mxu0 0
    %7662 = vmatpush1.bf16.msra.mxu0 0
    %7663 = vmatprep.subr.bf16.mxu0 0
    %7664 = vmatpush1.bf16.msra.mxu0 0
    %7665 = vmatprep.subr.bf16.mxu0 0
    %7666 = vmatpush1.bf16.msra.mxu0 0
    %7667 = vmatprep.subr.bf16.mxu0 0
    %7668 = vmatpush1.bf16.msra.mxu0 0
    %7669 = vmatprep.subr.bf16.mxu0 0
    %7670 = vmatpush1.bf16.msra.mxu0 0
    %7671 = vmatprep.subr.bf16.mxu0 0
    %7672 = vmatpush1.bf16.msra.mxu0 0
    %7673 = vmatprep.subr.bf16.mxu0 0
    %7674 = vmatpush1.bf16.msra.mxu0 0
    %7675 = vmatprep.subr.bf16.mxu0 0
    %7676 = vmatpush1.bf16.msra.mxu0 0
    %7677 = vmatprep.mubr.bf16.mxu0 0
    %7678 = vmatmul.mubr.bf16.gmra.mrb[0].mxu0 %v7643
    %v7679 = vpop.f32.mrb[0].mxu0
    %v7680 = vadd.f32 0.0, %v7679
    %v7681 = vpop.f32.mrb[0].mxu0
    %v7682 = vpop.f32.mrb[0].mxu0
    %v7683 = vadd.f32 0.0, %v7682
    %v7684 = vpop.f32.mrb[0].mxu0
    %7685 = vdwg.mxu0
    %7686 = vrot.lane.b32.xlu0 %v1200, 112
    %v7687 = vpop.permute.xlu0 %7686
    %v7690 = vsel %vm4427, %v5874, 0
    %7692 = vmatprep.subr.bf16.mxu0 0
    %7693 = vmatpush1.bf16.msra.mxu0 %v7687
    %7694 = vmatprep.subr.bf16.mxu0 0
    %7695 = vmatpush1.bf16.msra.mxu0 0
    %7696 = vmatprep.subr.bf16.mxu0 0
    %7697 = vmatpush1.bf16.msra.mxu0 0
    %7698 = vmatprep.subr.bf16.mxu0 0
    %7699 = vmatpush1.bf16.msra.mxu0 0
    %7700 = vmatprep.subr.bf16.mxu0 0
    %7701 = vmatpush1.bf16.msra.mxu0 0
    %7702 = vmatprep.subr.bf16.mxu0 0
    %7703 = vmatpush1.bf16.msra.mxu0 0
    %7704 = vmatprep.subr.bf16.mxu0 0
    %7705 = vmatpush1.bf16.msra.mxu0 0
    %7706 = vmatprep.subr.bf16.mxu0 0
    %7707 = vmatpush1.bf16.msra.mxu0 0
    %7708 = vmatprep.subr.bf16.mxu0 0
    %7709 = vmatpush1.bf16.msra.mxu0 0
    %7710 = vmatprep.subr.bf16.mxu0 0
    %7711 = vmatpush1.bf16.msra.mxu0 0
    %7712 = vmatprep.subr.bf16.mxu0 0
    %7713 = vmatpush1.bf16.msra.mxu0 0
    %7714 = vmatprep.subr.bf16.mxu0 0
    %7715 = vmatpush1.bf16.msra.mxu0 0
    %7716 = vmatprep.subr.bf16.mxu0 0
    %7717 = vmatpush1.bf16.msra.mxu0 0
    %7718 = vmatprep.subr.bf16.mxu0 0
    %7719 = vmatpush1.bf16.msra.mxu0 0
    %7720 = vmatprep.subr.bf16.mxu0 0
    %7721 = vmatpush1.bf16.msra.mxu0 0
    %7722 = vmatprep.subr.bf16.mxu0 0
    %7723 = vmatpush1.bf16.msra.mxu0 0
    %7724 = vmatprep.mubr.bf16.mxu0 0
    %7725 = vmatmul.mubr.bf16.gmra.mrb[0].mxu0 %v7690
    %v7726 = vpop.f32.mrb[0].mxu0
    %v7727 = vadd.f32 0.0, %v7726
    %v7728 = vpop.f32.mrb[0].mxu0
    %v7729 = vpop.f32.mrb[0].mxu0
    %v7730 = vadd.f32 0.0, %v7729
    %v7731 = vpop.f32.mrb[0].mxu0
    %7732 = vdwg.mxu0
    %7733 = vrot.lane.b32.xlu0 %v1201, 112
    %v7734 = vpop.permute.xlu0 %7733
    %v7737 = vsel %vm4427, %v5875, 0
    %7739 = vmatprep.subr.bf16.mxu0 0
    %7740 = vmatpush1.bf16.msra.mxu0 %v7734
    %7741 = vmatprep.subr.bf16.mxu0 0
    %7742 = vmatpush1.bf16.msra.mxu0 0
    %7743 = vmatprep.subr.bf16.mxu0 0
    %7744 = vmatpush1.bf16.msra.mxu0 0
    %7745 = vmatprep.subr.bf16.mxu0 0
    %7746 = vmatpush1.bf16.msra.mxu0 0
    %7747 = vmatprep.subr.bf16.mxu0 0
    %7748 = vmatpush1.bf16.msra.mxu0 0
    %7749 = vmatprep.subr.bf16.mxu0 0
    %7750 = vmatpush1.bf16.msra.mxu0 0
    %7751 = vmatprep.subr.bf16.mxu0 0
    %7752 = vmatpush1.bf16.msra.mxu0 0
    %7753 = vmatprep.subr.bf16.mxu0 0
    %7754 = vmatpush1.bf16.msra.mxu0 0
    %7755 = vmatprep.subr.bf16.mxu0 0
    %7756 = vmatpush1.bf16.msra.mxu0 0
    %7757 = vmatprep.subr.bf16.mxu0 0
    %7758 = vmatpush1.bf16.msra.mxu0 0
    %7759 = vmatprep.subr.bf16.mxu0 0
    %7760 = vmatpush1.bf16.msra.mxu0 0
    %7761 = vmatprep.subr.bf16.mxu0 0
    %7762 = vmatpush1.bf16.msra.mxu0 0
    %7763 = vmatprep.subr.bf16.mxu0 0
    %7764 = vmatpush1.bf16.msra.mxu0 0
    %7765 = vmatprep.subr.bf16.mxu0 0
    %7766 = vmatpush1.bf16.msra.mxu0 0
    %7767 = vmatprep.subr.bf16.mxu0 0
    %7768 = vmatpush1.bf16.msra.mxu0 0
    %7769 = vmatprep.subr.bf16.mxu0 0
    %7770 = vmatpush1.bf16.msra.mxu0 0
    %7771 = vmatprep.mubr.bf16.mxu0 0
    %7772 = vmatmul.mubr.bf16.gmra.mrb[0].mxu0 %v7737
    %v7773 = vpop.f32.mrb[0].mxu0
    %v7774 = vadd.f32 0.0, %v7773
    %v7775 = vpop.f32.mrb[0].mxu0
    %v7776 = vpop.f32.mrb[0].mxu0
    %v7777 = vadd.f32 0.0, %v7776
    %v7778 = vpop.f32.mrb[0].mxu0
    %7779 = vdwg.mxu0
    %7780 = vrot.lane.b32.xlu0 %v1202, 112
    %v7781 = vpop.permute.xlu0 %7780
    %v7784 = vsel %vm4427, %v5876, 0
    %7786 = vmatprep.subr.bf16.mxu0 0
    %7787 = vmatpush1.bf16.msra.mxu0 %v7781
    %7788 = vmatprep.subr.bf16.mxu0 0
    %7789 = vmatpush1.bf16.msra.mxu0 0
    %7790 = vmatprep.subr.bf16.mxu0 0
    %7791 = vmatpush1.bf16.msra.mxu0 0
    %7792 = vmatprep.subr.bf16.mxu0 0
    %7793 = vmatpush1.bf16.msra.mxu0 0
    %7794 = vmatprep.subr.bf16.mxu0 0
    %7795 = vmatpush1.bf16.msra.mxu0 0
    %7796 = vmatprep.subr.bf16.mxu0 0
    %7797 = vmatpush1.bf16.msra.mxu0 0
    %7798 = vmatprep.subr.bf16.mxu0 0
    %7799 = vmatpush1.bf16.msra.mxu0 0
    %7800 = vmatprep.subr.bf16.mxu0 0
    %7801 = vmatpush1.bf16.msra.mxu0 0
    %7802 = vmatprep.subr.bf16.mxu0 0
    %7803 = vmatpush1.bf16.msra.mxu0 0
    %7804 = vmatprep.subr.bf16.mxu0 0
    %7805 = vmatpush1.bf16.msra.mxu0 0
    %7806 = vmatprep.subr.bf16.mxu0 0
    %7807 = vmatpush1.bf16.msra.mxu0 0
    %7808 = vmatprep.subr.bf16.mxu0 0
    %7809 = vmatpush1.bf16.msra.mxu0 0
    %7810 = vmatprep.subr.bf16.mxu0 0
    %7811 = vmatpush1.bf16.msra.mxu0 0
    %7812 = vmatprep.subr.bf16.mxu0 0
    %7813 = vmatpush1.bf16.msra.mxu0 0
    %7814 = vmatprep.subr.bf16.mxu0 0
    %7815 = vmatpush1.bf16.msra.mxu0 0
    %7816 = vmatprep.subr.bf16.mxu0 0
    %7817 = vmatpush1.bf16.msra.mxu0 0
    %7818 = vmatprep.mubr.bf16.mxu0 0
    %7819 = vmatmul.mubr.bf16.gmra.mrb[0].mxu0 %v7784
    %v7820 = vpop.f32.mrb[0].mxu0
    %v7821 = vadd.f32 0.0, %v7820
    %v7822 = vpop.f32.mrb[0].mxu0
    %v7823 = vpop.f32.mrb[0].mxu0
    %v7824 = vadd.f32 0.0, %v7823
    %v7825 = vpop.f32.mrb[0].mxu0
    %7826 = vdwg.mxu0
    %7827 = vrot.lane.b32.xlu0 %v1203, 112
    %v7828 = vpop.permute.xlu0 %7827
    %v7831 = vsel %vm4427, %v5877, 0
    %7833 = vmatprep.subr.bf16.mxu0 0
    %7834 = vmatpush1.bf16.msra.mxu0 %v7828
    %7835 = vmatprep.subr.bf16.mxu0 0
    %7836 = vmatpush1.bf16.msra.mxu0 0
    %7837 = vmatprep.subr.bf16.mxu0 0
    %7838 = vmatpush1.bf16.msra.mxu0 0
    %7839 = vmatprep.subr.bf16.mxu0 0
    %7840 = vmatpush1.bf16.msra.mxu0 0
    %7841 = vmatprep.subr.bf16.mxu0 0
    %7842 = vmatpush1.bf16.msra.mxu0 0
    %7843 = vmatprep.subr.bf16.mxu0 0
    %7844 = vmatpush1.bf16.msra.mxu0 0
    %7845 = vmatprep.subr.bf16.mxu0 0
    %7846 = vmatpush1.bf16.msra.mxu0 0
    %7847 = vmatprep.subr.bf16.mxu0 0
    %7848 = vmatpush1.bf16.msra.mxu0 0
    %7849 = vmatprep.subr.bf16.mxu0 0
    %7850 = vmatpush1.bf16.msra.mxu0 0
    %7851 = vmatprep.subr.bf16.mxu0 0
    %7852 = vmatpush1.bf16.msra.mxu0 0
    %7853 = vmatprep.subr.bf16.mxu0 0
    %7854 = vmatpush1.bf16.msra.mxu0 0
    %7855 = vmatprep.subr.bf16.mxu0 0
    %7856 = vmatpush1.bf16.msra.mxu0 0
    %7857 = vmatprep.subr.bf16.mxu0 0
    %7858 = vmatpush1.bf16.msra.mxu0 0
    %7859 = vmatprep.subr.bf16.mxu0 0
    %7860 = vmatpush1.bf16.msra.mxu0 0
    %7861 = vmatprep.subr.bf16.mxu0 0
    %7862 = vmatpush1.bf16.msra.mxu0 0
    %7863 = vmatprep.subr.bf16.mxu0 0
    %7864 = vmatpush1.bf16.msra.mxu0 0
    %7865 = vmatprep.mubr.bf16.mxu0 0
    %7866 = vmatmul.mubr.bf16.gmra.mrb[0].mxu0 %v7831
    %v7867 = vpop.f32.mrb[0].mxu0
    %v7868 = vadd.f32 0.0, %v7867
    %v7869 = vpop.f32.mrb[0].mxu0
    %v7870 = vpop.f32.mrb[0].mxu0
    %v7871 = vadd.f32 0.0, %v7870
    %v7872 = vpop.f32.mrb[0].mxu0
    %7873 = vdwg.mxu0
    %7874 = vrot.lane.b32.xlu0 %v1204, 112
    %v7875 = vpop.permute.xlu0 %7874
    %v7878 = vsel %vm4427, %v5878, 0
    %7880 = vmatprep.subr.bf16.mxu0 0
    %7881 = vmatpush1.bf16.msra.mxu0 %v7875
    %7882 = vmatprep.subr.bf16.mxu0 0
    %7883 = vmatpush1.bf16.msra.mxu0 0
    %7884 = vmatprep.subr.bf16.mxu0 0
    %7885 = vmatpush1.bf16.msra.mxu0 0
    %7886 = vmatprep.subr.bf16.mxu0 0
    %7887 = vmatpush1.bf16.msra.mxu0 0
    %7888 = vmatprep.subr.bf16.mxu0 0
    %7889 = vmatpush1.bf16.msra.mxu0 0
    %7890 = vmatprep.subr.bf16.mxu0 0
    %7891 = vmatpush1.bf16.msra.mxu0 0
    %7892 = vmatprep.subr.bf16.mxu0 0
    %7893 = vmatpush1.bf16.msra.mxu0 0
    %7894 = vmatprep.subr.bf16.mxu0 0
    %7895 = vmatpush1.bf16.msra.mxu0 0
    %7896 = vmatprep.subr.bf16.mxu0 0
    %7897 = vmatpush1.bf16.msra.mxu0 0
    %7898 = vmatprep.subr.bf16.mxu0 0
    %7899 = vmatpush1.bf16.msra.mxu0 0
    %7900 = vmatprep.subr.bf16.mxu0 0
    %7901 = vmatpush1.bf16.msra.mxu0 0
    %7902 = vmatprep.subr.bf16.mxu0 0
    %7903 = vmatpush1.bf16.msra.mxu0 0
    %7904 = vmatprep.subr.bf16.mxu0 0
    %7905 = vmatpush1.bf16.msra.mxu0 0
    %7906 = vmatprep.subr.bf16.mxu0 0
    %7907 = vmatpush1.bf16.msra.mxu0 0
    %7908 = vmatprep.subr.bf16.mxu0 0
    %7909 = vmatpush1.bf16.msra.mxu0 0
    %7910 = vmatprep.subr.bf16.mxu0 0
    %7911 = vmatpush1.bf16.msra.mxu0 0
    %7912 = vmatprep.mubr.bf16.mxu0 0
    %7913 = vmatmul.mubr.bf16.gmra.mrb[0].mxu0 %v7878
    %v7914 = vpop.f32.mrb[0].mxu0
    %v7915 = vadd.f32 0.0, %v7914
    %v7916 = vpop.f32.mrb[0].mxu0
    %v7917 = vpop.f32.mrb[0].mxu0
    %v7918 = vadd.f32 0.0, %v7917
    %v7919 = vpop.f32.mrb[0].mxu0
    %7920 = vdwg.mxu0
    %7921 = vrot.lane.b32.xlu0 %v1205, 112
    %v7922 = vpop.permute.xlu0 %7921
    %v7925 = vsel %vm4427, %v5879, 0
    %7927 = vmatprep.subr.bf16.mxu0 0
    %7928 = vmatpush1.bf16.msra.mxu0 %v7922
    %7929 = vmatprep.subr.bf16.mxu0 0
    %7930 = vmatpush1.bf16.msra.mxu0 0
    %7931 = vmatprep.subr.bf16.mxu0 0
    %7932 = vmatpush1.bf16.msra.mxu0 0
    %7933 = vmatprep.subr.bf16.mxu0 0
    %7934 = vmatpush1.bf16.msra.mxu0 0
    %7935 = vmatprep.subr.bf16.mxu0 0
    %7936 = vmatpush1.bf16.msra.mxu0 0
    %7937 = vmatprep.subr.bf16.mxu0 0
    %7938 = vmatpush1.bf16.msra.mxu0 0
    %7939 = vmatprep.subr.bf16.mxu0 0
    %7940 = vmatpush1.bf16.msra.mxu0 0
    %7941 = vmatprep.subr.bf16.mxu0 0
    %7942 = vmatpush1.bf16.msra.mxu0 0
    %7943 = vmatprep.subr.bf16.mxu0 0
    %7944 = vmatpush1.bf16.msra.mxu0 0
    %7945 = vmatprep.subr.bf16.mxu0 0
    %7946 = vmatpush1.bf16.msra.mxu0 0
    %7947 = vmatprep.subr.bf16.mxu0 0
    %7948 = vmatpush1.bf16.msra.mxu0 0
    %7949 = vmatprep.subr.bf16.mxu0 0
    %7950 = vmatpush1.bf16.msra.mxu0 0
    %7951 = vmatprep.subr.bf16.mxu0 0
    %7952 = vmatpush1.bf16.msra.mxu0 0
    %7953 = vmatprep.subr.bf16.mxu0 0
    %7954 = vmatpush1.bf16.msra.mxu0 0
    %7955 = vmatprep.subr.bf16.mxu0 0
    %7956 = vmatpush1.bf16.msra.mxu0 0
    %7957 = vmatprep.subr.bf16.mxu0 0
    %7958 = vmatpush1.bf16.msra.mxu0 0
    %7959 = vmatprep.mubr.bf16.mxu0 0
    %7960 = vmatmul.mubr.bf16.gmra.mrb[0].mxu0 %v7925
    %v7961 = vpop.f32.mrb[0].mxu0
    %v7962 = vadd.f32 0.0, %v7961
    %v7963 = vpop.f32.mrb[0].mxu0
    %v7964 = vpop.f32.mrb[0].mxu0
    %v7965 = vadd.f32 0.0, %v7964
    %v7966 = vpop.f32.mrb[0].mxu0
    %7967 = vdwg.mxu0
    %7968 = vrot.lane.b32.xlu0 %v1206, 112
    %v7969 = vpop.permute.xlu0 %7968
    %v7972 = vsel %vm4427, %v5880, 0
    %7974 = vmatprep.subr.bf16.mxu0 0
    %7975 = vmatpush1.bf16.msra.mxu0 %v7969
    %7976 = vmatprep.subr.bf16.mxu0 0
    %7977 = vmatpush1.bf16.msra.mxu0 0
    %7978 = vmatprep.subr.bf16.mxu0 0
    %7979 = vmatpush1.bf16.msra.mxu0 0
    %7980 = vmatprep.subr.bf16.mxu0 0
    %7981 = vmatpush1.bf16.msra.mxu0 0
    %7982 = vmatprep.subr.bf16.mxu0 0
    %7983 = vmatpush1.bf16.msra.mxu0 0
    %7984 = vmatprep.subr.bf16.mxu0 0
    %7985 = vmatpush1.bf16.msra.mxu0 0
    %7986 = vmatprep.subr.bf16.mxu0 0
    %7987 = vmatpush1.bf16.msra.mxu0 0
    %7988 = vmatprep.subr.bf16.mxu0 0
    %7989 = vmatpush1.bf16.msra.mxu0 0
    %7990 = vmatprep.subr.bf16.mxu0 0
    %7991 = vmatpush1.bf16.msra.mxu0 0
    %7992 = vmatprep.subr.bf16.mxu0 0
    %7993 = vmatpush1.bf16.msra.mxu0 0
    %7994 = vmatprep.subr.bf16.mxu0 0
    %7995 = vmatpush1.bf16.msra.mxu0 0
    %7996 = vmatprep.subr.bf16.mxu0 0
    %7997 = vmatpush1.bf16.msra.mxu0 0
    %7998 = vmatprep.subr.bf16.mxu0 0
    %7999 = vmatpush1.bf16.msra.mxu0 0
    %8000 = vmatprep.subr.bf16.mxu0 0
    %8001 = vmatpush1.bf16.msra.mxu0 0
    %8002 = vmatprep.subr.bf16.mxu0 0
    %8003 = vmatpush1.bf16.msra.mxu0 0
    %8004 = vmatprep.subr.bf16.mxu0 0
    %8005 = vmatpush1.bf16.msra.mxu0 0
    %8006 = vmatprep.mubr.bf16.mxu0 0
    %8007 = vmatmul.mubr.bf16.gmra.mrb[0].mxu0 %v7972
    %v8008 = vpop.f32.mrb[0].mxu0
    %v8009 = vadd.f32 0.0, %v8008
    %v8010 = vpop.f32.mrb[0].mxu0
    %v8011 = vpop.f32.mrb[0].mxu0
    %v8012 = vadd.f32 0.0, %v8011
    %v8013 = vpop.f32.mrb[0].mxu0
    %8014 = vdwg.mxu0
    %8015 = vrot.lane.b32.xlu0 %v1207, 112
    %v8016 = vpop.permute.xlu0 %8015
    %v8019 = vsel %vm4427, %v5881, 0
    %8021 = vmatprep.subr.bf16.mxu0 0
    %8022 = vmatpush1.bf16.msra.mxu0 %v8016
    %8023 = vmatprep.subr.bf16.mxu0 0
    %8024 = vmatpush1.bf16.msra.mxu0 0
    %8025 = vmatprep.subr.bf16.mxu0 0
    %8026 = vmatpush1.bf16.msra.mxu0 0
    %8027 = vmatprep.subr.bf16.mxu0 0
    %8028 = vmatpush1.bf16.msra.mxu0 0
    %8029 = vmatprep.subr.bf16.mxu0 0
    %8030 = vmatpush1.bf16.msra.mxu0 0
    %8031 = vmatprep.subr.bf16.mxu0 0
    %8032 = vmatpush1.bf16.msra.mxu0 0
    %8033 = vmatprep.subr.bf16.mxu0 0
    %8034 = vmatpush1.bf16.msra.mxu0 0
    %8035 = vmatprep.subr.bf16.mxu0 0
    %8036 = vmatpush1.bf16.msra.mxu0 0
    %8037 = vmatprep.subr.bf16.mxu0 0
    %8038 = vmatpush1.bf16.msra.mxu0 0
    %8039 = vmatprep.subr.bf16.mxu0 0
    %8040 = vmatpush1.bf16.msra.mxu0 0
    %8041 = vmatprep.subr.bf16.mxu0 0
    %8042 = vmatpush1.bf16.msra.mxu0 0
    %8043 = vmatprep.subr.bf16.mxu0 0
    %8044 = vmatpush1.bf16.msra.mxu0 0
    %8045 = vmatprep.subr.bf16.mxu0 0
    %8046 = vmatpush1.bf16.msra.mxu0 0
    %8047 = vmatprep.subr.bf16.mxu0 0
    %8048 = vmatpush1.bf16.msra.mxu0 0
    %8049 = vmatprep.subr.bf16.mxu0 0
    %8050 = vmatpush1.bf16.msra.mxu0 0
    %8051 = vmatprep.subr.bf16.mxu0 0
    %8052 = vmatpush1.bf16.msra.mxu0 0
    %8053 = vmatprep.mubr.bf16.mxu0 0
    %8054 = vmatmul.mubr.bf16.gmra.mrb[0].mxu0 %v8019
    %v8055 = vpop.f32.mrb[0].mxu0
    %v8056 = vadd.f32 0.0, %v8055
    %v8057 = vpop.f32.mrb[0].mxu0
    %v8058 = vpop.f32.mrb[0].mxu0
    %v8059 = vadd.f32 0.0, %v8058
    %v8060 = vpop.f32.mrb[0].mxu0
    %8061 = vdwg.mxu0
    %8062 = vrot.lane.b32.xlu0 %v1208, 112
    %v8063 = vpop.permute.xlu0 %8062
    %v8066 = vsel %vm4427, %v5882, 0
    %8068 = vmatprep.subr.bf16.mxu0 0
    %8069 = vmatpush1.bf16.msra.mxu0 %v8063
    %8070 = vmatprep.subr.bf16.mxu0 0
    %8071 = vmatpush1.bf16.msra.mxu0 0
    %8072 = vmatprep.subr.bf16.mxu0 0
    %8073 = vmatpush1.bf16.msra.mxu0 0
    %8074 = vmatprep.subr.bf16.mxu0 0
    %8075 = vmatpush1.bf16.msra.mxu0 0
    %8076 = vmatprep.subr.bf16.mxu0 0
    %8077 = vmatpush1.bf16.msra.mxu0 0
    %8078 = vmatprep.subr.bf16.mxu0 0
    %8079 = vmatpush1.bf16.msra.mxu0 0
    %8080 = vmatprep.subr.bf16.mxu0 0
    %8081 = vmatpush1.bf16.msra.mxu0 0
    %8082 = vmatprep.subr.bf16.mxu0 0
    %8083 = vmatpush1.bf16.msra.mxu0 0
    %8084 = vmatprep.subr.bf16.mxu0 0
    %8085 = vmatpush1.bf16.msra.mxu0 0
    %8086 = vmatprep.subr.bf16.mxu0 0
    %8087 = vmatpush1.bf16.msra.mxu0 0
    %8088 = vmatprep.subr.bf16.mxu0 0
    %8089 = vmatpush1.bf16.msra.mxu0 0
    %8090 = vmatprep.subr.bf16.mxu0 0
    %8091 = vmatpush1.bf16.msra.mxu0 0
    %8092 = vmatprep.subr.bf16.mxu0 0
    %8093 = vmatpush1.bf16.msra.mxu0 0
    %8094 = vmatprep.subr.bf16.mxu0 0
    %8095 = vmatpush1.bf16.msra.mxu0 0
    %8096 = vmatprep.subr.bf16.mxu0 0
    %8097 = vmatpush1.bf16.msra.mxu0 0
    %8098 = vmatprep.subr.bf16.mxu0 0
    %8099 = vmatpush1.bf16.msra.mxu0 0
    %8100 = vmatprep.mubr.bf16.mxu0 0
    %8101 = vmatmul.mubr.bf16.gmra.mrb[0].mxu0 %v8066
    %v8102 = vpop.f32.mrb[0].mxu0
    %v8103 = vadd.f32 0.0, %v8102
    %v8104 = vpop.f32.mrb[0].mxu0
    %v8105 = vpop.f32.mrb[0].mxu0
    %v8106 = vadd.f32 0.0, %v8105
    %v8107 = vpop.f32.mrb[0].mxu0
    %8108 = vdwg.mxu0
    %8109 = vrot.lane.b32.xlu0 %v1209, 112
    %v8110 = vpop.permute.xlu0 %8109
    %v8113 = vsel %vm4427, %v5883, 0
    %8115 = vmatprep.subr.bf16.mxu0 0
    %8116 = vmatpush1.bf16.msra.mxu0 %v8110
    %8117 = vmatprep.subr.bf16.mxu0 0
    %8118 = vmatpush1.bf16.msra.mxu0 0
    %8119 = vmatprep.subr.bf16.mxu0 0
    %8120 = vmatpush1.bf16.msra.mxu0 0
    %8121 = vmatprep.subr.bf16.mxu0 0
    %8122 = vmatpush1.bf16.msra.mxu0 0
    %8123 = vmatprep.subr.bf16.mxu0 0
    %8124 = vmatpush1.bf16.msra.mxu0 0
    %8125 = vmatprep.subr.bf16.mxu0 0
    %8126 = vmatpush1.bf16.msra.mxu0 0
    %8127 = vmatprep.subr.bf16.mxu0 0
    %8128 = vmatpush1.bf16.msra.mxu0 0
    %8129 = vmatprep.subr.bf16.mxu0 0
    %8130 = vmatpush1.bf16.msra.mxu0 0
    %8131 = vmatprep.subr.bf16.mxu0 0
    %8132 = vmatpush1.bf16.msra.mxu0 0
    %8133 = vmatprep.subr.bf16.mxu0 0
    %8134 = vmatpush1.bf16.msra.mxu0 0
    %8135 = vmatprep.subr.bf16.mxu0 0
    %8136 = vmatpush1.bf16.msra.mxu0 0
    %8137 = vmatprep.subr.bf16.mxu0 0
    %8138 = vmatpush1.bf16.msra.mxu0 0
    %8139 = vmatprep.subr.bf16.mxu0 0
    %8140 = vmatpush1.bf16.msra.mxu0 0
    %8141 = vmatprep.subr.bf16.mxu0 0
    %8142 = vmatpush1.bf16.msra.mxu0 0
    %8143 = vmatprep.subr.bf16.mxu0 0
    %8144 = vmatpush1.bf16.msra.mxu0 0
    %8145 = vmatprep.subr.bf16.mxu0 0
    %8146 = vmatpush1.bf16.msra.mxu0 0
    %8147 = vmatprep.mubr.bf16.mxu0 0
    %8148 = vmatmul.mubr.bf16.gmra.mrb[0].mxu0 %v8113
    %v8149 = vpop.f32.mrb[0].mxu0
    %v8150 = vadd.f32 0.0, %v8149
    %v8151 = vpop.f32.mrb[0].mxu0
    %v8152 = vpop.f32.mrb[0].mxu0
    %v8153 = vadd.f32 0.0, %v8152
    %v8154 = vpop.f32.mrb[0].mxu0
    %8155 = vdwg.mxu0
    %8156 = vrot.lane.b32.xlu0 %v1210, 112
    %v8157 = vpop.permute.xlu0 %8156
    %v8160 = vsel %vm4427, %v5884, 0
    %8162 = vmatprep.subr.bf16.mxu0 0
    %8163 = vmatpush1.bf16.msra.mxu0 %v8157
    %8164 = vmatprep.subr.bf16.mxu0 0
    %8165 = vmatpush1.bf16.msra.mxu0 0
    %8166 = vmatprep.subr.bf16.mxu0 0
    %8167 = vmatpush1.bf16.msra.mxu0 0
    %8168 = vmatprep.subr.bf16.mxu0 0
    %8169 = vmatpush1.bf16.msra.mxu0 0
    %8170 = vmatprep.subr.bf16.mxu0 0
    %8171 = vmatpush1.bf16.msra.mxu0 0
    %8172 = vmatprep.subr.bf16.mxu0 0
    %8173 = vmatpush1.bf16.msra.mxu0 0
    %8174 = vmatprep.subr.bf16.mxu0 0
    %8175 = vmatpush1.bf16.msra.mxu0 0
    %8176 = vmatprep.subr.bf16.mxu0 0
    %8177 = vmatpush1.bf16.msra.mxu0 0
    %8178 = vmatprep.subr.bf16.mxu0 0
    %8179 = vmatpush1.bf16.msra.mxu0 0
    %8180 = vmatprep.subr.bf16.mxu0 0
    %8181 = vmatpush1.bf16.msra.mxu0 0
    %8182 = vmatprep.subr.bf16.mxu0 0
    %8183 = vmatpush1.bf16.msra.mxu0 0
    %8184 = vmatprep.subr.bf16.mxu0 0
    %8185 = vmatpush1.bf16.msra.mxu0 0
    %8186 = vmatprep.subr.bf16.mxu0 0
    %8187 = vmatpush1.bf16.msra.mxu0 0
    %8188 = vmatprep.subr.bf16.mxu0 0
    %8189 = vmatpush1.bf16.msra.mxu0 0
    %8190 = vmatprep.subr.bf16.mxu0 0
    %8191 = vmatpush1.bf16.msra.mxu0 0
    %8192 = vmatprep.subr.bf16.mxu0 0
    %8193 = vmatpush1.bf16.msra.mxu0 0
    %8194 = vmatprep.mubr.bf16.mxu0 0
    %8195 = vmatmul.mubr.bf16.gmra.mrb[0].mxu0 %v8160
    %v8196 = vpop.f32.mrb[0].mxu0
    %v8197 = vadd.f32 0.0, %v8196
    %v8198 = vpop.f32.mrb[0].mxu0
    %v8199 = vpop.f32.mrb[0].mxu0
    %v8200 = vadd.f32 0.0, %v8199
    %v8201 = vpop.f32.mrb[0].mxu0
    %8202 = vdwg.mxu0
    %8203 = vrot.lane.b32.xlu0 %v1211, 112
    %v8204 = vpop.permute.xlu0 %8203
    %v8207 = vsel %vm4427, %v5885, 0
    %8209 = vmatprep.subr.bf16.mxu0 0
    %8210 = vmatpush1.bf16.msra.mxu0 %v8204
    %8211 = vmatprep.subr.bf16.mxu0 0
    %8212 = vmatpush1.bf16.msra.mxu0 0
    %8213 = vmatprep.subr.bf16.mxu0 0
    %8214 = vmatpush1.bf16.msra.mxu0 0
    %8215 = vmatprep.subr.bf16.mxu0 0
    %8216 = vmatpush1.bf16.msra.mxu0 0
    %8217 = vmatprep.subr.bf16.mxu0 0
    %8218 = vmatpush1.bf16.msra.mxu0 0
    %8219 = vmatprep.subr.bf16.mxu0 0
    %8220 = vmatpush1.bf16.msra.mxu0 0
    %8221 = vmatprep.subr.bf16.mxu0 0
    %8222 = vmatpush1.bf16.msra.mxu0 0
    %8223 = vmatprep.subr.bf16.mxu0 0
    %8224 = vmatpush1.bf16.msra.mxu0 0
    %8225 = vmatprep.subr.bf16.mxu0 0
    %8226 = vmatpush1.bf16.msra.mxu0 0
    %8227 = vmatprep.subr.bf16.mxu0 0
    %8228 = vmatpush1.bf16.msra.mxu0 0
    %8229 = vmatprep.subr.bf16.mxu0 0
    %8230 = vmatpush1.bf16.msra.mxu0 0
    %8231 = vmatprep.subr.bf16.mxu0 0
    %8232 = vmatpush1.bf16.msra.mxu0 0
    %8233 = vmatprep.subr.bf16.mxu0 0
    %8234 = vmatpush1.bf16.msra.mxu0 0
    %8235 = vmatprep.subr.bf16.mxu0 0
    %8236 = vmatpush1.bf16.msra.mxu0 0
    %8237 = vmatprep.subr.bf16.mxu0 0
    %8238 = vmatpush1.bf16.msra.mxu0 0
    %8239 = vmatprep.subr.bf16.mxu0 0
    %8240 = vmatpush1.bf16.msra.mxu0 0
    %8241 = vmatprep.mubr.bf16.mxu0 0
    %8242 = vmatmul.mubr.bf16.gmra.mrb[0].mxu0 %v8207
    %v8243 = vpop.f32.mrb[0].mxu0
    %v8244 = vadd.f32 0.0, %v8243
    %v8245 = vpop.f32.mrb[0].mxu0
    %v8246 = vpop.f32.mrb[0].mxu0
    %v8247 = vadd.f32 0.0, %v8246
    %v8248 = vpop.f32.mrb[0].mxu0
    %8249 = vdwg.mxu0
    %8250 = vrot.lane.b32.xlu0 %v1212, 112
    %v8251 = vpop.permute.xlu0 %8250
    %v8254 = vsel %vm4427, %v5886, 0
    %8256 = vmatprep.subr.bf16.mxu0 0
    %8257 = vmatpush1.bf16.msra.mxu0 %v8251
    %8258 = vmatprep.subr.bf16.mxu0 0
    %8259 = vmatpush1.bf16.msra.mxu0 0
    %8260 = vmatprep.subr.bf16.mxu0 0
    %8261 = vmatpush1.bf16.msra.mxu0 0
    %8262 = vmatprep.subr.bf16.mxu0 0
    %8263 = vmatpush1.bf16.msra.mxu0 0
    %8264 = vmatprep.subr.bf16.mxu0 0
    %8265 = vmatpush1.bf16.msra.mxu0 0
    %8266 = vmatprep.subr.bf16.mxu0 0
    %8267 = vmatpush1.bf16.msra.mxu0 0
    %8268 = vmatprep.subr.bf16.mxu0 0
    %8269 = vmatpush1.bf16.msra.mxu0 0
    %8270 = vmatprep.subr.bf16.mxu0 0
    %8271 = vmatpush1.bf16.msra.mxu0 0
    %8272 = vmatprep.subr.bf16.mxu0 0
    %8273 = vmatpush1.bf16.msra.mxu0 0
    %8274 = vmatprep.subr.bf16.mxu0 0
    %8275 = vmatpush1.bf16.msra.mxu0 0
    %8276 = vmatprep.subr.bf16.mxu0 0
    %8277 = vmatpush1.bf16.msra.mxu0 0
    %8278 = vmatprep.subr.bf16.mxu0 0
    %8279 = vmatpush1.bf16.msra.mxu0 0
    %8280 = vmatprep.subr.bf16.mxu0 0
    %8281 = vmatpush1.bf16.msra.mxu0 0
    %8282 = vmatprep.subr.bf16.mxu0 0
    %8283 = vmatpush1.bf16.msra.mxu0 0
    %8284 = vmatprep.subr.bf16.mxu0 0
    %8285 = vmatpush1.bf16.msra.mxu0 0
    %8286 = vmatprep.subr.bf16.mxu0 0
    %8287 = vmatpush1.bf16.msra.mxu0 0
    %8288 = vmatprep.mubr.bf16.mxu0 0
    %8289 = vmatmul.mubr.bf16.gmra.mrb[0].mxu0 %v8254
    %v8290 = vpop.f32.mrb[0].mxu0
    %v8291 = vadd.f32 0.0, %v8290
    %v8292 = vpop.f32.mrb[0].mxu0
    %v8293 = vpop.f32.mrb[0].mxu0
    %v8294 = vadd.f32 0.0, %v8293
    %v8295 = vpop.f32.mrb[0].mxu0
    %8296 = vdwg.mxu0
    %8297 = vrot.lane.b32.xlu0 %v1213, 112
    %v8298 = vpop.permute.xlu0 %8297
    %v8301 = vsel %vm4427, %v5887, 0
    %8303 = vmatprep.subr.bf16.mxu0 0
    %8304 = vmatpush1.bf16.msra.mxu0 %v8298
    %8305 = vmatprep.subr.bf16.mxu0 0
    %8306 = vmatpush1.bf16.msra.mxu0 0
    %8307 = vmatprep.subr.bf16.mxu0 0
    %8308 = vmatpush1.bf16.msra.mxu0 0
    %8309 = vmatprep.subr.bf16.mxu0 0
    %8310 = vmatpush1.bf16.msra.mxu0 0
    %8311 = vmatprep.subr.bf16.mxu0 0
    %8312 = vmatpush1.bf16.msra.mxu0 0
    %8313 = vmatprep.subr.bf16.mxu0 0
    %8314 = vmatpush1.bf16.msra.mxu0 0
    %8315 = vmatprep.subr.bf16.mxu0 0
    %8316 = vmatpush1.bf16.msra.mxu0 0
    %8317 = vmatprep.subr.bf16.mxu0 0
    %8318 = vmatpush1.bf16.msra.mxu0 0
    %8319 = vmatprep.subr.bf16.mxu0 0
    %8320 = vmatpush1.bf16.msra.mxu0 0
    %8321 = vmatprep.subr.bf16.mxu0 0
    %8322 = vmatpush1.bf16.msra.mxu0 0
    %8323 = vmatprep.subr.bf16.mxu0 0
    %8324 = vmatpush1.bf16.msra.mxu0 0
    %8325 = vmatprep.subr.bf16.mxu0 0
    %8326 = vmatpush1.bf16.msra.mxu0 0
    %8327 = vmatprep.subr.bf16.mxu0 0
    %8328 = vmatpush1.bf16.msra.mxu0 0
    %8329 = vmatprep.subr.bf16.mxu0 0
    %8330 = vmatpush1.bf16.msra.mxu0 0
    %8331 = vmatprep.subr.bf16.mxu0 0
    %8332 = vmatpush1.bf16.msra.mxu0 0
    %8333 = vmatprep.subr.bf16.mxu0 0
    %8334 = vmatpush1.bf16.msra.mxu0 0
    %8335 = vmatprep.mubr.bf16.mxu0 0
    %8336 = vmatmul.mubr.bf16.gmra.mrb[0].mxu0 %v8301
    %v8337 = vpop.f32.mrb[0].mxu0
    %v8338 = vadd.f32 0.0, %v8337
    %v8339 = vpop.f32.mrb[0].mxu0
    %v8340 = vpop.f32.mrb[0].mxu0
    %v8341 = vadd.f32 0.0, %v8340
    %v8342 = vpop.f32.mrb[0].mxu0
    %8343 = vdwg.mxu0
    %8344 = vrot.lane.b32.xlu0 %v1214, 112
    %v8345 = vpop.permute.xlu0 %8344
    %v8348 = vsel %vm4427, %v5888, 0
    %8350 = vmatprep.subr.bf16.mxu0 0
    %8351 = vmatpush1.bf16.msra.mxu0 %v8345
    %8352 = vmatprep.subr.bf16.mxu0 0
    %8353 = vmatpush1.bf16.msra.mxu0 0
    %8354 = vmatprep.subr.bf16.mxu0 0
    %8355 = vmatpush1.bf16.msra.mxu0 0
    %8356 = vmatprep.subr.bf16.mxu0 0
    %8357 = vmatpush1.bf16.msra.mxu0 0
    %8358 = vmatprep.subr.bf16.mxu0 0
    %8359 = vmatpush1.bf16.msra.mxu0 0
    %8360 = vmatprep.subr.bf16.mxu0 0
    %8361 = vmatpush1.bf16.msra.mxu0 0
    %8362 = vmatprep.subr.bf16.mxu0 0
    %8363 = vmatpush1.bf16.msra.mxu0 0
    %8364 = vmatprep.subr.bf16.mxu0 0
    %8365 = vmatpush1.bf16.msra.mxu0 0
    %8366 = vmatprep.subr.bf16.mxu0 0
    %8367 = vmatpush1.bf16.msra.mxu0 0
    %8368 = vmatprep.subr.bf16.mxu0 0
    %8369 = vmatpush1.bf16.msra.mxu0 0
    %8370 = vmatprep.subr.bf16.mxu0 0
    %8371 = vmatpush1.bf16.msra.mxu0 0
    %8372 = vmatprep.subr.bf16.mxu0 0
    %8373 = vmatpush1.bf16.msra.mxu0 0
    %8374 = vmatprep.subr.bf16.mxu0 0
    %8375 = vmatpush1.bf16.msra.mxu0 0
    %8376 = vmatprep.subr.bf16.mxu0 0
    %8377 = vmatpush1.bf16.msra.mxu0 0
    %8378 = vmatprep.subr.bf16.mxu0 0
    %8379 = vmatpush1.bf16.msra.mxu0 0
    %8380 = vmatprep.subr.bf16.mxu0 0
    %8381 = vmatpush1.bf16.msra.mxu0 0
    %8382 = vmatprep.mubr.bf16.mxu0 0
    %8383 = vmatmul.mubr.bf16.gmra.mrb[0].mxu0 %v8348
    %v8384 = vpop.f32.mrb[0].mxu0
    %v8385 = vadd.f32 0.0, %v8384
    %v8386 = vpop.f32.mrb[0].mxu0
    %v8387 = vpop.f32.mrb[0].mxu0
    %v8388 = vadd.f32 0.0, %v8387
    %v8389 = vpop.f32.mrb[0].mxu0
    %8390 = vdwg.mxu0
    %8391 = vrot.lane.b32.xlu0 %v1215, 112
    %v8392 = vpop.permute.xlu0 %8391
    %v8395 = vsel %vm4427, %v5889, 0
    %8397 = vmatprep.subr.bf16.mxu0 0
    %8398 = vmatpush1.bf16.msra.mxu0 %v8392
    %8399 = vmatprep.subr.bf16.mxu0 0
    %8400 = vmatpush1.bf16.msra.mxu0 0
    %8401 = vmatprep.subr.bf16.mxu0 0
    %8402 = vmatpush1.bf16.msra.mxu0 0
    %8403 = vmatprep.subr.bf16.mxu0 0
    %8404 = vmatpush1.bf16.msra.mxu0 0
    %8405 = vmatprep.subr.bf16.mxu0 0
    %8406 = vmatpush1.bf16.msra.mxu0 0
    %8407 = vmatprep.subr.bf16.mxu0 0
    %8408 = vmatpush1.bf16.msra.mxu0 0
    %8409 = vmatprep.subr.bf16.mxu0 0
    %8410 = vmatpush1.bf16.msra.mxu0 0
    %8411 = vmatprep.subr.bf16.mxu0 0
    %8412 = vmatpush1.bf16.msra.mxu0 0
    %8413 = vmatprep.subr.bf16.mxu0 0
    %8414 = vmatpush1.bf16.msra.mxu0 0
    %8415 = vmatprep.subr.bf16.mxu0 0
    %8416 = vmatpush1.bf16.msra.mxu0 0
    %8417 = vmatprep.subr.bf16.mxu0 0
    %8418 = vmatpush1.bf16.msra.mxu0 0
    %8419 = vmatprep.subr.bf16.mxu0 0
    %8420 = vmatpush1.bf16.msra.mxu0 0
    %8421 = vmatprep.subr.bf16.mxu0 0
    %8422 = vmatpush1.bf16.msra.mxu0 0
    %8423 = vmatprep.subr.bf16.mxu0 0
    %8424 = vmatpush1.bf16.msra.mxu0 0
    %8425 = vmatprep.subr.bf16.mxu0 0
    %8426 = vmatpush1.bf16.msra.mxu0 0
    %8427 = vmatprep.subr.bf16.mxu0 0
    %8428 = vmatpush1.bf16.msra.mxu0 0
    %8429 = vmatprep.mubr.bf16.mxu0 0
    %8430 = vmatmul.mubr.bf16.gmra.mrb[0].mxu0 %v8395
    %v8431 = vpop.f32.mrb[0].mxu0
    %v8432 = vadd.f32 0.0, %v8431
    %v8433 = vpop.f32.mrb[0].mxu0
    %v8434 = vpop.f32.mrb[0].mxu0
    %v8435 = vadd.f32 0.0, %v8434
    %v8436 = vpop.f32.mrb[0].mxu0
    %8437 = vdwg.mxu0
    %8438 = vrot.lane.b32.xlu0 %v1216, 112
    %v8439 = vpop.permute.xlu0 %8438
    %v8442 = vsel %vm4427, %v5890, 0
    %8444 = vmatprep.subr.bf16.mxu0 0
    %8445 = vmatpush1.bf16.msra.mxu0 %v8439
    %8446 = vmatprep.subr.bf16.mxu0 0
    %8447 = vmatpush1.bf16.msra.mxu0 0
    %8448 = vmatprep.subr.bf16.mxu0 0
    %8449 = vmatpush1.bf16.msra.mxu0 0
    %8450 = vmatprep.subr.bf16.mxu0 0
    %8451 = vmatpush1.bf16.msra.mxu0 0
    %8452 = vmatprep.subr.bf16.mxu0 0
    %8453 = vmatpush1.bf16.msra.mxu0 0
    %8454 = vmatprep.subr.bf16.mxu0 0
    %8455 = vmatpush1.bf16.msra.mxu0 0
    %8456 = vmatprep.subr.bf16.mxu0 0
    %8457 = vmatpush1.bf16.msra.mxu0 0
    %8458 = vmatprep.subr.bf16.mxu0 0
    %8459 = vmatpush1.bf16.msra.mxu0 0
    %8460 = vmatprep.subr.bf16.mxu0 0
    %8461 = vmatpush1.bf16.msra.mxu0 0
    %8462 = vmatprep.subr.bf16.mxu0 0
    %8463 = vmatpush1.bf16.msra.mxu0 0
    %8464 = vmatprep.subr.bf16.mxu0 0
    %8465 = vmatpush1.bf16.msra.mxu0 0
    %8466 = vmatprep.subr.bf16.mxu0 0
    %8467 = vmatpush1.bf16.msra.mxu0 0
    %8468 = vmatprep.subr.bf16.mxu0 0
    %8469 = vmatpush1.bf16.msra.mxu0 0
    %8470 = vmatprep.subr.bf16.mxu0 0
    %8471 = vmatpush1.bf16.msra.mxu0 0
    %8472 = vmatprep.subr.bf16.mxu0 0
    %8473 = vmatpush1.bf16.msra.mxu0 0
    %8474 = vmatprep.subr.bf16.mxu0 0
    %8475 = vmatpush1.bf16.msra.mxu0 0
    %8476 = vmatprep.mubr.bf16.mxu0 0
    %8477 = vmatmul.mubr.bf16.gmra.mrb[0].mxu0 %v8442
    %v8478 = vpop.f32.mrb[0].mxu0
    %v8479 = vadd.f32 0.0, %v8478
    %v8480 = vpop.f32.mrb[0].mxu0
    %v8481 = vpop.f32.mrb[0].mxu0
    %v8482 = vadd.f32 0.0, %v8481
    %v8483 = vpop.f32.mrb[0].mxu0
    %8484 = vdwg.mxu0
    %8485 = vrot.lane.b32.xlu0 %v1217, 112
    %v8486 = vpop.permute.xlu0 %8485
    %v8489 = vsel %vm4427, %v5891, 0
    %8491 = vmatprep.subr.bf16.mxu0 0
    %8492 = vmatpush1.bf16.msra.mxu0 %v8486
    %8493 = vmatprep.subr.bf16.mxu0 0
    %8494 = vmatpush1.bf16.msra.mxu0 0
    %8495 = vmatprep.subr.bf16.mxu0 0
    %8496 = vmatpush1.bf16.msra.mxu0 0
    %8497 = vmatprep.subr.bf16.mxu0 0
    %8498 = vmatpush1.bf16.msra.mxu0 0
    %8499 = vmatprep.subr.bf16.mxu0 0
    %8500 = vmatpush1.bf16.msra.mxu0 0
    %8501 = vmatprep.subr.bf16.mxu0 0
    %8502 = vmatpush1.bf16.msra.mxu0 0
    %8503 = vmatprep.subr.bf16.mxu0 0
    %8504 = vmatpush1.bf16.msra.mxu0 0
    %8505 = vmatprep.subr.bf16.mxu0 0
    %8506 = vmatpush1.bf16.msra.mxu0 0
    %8507 = vmatprep.subr.bf16.mxu0 0
    %8508 = vmatpush1.bf16.msra.mxu0 0
    %8509 = vmatprep.subr.bf16.mxu0 0
    %8510 = vmatpush1.bf16.msra.mxu0 0
    %8511 = vmatprep.subr.bf16.mxu0 0
    %8512 = vmatpush1.bf16.msra.mxu0 0
    %8513 = vmatprep.subr.bf16.mxu0 0
    %8514 = vmatpush1.bf16.msra.mxu0 0
    %8515 = vmatprep.subr.bf16.mxu0 0
    %8516 = vmatpush1.bf16.msra.mxu0 0
    %8517 = vmatprep.subr.bf16.mxu0 0
    %8518 = vmatpush1.bf16.msra.mxu0 0
    %8519 = vmatprep.subr.bf16.mxu0 0
    %8520 = vmatpush1.bf16.msra.mxu0 0
    %8521 = vmatprep.subr.bf16.mxu0 0
    %8522 = vmatpush1.bf16.msra.mxu0 0
    %8523 = vmatprep.mubr.bf16.mxu0 0
    %8524 = vmatmul.mubr.bf16.gmra.mrb[0].mxu0 %v8489
    %v8525 = vpop.f32.mrb[0].mxu0
    %v8526 = vadd.f32 0.0, %v8525
    %v8527 = vpop.f32.mrb[0].mxu0
    %v8528 = vpop.f32.mrb[0].mxu0
    %v8529 = vadd.f32 0.0, %v8528
    %v8530 = vpop.f32.mrb[0].mxu0
    %8531 = vdwg.mxu0
    %8532 = vrot.lane.b32.xlu0 %v1218, 112
    %v8533 = vpop.permute.xlu0 %8532
    %v8536 = vsel %vm4427, %v5892, 0
    %8538 = vmatprep.subr.bf16.mxu0 0
    %8539 = vmatpush1.bf16.msra.mxu0 %v8533
    %8540 = vmatprep.subr.bf16.mxu0 0
    %8541 = vmatpush1.bf16.msra.mxu0 0
    %8542 = vmatprep.subr.bf16.mxu0 0
    %8543 = vmatpush1.bf16.msra.mxu0 0
    %8544 = vmatprep.subr.bf16.mxu0 0
    %8545 = vmatpush1.bf16.msra.mxu0 0
    %8546 = vmatprep.subr.bf16.mxu0 0
    %8547 = vmatpush1.bf16.msra.mxu0 0
    %8548 = vmatprep.subr.bf16.mxu0 0
    %8549 = vmatpush1.bf16.msra.mxu0 0
    %8550 = vmatprep.subr.bf16.mxu0 0
    %8551 = vmatpush1.bf16.msra.mxu0 0
    %8552 = vmatprep.subr.bf16.mxu0 0
    %8553 = vmatpush1.bf16.msra.mxu0 0
    %8554 = vmatprep.subr.bf16.mxu0 0
    %8555 = vmatpush1.bf16.msra.mxu0 0
    %8556 = vmatprep.subr.bf16.mxu0 0
    %8557 = vmatpush1.bf16.msra.mxu0 0
    %8558 = vmatprep.subr.bf16.mxu0 0
    %8559 = vmatpush1.bf16.msra.mxu0 0
    %8560 = vmatprep.subr.bf16.mxu0 0
    %8561 = vmatpush1.bf16.msra.mxu0 0
    %8562 = vmatprep.subr.bf16.mxu0 0
    %8563 = vmatpush1.bf16.msra.mxu0 0
    %8564 = vmatprep.subr.bf16.mxu0 0
    %8565 = vmatpush1.bf16.msra.mxu0 0
    %8566 = vmatprep.subr.bf16.mxu0 0
    %8567 = vmatpush1.bf16.msra.mxu0 0
    %8568 = vmatprep.subr.bf16.mxu0 0
    %8569 = vmatpush1.bf16.msra.mxu0 0
    %8570 = vmatprep.mubr.bf16.mxu0 0
    %8571 = vmatmul.mubr.bf16.gmra.mrb[0].mxu0 %v8536
    %v8572 = vpop.f32.mrb[0].mxu0
    %v8573 = vadd.f32 0.0, %v8572
    %v8574 = vpop.f32.mrb[0].mxu0
    %v8575 = vpop.f32.mrb[0].mxu0
    %v8576 = vadd.f32 0.0, %v8575
    %v8577 = vpop.f32.mrb[0].mxu0
    %8578 = vdwg.mxu0
    %8579 = vrot.lane.b32.xlu0 %v1219, 112
    %v8580 = vpop.permute.xlu0 %8579
    %v8583 = vsel %vm4427, %v5893, 0
    %8585 = vmatprep.subr.bf16.mxu0 0
    %8586 = vmatpush1.bf16.msra.mxu0 %v8580
    %8587 = vmatprep.subr.bf16.mxu0 0
    %8588 = vmatpush1.bf16.msra.mxu0 0
    %8589 = vmatprep.subr.bf16.mxu0 0
    %8590 = vmatpush1.bf16.msra.mxu0 0
    %8591 = vmatprep.subr.bf16.mxu0 0
    %8592 = vmatpush1.bf16.msra.mxu0 0
    %8593 = vmatprep.subr.bf16.mxu0 0
    %8594 = vmatpush1.bf16.msra.mxu0 0
    %8595 = vmatprep.subr.bf16.mxu0 0
    %8596 = vmatpush1.bf16.msra.mxu0 0
    %8597 = vmatprep.subr.bf16.mxu0 0
    %8598 = vmatpush1.bf16.msra.mxu0 0
    %8599 = vmatprep.subr.bf16.mxu0 0
    %8600 = vmatpush1.bf16.msra.mxu0 0
    %8601 = vmatprep.subr.bf16.mxu0 0
    %8602 = vmatpush1.bf16.msra.mxu0 0
    %8603 = vmatprep.subr.bf16.mxu0 0
    %8604 = vmatpush1.bf16.msra.mxu0 0
    %8605 = vmatprep.subr.bf16.mxu0 0
    %8606 = vmatpush1.bf16.msra.mxu0 0
    %8607 = vmatprep.subr.bf16.mxu0 0
    %8608 = vmatpush1.bf16.msra.mxu0 0
    %8609 = vmatprep.subr.bf16.mxu0 0
    %8610 = vmatpush1.bf16.msra.mxu0 0
    %8611 = vmatprep.subr.bf16.mxu0 0
    %8612 = vmatpush1.bf16.msra.mxu0 0
    %8613 = vmatprep.subr.bf16.mxu0 0
    %8614 = vmatpush1.bf16.msra.mxu0 0
    %8615 = vmatprep.subr.bf16.mxu0 0
    %8616 = vmatpush1.bf16.msra.mxu0 0
    %8617 = vmatprep.mubr.bf16.mxu0 0
    %8618 = vmatmul.mubr.bf16.gmra.mrb[0].mxu0 %v8583
    %v8619 = vpop.f32.mrb[0].mxu0
    %v8620 = vadd.f32 0.0, %v8619
    %v8621 = vpop.f32.mrb[0].mxu0
    %v8622 = vpop.f32.mrb[0].mxu0
    %v8623 = vadd.f32 0.0, %v8622
    %v8624 = vpop.f32.mrb[0].mxu0
    %8625 = vdwg.mxu0
    %8626 = vrot.lane.b32.xlu0 %v1220, 112
    %v8627 = vpop.permute.xlu0 %8626
    %v8630 = vsel %vm4427, %v5894, 0
    %8632 = vmatprep.subr.bf16.mxu0 0
    %8633 = vmatpush1.bf16.msra.mxu0 %v8627
    %8634 = vmatprep.subr.bf16.mxu0 0
    %8635 = vmatpush1.bf16.msra.mxu0 0
    %8636 = vmatprep.subr.bf16.mxu0 0
    %8637 = vmatpush1.bf16.msra.mxu0 0
    %8638 = vmatprep.subr.bf16.mxu0 0
    %8639 = vmatpush1.bf16.msra.mxu0 0
    %8640 = vmatprep.subr.bf16.mxu0 0
    %8641 = vmatpush1.bf16.msra.mxu0 0
    %8642 = vmatprep.subr.bf16.mxu0 0
    %8643 = vmatpush1.bf16.msra.mxu0 0
    %8644 = vmatprep.subr.bf16.mxu0 0
    %8645 = vmatpush1.bf16.msra.mxu0 0
    %8646 = vmatprep.subr.bf16.mxu0 0
    %8647 = vmatpush1.bf16.msra.mxu0 0
    %8648 = vmatprep.subr.bf16.mxu0 0
    %8649 = vmatpush1.bf16.msra.mxu0 0
    %8650 = vmatprep.subr.bf16.mxu0 0
    %8651 = vmatpush1.bf16.msra.mxu0 0
    %8652 = vmatprep.subr.bf16.mxu0 0
    %8653 = vmatpush1.bf16.msra.mxu0 0
    %8654 = vmatprep.subr.bf16.mxu0 0
    %8655 = vmatpush1.bf16.msra.mxu0 0
    %8656 = vmatprep.subr.bf16.mxu0 0
    %8657 = vmatpush1.bf16.msra.mxu0 0
    %8658 = vmatprep.subr.bf16.mxu0 0
    %8659 = vmatpush1.bf16.msra.mxu0 0
    %8660 = vmatprep.subr.bf16.mxu0 0
    %8661 = vmatpush1.bf16.msra.mxu0 0
    %8662 = vmatprep.subr.bf16.mxu0 0
    %8663 = vmatpush1.bf16.msra.mxu0 0
    %8664 = vmatprep.mubr.bf16.mxu0 0
    %8665 = vmatmul.mubr.bf16.gmra.mrb[0].mxu0 %v8630
    %v8666 = vpop.f32.mrb[0].mxu0
    %v8667 = vadd.f32 0.0, %v8666
    %v8668 = vpop.f32.mrb[0].mxu0
    %v8669 = vpop.f32.mrb[0].mxu0
    %v8670 = vadd.f32 0.0, %v8669
    %v8671 = vpop.f32.mrb[0].mxu0
    %8672 = vdwg.mxu0
    %8673 = vrot.lane.b32.xlu0 %v1221, 112
    %v8674 = vpop.permute.xlu0 %8673
    %v8677 = vsel %vm4427, %v5895, 0
    %8679 = vmatprep.subr.bf16.mxu0 0
    %8680 = vmatpush1.bf16.msra.mxu0 %v8674
    %8681 = vmatprep.subr.bf16.mxu0 0
    %8682 = vmatpush1.bf16.msra.mxu0 0
    %8683 = vmatprep.subr.bf16.mxu0 0
    %8684 = vmatpush1.bf16.msra.mxu0 0
    %8685 = vmatprep.subr.bf16.mxu0 0
    %8686 = vmatpush1.bf16.msra.mxu0 0
    %8687 = vmatprep.subr.bf16.mxu0 0
    %8688 = vmatpush1.bf16.msra.mxu0 0
    %8689 = vmatprep.subr.bf16.mxu0 0
    %8690 = vmatpush1.bf16.msra.mxu0 0
    %8691 = vmatprep.subr.bf16.mxu0 0
    %8692 = vmatpush1.bf16.msra.mxu0 0
    %8693 = vmatprep.subr.bf16.mxu0 0
    %8694 = vmatpush1.bf16.msra.mxu0 0
    %8695 = vmatprep.subr.bf16.mxu0 0
    %8696 = vmatpush1.bf16.msra.mxu0 0
    %8697 = vmatprep.subr.bf16.mxu0 0
    %8698 = vmatpush1.bf16.msra.mxu0 0
    %8699 = vmatprep.subr.bf16.mxu0 0
    %8700 = vmatpush1.bf16.msra.mxu0 0
    %8701 = vmatprep.subr.bf16.mxu0 0
    %8702 = vmatpush1.bf16.msra.mxu0 0
    %8703 = vmatprep.subr.bf16.mxu0 0
    %8704 = vmatpush1.bf16.msra.mxu0 0
    %8705 = vmatprep.subr.bf16.mxu0 0
    %8706 = vmatpush1.bf16.msra.mxu0 0
    %8707 = vmatprep.subr.bf16.mxu0 0
    %8708 = vmatpush1.bf16.msra.mxu0 0
    %8709 = vmatprep.subr.bf16.mxu0 0
    %8710 = vmatpush1.bf16.msra.mxu0 0
    %8711 = vmatprep.mubr.bf16.mxu0 0
    %8712 = vmatmul.mubr.bf16.gmra.mrb[0].mxu0 %v8677
    %v8713 = vpop.f32.mrb[0].mxu0
    %v8714 = vadd.f32 0.0, %v8713
    %v8715 = vpop.f32.mrb[0].mxu0
    %v8716 = vpop.f32.mrb[0].mxu0
    %v8717 = vadd.f32 0.0, %v8716
    %v8718 = vpop.f32.mrb[0].mxu0
    %8719 = vdwg.mxu0
    %8720 = vrot.lane.b32.xlu0 %v1222, 112
    %v8721 = vpop.permute.xlu0 %8720
    %v8724 = vsel %vm4427, %v5896, 0
    %8726 = vmatprep.subr.bf16.mxu0 0
    %8727 = vmatpush1.bf16.msra.mxu0 %v8721
    %8728 = vmatprep.subr.bf16.mxu0 0
    %8729 = vmatpush1.bf16.msra.mxu0 0
    %8730 = vmatprep.subr.bf16.mxu0 0
    %8731 = vmatpush1.bf16.msra.mxu0 0
    %8732 = vmatprep.subr.bf16.mxu0 0
    %8733 = vmatpush1.bf16.msra.mxu0 0
    %8734 = vmatprep.subr.bf16.mxu0 0
    %8735 = vmatpush1.bf16.msra.mxu0 0
    %8736 = vmatprep.subr.bf16.mxu0 0
    %8737 = vmatpush1.bf16.msra.mxu0 0
    %8738 = vmatprep.subr.bf16.mxu0 0
    %8739 = vmatpush1.bf16.msra.mxu0 0
    %8740 = vmatprep.subr.bf16.mxu0 0
    %8741 = vmatpush1.bf16.msra.mxu0 0
    %8742 = vmatprep.subr.bf16.mxu0 0
    %8743 = vmatpush1.bf16.msra.mxu0 0
    %8744 = vmatprep.subr.bf16.mxu0 0
    %8745 = vmatpush1.bf16.msra.mxu0 0
    %8746 = vmatprep.subr.bf16.mxu0 0
    %8747 = vmatpush1.bf16.msra.mxu0 0
    %8748 = vmatprep.subr.bf16.mxu0 0
    %8749 = vmatpush1.bf16.msra.mxu0 0
    %8750 = vmatprep.subr.bf16.mxu0 0
    %8751 = vmatpush1.bf16.msra.mxu0 0
    %8752 = vmatprep.subr.bf16.mxu0 0
    %8753 = vmatpush1.bf16.msra.mxu0 0
    %8754 = vmatprep.subr.bf16.mxu0 0
    %8755 = vmatpush1.bf16.msra.mxu0 0
    %8756 = vmatprep.subr.bf16.mxu0 0
    %8757 = vmatpush1.bf16.msra.mxu0 0
    %8758 = vmatprep.mubr.bf16.mxu0 0
    %8759 = vmatmul.mubr.bf16.gmra.mrb[0].mxu0 %v8724
    %v8760 = vpop.f32.mrb[0].mxu0
    %v8761 = vadd.f32 0.0, %v8760
    %v8762 = vpop.f32.mrb[0].mxu0
    %v8763 = vpop.f32.mrb[0].mxu0
    %v8764 = vadd.f32 0.0, %v8763
    %v8765 = vpop.f32.mrb[0].mxu0
    %8766 = vdwg.mxu0
    %8767 = vrot.lane.b32.xlu0 %v1223, 112
    %v8768 = vpop.permute.xlu0 %8767
    %v8771 = vsel %vm4427, %v5897, 0
    %8773 = vmatprep.subr.bf16.mxu0 0
    %8774 = vmatpush1.bf16.msra.mxu0 %v8768
    %8775 = vmatprep.subr.bf16.mxu0 0
    %8776 = vmatpush1.bf16.msra.mxu0 0
    %8777 = vmatprep.subr.bf16.mxu0 0
    %8778 = vmatpush1.bf16.msra.mxu0 0
    %8779 = vmatprep.subr.bf16.mxu0 0
    %8780 = vmatpush1.bf16.msra.mxu0 0
    %8781 = vmatprep.subr.bf16.mxu0 0
    %8782 = vmatpush1.bf16.msra.mxu0 0
    %8783 = vmatprep.subr.bf16.mxu0 0
    %8784 = vmatpush1.bf16.msra.mxu0 0
    %8785 = vmatprep.subr.bf16.mxu0 0
    %8786 = vmatpush1.bf16.msra.mxu0 0
    %8787 = vmatprep.subr.bf16.mxu0 0
    %8788 = vmatpush1.bf16.msra.mxu0 0
    %8789 = vmatprep.subr.bf16.mxu0 0
    %8790 = vmatpush1.bf16.msra.mxu0 0
    %8791 = vmatprep.subr.bf16.mxu0 0
    %8792 = vmatpush1.bf16.msra.mxu0 0
    %8793 = vmatprep.subr.bf16.mxu0 0
    %8794 = vmatpush1.bf16.msra.mxu0 0
    %8795 = vmatprep.subr.bf16.mxu0 0
    %8796 = vmatpush1.bf16.msra.mxu0 0
    %8797 = vmatprep.subr.bf16.mxu0 0
    %8798 = vmatpush1.bf16.msra.mxu0 0
    %8799 = vmatprep.subr.bf16.mxu0 0
    %8800 = vmatpush1.bf16.msra.mxu0 0
    %8801 = vmatprep.subr.bf16.mxu0 0
    %8802 = vmatpush1.bf16.msra.mxu0 0
    %8803 = vmatprep.subr.bf16.mxu0 0
    %8804 = vmatpush1.bf16.msra.mxu0 0
    %8805 = vmatprep.mubr.bf16.mxu0 0
    %8806 = vmatmul.mubr.bf16.gmra.mrb[0].mxu0 %v8771
    %v8807 = vpop.f32.mrb[0].mxu0
    %v8808 = vadd.f32 0.0, %v8807
    %v8809 = vpop.f32.mrb[0].mxu0
    %v8810 = vpop.f32.mrb[0].mxu0
    %v8811 = vadd.f32 0.0, %v8810
    %v8812 = vpop.f32.mrb[0].mxu0
    %8813 = vdwg.mxu0
    %8814 = vrot.lane.b32.xlu0 %v1224, 112
    %v8815 = vpop.permute.xlu0 %8814
    %v8818 = vsel %vm4427, %v5898, 0
    %8820 = vmatprep.subr.bf16.mxu0 0
    %8821 = vmatpush1.bf16.msra.mxu0 %v8815
    %8822 = vmatprep.subr.bf16.mxu0 0
    %8823 = vmatpush1.bf16.msra.mxu0 0
    %8824 = vmatprep.subr.bf16.mxu0 0
    %8825 = vmatpush1.bf16.msra.mxu0 0
    %8826 = vmatprep.subr.bf16.mxu0 0
    %8827 = vmatpush1.bf16.msra.mxu0 0
    %8828 = vmatprep.subr.bf16.mxu0 0
    %8829 = vmatpush1.bf16.msra.mxu0 0
    %8830 = vmatprep.subr.bf16.mxu0 0
    %8831 = vmatpush1.bf16.msra.mxu0 0
    %8832 = vmatprep.subr.bf16.mxu0 0
    %8833 = vmatpush1.bf16.msra.mxu0 0
    %8834 = vmatprep.subr.bf16.mxu0 0
    %8835 = vmatpush1.bf16.msra.mxu0 0
    %8836 = vmatprep.subr.bf16.mxu0 0
    %8837 = vmatpush1.bf16.msra.mxu0 0
    %8838 = vmatprep.subr.bf16.mxu0 0
    %8839 = vmatpush1.bf16.msra.mxu0 0
    %8840 = vmatprep.subr.bf16.mxu0 0
    %8841 = vmatpush1.bf16.msra.mxu0 0
    %8842 = vmatprep.subr.bf16.mxu0 0
    %8843 = vmatpush1.bf16.msra.mxu0 0
    %8844 = vmatprep.subr.bf16.mxu0 0
    %8845 = vmatpush1.bf16.msra.mxu0 0
    %8846 = vmatprep.subr.bf16.mxu0 0
    %8847 = vmatpush1.bf16.msra.mxu0 0
    %8848 = vmatprep.subr.bf16.mxu0 0
    %8849 = vmatpush1.bf16.msra.mxu0 0
    %8850 = vmatprep.subr.bf16.mxu0 0
    %8851 = vmatpush1.bf16.msra.mxu0 0
    %8852 = vmatprep.mubr.bf16.mxu0 0
    %8853 = vmatmul.mubr.bf16.gmra.mrb[0].mxu0 %v8818
    %v8854 = vpop.f32.mrb[0].mxu0
    %v8855 = vadd.f32 0.0, %v8854
    %v8856 = vpop.f32.mrb[0].mxu0
    %v8857 = vpop.f32.mrb[0].mxu0
    %v8858 = vadd.f32 0.0, %v8857
    %v8859 = vpop.f32.mrb[0].mxu0
    %8860 = vdwg.mxu0
    %8861 = vrot.lane.b32.xlu0 %v1225, 112
    %v8862 = vpop.permute.xlu0 %8861
    %v8865 = vsel %vm4427, %v5899, 0
    %8867 = vmatprep.subr.bf16.mxu0 0
    %8868 = vmatpush1.bf16.msra.mxu0 %v8862
    %8869 = vmatprep.subr.bf16.mxu0 0
    %8870 = vmatpush1.bf16.msra.mxu0 0
    %8871 = vmatprep.subr.bf16.mxu0 0
    %8872 = vmatpush1.bf16.msra.mxu0 0
    %8873 = vmatprep.subr.bf16.mxu0 0
    %8874 = vmatpush1.bf16.msra.mxu0 0
    %8875 = vmatprep.subr.bf16.mxu0 0
    %8876 = vmatpush1.bf16.msra.mxu0 0
    %8877 = vmatprep.subr.bf16.mxu0 0
    %8878 = vmatpush1.bf16.msra.mxu0 0
    %8879 = vmatprep.subr.bf16.mxu0 0
    %8880 = vmatpush1.bf16.msra.mxu0 0
    %8881 = vmatprep.subr.bf16.mxu0 0
    %8882 = vmatpush1.bf16.msra.mxu0 0
    %8883 = vmatprep.subr.bf16.mxu0 0
    %8884 = vmatpush1.bf16.msra.mxu0 0
    %8885 = vmatprep.subr.bf16.mxu0 0
    %8886 = vmatpush1.bf16.msra.mxu0 0
    %8887 = vmatprep.subr.bf16.mxu0 0
    %8888 = vmatpush1.bf16.msra.mxu0 0
    %8889 = vmatprep.subr.bf16.mxu0 0
    %8890 = vmatpush1.bf16.msra.mxu0 0
    %8891 = vmatprep.subr.bf16.mxu0 0
    %8892 = vmatpush1.bf16.msra.mxu0 0
    %8893 = vmatprep.subr.bf16.mxu0 0
    %8894 = vmatpush1.bf16.msra.mxu0 0
    %8895 = vmatprep.subr.bf16.mxu0 0
    %8896 = vmatpush1.bf16.msra.mxu0 0
    %8897 = vmatprep.subr.bf16.mxu0 0
    %8898 = vmatpush1.bf16.msra.mxu0 0
    %8899 = vmatprep.mubr.bf16.mxu0 0
    %8900 = vmatmul.mubr.bf16.gmra.mrb[0].mxu0 %v8865
    %v8901 = vpop.f32.mrb[0].mxu0
    %v8902 = vadd.f32 0.0, %v8901
    %v8903 = vpop.f32.mrb[0].mxu0
    %v8904 = vpop.f32.mrb[0].mxu0
    %v8905 = vadd.f32 0.0, %v8904
    %v8906 = vpop.f32.mrb[0].mxu0
    %8907 = vdwg.mxu0
    %8940 = vrot.lane.b32.xlu0 %v6693, 8
    %v8941 = vpop.permute.xlu0 %8940
    %8942 = vrot.lane.b32.xlu0 %v6696, 8
    %v8943 = vpop.permute.xlu0 %8942
    %8944 = vrot.lane.b32.xlu0 %v6740, 8
    %v8945 = vpop.permute.xlu0 %8944
    %8946 = vrot.lane.b32.xlu0 %v6743, 8
    %v8947 = vpop.permute.xlu0 %8946
    %8948 = vrot.lane.b32.xlu0 %v6787, 8
    %v8949 = vpop.permute.xlu0 %8948
    %8950 = vrot.lane.b32.xlu0 %v6790, 8
    %v8951 = vpop.permute.xlu0 %8950
    %8952 = vrot.lane.b32.xlu0 %v6834, 8
    %v8953 = vpop.permute.xlu0 %8952
    %8954 = vrot.lane.b32.xlu0 %v6837, 8
    %v8955 = vpop.permute.xlu0 %8954
    %8956 = vrot.lane.b32.xlu0 %v6881, 8
    %v8957 = vpop.permute.xlu0 %8956
    %8958 = vrot.lane.b32.xlu0 %v6884, 8
    %v8959 = vpop.permute.xlu0 %8958
    %8960 = vrot.lane.b32.xlu0 %v6928, 8
    %v8961 = vpop.permute.xlu0 %8960
    %8962 = vrot.lane.b32.xlu0 %v6931, 8
    %v8963 = vpop.permute.xlu0 %8962
    %8964 = vrot.lane.b32.xlu0 %v6975, 8
    %v8965 = vpop.permute.xlu0 %8964
    %8966 = vrot.lane.b32.xlu0 %v6978, 8
    %v8967 = vpop.permute.xlu0 %8966
    %8968 = vrot.lane.b32.xlu0 %v7022, 8
    %v8969 = vpop.permute.xlu0 %8968
    %8970 = vrot.lane.b32.xlu0 %v7025, 8
    %v8971 = vpop.permute.xlu0 %8970
    %8972 = vrot.lane.b32.xlu0 %v7069, 8
    %v8973 = vpop.permute.xlu0 %8972
    %8974 = vrot.lane.b32.xlu0 %v7072, 8
    %v8975 = vpop.permute.xlu0 %8974
    %8976 = vrot.lane.b32.xlu0 %v7116, 8
    %v8977 = vpop.permute.xlu0 %8976
    %8978 = vrot.lane.b32.xlu0 %v7119, 8
    %v8979 = vpop.permute.xlu0 %8978
    %8980 = vrot.lane.b32.xlu0 %v7163, 8
    %v8981 = vpop.permute.xlu0 %8980
    %8982 = vrot.lane.b32.xlu0 %v7166, 8
    %v8983 = vpop.permute.xlu0 %8982
    %8984 = vrot.lane.b32.xlu0 %v7210, 8
    %v8985 = vpop.permute.xlu0 %8984
    %8986 = vrot.lane.b32.xlu0 %v7213, 8
    %v8987 = vpop.permute.xlu0 %8986
    %8988 = vrot.lane.b32.xlu0 %v7257, 8
    %v8989 = vpop.permute.xlu0 %8988
    %8990 = vrot.lane.b32.xlu0 %v7260, 8
    %v8991 = vpop.permute.xlu0 %8990
    %8992 = vrot.lane.b32.xlu0 %v7304, 8
    %v8993 = vpop.permute.xlu0 %8992
    %8994 = vrot.lane.b32.xlu0 %v7307, 8
    %v8995 = vpop.permute.xlu0 %8994
    %8996 = vrot.lane.b32.xlu0 %v7351, 8
    %v8997 = vpop.permute.xlu0 %8996
    %8998 = vrot.lane.b32.xlu0 %v7354, 8
    %v8999 = vpop.permute.xlu0 %8998
    %9000 = vrot.lane.b32.xlu0 %v7398, 8
    %v9001 = vpop.permute.xlu0 %9000
    %9002 = vrot.lane.b32.xlu0 %v7401, 8
    %v9003 = vpop.permute.xlu0 %9002
    %9068 = vrot.lane.b32.xlu0 %v7445, 16
    %v9069 = vpop.permute.xlu0 %9068
    %9070 = vrot.lane.b32.xlu0 %v7448, 16
    %v9071 = vpop.permute.xlu0 %9070
    %9072 = vrot.lane.b32.xlu0 %v7492, 16
    %v9073 = vpop.permute.xlu0 %9072
    %9074 = vrot.lane.b32.xlu0 %v7495, 16
    %v9075 = vpop.permute.xlu0 %9074
    %9076 = vrot.lane.b32.xlu0 %v7539, 16
    %v9077 = vpop.permute.xlu0 %9076
    %9078 = vrot.lane.b32.xlu0 %v7542, 16
    %v9079 = vpop.permute.xlu0 %9078
    %9080 = vrot.lane.b32.xlu0 %v7586, 16
    %v9081 = vpop.permute.xlu0 %9080
    %9082 = vrot.lane.b32.xlu0 %v7589, 16
    %v9083 = vpop.permute.xlu0 %9082
    %9084 = vrot.lane.b32.xlu0 %v7633, 16
    %v9085 = vpop.permute.xlu0 %9084
    %9086 = vrot.lane.b32.xlu0 %v7636, 16
    %v9087 = vpop.permute.xlu0 %9086
    %9088 = vrot.lane.b32.xlu0 %v7680, 16
    %v9089 = vpop.permute.xlu0 %9088
    %9090 = vrot.lane.b32.xlu0 %v7683, 16
    %v9091 = vpop.permute.xlu0 %9090
    %9092 = vrot.lane.b32.xlu0 %v7727, 16
    %v9093 = vpop.permute.xlu0 %9092
    %9094 = vrot.lane.b32.xlu0 %v7730, 16
    %v9095 = vpop.permute.xlu0 %9094
    %9096 = vrot.lane.b32.xlu0 %v7774, 16
    %v9097 = vpop.permute.xlu0 %9096
    %9098 = vrot.lane.b32.xlu0 %v7777, 16
    %v9099 = vpop.permute.xlu0 %9098
    %9100 = vrot.lane.b32.xlu0 %v7821, 16
    %v9101 = vpop.permute.xlu0 %9100
    %9102 = vrot.lane.b32.xlu0 %v7824, 16
    %v9103 = vpop.permute.xlu0 %9102
    %9104 = vrot.lane.b32.xlu0 %v7868, 16
    %v9105 = vpop.permute.xlu0 %9104
    %9106 = vrot.lane.b32.xlu0 %v7871, 16
    %v9107 = vpop.permute.xlu0 %9106
    %9108 = vrot.lane.b32.xlu0 %v7915, 16
    %v9109 = vpop.permute.xlu0 %9108
    %9110 = vrot.lane.b32.xlu0 %v7918, 16
    %v9111 = vpop.permute.xlu0 %9110
    %9112 = vrot.lane.b32.xlu0 %v7962, 16
    %v9113 = vpop.permute.xlu0 %9112
    %9114 = vrot.lane.b32.xlu0 %v7965, 16
    %v9115 = vpop.permute.xlu0 %9114
    %9116 = vrot.lane.b32.xlu0 %v8009, 16
    %v9117 = vpop.permute.xlu0 %9116
    %9118 = vrot.lane.b32.xlu0 %v8012, 16
    %v9119 = vpop.permute.xlu0 %9118
    %9120 = vrot.lane.b32.xlu0 %v8056, 16
    %v9121 = vpop.permute.xlu0 %9120
    %9122 = vrot.lane.b32.xlu0 %v8059, 16
    %v9123 = vpop.permute.xlu0 %9122
    %9124 = vrot.lane.b32.xlu0 %v8103, 16
    %v9125 = vpop.permute.xlu0 %9124
    %9126 = vrot.lane.b32.xlu0 %v8106, 16
    %v9127 = vpop.permute.xlu0 %9126
    %9128 = vrot.lane.b32.xlu0 %v8150, 16
    %v9129 = vpop.permute.xlu0 %9128
    %9130 = vrot.lane.b32.xlu0 %v8153, 16
    %v9131 = vpop.permute.xlu0 %9130
    %9196 = vrot.lane.b32.xlu0 %v8197, 24
    %v9197 = vpop.permute.xlu0 %9196
    %9198 = vrot.lane.b32.xlu0 %v8200, 24
    %v9199 = vpop.permute.xlu0 %9198
    %9200 = vrot.lane.b32.xlu0 %v8244, 24
    %v9201 = vpop.permute.xlu0 %9200
    %9202 = vrot.lane.b32.xlu0 %v8247, 24
    %v9203 = vpop.permute.xlu0 %9202
    %9204 = vrot.lane.b32.xlu0 %v8291, 24
    %v9205 = vpop.permute.xlu0 %9204
    %9206 = vrot.lane.b32.xlu0 %v8294, 24
    %v9207 = vpop.permute.xlu0 %9206
    %9208 = vrot.lane.b32.xlu0 %v8338, 24
    %v9209 = vpop.permute.xlu0 %9208
    %9210 = vrot.lane.b32.xlu0 %v8341, 24
    %v9211 = vpop.permute.xlu0 %9210
    %9212 = vrot.lane.b32.xlu0 %v8385, 24
    %v9213 = vpop.permute.xlu0 %9212
    %9214 = vrot.lane.b32.xlu0 %v8388, 24
    %v9215 = vpop.permute.xlu0 %9214
    %9216 = vrot.lane.b32.xlu0 %v8432, 24
    %v9217 = vpop.permute.xlu0 %9216
    %9218 = vrot.lane.b32.xlu0 %v8435, 24
    %v9219 = vpop.permute.xlu0 %9218
    %9220 = vrot.lane.b32.xlu0 %v8479, 24
    %v9221 = vpop.permute.xlu0 %9220
    %9222 = vrot.lane.b32.xlu0 %v8482, 24
    %v9223 = vpop.permute.xlu0 %9222
    %9224 = vrot.lane.b32.xlu0 %v8526, 24
    %v9225 = vpop.permute.xlu0 %9224
    %9226 = vrot.lane.b32.xlu0 %v8529, 24
    %v9227 = vpop.permute.xlu0 %9226
    %9228 = vrot.lane.b32.xlu0 %v8573, 24
    %v9229 = vpop.permute.xlu0 %9228
    %9230 = vrot.lane.b32.xlu0 %v8576, 24
    %v9231 = vpop.permute.xlu0 %9230
    %9232 = vrot.lane.b32.xlu0 %v8620, 24
    %v9233 = vpop.permute.xlu0 %9232
    %9234 = vrot.lane.b32.xlu0 %v8623, 24
    %v9235 = vpop.permute.xlu0 %9234
    %9236 = vrot.lane.b32.xlu0 %v8667, 24
    %v9237 = vpop.permute.xlu0 %9236
    %9238 = vrot.lane.b32.xlu0 %v8670, 24
    %v9239 = vpop.permute.xlu0 %9238
    %9240 = vrot.lane.b32.xlu0 %v8714, 24
    %v9241 = vpop.permute.xlu0 %9240
    %9242 = vrot.lane.b32.xlu0 %v8717, 24
    %v9243 = vpop.permute.xlu0 %9242
    %9244 = vrot.lane.b32.xlu0 %v8761, 24
    %v9245 = vpop.permute.xlu0 %9244
    %9246 = vrot.lane.b32.xlu0 %v8764, 24
    %v9247 = vpop.permute.xlu0 %9246
    %9248 = vrot.lane.b32.xlu0 %v8808, 24
    %v9249 = vpop.permute.xlu0 %9248
    %9250 = vrot.lane.b32.xlu0 %v8811, 24
    %v9251 = vpop.permute.xlu0 %9250
    %9252 = vrot.lane.b32.xlu0 %v8855, 24
    %v9253 = vpop.permute.xlu0 %9252
    %9254 = vrot.lane.b32.xlu0 %v8858, 24
    %v9255 = vpop.permute.xlu0 %9254
    %9256 = vrot.lane.b32.xlu0 %v8902, 24
    %v9257 = vpop.permute.xlu0 %9256
    %9258 = vrot.lane.b32.xlu0 %v8905, 24
    %v9259 = vpop.permute.xlu0 %9258
    %v9292 = vsel %vm1229, %v5941, %v8941
    %v9293 = vsel %vm1229, %v5944, %v8943
    %v9294 = vsel %vm1229, %v5988, %v8945
    %v9295 = vsel %vm1229, %v5991, %v8947
    %v9296 = vsel %vm1229, %v6035, %v8949
    %v9297 = vsel %vm1229, %v6038, %v8951
    %v9298 = vsel %vm1229, %v6082, %v8953
    %v9299 = vsel %vm1229, %v6085, %v8955
    %v9300 = vsel %vm1229, %v6129, %v8957
    %v9301 = vsel %vm1229, %v6132, %v8959
    %v9302 = vsel %vm1229, %v6176, %v8961
    %v9303 = vsel %vm1229, %v6179, %v8963
    %v9304 = vsel %vm1229, %v6223, %v8965
    %v9305 = vsel %vm1229, %v6226, %v8967
    %v9306 = vsel %vm1229, %v6270, %v8969
    %v9307 = vsel %vm1229, %v6273, %v8971
    %v9308 = vsel %vm1229, %v6317, %v8973
    %v9309 = vsel %vm1229, %v6320, %v8975
    %v9310 = vsel %vm1229, %v6364, %v8977
    %v9311 = vsel %vm1229, %v6367, %v8979
    %v9312 = vsel %vm1229, %v6411, %v8981
    %v9313 = vsel %vm1229, %v6414, %v8983
    %v9314 = vsel %vm1229, %v6458, %v8985
    %v9315 = vsel %vm1229, %v6461, %v8987
    %v9316 = vsel %vm1229, %v6505, %v8989
    %v9317 = vsel %vm1229, %v6508, %v8991
    %v9318 = vsel %vm1229, %v6552, %v8993
    %v9319 = vsel %vm1229, %v6555, %v8995
    %v9320 = vsel %vm1229, %v6599, %v8997
    %v9321 = vsel %vm1229, %v6602, %v8999
    %v9322 = vsel %vm1229, %v6646, %v9001
    %v9323 = vsel %vm1229, %v6649, %v9003
    %v9324 = vsel %vm4427, %v9292, %v9069
    %v9325 = vsel %vm4427, %v9293, %v9071
    %v9326 = vsel %vm4427, %v9294, %v9073
    %v9327 = vsel %vm4427, %v9295, %v9075
    %v9328 = vsel %vm4427, %v9296, %v9077
    %v9329 = vsel %vm4427, %v9297, %v9079
    %v9330 = vsel %vm4427, %v9298, %v9081
    %v9331 = vsel %vm4427, %v9299, %v9083
    %v9332 = vsel %vm4427, %v9300, %v9085
    %v9333 = vsel %vm4427, %v9301, %v9087
    %v9334 = vsel %vm4427, %v9302, %v9089
    %v9335 = vsel %vm4427, %v9303, %v9091
    %v9336 = vsel %vm4427, %v9304, %v9093
    %v9337 = vsel %vm4427, %v9305, %v9095
    %v9338 = vsel %vm4427, %v9306, %v9097
    %v9339 = vsel %vm4427, %v9307, %v9099
    %v9340 = vsel %vm4427, %v9308, %v9101
    %v9341 = vsel %vm4427, %v9309, %v9103
    %v9342 = vsel %vm4427, %v9310, %v9105
    %v9343 = vsel %vm4427, %v9311, %v9107
    %v9344 = vsel %vm4427, %v9312, %v9109
    %v9345 = vsel %vm4427, %v9313, %v9111
    %v9346 = vsel %vm4427, %v9314, %v9113
    %v9347 = vsel %vm4427, %v9315, %v9115
    %v9348 = vsel %vm4427, %v9316, %v9117
    %v9349 = vsel %vm4427, %v9317, %v9119
    %v9350 = vsel %vm4427, %v9318, %v9121
    %v9351 = vsel %vm4427, %v9319, %v9123
    %v9352 = vsel %vm4427, %v9320, %v9125
    %v9353 = vsel %vm4427, %v9321, %v9127
    %v9354 = vsel %vm4427, %v9322, %v9129
    %v9355 = vsel %vm4427, %v9323, %v9131
    %vm9356 = vcmask 195584
    %v9357 = vsel %vm9356, %v9324, %v9197
    %v9358 = vsel %vm9356, %v9325, %v9199
    %v9359 = vsel %vm9356, %v9326, %v9201
    %v9360 = vsel %vm9356, %v9327, %v9203
    %v9361 = vsel %vm9356, %v9328, %v9205
    %v9362 = vsel %vm9356, %v9329, %v9207
    %v9363 = vsel %vm9356, %v9330, %v9209
    %v9364 = vsel %vm9356, %v9331, %v9211
    %v9365 = vsel %vm9356, %v9332, %v9213
    %v9366 = vsel %vm9356, %v9333, %v9215
    %v9367 = vsel %vm9356, %v9334, %v9217
    %v9368 = vsel %vm9356, %v9335, %v9219
    %v9369 = vsel %vm9356, %v9336, %v9221
    %v9370 = vsel %vm9356, %v9337, %v9223
    %v9371 = vsel %vm9356, %v9338, %v9225
    %v9372 = vsel %vm9356, %v9339, %v9227
    %v9373 = vsel %vm9356, %v9340, %v9229
    %v9374 = vsel %vm9356, %v9341, %v9231
    %v9375 = vsel %vm9356, %v9342, %v9233
    %v9376 = vsel %vm9356, %v9343, %v9235
    %v9377 = vsel %vm9356, %v9344, %v9237
    %v9378 = vsel %vm9356, %v9345, %v9239
    %v9379 = vsel %vm9356, %v9346, %v9241
    %v9380 = vsel %vm9356, %v9347, %v9243
    %v9381 = vsel %vm9356, %v9348, %v9245
    %v9382 = vsel %vm9356, %v9349, %v9247
    %v9383 = vsel %vm9356, %v9350, %v9249
    %v9384 = vsel %vm9356, %v9351, %v9251
    %v9385 = vsel %vm9356, %v9352, %v9253
    %v9386 = vsel %vm9356, %v9353, %v9255
    %v9387 = vsel %vm9356, %v9354, %v9257
    %v9388 = vsel %vm9356, %v9355, %v9259
    %v9389 = vpack.c.bf16 %v9358, %v9357
    %v9390 = vpack.c.bf16 %v9360, %v9359
    %v9391 = vpack.c.bf16 %v9362, %v9361
    %v9392 = vpack.c.bf16 %v9364, %v9363
    %v9393 = vpack.c.bf16 %v9366, %v9365
    %v9394 = vpack.c.bf16 %v9368, %v9367
    %v9395 = vpack.c.bf16 %v9370, %v9369
    %v9396 = vpack.c.bf16 %v9372, %v9371
    %v9397 = vpack.c.bf16 %v9374, %v9373
    %v9398 = vpack.c.bf16 %v9376, %v9375
    %v9399 = vpack.c.bf16 %v9378, %v9377
    %v9400 = vpack.c.bf16 %v9380, %v9379
    %v9401 = vpack.c.bf16 %v9382, %v9381
    %v9402 = vpack.c.bf16 %v9384, %v9383
    %v9403 = vpack.c.bf16 %v9386, %v9385
    %v9404 = vpack.c.bf16 %v9388, %v9387
    %v9405 = vld [vmem:[%s2] sm:$0xf]
    %v9406 = vld [vmem:[%s2 + $0x4] sm:$0xf]
    %v9407 = vld [vmem:[%s2 + $0x8] sm:$0xf]
    %v9408 = vld [vmem:[%s2 + $0xc] sm:$0xf]
    %v9413 = vunpack.c.l.b16 %v9405
    %v9414 = vunpack.c.l.b16 %v9406
    %v9415 = vunpack.c.l.b16 %v9407
    %v9416 = vunpack.c.l.b16 %v9408
    %v9417 = vpack.c.b16 %v9414, %v9413
    %v9418 = vpack.c.b16 %v9416, %v9415
    %vm9421 = vcmask 261120
    %v9423 = vsel %vm9421, %v9389, 0
    %v9426 = vsel %vm9421, %v9390, 0
    %v9429 = vsel %vm9421, %v9391, 0
    %v9432 = vsel %vm9421, %v9392, 0
    %v9435 = vsel %vm9421, %v9393, 0
    %v9438 = vsel %vm9421, %v9394, 0
    %v9441 = vsel %vm9421, %v9395, 0
    %v9444 = vsel %vm9421, %v9396, 0
    %v9447 = vsel %vm9421, %v9397, 0
    %v9450 = vsel %vm9421, %v9398, 0
    %v9453 = vsel %vm9421, %v9399, 0
    %v9456 = vsel %vm9421, %v9400, 0
    %v9459 = vsel %vm9421, %v9401, 0
    %v9462 = vsel %vm9421, %v9402, 0
    %v9465 = vsel %vm9421, %v9403, 0
    %v9468 = vsel %vm9421, %v9404, 0
    %9470 = vmatprep.subr.bf16.mxu0 0
    %9471 = vmatpush1.bf16.msra.mxu0 %v9417
    %9472 = vmatprep.subr.bf16.mxu0 0
    %9473 = vmatpush1.bf16.msra.mxu0 %v9418
    %9474 = vmatprep.subr.bf16.mxu0 0
    %9475 = vmatpush1.bf16.msra.mxu0 0
    %9476 = vmatprep.subr.bf16.mxu0 0
    %9477 = vmatpush1.bf16.msra.mxu0 0
    %9478 = vmatprep.subr.bf16.mxu0 0
    %9479 = vmatpush1.bf16.msra.mxu0 0
    %9480 = vmatprep.subr.bf16.mxu0 0
    %9481 = vmatpush1.bf16.msra.mxu0 0
    %9482 = vmatprep.subr.bf16.mxu0 0
    %9483 = vmatpush1.bf16.msra.mxu0 0
    %9484 = vmatprep.subr.bf16.mxu0 0
    %9485 = vmatpush1.bf16.msra.mxu0 0
    %9486 = vmatprep.subr.bf16.mxu0 0
    %9487 = vmatpush1.bf16.msra.mxu0 0
    %9488 = vmatprep.subr.bf16.mxu0 0
    %9489 = vmatpush1.bf16.msra.mxu0 0
    %9490 = vmatprep.subr.bf16.mxu0 0
    %9491 = vmatpush1.bf16.msra.mxu0 0
    %9492 = vmatprep.subr.bf16.mxu0 0
    %9493 = vmatpush1.bf16.msra.mxu0 0
    %9494 = vmatprep.subr.bf16.mxu0 0
    %9495 = vmatpush1.bf16.msra.mxu0 0
    %9496 = vmatprep.subr.bf16.mxu0 0
    %9497 = vmatpush1.bf16.msra.mxu0 0
    %9498 = vmatprep.subr.bf16.mxu0 0
    %9499 = vmatpush1.bf16.msra.mxu0 0
    %9500 = vmatprep.subr.bf16.mxu0 0
    %9501 = vmatpush1.bf16.msra.mxu0 0
    %9502 = vmatprep.mubr.bf16.mxu0 0
    %9503 = vmatmul.mubr.bf16.gmra.mrb[0].mxu0 %v9423
    %v9504 = vpop.f32.mrb[0].mxu0
    %v9505 = vadd.f32 0.0, %v9504
    %v9506 = vpop.f32.mrb[0].mxu0
    %v9507 = vpop.f32.mrb[0].mxu0
    %v9508 = vadd.f32 0.0, %v9507
    %v9509 = vpop.f32.mrb[0].mxu0
    %9510 = vmatprep.mubr.bf16.mxu0 0
    %9511 = vmatmul.mubr.bf16.gmra.mrb[0].mxu0 %v9426
    %v9512 = vpop.f32.mrb[0].mxu0
    %v9513 = vadd.f32 0.0, %v9512
    %v9514 = vpop.f32.mrb[0].mxu0
    %v9515 = vpop.f32.mrb[0].mxu0
    %v9516 = vadd.f32 0.0, %v9515
    %v9517 = vpop.f32.mrb[0].mxu0
    %9518 = vmatprep.mubr.bf16.mxu0 0
    %9519 = vmatmul.mubr.bf16.gmra.mrb[0].mxu0 %v9429
    %v9520 = vpop.f32.mrb[0].mxu0
    %v9521 = vadd.f32 0.0, %v9520
    %v9522 = vpop.f32.mrb[0].mxu0
    %v9523 = vpop.f32.mrb[0].mxu0
    %v9524 = vadd.f32 0.0, %v9523
    %v9525 = vpop.f32.mrb[0].mxu0
    %9526 = vmatprep.mubr.bf16.mxu0 0
    %9527 = vmatmul.mubr.bf16.gmra.mrb[0].mxu0 %v9432
    %v9528 = vpop.f32.mrb[0].mxu0
    %v9529 = vadd.f32 0.0, %v9528
    %v9530 = vpop.f32.mrb[0].mxu0
    %v9531 = vpop.f32.mrb[0].mxu0
    %v9532 = vadd.f32 0.0, %v9531
    %v9533 = vpop.f32.mrb[0].mxu0
    %9534 = vmatprep.mubr.bf16.mxu0 0
    %9535 = vmatmul.mubr.bf16.gmra.mrb[0].mxu0 %v9435
    %v9536 = vpop.f32.mrb[0].mxu0
    %v9537 = vadd.f32 0.0, %v9536
    %v9538 = vpop.f32.mrb[0].mxu0
    %v9539 = vpop.f32.mrb[0].mxu0
    %v9540 = vadd.f32 0.0, %v9539
    %v9541 = vpop.f32.mrb[0].mxu0
    %9542 = vmatprep.mubr.bf16.mxu0 0
    %9543 = vmatmul.mubr.bf16.gmra.mrb[0].mxu0 %v9438
    %v9544 = vpop.f32.mrb[0].mxu0
    %v9545 = vadd.f32 0.0, %v9544
    %v9546 = vpop.f32.mrb[0].mxu0
    %v9547 = vpop.f32.mrb[0].mxu0
    %v9548 = vadd.f32 0.0, %v9547
    %v9549 = vpop.f32.mrb[0].mxu0
    %9550 = vmatprep.mubr.bf16.mxu0 0
    %9551 = vmatmul.mubr.bf16.gmra.mrb[0].mxu0 %v9441
    %v9552 = vpop.f32.mrb[0].mxu0
    %v9553 = vadd.f32 0.0, %v9552
    %v9554 = vpop.f32.mrb[0].mxu0
    %v9555 = vpop.f32.mrb[0].mxu0
    %v9556 = vadd.f32 0.0, %v9555
    %v9557 = vpop.f32.mrb[0].mxu0
    %9558 = vmatprep.mubr.bf16.mxu0 0
    %9559 = vmatmul.mubr.bf16.gmra.mrb[0].mxu0 %v9444
    %v9560 = vpop.f32.mrb[0].mxu0
    %v9561 = vadd.f32 0.0, %v9560
    %v9562 = vpop.f32.mrb[0].mxu0
    %v9563 = vpop.f32.mrb[0].mxu0
    %v9564 = vadd.f32 0.0, %v9563
    %v9565 = vpop.f32.mrb[0].mxu0
    %9566 = vmatprep.mubr.bf16.mxu0 0
    %9567 = vmatmul.mubr.bf16.gmra.mrb[0].mxu0 %v9447
    %v9568 = vpop.f32.mrb[0].mxu0
    %v9569 = vadd.f32 0.0, %v9568
    %v9570 = vpop.f32.mrb[0].mxu0
    %v9571 = vpop.f32.mrb[0].mxu0
    %v9572 = vadd.f32 0.0, %v9571
    %v9573 = vpop.f32.mrb[0].mxu0
    %9574 = vmatprep.mubr.bf16.mxu0 0
    %9575 = vmatmul.mubr.bf16.gmra.mrb[0].mxu0 %v9450
    %v9576 = vpop.f32.mrb[0].mxu0
    %v9577 = vadd.f32 0.0, %v9576
    %v9578 = vpop.f32.mrb[0].mxu0
    %v9579 = vpop.f32.mrb[0].mxu0
    %v9580 = vadd.f32 0.0, %v9579
    %v9581 = vpop.f32.mrb[0].mxu0
    %9582 = vmatprep.mubr.bf16.mxu0 0
    %9583 = vmatmul.mubr.bf16.gmra.mrb[0].mxu0 %v9453
    %v9584 = vpop.f32.mrb[0].mxu0
    %v9585 = vadd.f32 0.0, %v9584
    %v9586 = vpop.f32.mrb[0].mxu0
    %v9587 = vpop.f32.mrb[0].mxu0
    %v9588 = vadd.f32 0.0, %v9587
    %v9589 = vpop.f32.mrb[0].mxu0
    %9590 = vmatprep.mubr.bf16.mxu0 0
    %9591 = vmatmul.mubr.bf16.gmra.mrb[0].mxu0 %v9456
    %v9592 = vpop.f32.mrb[0].mxu0
    %v9593 = vadd.f32 0.0, %v9592
    %v9594 = vpop.f32.mrb[0].mxu0
    %v9595 = vpop.f32.mrb[0].mxu0
    %v9596 = vadd.f32 0.0, %v9595
    %v9597 = vpop.f32.mrb[0].mxu0
    %9598 = vmatprep.mubr.bf16.mxu0 0
    %9599 = vmatmul.mubr.bf16.gmra.mrb[0].mxu0 %v9459
    %v9600 = vpop.f32.mrb[0].mxu0
    %v9601 = vadd.f32 0.0, %v9600
    %v9602 = vpop.f32.mrb[0].mxu0
    %v9603 = vpop.f32.mrb[0].mxu0
    %v9604 = vadd.f32 0.0, %v9603
    %v9605 = vpop.f32.mrb[0].mxu0
    %9606 = vmatprep.mubr.bf16.mxu0 0
    %9607 = vmatmul.mubr.bf16.gmra.mrb[0].mxu0 %v9462
    %v9608 = vpop.f32.mrb[0].mxu0
    %v9609 = vadd.f32 0.0, %v9608
    %v9610 = vpop.f32.mrb[0].mxu0
    %v9611 = vpop.f32.mrb[0].mxu0
    %v9612 = vadd.f32 0.0, %v9611
    %v9613 = vpop.f32.mrb[0].mxu0
    %9614 = vmatprep.mubr.bf16.mxu0 0
    %9615 = vmatmul.mubr.bf16.gmra.mrb[0].mxu0 %v9465
    %v9616 = vpop.f32.mrb[0].mxu0
    %v9617 = vadd.f32 0.0, %v9616
    %v9618 = vpop.f32.mrb[0].mxu0
    %v9619 = vpop.f32.mrb[0].mxu0
    %v9620 = vadd.f32 0.0, %v9619
    %v9621 = vpop.f32.mrb[0].mxu0
    %9622 = vmatprep.mubr.bf16.mxu0 0
    %9623 = vmatmul.mubr.bf16.gmra.mrb[0].mxu0 %v9468
    %v9624 = vpop.f32.mrb[0].mxu0
    %v9625 = vadd.f32 0.0, %v9624
    %v9626 = vpop.f32.mrb[0].mxu0
    %v9627 = vpop.f32.mrb[0].mxu0
    %v9628 = vadd.f32 0.0, %v9627
    %v9629 = vpop.f32.mrb[0].mxu0
    %9630 = vdwg.mxu0
    %v9631 = vsel %vm9421, %v9505, 0.0
    %v9632 = vsel %vm9421, %v9508, 0.0
    %v9633 = vadd.f32 %v9631, %v9632
    %v9634 = vsel %vm9421, %v9513, 0.0
    %v9635 = vadd.f32 %v9633, %v9634
    %v9636 = vsel %vm9421, %v9516, 0.0
    %v9637 = vadd.f32 %v9635, %v9636
    %v9638 = vsel %vm9421, %v9521, 0.0
    %v9639 = vadd.f32 %v9637, %v9638
    %v9640 = vsel %vm9421, %v9524, 0.0
    %v9641 = vadd.f32 %v9639, %v9640
    %v9642 = vsel %vm9421, %v9529, 0.0
    %v9643 = vadd.f32 %v9641, %v9642
    %v9644 = vsel %vm9421, %v9532, 0.0
    %v9645 = vadd.f32 %v9643, %v9644
    %v9646 = vsel %vm9421, %v9537, 0.0
    %v9647 = vadd.f32 %v9645, %v9646
    %v9648 = vsel %vm9421, %v9540, 0.0
    %v9649 = vadd.f32 %v9647, %v9648
    %v9650 = vsel %vm9421, %v9545, 0.0
    %v9651 = vadd.f32 %v9649, %v9650
    %v9652 = vsel %vm9421, %v9548, 0.0
    %v9653 = vadd.f32 %v9651, %v9652
    %v9654 = vsel %vm9421, %v9553, 0.0
    %v9655 = vadd.f32 %v9653, %v9654
    %v9656 = vsel %vm9421, %v9556, 0.0
    %v9657 = vadd.f32 %v9655, %v9656
    %v9658 = vsel %vm9421, %v9561, 0.0
    %v9659 = vadd.f32 %v9657, %v9658
    %v9660 = vsel %vm9421, %v9564, 0.0
    %v9661 = vadd.f32 %v9659, %v9660
    %v9662 = vsel %vm9421, %v9569, 0.0
    %v9663 = vadd.f32 %v9661, %v9662
    %v9664 = vsel %vm9421, %v9572, 0.0
    %v9665 = vadd.f32 %v9663, %v9664
    %v9666 = vsel %vm9421, %v9577, 0.0
    %v9667 = vadd.f32 %v9665, %v9666
    %v9668 = vsel %vm9421, %v9580, 0.0
    %v9669 = vadd.f32 %v9667, %v9668
    %v9670 = vsel %vm9421, %v9585, 0.0
    %v9671 = vadd.f32 %v9669, %v9670
    %v9672 = vsel %vm9421, %v9588, 0.0
    %v9673 = vadd.f32 %v9671, %v9672
    %v9674 = vsel %vm9421, %v9593, 0.0
    %v9675 = vadd.f32 %v9673, %v9674
    %v9676 = vsel %vm9421, %v9596, 0.0
    %v9677 = vadd.f32 %v9675, %v9676
    %v9678 = vsel %vm9421, %v9601, 0.0
    %v9679 = vadd.f32 %v9677, %v9678
    %v9680 = vsel %vm9421, %v9604, 0.0
    %v9681 = vadd.f32 %v9679, %v9680
    %v9682 = vsel %vm9421, %v9609, 0.0
    %v9683 = vadd.f32 %v9681, %v9682
    %v9684 = vsel %vm9421, %v9612, 0.0
    %v9685 = vadd.f32 %v9683, %v9684
    %v9686 = vsel %vm9421, %v9617, 0.0
    %v9687 = vadd.f32 %v9685, %v9686
    %v9688 = vsel %vm9421, %v9620, 0.0
    %v9689 = vadd.f32 %v9687, %v9688
    %v9690 = vsel %vm9421, %v9625, 0.0
    %v9691 = vadd.f32 %v9689, %v9690
    %v9692 = vsel %vm9421, %v9628, 0.0
    %v9693 = vadd.f32 %v9691, %v9692
    %v9694 = vrot.slane %v9693, 4
    %v9695 = vadd.f32 %v9693, %v9694
    %v9696 = vrot.slane %v9695, 2
    %v9697 = vadd.f32 %v9695, %v9696
    %v9698 = vrot.slane %v9697, 1
    %v9699 = vadd.f32 %v9697, %v9698
    %v9700 = vmul.f32 %v9699, %v448
    %v9701 = vsub.f32 %v9505, %v9700
    %v9702 = vsub.f32 %v9508, %v9700
    %v9703 = vsub.f32 %v9513, %v9700
    %v9704 = vsub.f32 %v9516, %v9700
    %v9705 = vsub.f32 %v9521, %v9700
    %v9706 = vsub.f32 %v9524, %v9700
    %v9707 = vsub.f32 %v9529, %v9700
    %v9708 = vsub.f32 %v9532, %v9700
    %v9709 = vsub.f32 %v9537, %v9700
    %v9710 = vsub.f32 %v9540, %v9700
    %v9711 = vsub.f32 %v9545, %v9700
    %v9712 = vsub.f32 %v9548, %v9700
    %v9713 = vsub.f32 %v9553, %v9700
    %v9714 = vsub.f32 %v9556, %v9700
    %v9715 = vsub.f32 %v9561, %v9700
    %v9716 = vsub.f32 %v9564, %v9700
    %v9717 = vsub.f32 %v9569, %v9700
    %v9718 = vsub.f32 %v9572, %v9700
    %v9719 = vsub.f32 %v9577, %v9700
    %v9720 = vsub.f32 %v9580, %v9700
    %v9721 = vsub.f32 %v9585, %v9700
    %v9722 = vsub.f32 %v9588, %v9700
    %v9723 = vsub.f32 %v9593, %v9700
    %v9724 = vsub.f32 %v9596, %v9700
    %v9725 = vsub.f32 %v9601, %v9700
    %v9726 = vsub.f32 %v9604, %v9700
    %v9727 = vsub.f32 %v9609, %v9700
    %v9728 = vsub.f32 %v9612, %v9700
    %v9729 = vsub.f32 %v9617, %v9700
    %v9730 = vsub.f32 %v9620, %v9700
    %v9731 = vsub.f32 %v9625, %v9700
    %v9732 = vsub.f32 %v9628, %v9700
    %v9733 = vmul.f32 %v9701, %v9701
    %v9734 = vmul.f32 %v9702, %v9702
    %v9735 = vmul.f32 %v9703, %v9703
    %v9736 = vmul.f32 %v9704, %v9704
    %v9737 = vmul.f32 %v9705, %v9705
    %v9738 = vmul.f32 %v9706, %v9706
    %v9739 = vmul.f32 %v9707, %v9707
    %v9740 = vmul.f32 %v9708, %v9708
    %v9741 = vmul.f32 %v9709, %v9709
    %v9742 = vmul.f32 %v9710, %v9710
    %v9743 = vmul.f32 %v9711, %v9711
    %v9744 = vmul.f32 %v9712, %v9712
    %v9745 = vmul.f32 %v9713, %v9713
    %v9746 = vmul.f32 %v9714, %v9714
    %v9747 = vmul.f32 %v9715, %v9715
    %v9748 = vmul.f32 %v9716, %v9716
    %v9749 = vmul.f32 %v9717, %v9717
    %v9750 = vmul.f32 %v9718, %v9718
    %v9751 = vmul.f32 %v9719, %v9719
    %v9752 = vmul.f32 %v9720, %v9720
    %v9753 = vmul.f32 %v9721, %v9721
    %v9754 = vmul.f32 %v9722, %v9722
    %v9755 = vmul.f32 %v9723, %v9723
    %v9756 = vmul.f32 %v9724, %v9724
    %v9757 = vmul.f32 %v9725, %v9725
    %v9758 = vmul.f32 %v9726, %v9726
    %v9759 = vmul.f32 %v9727, %v9727
    %v9760 = vmul.f32 %v9728, %v9728
    %v9761 = vmul.f32 %v9729, %v9729
    %v9762 = vmul.f32 %v9730, %v9730
    %v9763 = vmul.f32 %v9731, %v9731
    %v9764 = vmul.f32 %v9732, %v9732
    %v9765 = vsel %vm9421, %v9733, 0.0
    %v9766 = vsel %vm9421, %v9734, 0.0
    %v9767 = vadd.f32 %v9765, %v9766
    %v9768 = vsel %vm9421, %v9735, 0.0
    %v9769 = vadd.f32 %v9767, %v9768
    %v9770 = vsel %vm9421, %v9736, 0.0
    %v9771 = vadd.f32 %v9769, %v9770
    %v9772 = vsel %vm9421, %v9737, 0.0
    %v9773 = vadd.f32 %v9771, %v9772
    %v9774 = vsel %vm9421, %v9738, 0.0
    %v9775 = vadd.f32 %v9773, %v9774
    %v9776 = vsel %vm9421, %v9739, 0.0
    %v9777 = vadd.f32 %v9775, %v9776
    %v9778 = vsel %vm9421, %v9740, 0.0
    %v9779 = vadd.f32 %v9777, %v9778
    %v9780 = vsel %vm9421, %v9741, 0.0
    %v9781 = vadd.f32 %v9779, %v9780
    %v9782 = vsel %vm9421, %v9742, 0.0
    %v9783 = vadd.f32 %v9781, %v9782
    %v9784 = vsel %vm9421, %v9743, 0.0
    %v9785 = vadd.f32 %v9783, %v9784
    %v9786 = vsel %vm9421, %v9744, 0.0
    %v9787 = vadd.f32 %v9785, %v9786
    %v9788 = vsel %vm9421, %v9745, 0.0
    %v9789 = vadd.f32 %v9787, %v9788
    %v9790 = vsel %vm9421, %v9746, 0.0
    %v9791 = vadd.f32 %v9789, %v9790
    %v9792 = vsel %vm9421, %v9747, 0.0
    %v9793 = vadd.f32 %v9791, %v9792
    %v9794 = vsel %vm9421, %v9748, 0.0
    %v9795 = vadd.f32 %v9793, %v9794
    %v9796 = vsel %vm9421, %v9749, 0.0
    %v9797 = vadd.f32 %v9795, %v9796
    %v9798 = vsel %vm9421, %v9750, 0.0
    %v9799 = vadd.f32 %v9797, %v9798
    %v9800 = vsel %vm9421, %v9751, 0.0
    %v9801 = vadd.f32 %v9799, %v9800
    %v9802 = vsel %vm9421, %v9752, 0.0
    %v9803 = vadd.f32 %v9801, %v9802
    %v9804 = vsel %vm9421, %v9753, 0.0
    %v9805 = vadd.f32 %v9803, %v9804
    %v9806 = vsel %vm9421, %v9754, 0.0
    %v9807 = vadd.f32 %v9805, %v9806
    %v9808 = vsel %vm9421, %v9755, 0.0
    %v9809 = vadd.f32 %v9807, %v9808
    %v9810 = vsel %vm9421, %v9756, 0.0
    %v9811 = vadd.f32 %v9809, %v9810
    %v9812 = vsel %vm9421, %v9757, 0.0
    %v9813 = vadd.f32 %v9811, %v9812
    %v9814 = vsel %vm9421, %v9758, 0.0
    %v9815 = vadd.f32 %v9813, %v9814
    %v9816 = vsel %vm9421, %v9759, 0.0
    %v9817 = vadd.f32 %v9815, %v9816
    %v9818 = vsel %vm9421, %v9760, 0.0
    %v9819 = vadd.f32 %v9817, %v9818
    %v9820 = vsel %vm9421, %v9761, 0.0
    %v9821 = vadd.f32 %v9819, %v9820
    %v9822 = vsel %vm9421, %v9762, 0.0
    %v9823 = vadd.f32 %v9821, %v9822
    %v9824 = vsel %vm9421, %v9763, 0.0
    %v9825 = vadd.f32 %v9823, %v9824
    %v9826 = vsel %vm9421, %v9764, 0.0
    %v9827 = vadd.f32 %v9825, %v9826
    %v9828 = vrot.slane %v9827, 4
    %v9829 = vadd.f32 %v9827, %v9828
    %v9830 = vrot.slane %v9829, 2
    %v9831 = vadd.f32 %v9829, %v9830
    %v9832 = vrot.slane %v9831, 1
    %v9833 = vadd.f32 %v9831, %v9832
    %v9834 = vmul.f32 %v9833, %v448
    %v9835 = vadd.f32 %v9834, 1e-05
    %v9836 = vrsqrt.pop %v9835
    %v9837 = vmul.f32 %v9701, %v9836
    %v9838 = vmul.f32 %v9702, %v9836
    %v9839 = vmul.f32 %v9703, %v9836
    %v9840 = vmul.f32 %v9704, %v9836
    %v9841 = vmul.f32 %v9705, %v9836
    %v9842 = vmul.f32 %v9706, %v9836
    %v9843 = vmul.f32 %v9707, %v9836
    %v9844 = vmul.f32 %v9708, %v9836
    %v9845 = vmul.f32 %v9709, %v9836
    %v9846 = vmul.f32 %v9710, %v9836
    %v9847 = vmul.f32 %v9711, %v9836
    %v9848 = vmul.f32 %v9712, %v9836
    %v9849 = vmul.f32 %v9713, %v9836
    %v9850 = vmul.f32 %v9714, %v9836
    %v9851 = vmul.f32 %v9715, %v9836
    %v9852 = vmul.f32 %v9716, %v9836
    %v9853 = vmul.f32 %v9717, %v9836
    %v9854 = vmul.f32 %v9718, %v9836
    %v9855 = vmul.f32 %v9719, %v9836
    %v9856 = vmul.f32 %v9720, %v9836
    %v9857 = vmul.f32 %v9721, %v9836
    %v9858 = vmul.f32 %v9722, %v9836
    %v9859 = vmul.f32 %v9723, %v9836
    %v9860 = vmul.f32 %v9724, %v9836
    %v9861 = vmul.f32 %v9725, %v9836
    %v9862 = vmul.f32 %v9726, %v9836
    %v9863 = vmul.f32 %v9727, %v9836
    %v9864 = vmul.f32 %v9728, %v9836
    %v9865 = vmul.f32 %v9729, %v9836
    %v9866 = vmul.f32 %v9730, %v9836
    %v9867 = vmul.f32 %v9731, %v9836
    %v9868 = vmul.f32 %v9732, %v9836
    %v9869 = vmax.f32 %v9837, 0.0
    %v9870 = vmax.f32 %v9838, 0.0
    %v9871 = vmax.f32 %v9839, 0.0
    %v9872 = vmax.f32 %v9840, 0.0
    %v9873 = vmax.f32 %v9841, 0.0
    %v9874 = vmax.f32 %v9842, 0.0
    %v9875 = vmax.f32 %v9843, 0.0
    %v9876 = vmax.f32 %v9844, 0.0
    %v9877 = vmax.f32 %v9845, 0.0
    %v9878 = vmax.f32 %v9846, 0.0
    %v9879 = vmax.f32 %v9847, 0.0
    %v9880 = vmax.f32 %v9848, 0.0
    %v9881 = vmax.f32 %v9849, 0.0
    %v9882 = vmax.f32 %v9850, 0.0
    %v9883 = vmax.f32 %v9851, 0.0
    %v9884 = vmax.f32 %v9852, 0.0
    %v9885 = vmax.f32 %v9853, 0.0
    %v9886 = vmax.f32 %v9854, 0.0
    %v9887 = vmax.f32 %v9855, 0.0
    %v9888 = vmax.f32 %v9856, 0.0
    %v9889 = vmax.f32 %v9857, 0.0
    %v9890 = vmax.f32 %v9858, 0.0
    %v9891 = vmax.f32 %v9859, 0.0
    %v9892 = vmax.f32 %v9860, 0.0
    %v9893 = vmax.f32 %v9861, 0.0
    %v9894 = vmax.f32 %v9862, 0.0
    %v9895 = vmax.f32 %v9863, 0.0
    %v9896 = vmax.f32 %v9864, 0.0
    %v9897 = vmax.f32 %v9865, 0.0
    %v9898 = vmax.f32 %v9866, 0.0
    %v9899 = vmax.f32 %v9867, 0.0
    %v9900 = vmax.f32 %v9868, 0.0
    %9901 = vst.msk [vmem:[#allocation2] sm:$0xff] %vm9421, %v9869
    %9902 = vst.msk [vmem:[#allocation2 + $0x8] sm:$0xff] %vm9421, %v9870
    %9903 = vst.msk [vmem:[#allocation2 + $0x10] sm:$0xff] %vm9421, %v9871
    %9904 = vst.msk [vmem:[#allocation2 + $0x18] sm:$0xff] %vm9421, %v9872
    %9905 = vst.msk [vmem:[#allocation2 + $0x20] sm:$0xff] %vm9421, %v9873
    %9906 = vst.msk [vmem:[#allocation2 + $0x28] sm:$0xff] %vm9421, %v9874
    %9907 = vst.msk [vmem:[#allocation2 + $0x30] sm:$0xff] %vm9421, %v9875
    %9908 = vst.msk [vmem:[#allocation2 + $0x38] sm:$0xff] %vm9421, %v9876
    %9909 = vst.msk [vmem:[#allocation2 + $0x40] sm:$0xff] %vm9421, %v9877
    %9910 = vst.msk [vmem:[#allocation2 + $0x48] sm:$0xff] %vm9421, %v9878
    %9911 = vst.msk [vmem:[#allocation2 + $0x50] sm:$0xff] %vm9421, %v9879
    %9912 = vst.msk [vmem:[#allocation2 + $0x58] sm:$0xff] %vm9421, %v9880
    %9913 = vst.msk [vmem:[#allocation2 + $0x60] sm:$0xff] %vm9421, %v9881
    %9914 = vst.msk [vmem:[#allocation2 + $0x68] sm:$0xff] %vm9421, %v9882
    %9915 = vst.msk [vmem:[#allocation2 + $0x70] sm:$0xff] %vm9421, %v9883
    %9916 = vst.msk [vmem:[#allocation2 + $0x78] sm:$0xff] %vm9421, %v9884
    %9917 = vst.msk [vmem:[#allocation2 + $0x80] sm:$0xff] %vm9421, %v9885
    %9918 = vst.msk [vmem:[#allocation2 + $0x88] sm:$0xff] %vm9421, %v9886
    %9919 = vst.msk [vmem:[#allocation2 + $0x90] sm:$0xff] %vm9421, %v9887
    %9920 = vst.msk [vmem:[#allocation2 + $0x98] sm:$0xff] %vm9421, %v9888
    %9921 = vst.msk [vmem:[#allocation2 + $0xa0] sm:$0xff] %vm9421, %v9889
    %9922 = vst.msk [vmem:[#allocation2 + $0xa8] sm:$0xff] %vm9421, %v9890
    %9923 = vst.msk [vmem:[#allocation2 + $0xb0] sm:$0xff] %vm9421, %v9891
    %9924 = vst.msk [vmem:[#allocation2 + $0xb8] sm:$0xff] %vm9421, %v9892
    %9925 = vst.msk [vmem:[#allocation2 + $0xc0] sm:$0xff] %vm9421, %v9893
    %9926 = vst.msk [vmem:[#allocation2 + $0xc8] sm:$0xff] %vm9421, %v9894
    %9927 = vst.msk [vmem:[#allocation2 + $0xd0] sm:$0xff] %vm9421, %v9895
    %9928 = vst.msk [vmem:[#allocation2 + $0xd8] sm:$0xff] %vm9421, %v9896
    %9929 = vst.msk [vmem:[#allocation2 + $0xe0] sm:$0xff] %vm9421, %v9897
    %9930 = vst.msk [vmem:[#allocation2 + $0xe8] sm:$0xff] %vm9421, %v9898
    %9931 = vst.msk [vmem:[#allocation2 + $0xf0] sm:$0xff] %vm9421, %v9899
    %9932 = vst.msk [vmem:[#allocation2 + $0xf8] sm:$0xff] %vm9421, %v9900
    // Predicated region
    $region14: #{spatial_attention.1} parent=1 // pred_check
      _
    $region15: #{spatial_attention.1} parent=1 // pred_check_branch
      %9934 = sbr.rel (0) target = $region17
    $region16: #{spatial_attention.1} parent=1 // pred_region
      %s9936 = ssub.s32 4096, 4096
      %9937 = vsyncadd [#allocation3], %s9936
      %s9938 = sshll.u32 [#allocation2], 4
      %s9939 = int_to_ptr.vmem [resolvable:$true] %s9938
      %9944 = dma.vmem_to_hbm [thread:$0]  %s9939, 4096, %s3, [#allocation3], 128, 128, 8
    $region17: #{spatial_attention.1} parent=1 // pred_fallthru
      _
    // Predicated region
    $region18: #{spatial_attention.1} parent=1 // pred_check
      _
    $region19: #{spatial_attention.1} parent=1 // pred_check_branch
      %9946 = sbr.rel (0) target = $region21
    $region20: #{spatial_attention.1} parent=1 // pred_region
      %9947 = dma.done [#allocation3], 4096
    $region21: #{spatial_attention.1} parent=1 // pred_fallthru
      _
    %9948 = vsyncpa [#allocation3], 1

</llo_original>
